<compile_context>
chip_gen: v6e
topology: v6e:2x2x1
jax: 0.10.0
libtpu: 0.0.40
codegen_flags: <defaults>
</compile_context>

<pallas_src>
import jax
import jax.numpy as jnp
from jax.experimental import pallas as pl
from jax.experimental.pallas import tpu as pltpu

EPS = 1e-5   # nn.InstanceNorm2d default eps (affine=False, no running stats)
LANE = 128


def _round_up(x, m):
    return ((x + m - 1) // m) * m


def _vmem_limit_bytes():
    """~75% of this chip's physical VMEM (48 MiB on v7x, 96 MiB on v5e/v6e)."""
    try:
        cap = pltpu.get_tpu_info().vmem_capacity_bytes
    except Exception:
        cap = 64 * 1024 * 1024   # conservative fallback, safe on all gens
    return int(cap * 0.75)


def _compiler_params(dimension_semantics):
    return pltpu.CompilerParams(
        dimension_semantics=dimension_semantics,
        vmem_limit_bytes=_vmem_limit_bytes(),
    )


def _instance_norm_flat(a):
    """a: (H*W, C) f32 -> per-channel normalization over the spatial axis.

    One-pass stats (var = E[a^2] - mean^2, biased) match nn.InstanceNorm2d; the
    max(., 0) clamp guards f32 cancellation.  A two-pass variance would track
    PyTorch slightly more tightly but adds full-tensor VPU work, which the
    v6e/v7x VALU budget does not want.
    """
    inv_n = 1.0 / a.shape[0]
    mean = jnp.sum(a, axis=0, keepdims=True) * inv_n
    ex2 = jnp.sum(a * a, axis=0, keepdims=True) * inv_n
    var = jnp.maximum(ex2 - mean * mean, 0.0)
    return (a - mean) * jax.lax.rsqrt(var + EPS)


def _reflect_pad_store(pad_ref, t, H, W):
    """Write ReflectionPad2d(1) of t (H, W, C) into pad_ref[:H+2, :W+2, :]."""
    pad_ref[1:H + 1, 1:W + 1, :] = t
    pad_ref[0:1, 1:W + 1, :] = t[1:2]                     # top row    <- row 1
    pad_ref[H + 1:H + 2, 1:W + 1, :] = t[H - 2:H - 1]     # bottom row <- row H-2
    pad_ref[:, 0:1, :] = pad_ref[:, 2:3, :]               # left col  (incl. corners)
    pad_ref[:, W + 1:W + 2, :] = pad_ref[:, W - 1:W, :]   # right col (incl. corners)


def _conv3x3(pad_ref, w_ref, H, W, Cin):
    """3x3 'VALID' conv over the reflection-padded activation in pad_ref.

    pad_ref: (H+2, Wp, Cin) bf16 scratch (only columns [0, W+2) are valid).
    w_ref:   (9, Cin, Cout) bf16 ref, tap index k = dy*3 + dx.
    Returns (H*W, Cout) f32.

    NOTE(v6e/v7x): if a bundle dump shows the VALU slot saturating (the 8
    accumulation adds + IN work), fold the dy accumulation into the MXU with
    per-dx K=3*Cin matmuls (weights reshaped to (3, 3*Cin, Cout)).  Measure
    first: on v5e the MXU dominates and this is pure overhead.
    """
    acc = None
    for dx in range(3):
        # One sublane-shifted column block per dx, reused for all three dy taps.
        col = pad_ref[:, dx:dx + W, :]                    # (H+2, W, Cin) bf16
        for dy in range(3):
            patch = col[dy:dy + H].reshape(H * W, Cin)    # leading-axis slice
            t = jnp.dot(patch, w_ref[dy * 3 + dx],
                        preferred_element_type=jnp.float32)
            acc = t if acc is None else acc + t
    return acc


# ----------------------------------------------------------------------------
# Fused path: whole block in one kernel, grid over batch.
# ----------------------------------------------------------------------------
def _resblock_fused_kernel(x_ref, w1_ref, w2_ref, y_ref, pad_ref):
    _, H, W, C = x_ref.shape                              # C = lane-padded Cp

    # reflection-pad x (bf16) into the shared scratch
    _reflect_pad_store(pad_ref, x_ref[0].astype(jnp.bfloat16), H, W)

    # conv1 -> InstanceNorm -> ReLU
    a1 = _conv3x3(pad_ref, w1_ref, H, W, C)               # (H*W, C) f32
    h = jnp.maximum(_instance_norm_flat(a1), 0.0)

    # reflection-pad intermediate (reuse the SAME scratch buffer)
    _reflect_pad_store(pad_ref, h.reshape(H, W, C).astype(jnp.bfloat16), H, W)

    # conv2 -> InstanceNorm
    a2 = _conv3x3(pad_ref, w2_ref, H, W, C)
    h2 = _instance_norm_flat(a2).reshape(H, W, C)

    # residual add (f32)
    y_ref[0] = (x_ref[0].astype(jnp.float32) + h2).astype(y_ref.dtype)


def _resident_weight_spec(Cp):
    """Weights have a constant index_map across the grid: request a single
    VMEM buffer (no double buffering) -> ~1.1 MiB saved per weight at C=256."""
    index_map = lambda b: (0, 0, 0)
    try:
        return pl.BlockSpec((9, Cp, Cp), index_map, pipeline_mode=pl.Buffered(1))
    except Exception:   # JAX without BlockSpec.pipeline_mode: fall back cleanly
        return pl.BlockSpec((9, Cp, Cp), index_map)


def _resblock_fused(x, w1k, w2k):
    N, H, W, Cp = x.shape
    Wp = _round_up(W + 2, 8)
    return pl.pallas_call(
        _resblock_fused_kernel,
        out_shape=jax.ShapeDtypeStruct((N, H, W, Cp), x.dtype),
        grid_spec=pltpu.PrefetchScalarGridSpec(
            num_scalar_prefetch=0,
            grid=(N,),
            in_specs=[
                pl.BlockSpec((1, H, W, Cp), lambda b: (b, 0, 0, 0)),
                _resident_weight_spec(Cp),
                _resident_weight_spec(Cp),
            ],
            out_specs=pl.BlockSpec((1, H, W, Cp), lambda b: (b, 0, 0, 0)),
            scratch_shapes=[pltpu.VMEM((H + 2, Wp, Cp), jnp.bfloat16)],
        ),
        compiler_params=_compiler_params(("parallel",)),
    )(x, w1k, w2k)


# ----------------------------------------------------------------------------
# Split path: two pallas_calls, each gridded over (batch, Cout tiles) so there
# are >= 2 "parallel" grid points even at N=1 (both v7x TensorCores busy) and
# per-call f32 temporaries are halved.  InstanceNorm is per-channel, so Cout
# tiling is exact; the bf16 intermediate h takes one cheap HBM round trip.
# ----------------------------------------------------------------------------
def _conv_in_relu_kernel(x_ref, w_ref, h_ref, pad_ref):
    _, H, W, Cin = x_ref.shape
    _reflect_pad_store(pad_ref, x_ref[0].astype(jnp.bfloat16), H, W)
    a = _conv3x3(pad_ref, w_ref, H, W, Cin)               # (H*W, TCo) f32
    h = jnp.maximum(_instance_norm_flat(a), 0.0)
    h_ref[0] = h.reshape(H, W, -1).astype(h_ref.dtype)


def _conv_in_residual_kernel(h_ref, x_ref, w_ref, y_ref, pad_ref):
    _, H, W, Cin = h_ref.shape
    _reflect_pad_store(pad_ref, h_ref[0], H, W)           # h is already bf16
    a = _conv3x3(pad_ref, w_ref, H, W, Cin)
    h2 = _instance_norm_flat(a).reshape(H, W, -1)
    y_ref[0] = (x_ref[0].astype(jnp.float32) + h2).astype(y_ref.dtype)


def _resblock_split(x, w1k, w2k, cout_tile):
    N, H, W, Cp = x.shape
    Wp = _round_up(W + 2, 8)
    tco = min(cout_tile, Cp)
    nco = Cp // tco
    params = _compiler_params(("parallel", "parallel"))

    h = pl.pallas_call(
        _conv_in_relu_kernel,
        out_shape=jax.ShapeDtypeStruct((N, H, W, Cp), jnp.bfloat16),
        grid_spec=pltpu.PrefetchScalarGridSpec(
            num_scalar_prefetch=0,
            grid=(N, nco),
            in_specs=[
                pl.BlockSpec((1, H, W, Cp), lambda b, j: (b, 0, 0, 0)),
                pl.BlockSpec((9, Cp, tco), lambda b, j: (0, 0, j)),
            ],
            out_specs=pl.BlockSpec((1, H, W, tco), lambda b, j: (b, 0, 0, j)),
            scratch_shapes=[pltpu.VMEM((H + 2, Wp, Cp), jnp.bfloat16)],
        ),
        compiler_params=params,
    )(x, w1k)

    return pl.pallas_call(
        _conv_in_residual_kernel,
        out_shape=jax.ShapeDtypeStruct((N, H, W, Cp), x.dtype),
        grid_spec=pltpu.PrefetchScalarGridSpec(
            num_scalar_prefetch=0,
            grid=(N, nco),
            in_specs=[
                pl.BlockSpec((1, H, W, Cp), lambda b, j: (b, 0, 0, 0)),
                pl.BlockSpec((1, H, W, tco), lambda b, j: (b, 0, 0, j)),
                pl.BlockSpec((9, Cp, tco), lambda b, j: (0, 0, j)),
            ],
            out_specs=pl.BlockSpec((1, H, W, tco), lambda b, j: (b, 0, 0, j)),
            scratch_shapes=[pltpu.VMEM((H + 2, Wp, Cp), jnp.bfloat16)],
        ),
        compiler_params=params,
    )(h, x, w2k)


# ----------------------------------------------------------------------------
# Public entry points.
# ----------------------------------------------------------------------------
def prep_weights(w, Cp=None):
    """(Cout, Cin, 3, 3) PyTorch conv weight -> (9, Cp, Cp) bf16 tap matrices
    (tap index k = ky*3 + kx).  Do this once per layer and reuse."""
    C = w.shape[0]
    if Cp is None:
        Cp = _round_up(C, LANE)
    wk = jnp.transpose(w, (2, 3, 1, 0)).reshape(9, C, C)   # (tap, Cin, Cout)
    if Cp != C:
        wk = jnp.pad(wk, ((0, 0), (0, Cp - C), (0, Cp - C)))
    return wk.astype(jnp.bfloat16)


def residual_block_nhwc(x_nhwc, w1k, w2k, *, split_cout=None, cout_tile=LANE):
    """NHWC-native residual block (the per-block entry for a resblock stack).

    x_nhwc: (N, H, W, Cp) with Cp % 128 == 0 (extra lane-pad channels zero);
    w1k/w2k: prep_weights outputs.  No transposes, no channel pad/slice.
    Pass bf16 activations to halve I/O-block VMEM / HBM traffic (accumulation,
    IN stats and the residual add stay f32 inside the kernel).
    """
    N, _, _, Cp = x_nhwc.shape
    if Cp % LANE:
        raise ValueError("channels must be lane-padded to a multiple of 128")
    if split_cout is None:
        # grid=(N,) only fills both v7x TensorCores for N >= 2.
        split_cout = (N == 1 and Cp >= 2 * cout_tile)
    if split_cout:
        return _resblock_split(x_nhwc, w1k, w2k, cout_tile)
    return _resblock_fused(x_nhwc, w1k, w2k)


def residual_block(x_nchw, w1, b1, w2, b2, *, split_cout=None):
    """Spec-compatible NCHW wrapper (PyTorch ResidualBlock forward).

    The NCHW<->NHWC transposes (+ channel lane-pad) here are boundary-only
    glue for drop-in testing; for the CycleGAN 9-resblock stack transpose
    once at the network boundary and chain residual_block_nhwc directly.
    """
    N, C, H, W = x_nchw.shape
    del b1, b2   # InstanceNorm (affine=False) cancels per-channel conv biases.
    Cp = _round_up(C, LANE)

    x = jnp.transpose(x_nchw, (0, 2, 3, 1))                 # -> NHWC
    if Cp != C:
        x = jnp.pad(x, ((0, 0), (0, 0), (0, 0), (0, Cp - C)))

    out = residual_block_nhwc(x, prep_weights(w1, Cp), prep_weights(w2, Cp),
                              split_cout=split_cout)
    if Cp != C:
        out = out[..., :C]
    return jnp.transpose(out, (0, 3, 1, 2))                 # back to NCHW


# ----------------------------------------------------------------------------
# Pure-JAX reference of the PyTorch forward.
# ----------------------------------------------------------------------------
def _reference(x_nchw, w1, b1, w2, b2, conv_dtype=jnp.float32):
    """conv_dtype=bf16 emulates the kernel's bf16 MXU operands (f32 accum);
    conv_dtype=f32 is the exact module semantics."""
    def conv(x, w, b):
        xp = jnp.pad(x, ((0, 0), (0, 0), (1, 1), (1, 1)), mode="reflect")
        y = jax.lax.conv_general_dilated(
            xp.astype(conv_dtype), w.astype(conv_dtype),
            window_strides=(1, 1), padding="VALID",
            dimension_numbers=("NCHW", "OIHW", "NCHW"),
            preferred_element_type=jnp.float32)
        return y + b[None, :, None, None]

    def inorm(x):
        mean = jnp.mean(x, axis=(2, 3), keepdims=True)
        var = jnp.mean((x - mean) ** 2, axis=(2, 3), keepdims=True)
        return (x - mean) * jax.lax.rsqrt(var + EPS)

    h = jnp.maximum(inorm(conv(x_nchw, w1, b1)), 0.0)
    h = inorm(conv(h, w2, b2))
    return x_nchw + h


if __name__ == "__main__":
    N, C, H, W = 2, 4, 16, 16
    key = jax.random.PRNGKey(0)
    kx, kw1, kb1, kw2, kb2 = jax.random.split(key, 5)

    x = jax.random.normal(kx, (N, C, H, W), dtype=jnp.float32)

    fan_in = C * 3 * 3
    bound = 1.0 / (fan_in ** 0.5)
    w1 = jax.random.uniform(kw1, (C, C, 3, 3), jnp.float32, -bound, bound)
    b1 = jax.random.uniform(kb1, (C,), jnp.float32, -bound, bound)
    w2 = jax.random.uniform(kw2, (C, C, 3, 3), jnp.float32, -bound, bound)
    b2 = jax.random.uniform(kb2, (C,), jnp.float32, -bound, bound)

    # --- fused path (default: grid over batch) ---
    fn = jax.jit(residual_block)
    y = jax.block_until_ready(fn(x, w1, b1, w2, b2))
    assert y.shape == (N, C, H, W)

    # Tight check vs. a reference that emulates the kernel's bf16 MXU operands.
    y_bf = _reference(x, w1, b1, w2, b2, conv_dtype=jnp.bfloat16)
    err_bf = jnp.max(jnp.abs(y - y_bf))
    assert jnp.allclose(y, y_bf, atol=1e-2, rtol=1e-2), f"bf16-ref max err {err_bf}"

    # Looser sanity check vs. exact f32 module semantics.
    y_f32 = _reference(x, w1, b1, w2, b2, conv_dtype=jnp.float32)
    err_f32 = jnp.max(jnp.abs(y - y_f32))
    assert jnp.allclose(y, y_f32, atol=1e-1, rtol=1e-1), f"f32-ref max err {err_f32}"

    # --- split (two-call, Cout-tiled) path: the v7x batch-1 / dual-core route ---
    fn_split = jax.jit(lambda xx: residual_block(xx, w1, b1, w2, b2,
                                                 split_cout=True))
    y1 = jax.block_until_ready(fn_split(x[:1]))
    y1_bf = _reference(x[:1], w1, b1, w2, b2, conv_dtype=jnp.bfloat16)
    err_sp = jnp.max(jnp.abs(y1 - y1_bf))
    assert jnp.allclose(y1, y1_bf, atol=1e-2, rtol=1e-2), f"split-path max err {err_sp}"

    print("KERNEL_OK")
</pallas_src>

<mosaic_0001>
module attributes {stable_mosaic.version = 11 : i64} {
  func.func @_resblock_fused_kernel(%arg0: i32, %arg1: memref<1x16x16x128xf32, #tpu.memory_space<vmem>>, %arg2: memref<9x128x128xbf16, #tpu.memory_space<vmem>>, %arg3: memref<9x128x128xbf16, #tpu.memory_space<vmem>>, %arg4: memref<1x16x16x128xf32, #tpu.memory_space<vmem>>, %arg5: memref<18x24x128xbf16, #tpu.memory_space<vmem>>) attributes {dimension_semantics = [#tpu.dimension_semantics<parallel>], iteration_bounds = array<i64: 2>, scalar_prefetch = 0 : i64, scratch_operands = 1 : i64, tpu.core_type = #tpu.core_type<tc>, window_params = [{transform_indices = @transform_0, window_bounds = array<i64: 1, 16, 16, 128>}, {pipeline_mode = #tpu.pipeline_mode<synchronous>, transform_indices = @transform_1, window_bounds = array<i64: 9, 128, 128>}, {pipeline_mode = #tpu.pipeline_mode<synchronous>, transform_indices = @transform_2, window_bounds = array<i64: 9, 128, 128>}, {transform_indices = @transform_3, window_bounds = array<i64: 1, 16, 16, 128>}]} {
    %c0 = arith.constant 0 : index
    %c0_0 = arith.constant 0 : index
    %c0_1 = arith.constant 0 : index
    %c0_2 = arith.constant 0 : index
    %0 = vector.load %arg1[%c0, %c0_0, %c0_1, %c0_2] : memref<1x16x16x128xf32, #tpu.memory_space<vmem>>, vector<1x16x16x128xf32>
    %1 = vector.shape_cast %0 : vector<1x16x16x128xf32> to vector<16x16x128xf32>
    %2 = arith.truncf %1 : vector<16x16x128xf32> to vector<16x16x128xbf16>
    %c1 = arith.constant 1 : index
    %c1_3 = arith.constant 1 : index
    %c0_4 = arith.constant 0 : index
    %3 = vector.load %arg5[%c1, %c1_3, %c0_4] : memref<18x24x128xbf16, #tpu.memory_space<vmem>>, vector<16x16x128xbf16>
    tpu.vector_store %arg5[%c1, %c1_3, %c0_4], %2 {strides = array<i32>} : memref<18x24x128xbf16, #tpu.memory_space<vmem>>, vector<16x16x128xbf16>,
    %4 = vector.extract_strided_slice %2 {offsets = [1, 0, 0], sizes = [1, 16, 128], strides = [1, 1, 1]} : vector<16x16x128xbf16> to vector<1x16x128xbf16>
    %c0_5 = arith.constant 0 : index
    %c1_6 = arith.constant 1 : index
    %c0_7 = arith.constant 0 : index
    %5 = vector.load %arg5[%c0_5, %c1_6, %c0_7] : memref<18x24x128xbf16, #tpu.memory_space<vmem>>, vector<1x16x128xbf16>
    tpu.vector_store %arg5[%c0_5, %c1_6, %c0_7], %4 {strides = array<i32>} : memref<18x24x128xbf16, #tpu.memory_space<vmem>>, vector<1x16x128xbf16>,
    %6 = vector.extract_strided_slice %2 {offsets = [14, 0, 0], sizes = [1, 16, 128], strides = [1, 1, 1]} : vector<16x16x128xbf16> to vector<1x16x128xbf16>
    %c17 = arith.constant 17 : index
    %c1_8 = arith.constant 1 : index
    %c0_9 = arith.constant 0 : index
    %7 = vector.load %arg5[%c17, %c1_8, %c0_9] : memref<18x24x128xbf16, #tpu.memory_space<vmem>>, vector<1x16x128xbf16>
    tpu.vector_store %arg5[%c17, %c1_8, %c0_9], %6 {strides = array<i32>} : memref<18x24x128xbf16, #tpu.memory_space<vmem>>, vector<1x16x128xbf16>,
    %c0_10 = arith.constant 0 : index
    %c2 = arith.constant 2 : index
    %c0_11 = arith.constant 0 : index
    %8 = vector.load %arg5[%c0_10, %c2, %c0_11] : memref<18x24x128xbf16, #tpu.memory_space<vmem>>, vector<18x1x128xbf16>
    %c0_12 = arith.constant 0 : index
    %c0_13 = arith.constant 0 : index
    %c0_14 = arith.constant 0 : index
    %9 = vector.load %arg5[%c0_12, %c0_13, %c0_14] : memref<18x24x128xbf16, #tpu.memory_space<vmem>>, vector<18x1x128xbf16>
    tpu.vector_store %arg5[%c0_12, %c0_13, %c0_14], %8 {strides = array<i32>} : memref<18x24x128xbf16, #tpu.memory_space<vmem>>, vector<18x1x128xbf16>,
    %c0_15 = arith.constant 0 : index
    %c15 = arith.constant 15 : index
    %c0_16 = arith.constant 0 : index
    %10 = vector.load %arg5[%c0_15, %c15, %c0_16] : memref<18x24x128xbf16, #tpu.memory_space<vmem>>, vector<18x1x128xbf16>
    %c0_17 = arith.constant 0 : index
    %c17_18 = arith.constant 17 : index
    %c0_19 = arith.constant 0 : index
    %11 = vector.load %arg5[%c0_17, %c17_18, %c0_19] : memref<18x24x128xbf16, #tpu.memory_space<vmem>>, vector<18x1x128xbf16>
    tpu.vector_store %arg5[%c0_17, %c17_18, %c0_19], %10 {strides = array<i32>} : memref<18x24x128xbf16, #tpu.memory_space<vmem>>, vector<18x1x128xbf16>,
    %c0_20 = arith.constant 0 : index
    %c0_21 = arith.constant 0 : index
    %c0_22 = arith.constant 0 : index
    %12 = vector.load %arg5[%c0_20, %c0_21, %c0_22] : memref<18x24x128xbf16, #tpu.memory_space<vmem>>, vector<18x16x128xbf16>
    %13 = vector.extract_strided_slice %12 {offsets = [0, 0, 0], sizes = [16, 16, 128], strides = [1, 1, 1]} : vector<18x16x128xbf16> to vector<16x16x128xbf16>
    %14 = vector.shape_cast %13 : vector<16x16x128xbf16> to vector<256x128xbf16>
    %c0_23 = arith.constant 0 : index
    %c0_24 = arith.constant 0 : index
    %c0_25 = arith.constant 0 : index
    %15 = vector.load %arg2[%c0_23, %c0_24, %c0_25] : memref<9x128x128xbf16, #tpu.memory_space<vmem>>, vector<1x128x128xbf16>
    %16 = vector.shape_cast %15 : vector<1x128x128xbf16> to vector<128x128xbf16>
    %cst = arith.constant dense<0.000000e+00> : vector<256x128xf32>
    %17 = tpu.matmul %14, %16, %cst {dimension_numbers = #tpu.dot_dimension_numbers<[1], [0], [0], [1], [0, 0, 1, 1], [], []>} : vector<256x128xbf16>, vector<128x128xbf16>, vector<256x128xf32> -> vector<256x128xf32>
    %18 = vector.extract_strided_slice %12 {offsets = [1, 0, 0], sizes = [16, 16, 128], strides = [1, 1, 1]} : vector<18x16x128xbf16> to vector<16x16x128xbf16>
    %19 = vector.shape_cast %18 : vector<16x16x128xbf16> to vector<256x128xbf16>
    %c3 = arith.constant 3 : index
    %c0_26 = arith.constant 0 : index
    %c0_27 = arith.constant 0 : index
    %20 = vector.load %arg2[%c3, %c0_26, %c0_27] : memref<9x128x128xbf16, #tpu.memory_space<vmem>>, vector<1x128x128xbf16>
    %21 = vector.shape_cast %20 : vector<1x128x128xbf16> to vector<128x128xbf16>
    %cst_28 = arith.constant dense<0.000000e+00> : vector<256x128xf32>
    %22 = tpu.matmul %19, %21, %cst_28 {dimension_numbers = #tpu.dot_dimension_numbers<[1], [0], [0], [1], [0, 0, 1, 1], [], []>} : vector<256x128xbf16>, vector<128x128xbf16>, vector<256x128xf32> -> vector<256x128xf32>
    %23 = arith.addf %17, %22 : vector<256x128xf32>
    %24 = vector.extract_strided_slice %12 {offsets = [2, 0, 0], sizes = [16, 16, 128], strides = [1, 1, 1]} : vector<18x16x128xbf16> to vector<16x16x128xbf16>
    %25 = vector.shape_cast %24 : vector<16x16x128xbf16> to vector<256x128xbf16>
    %c6 = arith.constant 6 : index
    %c0_29 = arith.constant 0 : index
    %c0_30 = arith.constant 0 : index
    %26 = vector.load %arg2[%c6, %c0_29, %c0_30] : memref<9x128x128xbf16, #tpu.memory_space<vmem>>, vector<1x128x128xbf16>
    %27 = vector.shape_cast %26 : vector<1x128x128xbf16> to vector<128x128xbf16>
    %cst_31 = arith.constant dense<0.000000e+00> : vector<256x128xf32>
    %28 = tpu.matmul %25, %27, %cst_31 {dimension_numbers = #tpu.dot_dimension_numbers<[1], [0], [0], [1], [0, 0, 1, 1], [], []>} : vector<256x128xbf16>, vector<128x128xbf16>, vector<256x128xf32> -> vector<256x128xf32>
    %29 = arith.addf %23, %28 : vector<256x128xf32>
    %c0_32 = arith.constant 0 : index
    %c1_33 = arith.constant 1 : index
    %c0_34 = arith.constant 0 : index
    %30 = vector.load %arg5[%c0_32, %c1_33, %c0_34] : memref<18x24x128xbf16, #tpu.memory_space<vmem>>, vector<18x16x128xbf16>
    %31 = vector.extract_strided_slice %30 {offsets = [0, 0, 0], sizes = [16, 16, 128], strides = [1, 1, 1]} : vector<18x16x128xbf16> to vector<16x16x128xbf16>
    %32 = vector.shape_cast %31 : vector<16x16x128xbf16> to vector<256x128xbf16>
    %c1_35 = arith.constant 1 : index
    %c0_36 = arith.constant 0 : index
    %c0_37 = arith.constant 0 : index
    %33 = vector.load %arg2[%c1_35, %c0_36, %c0_37] : memref<9x128x128xbf16, #tpu.memory_space<vmem>>, vector<1x128x128xbf16>
    %34 = vector.shape_cast %33 : vector<1x128x128xbf16> to vector<128x128xbf16>
    %cst_38 = arith.constant dense<0.000000e+00> : vector<256x128xf32>
    %35 = tpu.matmul %32, %34, %cst_38 {dimension_numbers = #tpu.dot_dimension_numbers<[1], [0], [0], [1], [0, 0, 1, 1], [], []>} : vector<256x128xbf16>, vector<128x128xbf16>, vector<256x128xf32> -> vector<256x128xf32>
    %36 = arith.addf %29, %35 : vector<256x128xf32>
    %37 = vector.extract_strided_slice %30 {offsets = [1, 0, 0], sizes = [16, 16, 128], strides = [1, 1, 1]} : vector<18x16x128xbf16> to vector<16x16x128xbf16>
    %38 = vector.shape_cast %37 : vector<16x16x128xbf16> to vector<256x128xbf16>
    %c4 = arith.constant 4 : index
    %c0_39 = arith.constant 0 : index
    %c0_40 = arith.constant 0 : index
    %39 = vector.load %arg2[%c4, %c0_39, %c0_40] : memref<9x128x128xbf16, #tpu.memory_space<vmem>>, vector<1x128x128xbf16>
    %40 = vector.shape_cast %39 : vector<1x128x128xbf16> to vector<128x128xbf16>
    %cst_41 = arith.constant dense<0.000000e+00> : vector<256x128xf32>
    %41 = tpu.matmul %38, %40, %cst_41 {dimension_numbers = #tpu.dot_dimension_numbers<[1], [0], [0], [1], [0, 0, 1, 1], [], []>} : vector<256x128xbf16>, vector<128x128xbf16>, vector<256x128xf32> -> vector<256x128xf32>
    %42 = arith.addf %36, %41 : vector<256x128xf32>
    %43 = vector.extract_strided_slice %30 {offsets = [2, 0, 0], sizes = [16, 16, 128], strides = [1, 1, 1]} : vector<18x16x128xbf16> to vector<16x16x128xbf16>
    %44 = vector.shape_cast %43 : vector<16x16x128xbf16> to vector<256x128xbf16>
    %c7 = arith.constant 7 : index
    %c0_42 = arith.constant 0 : index
    %c0_43 = arith.constant 0 : index
    %45 = vector.load %arg2[%c7, %c0_42, %c0_43] : memref<9x128x128xbf16, #tpu.memory_space<vmem>>, vector<1x128x128xbf16>
    %46 = vector.shape_cast %45 : vector<1x128x128xbf16> to vector<128x128xbf16>
    %cst_44 = arith.constant dense<0.000000e+00> : vector<256x128xf32>
    %47 = tpu.matmul %44, %46, %cst_44 {dimension_numbers = #tpu.dot_dimension_numbers<[1], [0], [0], [1], [0, 0, 1, 1], [], []>} : vector<256x128xbf16>, vector<128x128xbf16>, vector<256x128xf32> -> vector<256x128xf32>
    %48 = arith.addf %42, %47 : vector<256x128xf32>
    %c0_45 = arith.constant 0 : index
    %c2_46 = arith.constant 2 : index
    %c0_47 = arith.constant 0 : index
    %49 = vector.load %arg5[%c0_45, %c2_46, %c0_47] : memref<18x24x128xbf16, #tpu.memory_space<vmem>>, vector<18x16x128xbf16>
    %50 = vector.extract_strided_slice %49 {offsets = [0, 0, 0], sizes = [16, 16, 128], strides = [1, 1, 1]} : vector<18x16x128xbf16> to vector<16x16x128xbf16>
    %51 = vector.shape_cast %50 : vector<16x16x128xbf16> to vector<256x128xbf16>
    %c2_48 = arith.constant 2 : index
    %c0_49 = arith.constant 0 : index
    %c0_50 = arith.constant 0 : index
    %52 = vector.load %arg2[%c2_48, %c0_49, %c0_50] : memref<9x128x128xbf16, #tpu.memory_space<vmem>>, vector<1x128x128xbf16>
    %53 = vector.shape_cast %52 : vector<1x128x128xbf16> to vector<128x128xbf16>
    %cst_51 = arith.constant dense<0.000000e+00> : vector<256x128xf32>
    %54 = tpu.matmul %51, %53, %cst_51 {dimension_numbers = #tpu.dot_dimension_numbers<[1], [0], [0], [1], [0, 0, 1, 1], [], []>} : vector<256x128xbf16>, vector<128x128xbf16>, vector<256x128xf32> -> vector<256x128xf32>
    %55 = arith.addf %48, %54 : vector<256x128xf32>
    %56 = vector.extract_strided_slice %49 {offsets = [1, 0, 0], sizes = [16, 16, 128], strides = [1, 1, 1]} : vector<18x16x128xbf16> to vector<16x16x128xbf16>
    %57 = vector.shape_cast %56 : vector<16x16x128xbf16> to vector<256x128xbf16>
    %c5 = arith.constant 5 : index
    %c0_52 = arith.constant 0 : index
    %c0_53 = arith.constant 0 : index
    %58 = vector.load %arg2[%c5, %c0_52, %c0_53] : memref<9x128x128xbf16, #tpu.memory_space<vmem>>, vector<1x128x128xbf16>
    %59 = vector.shape_cast %58 : vector<1x128x128xbf16> to vector<128x128xbf16>
    %cst_54 = arith.constant dense<0.000000e+00> : vector<256x128xf32>
    %60 = tpu.matmul %57, %59, %cst_54 {dimension_numbers = #tpu.dot_dimension_numbers<[1], [0], [0], [1], [0, 0, 1, 1], [], []>} : vector<256x128xbf16>, vector<128x128xbf16>, vector<256x128xf32> -> vector<256x128xf32>
    %61 = arith.addf %55, %60 : vector<256x128xf32>
    %62 = vector.extract_strided_slice %49 {offsets = [2, 0, 0], sizes = [16, 16, 128], strides = [1, 1, 1]} : vector<18x16x128xbf16> to vector<16x16x128xbf16>
    %63 = vector.shape_cast %62 : vector<16x16x128xbf16> to vector<256x128xbf16>
    %c8 = arith.constant 8 : index
    %c0_55 = arith.constant 0 : index
    %c0_56 = arith.constant 0 : index
    %64 = vector.load %arg2[%c8, %c0_55, %c0_56] : memref<9x128x128xbf16, #tpu.memory_space<vmem>>, vector<1x128x128xbf16>
    %65 = vector.shape_cast %64 : vector<1x128x128xbf16> to vector<128x128xbf16>
    %cst_57 = arith.constant dense<0.000000e+00> : vector<256x128xf32>
    %66 = tpu.matmul %63, %65, %cst_57 {dimension_numbers = #tpu.dot_dimension_numbers<[1], [0], [0], [1], [0, 0, 1, 1], [], []>} : vector<256x128xbf16>, vector<128x128xbf16>, vector<256x128xf32> -> vector<256x128xf32>
    %67 = arith.addf %61, %66 : vector<256x128xf32>
    %cst_58 = arith.constant dense<0.000000e+00> : vector<128xf32>
    %68 = vector.multi_reduction <add>, %67, %cst_58 [0] : vector<256x128xf32> to vector<128xf32>
    %69 = vector.shape_cast %68 : vector<128xf32> to vector<1x128xf32>
    %cst_59 = arith.constant 3.906250e-03 : f32
    %70 = vector.broadcast %cst_59 : f32 to vector<1x128xf32>
    %71 = arith.mulf %69, %70 : vector<1x128xf32>
    %72 = arith.mulf %67, %67 : vector<256x128xf32>
    %cst_60 = arith.constant dense<0.000000e+00> : vector<128xf32>
    %73 = vector.multi_reduction <add>, %72, %cst_60 [0] : vector<256x128xf32> to vector<128xf32>
    %74 = vector.shape_cast %73 : vector<128xf32> to vector<1x128xf32>
    %cst_61 = arith.constant 3.906250e-03 : f32
    %75 = vector.broadcast %cst_61 : f32 to vector<1x128xf32>
    %76 = arith.mulf %74, %75 : vector<1x128xf32>
    %77 = arith.mulf %71, %71 : vector<1x128xf32>
    %78 = arith.subf %76, %77 : vector<1x128xf32>
    %cst_62 = arith.constant 0.000000e+00 : f32
    %79 = vector.broadcast %cst_62 : f32 to vector<1x128xf32>
    %80 = arith.maximumf %78, %79 : vector<1x128xf32>
    %81 = vector.broadcast %71 : vector<1x128xf32> to vector<256x128xf32>
    %82 = arith.subf %67, %81 : vector<256x128xf32>
    %cst_63 = arith.constant 9.99999974E-6 : f32
    %83 = vector.broadcast %cst_63 : f32 to vector<1x128xf32>
    %84 = arith.addf %80, %83 : vector<1x128xf32>
    %85 = math.rsqrt %84 : vector<1x128xf32>
    %86 = vector.broadcast %85 : vector<1x128xf32> to vector<256x128xf32>
    %87 = arith.mulf %82, %86 : vector<256x128xf32>
    %cst_64 = arith.constant 0.000000e+00 : f32
    %88 = vector.broadcast %cst_64 : f32 to vector<256x128xf32>
    %89 = arith.maximumf %87, %88 : vector<256x128xf32>
    %90 = vector.shape_cast %89 : vector<256x128xf32> to vector<16x16x128xf32>
    %91 = arith.truncf %90 : vector<16x16x128xf32> to vector<16x16x128xbf16>
    %c1_65 = arith.constant 1 : index
    %c1_66 = arith.constant 1 : index
    %c0_67 = arith.constant 0 : index
    %92 = vector.load %arg5[%c1_65, %c1_66, %c0_67] : memref<18x24x128xbf16, #tpu.memory_space<vmem>>, vector<16x16x128xbf16>
    tpu.vector_store %arg5[%c1_65, %c1_66, %c0_67], %91 {strides = array<i32>} : memref<18x24x128xbf16, #tpu.memory_space<vmem>>, vector<16x16x128xbf16>,
    %93 = vector.extract_strided_slice %91 {offsets = [1, 0, 0], sizes = [1, 16, 128], strides = [1, 1, 1]} : vector<16x16x128xbf16> to vector<1x16x128xbf16>
    %c0_68 = arith.constant 0 : index
    %c1_69 = arith.constant 1 : index
    %c0_70 = arith.constant 0 : index
    %94 = vector.load %arg5[%c0_68, %c1_69, %c0_70] : memref<18x24x128xbf16, #tpu.memory_space<vmem>>, vector<1x16x128xbf16>
    tpu.vector_store %arg5[%c0_68, %c1_69, %c0_70], %93 {strides = array<i32>} : memref<18x24x128xbf16, #tpu.memory_space<vmem>>, vector<1x16x128xbf16>,
    %95 = vector.extract_strided_slice %91 {offsets = [14, 0, 0], sizes = [1, 16, 128], strides = [1, 1, 1]} : vector<16x16x128xbf16> to vector<1x16x128xbf16>
    %c17_71 = arith.constant 17 : index
    %c1_72 = arith.constant 1 : index
    %c0_73 = arith.constant 0 : index
    %96 = vector.load %arg5[%c17_71, %c1_72, %c0_73] : memref<18x24x128xbf16, #tpu.memory_space<vmem>>, vector<1x16x128xbf16>
    tpu.vector_store %arg5[%c17_71, %c1_72, %c0_73], %95 {strides = array<i32>} : memref<18x24x128xbf16, #tpu.memory_space<vmem>>, vector<1x16x128xbf16>,
    %c0_74 = arith.constant 0 : index
    %c2_75 = arith.constant 2 : index
    %c0_76 = arith.constant 0 : index
    %97 = vector.load %arg5[%c0_74, %c2_75, %c0_76] : memref<18x24x128xbf16, #tpu.memory_space<vmem>>, vector<18x1x128xbf16>
    %c0_77 = arith.constant 0 : index
    %c0_78 = arith.constant 0 : index
    %c0_79 = arith.constant 0 : index
    %98 = vector.load %arg5[%c0_77, %c0_78, %c0_79] : memref<18x24x128xbf16, #tpu.memory_space<vmem>>, vector<18x1x128xbf16>
    tpu.vector_store %arg5[%c0_77, %c0_78, %c0_79], %97 {strides = array<i32>} : memref<18x24x128xbf16, #tpu.memory_space<vmem>>, vector<18x1x128xbf16>,
    %c0_80 = arith.constant 0 : index
    %c15_81 = arith.constant 15 : index
    %c0_82 = arith.constant 0 : index
    %99 = vector.load %arg5[%c0_80, %c15_81, %c0_82] : memref<18x24x128xbf16, #tpu.memory_space<vmem>>, vector<18x1x128xbf16>
    %c0_83 = arith.constant 0 : index
    %c17_84 = arith.constant 17 : index
    %c0_85 = arith.constant 0 : index
    %100 = vector.load %arg5[%c0_83, %c17_84, %c0_85] : memref<18x24x128xbf16, #tpu.memory_space<vmem>>, vector<18x1x128xbf16>
    tpu.vector_store %arg5[%c0_83, %c17_84, %c0_85], %99 {strides = array<i32>} : memref<18x24x128xbf16, #tpu.memory_space<vmem>>, vector<18x1x128xbf16>,
    %c0_86 = arith.constant 0 : index
    %c0_87 = arith.constant 0 : index
    %c0_88 = arith.constant 0 : index
    %101 = vector.load %arg5[%c0_86, %c0_87, %c0_88] : memref<18x24x128xbf16, #tpu.memory_space<vmem>>, vector<18x16x128xbf16>
    %102 = vector.extract_strided_slice %101 {offsets = [0, 0, 0], sizes = [16, 16, 128], strides = [1, 1, 1]} : vector<18x16x128xbf16> to vector<16x16x128xbf16>
    %103 = vector.shape_cast %102 : vector<16x16x128xbf16> to vector<256x128xbf16>
    %c0_89 = arith.constant 0 : index
    %c0_90 = arith.constant 0 : index
    %c0_91 = arith.constant 0 : index
    %104 = vector.load %arg3[%c0_89, %c0_90, %c0_91] : memref<9x128x128xbf16, #tpu.memory_space<vmem>>, vector<1x128x128xbf16>
    %105 = vector.shape_cast %104 : vector<1x128x128xbf16> to vector<128x128xbf16>
    %cst_92 = arith.constant dense<0.000000e+00> : vector<256x128xf32>
    %106 = tpu.matmul %103, %105, %cst_92 {dimension_numbers = #tpu.dot_dimension_numbers<[1], [0], [0], [1], [0, 0, 1, 1], [], []>} : vector<256x128xbf16>, vector<128x128xbf16>, vector<256x128xf32> -> vector<256x128xf32>
    %107 = vector.extract_strided_slice %101 {offsets = [1, 0, 0], sizes = [16, 16, 128], strides = [1, 1, 1]} : vector<18x16x128xbf16> to vector<16x16x128xbf16>
    %108 = vector.shape_cast %107 : vector<16x16x128xbf16> to vector<256x128xbf16>
    %c3_93 = arith.constant 3 : index
    %c0_94 = arith.constant 0 : index
    %c0_95 = arith.constant 0 : index
    %109 = vector.load %arg3[%c3_93, %c0_94, %c0_95] : memref<9x128x128xbf16, #tpu.memory_space<vmem>>, vector<1x128x128xbf16>
    %110 = vector.shape_cast %109 : vector<1x128x128xbf16> to vector<128x128xbf16>
    %cst_96 = arith.constant dense<0.000000e+00> : vector<256x128xf32>
    %111 = tpu.matmul %108, %110, %cst_96 {dimension_numbers = #tpu.dot_dimension_numbers<[1], [0], [0], [1], [0, 0, 1, 1], [], []>} : vector<256x128xbf16>, vector<128x128xbf16>, vector<256x128xf32> -> vector<256x128xf32>
    %112 = arith.addf %106, %111 : vector<256x128xf32>
    %113 = vector.extract_strided_slice %101 {offsets = [2, 0, 0], sizes = [16, 16, 128], strides = [1, 1, 1]} : vector<18x16x128xbf16> to vector<16x16x128xbf16>
    %114 = vector.shape_cast %113 : vector<16x16x128xbf16> to vector<256x128xbf16>
    %c6_97 = arith.constant 6 : index
    %c0_98 = arith.constant 0 : index
    %c0_99 = arith.constant 0 : index
    %115 = vector.load %arg3[%c6_97, %c0_98, %c0_99] : memref<9x128x128xbf16, #tpu.memory_space<vmem>>, vector<1x128x128xbf16>
    %116 = vector.shape_cast %115 : vector<1x128x128xbf16> to vector<128x128xbf16>
    %cst_100 = arith.constant dense<0.000000e+00> : vector<256x128xf32>
    %117 = tpu.matmul %114, %116, %cst_100 {dimension_numbers = #tpu.dot_dimension_numbers<[1], [0], [0], [1], [0, 0, 1, 1], [], []>} : vector<256x128xbf16>, vector<128x128xbf16>, vector<256x128xf32> -> vector<256x128xf32>
    %118 = arith.addf %112, %117 : vector<256x128xf32>
    %c0_101 = arith.constant 0 : index
    %c1_102 = arith.constant 1 : index
    %c0_103 = arith.constant 0 : index
    %119 = vector.load %arg5[%c0_101, %c1_102, %c0_103] : memref<18x24x128xbf16, #tpu.memory_space<vmem>>, vector<18x16x128xbf16>
    %120 = vector.extract_strided_slice %119 {offsets = [0, 0, 0], sizes = [16, 16, 128], strides = [1, 1, 1]} : vector<18x16x128xbf16> to vector<16x16x128xbf16>
    %121 = vector.shape_cast %120 : vector<16x16x128xbf16> to vector<256x128xbf16>
    %c1_104 = arith.constant 1 : index
    %c0_105 = arith.constant 0 : index
    %c0_106 = arith.constant 0 : index
    %122 = vector.load %arg3[%c1_104, %c0_105, %c0_106] : memref<9x128x128xbf16, #tpu.memory_space<vmem>>, vector<1x128x128xbf16>
    %123 = vector.shape_cast %122 : vector<1x128x128xbf16> to vector<128x128xbf16>
    %cst_107 = arith.constant dense<0.000000e+00> : vector<256x128xf32>
    %124 = tpu.matmul %121, %123, %cst_107 {dimension_numbers = #tpu.dot_dimension_numbers<[1], [0], [0], [1], [0, 0, 1, 1], [], []>} : vector<256x128xbf16>, vector<128x128xbf16>, vector<256x128xf32> -> vector<256x128xf32>
    %125 = arith.addf %118, %124 : vector<256x128xf32>
    %126 = vector.extract_strided_slice %119 {offsets = [1, 0, 0], sizes = [16, 16, 128], strides = [1, 1, 1]} : vector<18x16x128xbf16> to vector<16x16x128xbf16>
    %127 = vector.shape_cast %126 : vector<16x16x128xbf16> to vector<256x128xbf16>
    %c4_108 = arith.constant 4 : index
    %c0_109 = arith.constant 0 : index
    %c0_110 = arith.constant 0 : index
    %128 = vector.load %arg3[%c4_108, %c0_109, %c0_110] : memref<9x128x128xbf16, #tpu.memory_space<vmem>>, vector<1x128x128xbf16>
    %129 = vector.shape_cast %128 : vector<1x128x128xbf16> to vector<128x128xbf16>
    %cst_111 = arith.constant dense<0.000000e+00> : vector<256x128xf32>
    %130 = tpu.matmul %127, %129, %cst_111 {dimension_numbers = #tpu.dot_dimension_numbers<[1], [0], [0], [1], [0, 0, 1, 1], [], []>} : vector<256x128xbf16>, vector<128x128xbf16>, vector<256x128xf32> -> vector<256x128xf32>
    %131 = arith.addf %125, %130 : vector<256x128xf32>
    %132 = vector.extract_strided_slice %119 {offsets = [2, 0, 0], sizes = [16, 16, 128], strides = [1, 1, 1]} : vector<18x16x128xbf16> to vector<16x16x128xbf16>
    %133 = vector.shape_cast %132 : vector<16x16x128xbf16> to vector<256x128xbf16>
    %c7_112 = arith.constant 7 : index
    %c0_113 = arith.constant 0 : index
    %c0_114 = arith.constant 0 : index
    %134 = vector.load %arg3[%c7_112, %c0_113, %c0_114] : memref<9x128x128xbf16, #tpu.memory_space<vmem>>, vector<1x128x128xbf16>
    %135 = vector.shape_cast %134 : vector<1x128x128xbf16> to vector<128x128xbf16>
    %cst_115 = arith.constant dense<0.000000e+00> : vector<256x128xf32>
    %136 = tpu.matmul %133, %135, %cst_115 {dimension_numbers = #tpu.dot_dimension_numbers<[1], [0], [0], [1], [0, 0, 1, 1], [], []>} : vector<256x128xbf16>, vector<128x128xbf16>, vector<256x128xf32> -> vector<256x128xf32>
    %137 = arith.addf %131, %136 : vector<256x128xf32>
    %c0_116 = arith.constant 0 : index
    %c2_117 = arith.constant 2 : index
    %c0_118 = arith.constant 0 : index
    %138 = vector.load %arg5[%c0_116, %c2_117, %c0_118] : memref<18x24x128xbf16, #tpu.memory_space<vmem>>, vector<18x16x128xbf16>
    %139 = vector.extract_strided_slice %138 {offsets = [0, 0, 0], sizes = [16, 16, 128], strides = [1, 1, 1]} : vector<18x16x128xbf16> to vector<16x16x128xbf16>
    %140 = vector.shape_cast %139 : vector<16x16x128xbf16> to vector<256x128xbf16>
    %c2_119 = arith.constant 2 : index
    %c0_120 = arith.constant 0 : index
    %c0_121 = arith.constant 0 : index
    %141 = vector.load %arg3[%c2_119, %c0_120, %c0_121] : memref<9x128x128xbf16, #tpu.memory_space<vmem>>, vector<1x128x128xbf16>
    %142 = vector.shape_cast %141 : vector<1x128x128xbf16> to vector<128x128xbf16>
    %cst_122 = arith.constant dense<0.000000e+00> : vector<256x128xf32>
    %143 = tpu.matmul %140, %142, %cst_122 {dimension_numbers = #tpu.dot_dimension_numbers<[1], [0], [0], [1], [0, 0, 1, 1], [], []>} : vector<256x128xbf16>, vector<128x128xbf16>, vector<256x128xf32> -> vector<256x128xf32>
    %144 = arith.addf %137, %143 : vector<256x128xf32>
    %145 = vector.extract_strided_slice %138 {offsets = [1, 0, 0], sizes = [16, 16, 128], strides = [1, 1, 1]} : vector<18x16x128xbf16> to vector<16x16x128xbf16>
    %146 = vector.shape_cast %145 : vector<16x16x128xbf16> to vector<256x128xbf16>
    %c5_123 = arith.constant 5 : index
    %c0_124 = arith.constant 0 : index
    %c0_125 = arith.constant 0 : index
    %147 = vector.load %arg3[%c5_123, %c0_124, %c0_125] : memref<9x128x128xbf16, #tpu.memory_space<vmem>>, vector<1x128x128xbf16>
    %148 = vector.shape_cast %147 : vector<1x128x128xbf16> to vector<128x128xbf16>
    %cst_126 = arith.constant dense<0.000000e+00> : vector<256x128xf32>
    %149 = tpu.matmul %146, %148, %cst_126 {dimension_numbers = #tpu.dot_dimension_numbers<[1], [0], [0], [1], [0, 0, 1, 1], [], []>} : vector<256x128xbf16>, vector<128x128xbf16>, vector<256x128xf32> -> vector<256x128xf32>
    %150 = arith.addf %144, %149 : vector<256x128xf32>
    %151 = vector.extract_strided_slice %138 {offsets = [2, 0, 0], sizes = [16, 16, 128], strides = [1, 1, 1]} : vector<18x16x128xbf16> to vector<16x16x128xbf16>
    %152 = vector.shape_cast %151 : vector<16x16x128xbf16> to vector<256x128xbf16>
    %c8_127 = arith.constant 8 : index
    %c0_128 = arith.constant 0 : index
    %c0_129 = arith.constant 0 : index
    %153 = vector.load %arg3[%c8_127, %c0_128, %c0_129] : memref<9x128x128xbf16, #tpu.memory_space<vmem>>, vector<1x128x128xbf16>
    %154 = vector.shape_cast %153 : vector<1x128x128xbf16> to vector<128x128xbf16>
    %cst_130 = arith.constant dense<0.000000e+00> : vector<256x128xf32>
    %155 = tpu.matmul %152, %154, %cst_130 {dimension_numbers = #tpu.dot_dimension_numbers<[1], [0], [0], [1], [0, 0, 1, 1], [], []>} : vector<256x128xbf16>, vector<128x128xbf16>, vector<256x128xf32> -> vector<256x128xf32>
    %156 = arith.addf %150, %155 : vector<256x128xf32>
    %cst_131 = arith.constant dense<0.000000e+00> : vector<128xf32>
    %157 = vector.multi_reduction <add>, %156, %cst_131 [0] : vector<256x128xf32> to vector<128xf32>
    %158 = vector.shape_cast %157 : vector<128xf32> to vector<1x128xf32>
    %cst_132 = arith.constant 3.906250e-03 : f32
    %159 = vector.broadcast %cst_132 : f32 to vector<1x128xf32>
    %160 = arith.mulf %158, %159 : vector<1x128xf32>
    %161 = arith.mulf %156, %156 : vector<256x128xf32>
    %cst_133 = arith.constant dense<0.000000e+00> : vector<128xf32>
    %162 = vector.multi_reduction <add>, %161, %cst_133 [0] : vector<256x128xf32> to vector<128xf32>
    %163 = vector.shape_cast %162 : vector<128xf32> to vector<1x128xf32>
    %cst_134 = arith.constant 3.906250e-03 : f32
    %164 = vector.broadcast %cst_134 : f32 to vector<1x128xf32>
    %165 = arith.mulf %163, %164 : vector<1x128xf32>
    %166 = arith.mulf %160, %160 : vector<1x128xf32>
    %167 = arith.subf %165, %166 : vector<1x128xf32>
    %cst_135 = arith.constant 0.000000e+00 : f32
    %168 = vector.broadcast %cst_135 : f32 to vector<1x128xf32>
    %169 = arith.maximumf %167, %168 : vector<1x128xf32>
    %170 = vector.broadcast %160 : vector<1x128xf32> to vector<256x128xf32>
    %171 = arith.subf %156, %170 : vector<256x128xf32>
    %cst_136 = arith.constant 9.99999974E-6 : f32
    %172 = vector.broadcast %cst_136 : f32 to vector<1x128xf32>
    %173 = arith.addf %169, %172 : vector<1x128xf32>
    %174 = math.rsqrt %173 : vector<1x128xf32>
    %175 = vector.broadcast %174 : vector<1x128xf32> to vector<256x128xf32>
    %176 = arith.mulf %171, %175 : vector<256x128xf32>
    %177 = vector.shape_cast %176 : vector<256x128xf32> to vector<16x16x128xf32>
    %c0_137 = arith.constant 0 : index
    %c0_138 = arith.constant 0 : index
    %c0_139 = arith.constant 0 : index
    %c0_140 = arith.constant 0 : index
    %178 = vector.load %arg1[%c0_137, %c0_138, %c0_139, %c0_140] : memref<1x16x16x128xf32, #tpu.memory_space<vmem>>, vector<1x16x16x128xf32>
    %179 = vector.shape_cast %178 : vector<1x16x16x128xf32> to vector<16x16x128xf32>
    %180 = arith.addf %179, %177 : vector<16x16x128xf32>
    %c0_141 = arith.constant 0 : index
    %c0_142 = arith.constant 0 : index
    %c0_143 = arith.constant 0 : index
    %c0_144 = arith.constant 0 : index
    %181 = vector.load %arg4[%c0_141, %c0_142, %c0_143, %c0_144] : memref<1x16x16x128xf32, #tpu.memory_space<vmem>>, vector<1x16x16x128xf32>
    %182 = vector.shape_cast %181 : vector<1x16x16x128xf32> to vector<16x16x128xf32>
    %183 = vector.shape_cast %180 : vector<16x16x128xf32> to vector<1x16x16x128xf32>
    tpu.vector_store %arg4[%c0_141, %c0_142, %c0_143, %c0_144], %183 {strides = array<i32>} : memref<1x16x16x128xf32, #tpu.memory_space<vmem>>, vector<1x16x16x128xf32>,
    return
  }
  func.func @transform_0(%arg0: i32) -> (i32, i32, i32, i32) {
    %c0_i32 = arith.constant 0 : i32
    %c0_i32_0 = arith.constant 0 : i32
    %c0_i32_1 = arith.constant 0 : i32
    %c0_i32_2 = arith.constant 0 : i32
    return %arg0, %c0_i32, %c0_i32_0, %c0_i32_1 : i32, i32, i32, i32
  }
  func.func @transform_1(%arg0: i32) -> (i32, i32, i32) {
    %c0_i32 = arith.constant 0 : i32
    %c0_i32_0 = arith.constant 0 : i32
    %c0_i32_1 = arith.constant 0 : i32
    %c0_i32_2 = arith.constant 0 : i32
    return %c0_i32, %c0_i32_0, %c0_i32_1 : i32, i32, i32
  }
  func.func @transform_2(%arg0: i32) -> (i32, i32, i32) {
    %c0_i32 = arith.constant 0 : i32
    %c0_i32_0 = arith.constant 0 : i32
    %c0_i32_1 = arith.constant 0 : i32
    %c0_i32_2 = arith.constant 0 : i32
    return %c0_i32, %c0_i32_0, %c0_i32_1 : i32, i32, i32
  }
  func.func @transform_3(%arg0: i32) -> (i32, i32, i32, i32) {
    %c0_i32 = arith.constant 0 : i32
    %c0_i32_0 = arith.constant 0 : i32
    %c0_i32_1 = arith.constant 0 : i32
    %c0_i32_2 = arith.constant 0 : i32
    return %arg0, %c0_i32, %c0_i32_0, %c0_i32_1 : i32, i32, i32, i32
  }
}

</mosaic_0001>

<llo_original>
// kernel: residual_block.1
$region0: #{residual_block.1}
  #allocation0 [shape = 'u32[]', space=smem, size = 0x4, offset = 0x4, fixed_abs, tag = 'smem constant byte address 0x4 - core index']
  #allocation1 [shape = 'u32[144,128]{1,0:T(1,128)}', space=vmem, size = 0x12000, scoped, tag = 'internal scratch']
  #allocation2 [shape = 'bf16[18,24,128]{2,1,0:T(8,128)(2,1)}', space=vmem, size = 0x1b000, scoped, tag = 'scratch operand']
  %s0 = inlined_call_operand.vmem [shape: f32[2,16,16,128], index: 0, kind: input, shape index: {}]
  %s1 = inlined_call_operand.vmem [shape: bf16[9,128,128], index: 1, kind: input, shape index: {}]
  %s2 = inlined_call_operand.vmem [shape: bf16[9,128,128], index: 2, kind: input, shape index: {}]
  %s3 = inlined_call_operand.vmem [shape: f32[2,16,16,128], index: 3, kind: output, shape index: {}]
  %s4 = sld [smem:[#allocation0]]
  $region45: #{residual_block.1} parent=0
    _
  %s6 = ssub.s32 1, %s4
  %s7 = scalar_select 0, %s6, %s4
  loop: start=0, step=1, limit=4
  $region2: #{residual_block.1} parent=0 // loop_pre_header
    _
  $region3: #{residual_block.1} parent=0 // loop_header
    %s9 = sphi 0, %s13
    %p10 = scmp.ge.s32.totalorder %s9, 4
    %s19 = sphi 0, %s21
    %s22 = sphi 0, %s19
    %s23 = sphi 0, %s22
    %s39 = sphi 0, %s23
    %s43 = sphi 0, %s43
    %s45 = sphi 0, %s43
    %s46 = sphi 0, %s45
    %s60 = sphi 0, %s46
    %s64 = sphi 0, %s64
    %s66 = sphi 0, %s64
    %s67 = sphi 0, %s66
    %s81 = sphi 0, %s67
    %s87 = sphi 0, %s89
    %s90 = sphi 0, %s87
    %s91 = sphi 0, %s90
    %s107 = sphi 0, %s91
  $region4: #{residual_block.1} parent=0 // loop_header_branch
    %12 = sbr.rel (%p10) target = $region8
  $region5: #{residual_block.1} parent=0 // loop_body
    %s14 = ssub.s32 %s9, 1
    %s15 = ssub.s32 %s9, 2
    %s16 = sadd.s32 %s9, 1
    %s17 = ssub.s32 %s9, %s16
    %p18 = scmp.eq.s32.totalorder %s17, 0
    %s20 = sadd.s32 %s19, 1
    %s21 = scalar_select %p18, %s19, %s20
    %p24 = pneg %p18
    %p25 = scmp.eq.s32.totalorder %s9, 1
    %p26 = por %p24, %p25
    %p27 = scmp.ne.s32.totalorder %s19, %s22
    %p28 = scmp.eq.s32.totalorder %s9, 0
    %p29 = por %p27, %p28
    %p30 = scmp.ne.s32.totalorder %s19, %s22
    %p31 = scmp.eq.s32.totalorder %s14, 1
    %p32 = por %p30, %p31
    %p33 = scmp.ne.s32.totalorder %s22, %s23
    %p34 = scmp.eq.s32.totalorder %s14, 0
    %p35 = por %p33, %p34
    %p36 = scmp.ne.s32.totalorder %s22, %s23
    %p37 = scmp.eq.s32.totalorder %s15, 1
    %p38 = por %p36, %p37
    %p40 = scmp.ne.s32.totalorder %s23, %s39
    %p41 = scmp.eq.s32.totalorder %s15, 0
    %p42 = por %p40, %p41
    %s44 = sadd.s32 %s43, 1
    %p47 = scmp.eq.s32.totalorder %s9, 1
    %p48 = scmp.ne.s32.totalorder %s43, %s45
    %p49 = scmp.eq.s32.totalorder %s9, 0
    %p50 = por %p48, %p49
    %p51 = scmp.ne.s32.totalorder %s43, %s45
    %p52 = scmp.eq.s32.totalorder %s14, 1
    %p53 = por %p51, %p52
    %p54 = scmp.ne.s32.totalorder %s45, %s46
    %p55 = scmp.eq.s32.totalorder %s14, 0
    %p56 = por %p54, %p55
    %p57 = scmp.ne.s32.totalorder %s45, %s46
    %p58 = scmp.eq.s32.totalorder %s15, 1
    %p59 = por %p57, %p58
    %p61 = scmp.ne.s32.totalorder %s46, %s60
    %p62 = scmp.eq.s32.totalorder %s15, 0
    %p63 = por %p61, %p62
    %s65 = sadd.s32 %s64, 1
    %p68 = scmp.eq.s32.totalorder %s9, 1
    %p69 = scmp.ne.s32.totalorder %s64, %s66
    %p70 = scmp.eq.s32.totalorder %s9, 0
    %p71 = por %p69, %p70
    %p72 = scmp.ne.s32.totalorder %s64, %s66
    %p73 = scmp.eq.s32.totalorder %s14, 1
    %p74 = por %p72, %p73
    %p75 = scmp.ne.s32.totalorder %s66, %s67
    %p76 = scmp.eq.s32.totalorder %s14, 0
    %p77 = por %p75, %p76
    %p78 = scmp.ne.s32.totalorder %s66, %s67
    %p79 = scmp.eq.s32.totalorder %s15, 1
    %p80 = por %p78, %p79
    %p82 = scmp.ne.s32.totalorder %s67, %s81
    %p83 = scmp.eq.s32.totalorder %s15, 0
    %p84 = por %p82, %p83
    %s85 = ssub.s32 %s9, %s16
    %p86 = scmp.eq.s32.totalorder %s85, 0
    %s88 = sadd.s32 %s87, 1
    %s89 = scalar_select %p86, %s87, %s88
    %p92 = pneg %p86
    %p93 = scmp.eq.s32.totalorder %s9, 1
    %p94 = por %p92, %p93
    %p95 = scmp.ne.s32.totalorder %s87, %s90
    %p96 = scmp.eq.s32.totalorder %s9, 0
    %p97 = por %p95, %p96
    %p98 = scmp.ne.s32.totalorder %s87, %s90
    %p99 = scmp.eq.s32.totalorder %s14, 1
    %p100 = por %p98, %p99
    %p101 = scmp.ne.s32.totalorder %s90, %s91
    %p102 = scmp.eq.s32.totalorder %s14, 0
    %p103 = por %p101, %p102
    %p104 = scmp.ne.s32.totalorder %s90, %s91
    %p105 = scmp.eq.s32.totalorder %s15, 1
    %p106 = por %p104, %p105
    %p108 = scmp.ne.s32.totalorder %s91, %s107
    %p109 = scmp.eq.s32.totalorder %s15, 0
    %p110 = por %p108, %p109
    %p111 = scmp.le.s32.totalorder 1, %s9
    %p112 = scmp.lt.s32.totalorder %s9, 3
    %p113 = pnand %p111, %p112
    %p114 = pneg %p113
    // Predicated region
    $region9: #{residual_block.1} parent=5 // pred_check
      _
    $region10: #{residual_block.1} parent=5 // pred_check_branch
      %116 = sbr.rel (%p113) target = $region12
    $region11: #{residual_block.1} parent=5 // pred_region
      %s117 = ssub.s32 %s9, 1
      // Predicated region
      $region13: #{residual_block.1} parent=11 // pred_check
        %p118 = pneg %p56
      $region14: #{residual_block.1} parent=11 // pred_check_branch
        %120 = sbr.rel (%p118) target = $region16
      $region15: #{residual_block.1} parent=11 // pred_region
        _
      $region16: #{residual_block.1} parent=11 // pred_fallthru
        _
      // Predicated region
      $region17: #{residual_block.1} parent=11 // pred_check
        %p121 = pneg %p77
      $region18: #{residual_block.1} parent=11 // pred_check_branch
        %123 = sbr.rel (%p121) target = $region20
      $region19: #{residual_block.1} parent=11 // pred_region
        _
      $region20: #{residual_block.1} parent=11 // pred_fallthru
        _
    $region12: #{residual_block.1} parent=5 // pred_fallthru
      _
    %p124 = scmp.lt.s32.totalorder %s9, 2
    // Predicated region
    $region21: #{residual_block.1} parent=5 // pred_check
      %p125 = pneg %p124
    $region22: #{residual_block.1} parent=5 // pred_check_branch
      %127 = sbr.rel (%p125) target = $region24
    $region23: #{residual_block.1} parent=5 // pred_region
      // Predicated region
      $region25: #{residual_block.1} parent=23 // pred_check
        %p128 = pneg %p29
      $region26: #{residual_block.1} parent=23 // pred_check_branch
        %130 = sbr.rel (%p128) target = $region28
      $region27: #{residual_block.1} parent=23 // pred_region
        %p131 = scmp.lt.s32.totalorder %s9, 1
        %s132 = scalar_select %p131, %s9, 1
        %s133 = smul.addr %s132, 32
        %s134 = smul.addr %s133, 8
        %s135 = scalar_lea.vmem %s0, %s134
      $region28: #{residual_block.1} parent=23 // pred_fallthru
        _
    $region24: #{residual_block.1} parent=5 // pred_fallthru
      _
    %p136 = scmp.le.s32.totalorder 1, %s9
    %p137 = scmp.lt.s32.totalorder %s9, 3
    %p138 = pnand %p136, %p137
    %p139 = pneg %p138
    // Predicated region
    $region29: #{residual_block.1} parent=5 // pred_check
      _
    $region30: #{residual_block.1} parent=5 // pred_check_branch
      %141 = sbr.rel (%p138) target = $region32
    $region31: #{residual_block.1} parent=5 // pred_region
      %s142 = ssub.s32 %s9, 1
      %p143 = scmp.lt.s32.totalorder %s14, 1
      %s144 = scalar_select %p143, %s14, 1
      %s145 = smul.addr %s144, 32
      %s146 = smul.addr %s145, 8
      %s147 = scalar_lea.vmem %s0, %s146
      %p148 = pneg %p35
      %p149 = pneg %p32
      %p150 = pneg %p56
      %p151 = pneg %p53
      %p152 = pneg %p77
      %p153 = pneg %p74
      %p154 = pneg %p103
      %p155 = pneg %p100
      %p156 = scmp.lt.s32.totalorder %s14, 1
      %s157 = scalar_select %p156, %s14, 1
      %s158 = smul.addr %s157, 32
      %s159 = smul.addr %s158, 8
      %s160 = scalar_lea.vmem %s3, %s159
      %p161 = scmp.lt.s32.totalorder %s14, 1
      %s162 = scalar_select %p161, %s14, 1
      %s163 = smul.addr %s162, 32
      %s164 = smul.addr %s163, 8
      %s165 = scalar_lea.vmem %s0, %s164
      %p166 = scmp.lt.s32.totalorder %s14, 1
      %s167 = scalar_select %p166, %s14, 1
      %s168 = smul.addr %s167, 32
      %s169 = smul.addr %s168, 8
      %s170 = scalar_lea.vmem %s3, %s169
      %v172 = vld [vmem:[%s165] sm:$0xff]
      %v173 = vld [vmem:[%s165 + $0x8] sm:$0xff]
      %v174 = vld [vmem:[%s165 + $0x10] sm:$0xff]
      %v175 = vld [vmem:[%s165 + $0x18] sm:$0xff]
      %v176 = vld [vmem:[%s165 + $0x20] sm:$0xff]
      %v177 = vld [vmem:[%s165 + $0x28] sm:$0xff]
      %v178 = vld [vmem:[%s165 + $0x30] sm:$0xff]
      %v179 = vld [vmem:[%s165 + $0x38] sm:$0xff]
      %v180 = vld [vmem:[%s165 + $0x40] sm:$0xff]
      %v181 = vld [vmem:[%s165 + $0x48] sm:$0xff]
      %v182 = vld [vmem:[%s165 + $0x50] sm:$0xff]
      %v183 = vld [vmem:[%s165 + $0x58] sm:$0xff]
      %v184 = vld [vmem:[%s165 + $0x60] sm:$0xff]
      %v185 = vld [vmem:[%s165 + $0x68] sm:$0xff]
      %v186 = vld [vmem:[%s165 + $0x70] sm:$0xff]
      %v187 = vld [vmem:[%s165 + $0x78] sm:$0xff]
      %v188 = vld [vmem:[%s165 + $0x80] sm:$0xff]
      %v189 = vld [vmem:[%s165 + $0x88] sm:$0xff]
      %v190 = vld [vmem:[%s165 + $0x90] sm:$0xff]
      %v191 = vld [vmem:[%s165 + $0x98] sm:$0xff]
      %v192 = vld [vmem:[%s165 + $0xa0] sm:$0xff]
      %v193 = vld [vmem:[%s165 + $0xa8] sm:$0xff]
      %v194 = vld [vmem:[%s165 + $0xb0] sm:$0xff]
      %v195 = vld [vmem:[%s165 + $0xb8] sm:$0xff]
      %v196 = vld [vmem:[%s165 + $0xc0] sm:$0xff]
      %v197 = vld [vmem:[%s165 + $0xc8] sm:$0xff]
      %v198 = vld [vmem:[%s165 + $0xd0] sm:$0xff]
      %v199 = vld [vmem:[%s165 + $0xd8] sm:$0xff]
      %v200 = vld [vmem:[%s165 + $0xe0] sm:$0xff]
      %v201 = vld [vmem:[%s165 + $0xe8] sm:$0xff]
      %v202 = vld [vmem:[%s165 + $0xf0] sm:$0xff]
      %v203 = vld [vmem:[%s165 + $0xf8] sm:$0xff]
      %v204 = vpack.c.bf16 %v173, %v172
      %v205 = vpack.c.bf16 %v175, %v174
      %v206 = vpack.c.bf16 %v177, %v176
      %v207 = vpack.c.bf16 %v179, %v178
      %v208 = vpack.c.bf16 %v181, %v180
      %v209 = vpack.c.bf16 %v183, %v182
      %v210 = vpack.c.bf16 %v185, %v184
      %v211 = vpack.c.bf16 %v187, %v186
      %v212 = vpack.c.bf16 %v189, %v188
      %v213 = vpack.c.bf16 %v191, %v190
      %v214 = vpack.c.bf16 %v193, %v192
      %v215 = vpack.c.bf16 %v195, %v194
      %v216 = vpack.c.bf16 %v197, %v196
      %v217 = vpack.c.bf16 %v199, %v198
      %v218 = vpack.c.bf16 %v201, %v200
      %v219 = vpack.c.bf16 %v203, %v202
      %v236 = vunpack.c.l.b16 %v204
      %v237 = vunpack.c.h.b16 %v204
      %v238 = vunpack.c.l.b16 %v205
      %v239 = vunpack.c.h.b16 %v205
      %v240 = vunpack.c.l.b16 %v206
      %v241 = vunpack.c.h.b16 %v206
      %v242 = vunpack.c.l.b16 %v207
      %v243 = vunpack.c.h.b16 %v207
      %v244 = vunpack.c.l.b16 %v208
      %v245 = vunpack.c.h.b16 %v208
      %v246 = vunpack.c.l.b16 %v209
      %v247 = vunpack.c.h.b16 %v209
      %v248 = vunpack.c.l.b16 %v210
      %v249 = vunpack.c.h.b16 %v210
      %v250 = vunpack.c.l.b16 %v211
      %v251 = vunpack.c.h.b16 %v211
      %v252 = vunpack.c.l.b16 %v212
      %v253 = vunpack.c.h.b16 %v212
      %v254 = vunpack.c.l.b16 %v213
      %v255 = vunpack.c.h.b16 %v213
      %v256 = vunpack.c.l.b16 %v214
      %v257 = vunpack.c.h.b16 %v214
      %v258 = vunpack.c.l.b16 %v215
      %v259 = vunpack.c.h.b16 %v215
      %v260 = vunpack.c.l.b16 %v216
      %v261 = vunpack.c.h.b16 %v216
      %v262 = vunpack.c.l.b16 %v217
      %v263 = vunpack.c.h.b16 %v217
      %v264 = vunpack.c.l.b16 %v218
      %v265 = vunpack.c.h.b16 %v218
      %v266 = vunpack.c.l.b16 %v219
      %v267 = vunpack.c.h.b16 %v219
      %v268 = vpack.c.b16 %v236, %v236
      %v269 = vpack.c.b16 %v237, %v237
      %v270 = vpack.c.b16 %v238, %v238
      %v271 = vpack.c.b16 %v239, %v239
      %v272 = vpack.c.b16 %v240, %v240
      %v273 = vpack.c.b16 %v241, %v241
      %v274 = vpack.c.b16 %v242, %v242
      %v275 = vpack.c.b16 %v243, %v243
      %v276 = vpack.c.b16 %v244, %v244
      %v277 = vpack.c.b16 %v245, %v245
      %v278 = vpack.c.b16 %v246, %v246
      %v279 = vpack.c.b16 %v247, %v247
      %v280 = vpack.c.b16 %v248, %v248
      %v281 = vpack.c.b16 %v249, %v249
      %v282 = vpack.c.b16 %v250, %v250
      %v283 = vpack.c.b16 %v251, %v251
      %v284 = vpack.c.b16 %v252, %v252
      %v285 = vpack.c.b16 %v253, %v253
      %v286 = vpack.c.b16 %v254, %v254
      %v287 = vpack.c.b16 %v255, %v255
      %v288 = vpack.c.b16 %v256, %v256
      %v289 = vpack.c.b16 %v257, %v257
      %v290 = vpack.c.b16 %v258, %v258
      %v291 = vpack.c.b16 %v259, %v259
      %v292 = vpack.c.b16 %v260, %v260
      %v293 = vpack.c.b16 %v261, %v261
      %v294 = vpack.c.b16 %v262, %v262
      %v295 = vpack.c.b16 %v263, %v263
      %v296 = vpack.c.b16 %v264, %v264
      %v297 = vpack.c.b16 %v265, %v265
      %v298 = vpack.c.b16 %v266, %v266
      %v299 = vpack.c.b16 %v267, %v267
      %vm300 = vsmask.f32 256
      %vm301 = vsmask.f32 4368
      %vm302 = vmor %vm300, %vm301
      %v304 = vshrl.u32 %v268, 16
      %v306 = vrot.slane %v304, 7
      %v307 = vshll.u32 %v268, 16
      %v309 = vor.u32 %v306, %v307
      %v310 = vrot.slane %v306, 4
      %v312 = vshrl.u32 %v269, 16
      %v314 = vrot.slane %v312, 7
      %v315 = vshll.u32 %v269, 16
      %v317 = vor.u32 %v314, %v315
      %v318 = vsel %vm302, %v310, %v317
      %v319 = vrot.slane %v314, 4
      %v321 = vshrl.u32 %v270, 16
      %v323 = vrot.slane %v321, 7
      %v324 = vshll.u32 %v270, 16
      %v326 = vor.u32 %v323, %v324
      %v327 = vrot.slane %v323, 4
      %v329 = vshrl.u32 %v271, 16
      %v331 = vrot.slane %v329, 7
      %v332 = vshll.u32 %v271, 16
      %v334 = vor.u32 %v331, %v332
      %v335 = vsel %vm302, %v327, %v334
      %v336 = vrot.slane %v331, 4
      %v338 = vshrl.u32 %v272, 16
      %v340 = vrot.slane %v338, 7
      %v341 = vshll.u32 %v272, 16
      %v343 = vor.u32 %v340, %v341
      %v344 = vrot.slane %v340, 4
      %v346 = vshrl.u32 %v273, 16
      %v348 = vrot.slane %v346, 7
      %v349 = vshll.u32 %v273, 16
      %v351 = vor.u32 %v348, %v349
      %v352 = vsel %vm302, %v344, %v351
      %v353 = vrot.slane %v348, 4
      %v355 = vshrl.u32 %v274, 16
      %v357 = vrot.slane %v355, 7
      %v358 = vshll.u32 %v274, 16
      %v360 = vor.u32 %v357, %v358
      %v361 = vrot.slane %v357, 4
      %v363 = vshrl.u32 %v275, 16
      %v365 = vrot.slane %v363, 7
      %v366 = vshll.u32 %v275, 16
      %v368 = vor.u32 %v365, %v366
      %v369 = vsel %vm302, %v361, %v368
      %v370 = vrot.slane %v365, 4
      %v372 = vshrl.u32 %v276, 16
      %v374 = vrot.slane %v372, 7
      %v375 = vshll.u32 %v276, 16
      %v377 = vor.u32 %v374, %v375
      %v378 = vrot.slane %v374, 4
      %v380 = vshrl.u32 %v277, 16
      %v382 = vrot.slane %v380, 7
      %v383 = vshll.u32 %v277, 16
      %v385 = vor.u32 %v382, %v383
      %v386 = vsel %vm302, %v378, %v385
      %v387 = vrot.slane %v382, 4
      %v389 = vshrl.u32 %v278, 16
      %v391 = vrot.slane %v389, 7
      %v392 = vshll.u32 %v278, 16
      %v394 = vor.u32 %v391, %v392
      %v395 = vrot.slane %v391, 4
      %v397 = vshrl.u32 %v279, 16
      %v399 = vrot.slane %v397, 7
      %v400 = vshll.u32 %v279, 16
      %v402 = vor.u32 %v399, %v400
      %v403 = vsel %vm302, %v395, %v402
      %v404 = vrot.slane %v399, 4
      %v406 = vshrl.u32 %v280, 16
      %v408 = vrot.slane %v406, 7
      %v409 = vshll.u32 %v280, 16
      %v411 = vor.u32 %v408, %v409
      %v412 = vrot.slane %v408, 4
      %v414 = vshrl.u32 %v281, 16
      %v416 = vrot.slane %v414, 7
      %v417 = vshll.u32 %v281, 16
      %v419 = vor.u32 %v416, %v417
      %v420 = vsel %vm302, %v412, %v419
      %v421 = vrot.slane %v416, 4
      %v423 = vshrl.u32 %v282, 16
      %v425 = vrot.slane %v423, 7
      %v426 = vshll.u32 %v282, 16
      %v428 = vor.u32 %v425, %v426
      %v429 = vrot.slane %v425, 4
      %v431 = vshrl.u32 %v283, 16
      %v433 = vrot.slane %v431, 7
      %v434 = vshll.u32 %v283, 16
      %v436 = vor.u32 %v433, %v434
      %v437 = vsel %vm302, %v429, %v436
      %v438 = vrot.slane %v433, 4
      %v440 = vshrl.u32 %v284, 16
      %v442 = vrot.slane %v440, 7
      %v443 = vshll.u32 %v284, 16
      %v445 = vor.u32 %v442, %v443
      %v446 = vrot.slane %v442, 4
      %v448 = vshrl.u32 %v285, 16
      %v450 = vrot.slane %v448, 7
      %v451 = vshll.u32 %v285, 16
      %v453 = vor.u32 %v450, %v451
      %v454 = vsel %vm302, %v446, %v453
      %v455 = vrot.slane %v450, 4
      %v457 = vshrl.u32 %v286, 16
      %v459 = vrot.slane %v457, 7
      %v460 = vshll.u32 %v286, 16
      %v462 = vor.u32 %v459, %v460
      %v463 = vrot.slane %v459, 4
      %v465 = vshrl.u32 %v287, 16
      %v467 = vrot.slane %v465, 7
      %v468 = vshll.u32 %v287, 16
      %v470 = vor.u32 %v467, %v468
      %v471 = vsel %vm302, %v463, %v470
      %v472 = vrot.slane %v467, 4
      %v474 = vshrl.u32 %v288, 16
      %v476 = vrot.slane %v474, 7
      %v477 = vshll.u32 %v288, 16
      %v479 = vor.u32 %v476, %v477
      %v480 = vrot.slane %v476, 4
      %v482 = vshrl.u32 %v289, 16
      %v484 = vrot.slane %v482, 7
      %v485 = vshll.u32 %v289, 16
      %v487 = vor.u32 %v484, %v485
      %v488 = vsel %vm302, %v480, %v487
      %v489 = vrot.slane %v484, 4
      %v491 = vshrl.u32 %v290, 16
      %v493 = vrot.slane %v491, 7
      %v494 = vshll.u32 %v290, 16
      %v496 = vor.u32 %v493, %v494
      %v497 = vrot.slane %v493, 4
      %v499 = vshrl.u32 %v291, 16
      %v501 = vrot.slane %v499, 7
      %v502 = vshll.u32 %v291, 16
      %v504 = vor.u32 %v501, %v502
      %v505 = vsel %vm302, %v497, %v504
      %v506 = vrot.slane %v501, 4
      %v508 = vshrl.u32 %v292, 16
      %v510 = vrot.slane %v508, 7
      %v511 = vshll.u32 %v292, 16
      %v513 = vor.u32 %v510, %v511
      %v514 = vrot.slane %v510, 4
      %v516 = vshrl.u32 %v293, 16
      %v518 = vrot.slane %v516, 7
      %v519 = vshll.u32 %v293, 16
      %v521 = vor.u32 %v518, %v519
      %v522 = vsel %vm302, %v514, %v521
      %v523 = vrot.slane %v518, 4
      %v525 = vshrl.u32 %v294, 16
      %v527 = vrot.slane %v525, 7
      %v528 = vshll.u32 %v294, 16
      %v530 = vor.u32 %v527, %v528
      %v531 = vrot.slane %v527, 4
      %v533 = vshrl.u32 %v295, 16
      %v535 = vrot.slane %v533, 7
      %v536 = vshll.u32 %v295, 16
      %v538 = vor.u32 %v535, %v536
      %v539 = vsel %vm302, %v531, %v538
      %v540 = vrot.slane %v535, 4
      %v542 = vshrl.u32 %v296, 16
      %v544 = vrot.slane %v542, 7
      %v545 = vshll.u32 %v296, 16
      %v547 = vor.u32 %v544, %v545
      %v548 = vrot.slane %v544, 4
      %v550 = vshrl.u32 %v297, 16
      %v552 = vrot.slane %v550, 7
      %v553 = vshll.u32 %v297, 16
      %v555 = vor.u32 %v552, %v553
      %v556 = vsel %vm302, %v548, %v555
      %v557 = vrot.slane %v552, 4
      %v559 = vshrl.u32 %v298, 16
      %v561 = vrot.slane %v559, 7
      %v562 = vshll.u32 %v298, 16
      %v564 = vor.u32 %v561, %v562
      %v565 = vrot.slane %v561, 4
      %v567 = vshrl.u32 %v299, 16
      %v569 = vrot.slane %v567, 7
      %v570 = vshll.u32 %v299, 16
      %v572 = vor.u32 %v569, %v570
      %v573 = vsel %vm302, %v565, %v572
      %v574 = vrot.slane %v569, 4
      %s623 = scalar_lea.vmem [#allocation2], 12
      %vm624 = vcmask 1043456
      %vm625 = vsmask.f32 7938
      %vm626 = vmand %vm624, %vm625
      %v627 = vld [vmem:[%s623] sm:$0xf]
      %v628 = vsel %vm626, %v309, %v627
      %629 = vst [vmem:[%s623] sm:$0xf] %v628
      %630 = vst [vmem:[%s623 + $0x4] sm:$0xf] %v318
      %vm631 = vcmask 1040384
      %vm632 = vmand %vm631, %vm300
      %v633 = vld [vmem:[%s623 + $0x8] sm:$0x1]
      %v634 = vsel %vm632, %v319, %v633
      %635 = vst [vmem:[%s623 + $0x8] sm:$0x1] %v634
      %v636 = vld [vmem:[%s623 + $0xc] sm:$0xf]
      %v637 = vsel %vm626, %v326, %v636
      %638 = vst [vmem:[%s623 + $0xc] sm:$0xf] %v637
      %639 = vst [vmem:[%s623 + $0x10] sm:$0xf] %v335
      %v640 = vld [vmem:[%s623 + $0x14] sm:$0x1]
      %v641 = vsel %vm632, %v336, %v640
      %642 = vst [vmem:[%s623 + $0x14] sm:$0x1] %v641
      %v643 = vld [vmem:[%s623 + $0x18] sm:$0xf]
      %v644 = vsel %vm626, %v343, %v643
      %645 = vst [vmem:[%s623 + $0x18] sm:$0xf] %v644
      %646 = vst [vmem:[%s623 + $0x1c] sm:$0xf] %v352
      %v647 = vld [vmem:[%s623 + $0x20] sm:$0x1]
      %v648 = vsel %vm632, %v353, %v647
      %649 = vst [vmem:[%s623 + $0x20] sm:$0x1] %v648
      %v650 = vld [vmem:[%s623 + $0x24] sm:$0xf]
      %v651 = vsel %vm626, %v360, %v650
      %652 = vst [vmem:[%s623 + $0x24] sm:$0xf] %v651
      %653 = vst [vmem:[%s623 + $0x28] sm:$0xf] %v369
      %v654 = vld [vmem:[%s623 + $0x2c] sm:$0x1]
      %v655 = vsel %vm632, %v370, %v654
      %656 = vst [vmem:[%s623 + $0x2c] sm:$0x1] %v655
      %v657 = vld [vmem:[%s623 + $0x30] sm:$0xf]
      %v658 = vsel %vm626, %v377, %v657
      %659 = vst [vmem:[%s623 + $0x30] sm:$0xf] %v658
      %660 = vst [vmem:[%s623 + $0x34] sm:$0xf] %v386
      %v661 = vld [vmem:[%s623 + $0x38] sm:$0x1]
      %v662 = vsel %vm632, %v387, %v661
      %663 = vst [vmem:[%s623 + $0x38] sm:$0x1] %v662
      %v664 = vld [vmem:[%s623 + $0x3c] sm:$0xf]
      %v665 = vsel %vm626, %v394, %v664
      %666 = vst [vmem:[%s623 + $0x3c] sm:$0xf] %v665
      %667 = vst [vmem:[%s623 + $0x40] sm:$0xf] %v403
      %v668 = vld [vmem:[%s623 + $0x44] sm:$0x1]
      %v669 = vsel %vm632, %v404, %v668
      %670 = vst [vmem:[%s623 + $0x44] sm:$0x1] %v669
      %v671 = vld [vmem:[%s623 + $0x48] sm:$0xf]
      %v672 = vsel %vm626, %v411, %v671
      %673 = vst [vmem:[%s623 + $0x48] sm:$0xf] %v672
      %674 = vst [vmem:[%s623 + $0x4c] sm:$0xf] %v420
      %v675 = vld [vmem:[%s623 + $0x50] sm:$0x1]
      %v676 = vsel %vm632, %v421, %v675
      %677 = vst [vmem:[%s623 + $0x50] sm:$0x1] %v676
      %v678 = vld [vmem:[%s623 + $0x54] sm:$0xf]
      %v679 = vsel %vm626, %v428, %v678
      %680 = vst [vmem:[%s623 + $0x54] sm:$0xf] %v679
      %681 = vst [vmem:[%s623 + $0x58] sm:$0xf] %v437
      %v682 = vld [vmem:[%s623 + $0x5c] sm:$0x1]
      %v683 = vsel %vm632, %v438, %v682
      %684 = vst [vmem:[%s623 + $0x5c] sm:$0x1] %v683
      %v685 = vld [vmem:[%s623 + $0x60] sm:$0xf]
      %v686 = vsel %vm626, %v445, %v685
      %687 = vst [vmem:[%s623 + $0x60] sm:$0xf] %v686
      %688 = vst [vmem:[%s623 + $0x64] sm:$0xf] %v454
      %v689 = vld [vmem:[%s623 + $0x68] sm:$0x1]
      %v690 = vsel %vm632, %v455, %v689
      %691 = vst [vmem:[%s623 + $0x68] sm:$0x1] %v690
      %v692 = vld [vmem:[%s623 + $0x6c] sm:$0xf]
      %v693 = vsel %vm626, %v462, %v692
      %694 = vst [vmem:[%s623 + $0x6c] sm:$0xf] %v693
      %695 = vst [vmem:[%s623 + $0x70] sm:$0xf] %v471
      %v696 = vld [vmem:[%s623 + $0x74] sm:$0x1]
      %v697 = vsel %vm632, %v472, %v696
      %698 = vst [vmem:[%s623 + $0x74] sm:$0x1] %v697
      %v699 = vld [vmem:[%s623 + $0x78] sm:$0xf]
      %v700 = vsel %vm626, %v479, %v699
      %701 = vst [vmem:[%s623 + $0x78] sm:$0xf] %v700
      %702 = vst [vmem:[%s623 + $0x7c] sm:$0xf] %v488
      %v703 = vld [vmem:[%s623 + $0x80] sm:$0x1]
      %v704 = vsel %vm632, %v489, %v703
      %705 = vst [vmem:[%s623 + $0x80] sm:$0x1] %v704
      %v706 = vld [vmem:[%s623 + $0x84] sm:$0xf]
      %v707 = vsel %vm626, %v496, %v706
      %708 = vst [vmem:[%s623 + $0x84] sm:$0xf] %v707
      %709 = vst [vmem:[%s623 + $0x88] sm:$0xf] %v505
      %v710 = vld [vmem:[%s623 + $0x8c] sm:$0x1]
      %v711 = vsel %vm632, %v506, %v710
      %712 = vst [vmem:[%s623 + $0x8c] sm:$0x1] %v711
      %v713 = vld [vmem:[%s623 + $0x90] sm:$0xf]
      %v714 = vsel %vm626, %v513, %v713
      %715 = vst [vmem:[%s623 + $0x90] sm:$0xf] %v714
      %716 = vst [vmem:[%s623 + $0x94] sm:$0xf] %v522
      %v717 = vld [vmem:[%s623 + $0x98] sm:$0x1]
      %v718 = vsel %vm632, %v523, %v717
      %719 = vst [vmem:[%s623 + $0x98] sm:$0x1] %v718
      %v720 = vld [vmem:[%s623 + $0x9c] sm:$0xf]
      %v721 = vsel %vm626, %v530, %v720
      %722 = vst [vmem:[%s623 + $0x9c] sm:$0xf] %v721
      %723 = vst [vmem:[%s623 + $0xa0] sm:$0xf] %v539
      %v724 = vld [vmem:[%s623 + $0xa4] sm:$0x1]
      %v725 = vsel %vm632, %v540, %v724
      %726 = vst [vmem:[%s623 + $0xa4] sm:$0x1] %v725
      %v727 = vld [vmem:[%s623 + $0xa8] sm:$0xf]
      %v728 = vsel %vm626, %v547, %v727
      %729 = vst [vmem:[%s623 + $0xa8] sm:$0xf] %v728
      %730 = vst [vmem:[%s623 + $0xac] sm:$0xf] %v556
      %v731 = vld [vmem:[%s623 + $0xb0] sm:$0x1]
      %v732 = vsel %vm632, %v557, %v731
      %733 = vst [vmem:[%s623 + $0xb0] sm:$0x1] %v732
      %v734 = vld [vmem:[%s623 + $0xb4] sm:$0xf]
      %v735 = vsel %vm626, %v564, %v734
      %736 = vst [vmem:[%s623 + $0xb4] sm:$0xf] %v735
      %737 = vst [vmem:[%s623 + $0xb8] sm:$0xf] %v573
      %v738 = vld [vmem:[%s623 + $0xbc] sm:$0x1]
      %v739 = vsel %vm632, %v574, %v738
      %740 = vst [vmem:[%s623 + $0xbc] sm:$0x1] %v739
      %v741 = vld [vmem:[#allocation2] sm:$0xf]
      %v742 = vsel %vm626, %v326, %v741
      %743 = vst [vmem:[#allocation2] sm:$0xf] %v742
      %744 = vst [vmem:[#allocation2 + $0x4] sm:$0xf] %v335
      %v745 = vld [vmem:[#allocation2 + $0x8] sm:$0x1]
      %v746 = vsel %vm632, %v336, %v745
      %747 = vst [vmem:[#allocation2 + $0x8] sm:$0x1] %v746
      %s748 = scalar_lea.vmem [#allocation2], 204
      %v749 = vld [vmem:[%s748] sm:$0xf]
      %v750 = vsel %vm626, %v547, %v749
      %751 = vst [vmem:[%s748] sm:$0xf] %v750
      %752 = vst [vmem:[%s748 + $0x4] sm:$0xf] %v556
      %v753 = vld [vmem:[%s748 + $0x8] sm:$0x1]
      %v754 = vsel %vm632, %v557, %v753
      %755 = vst [vmem:[%s748 + $0x8] sm:$0x1] %v754
      %v756 = vld [vmem:[#allocation2] sm:$0x2]
      %v757 = vld [vmem:[#allocation2 + $0xc] sm:$0x2]
      %v758 = vld [vmem:[#allocation2 + $0x18] sm:$0x2]
      %v759 = vld [vmem:[#allocation2 + $0x24] sm:$0x2]
      %v760 = vld [vmem:[#allocation2 + $0x30] sm:$0x2]
      %v761 = vld [vmem:[#allocation2 + $0x3c] sm:$0x2]
      %v762 = vld [vmem:[#allocation2 + $0x48] sm:$0x2]
      %v763 = vld [vmem:[#allocation2 + $0x54] sm:$0x2]
      %v764 = vld [vmem:[#allocation2 + $0x60] sm:$0x2]
      %v765 = vld [vmem:[#allocation2 + $0x6c] sm:$0x2]
      %v766 = vld [vmem:[#allocation2 + $0x78] sm:$0x2]
      %v767 = vld [vmem:[#allocation2 + $0x84] sm:$0x2]
      %v768 = vld [vmem:[#allocation2 + $0x90] sm:$0x2]
      %v769 = vld [vmem:[#allocation2 + $0x9c] sm:$0x2]
      %v770 = vld [vmem:[#allocation2 + $0xa8] sm:$0x2]
      %v771 = vld [vmem:[#allocation2 + $0xb4] sm:$0x2]
      %v772 = vld [vmem:[#allocation2 + $0xc0] sm:$0x2]
      %v773 = vld [vmem:[#allocation2 + $0xcc] sm:$0x2]
      %v792 = vrot.slane %v756, 5
      %v793 = vrot.slane %v792, 4
      %v794 = vrot.slane %v757, 5
      %v795 = vrot.slane %v794, 4
      %v796 = vrot.slane %v758, 5
      %v797 = vrot.slane %v796, 4
      %v798 = vrot.slane %v759, 5
      %v799 = vrot.slane %v798, 4
      %v800 = vrot.slane %v760, 5
      %v801 = vrot.slane %v800, 4
      %v802 = vrot.slane %v761, 5
      %v803 = vrot.slane %v802, 4
      %v804 = vrot.slane %v762, 5
      %v805 = vrot.slane %v804, 4
      %v806 = vrot.slane %v763, 5
      %v807 = vrot.slane %v806, 4
      %v808 = vrot.slane %v764, 5
      %v809 = vrot.slane %v808, 4
      %v810 = vrot.slane %v765, 5
      %v811 = vrot.slane %v810, 4
      %v812 = vrot.slane %v766, 5
      %v813 = vrot.slane %v812, 4
      %v814 = vrot.slane %v767, 5
      %v815 = vrot.slane %v814, 4
      %v816 = vrot.slane %v768, 5
      %v817 = vrot.slane %v816, 4
      %v818 = vrot.slane %v769, 5
      %v819 = vrot.slane %v818, 4
      %v820 = vrot.slane %v770, 5
      %v821 = vrot.slane %v820, 4
      %v822 = vrot.slane %v771, 5
      %v823 = vrot.slane %v822, 4
      %v824 = vrot.slane %v772, 5
      %v825 = vrot.slane %v824, 4
      %v826 = vrot.slane %v773, 5
      %v827 = vrot.slane %v826, 4
      %v846 = vld [vmem:[#allocation2] sm:$0x1]
      %v847 = vsel %vm632, %v793, %v846
      %848 = vst [vmem:[#allocation2] sm:$0x1] %v847
      %v849 = vld [vmem:[#allocation2 + $0xc] sm:$0x1]
      %v850 = vsel %vm632, %v795, %v849
      %851 = vst [vmem:[#allocation2 + $0xc] sm:$0x1] %v850
      %v852 = vld [vmem:[#allocation2 + $0x18] sm:$0x1]
      %v853 = vsel %vm632, %v797, %v852
      %854 = vst [vmem:[#allocation2 + $0x18] sm:$0x1] %v853
      %v855 = vld [vmem:[#allocation2 + $0x24] sm:$0x1]
      %v856 = vsel %vm632, %v799, %v855
      %857 = vst [vmem:[#allocation2 + $0x24] sm:$0x1] %v856
      %v858 = vld [vmem:[#allocation2 + $0x30] sm:$0x1]
      %v859 = vsel %vm632, %v801, %v858
      %860 = vst [vmem:[#allocation2 + $0x30] sm:$0x1] %v859
      %v861 = vld [vmem:[#allocation2 + $0x3c] sm:$0x1]
      %v862 = vsel %vm632, %v803, %v861
      %863 = vst [vmem:[#allocation2 + $0x3c] sm:$0x1] %v862
      %v864 = vld [vmem:[#allocation2 + $0x48] sm:$0x1]
      %v865 = vsel %vm632, %v805, %v864
      %866 = vst [vmem:[#allocation2 + $0x48] sm:$0x1] %v865
      %v867 = vld [vmem:[#allocation2 + $0x54] sm:$0x1]
      %v868 = vsel %vm632, %v807, %v867
      %869 = vst [vmem:[#allocation2 + $0x54] sm:$0x1] %v868
      %v870 = vld [vmem:[#allocation2 + $0x60] sm:$0x1]
      %v871 = vsel %vm632, %v809, %v870
      %872 = vst [vmem:[#allocation2 + $0x60] sm:$0x1] %v871
      %v873 = vld [vmem:[#allocation2 + $0x6c] sm:$0x1]
      %v874 = vsel %vm632, %v811, %v873
      %875 = vst [vmem:[#allocation2 + $0x6c] sm:$0x1] %v874
      %v876 = vld [vmem:[#allocation2 + $0x78] sm:$0x1]
      %v877 = vsel %vm632, %v813, %v876
      %878 = vst [vmem:[#allocation2 + $0x78] sm:$0x1] %v877
      %v879 = vld [vmem:[#allocation2 + $0x84] sm:$0x1]
      %v880 = vsel %vm632, %v815, %v879
      %881 = vst [vmem:[#allocation2 + $0x84] sm:$0x1] %v880
      %v882 = vld [vmem:[#allocation2 + $0x90] sm:$0x1]
      %v883 = vsel %vm632, %v817, %v882
      %884 = vst [vmem:[#allocation2 + $0x90] sm:$0x1] %v883
      %v885 = vld [vmem:[#allocation2 + $0x9c] sm:$0x1]
      %v886 = vsel %vm632, %v819, %v885
      %887 = vst [vmem:[#allocation2 + $0x9c] sm:$0x1] %v886
      %v888 = vld [vmem:[#allocation2 + $0xa8] sm:$0x1]
      %v889 = vsel %vm632, %v821, %v888
      %890 = vst [vmem:[#allocation2 + $0xa8] sm:$0x1] %v889
      %v891 = vld [vmem:[#allocation2 + $0xb4] sm:$0x1]
      %v892 = vsel %vm632, %v823, %v891
      %893 = vst [vmem:[#allocation2 + $0xb4] sm:$0x1] %v892
      %v894 = vld [vmem:[#allocation2 + $0xc0] sm:$0x1]
      %v895 = vsel %vm632, %v825, %v894
      %896 = vst [vmem:[#allocation2 + $0xc0] sm:$0x1] %v895
      %v897 = vld [vmem:[#allocation2 + $0xcc] sm:$0x1]
      %v898 = vsel %vm632, %v827, %v897
      %899 = vst [vmem:[#allocation2 + $0xcc] sm:$0x1] %v898
      %v900 = vld [vmem:[#allocation2 + $0x4] sm:$0x8]
      %v901 = vld [vmem:[#allocation2 + $0x10] sm:$0x8]
      %v902 = vld [vmem:[#allocation2 + $0x1c] sm:$0x8]
      %v903 = vld [vmem:[#allocation2 + $0x28] sm:$0x8]
      %v904 = vld [vmem:[#allocation2 + $0x34] sm:$0x8]
      %v905 = vld [vmem:[#allocation2 + $0x40] sm:$0x8]
      %v906 = vld [vmem:[#allocation2 + $0x4c] sm:$0x8]
      %v907 = vld [vmem:[#allocation2 + $0x58] sm:$0x8]
      %v908 = vld [vmem:[#allocation2 + $0x64] sm:$0x8]
      %v909 = vld [vmem:[#allocation2 + $0x70] sm:$0x8]
      %v910 = vld [vmem:[#allocation2 + $0x7c] sm:$0x8]
      %v911 = vld [vmem:[#allocation2 + $0x88] sm:$0x8]
      %v912 = vld [vmem:[#allocation2 + $0x94] sm:$0x8]
      %v913 = vld [vmem:[#allocation2 + $0xa0] sm:$0x8]
      %v914 = vld [vmem:[#allocation2 + $0xac] sm:$0x8]
      %v915 = vld [vmem:[#allocation2 + $0xb8] sm:$0x8]
      %v916 = vld [vmem:[#allocation2 + $0xc4] sm:$0x8]
      %v917 = vld [vmem:[#allocation2 + $0xd0] sm:$0x8]
      %v936 = vrot.slane %v900, 7
      %v937 = vrot.slane %v936, 4
      %v938 = vrot.slane %v901, 7
      %v939 = vrot.slane %v938, 4
      %v940 = vrot.slane %v902, 7
      %v941 = vrot.slane %v940, 4
      %v942 = vrot.slane %v903, 7
      %v943 = vrot.slane %v942, 4
      %v944 = vrot.slane %v904, 7
      %v945 = vrot.slane %v944, 4
      %v946 = vrot.slane %v905, 7
      %v947 = vrot.slane %v946, 4
      %v948 = vrot.slane %v906, 7
      %v949 = vrot.slane %v948, 4
      %v950 = vrot.slane %v907, 7
      %v951 = vrot.slane %v950, 4
      %v952 = vrot.slane %v908, 7
      %v953 = vrot.slane %v952, 4
      %v954 = vrot.slane %v909, 7
      %v955 = vrot.slane %v954, 4
      %v956 = vrot.slane %v910, 7
      %v957 = vrot.slane %v956, 4
      %v958 = vrot.slane %v911, 7
      %v959 = vrot.slane %v958, 4
      %v960 = vrot.slane %v912, 7
      %v961 = vrot.slane %v960, 4
      %v962 = vrot.slane %v913, 7
      %v963 = vrot.slane %v962, 4
      %v964 = vrot.slane %v914, 7
      %v965 = vrot.slane %v964, 4
      %v966 = vrot.slane %v915, 7
      %v967 = vrot.slane %v966, 4
      %v968 = vrot.slane %v916, 7
      %v969 = vrot.slane %v968, 4
      %v970 = vrot.slane %v917, 7
      %v971 = vrot.slane %v970, 4
      %vm990 = vmand %vm631, %vm625
      %v991 = vld [vmem:[#allocation2 + $0x8] sm:$0x1]
      %v992 = vsel %vm990, %v937, %v991
      %993 = vst [vmem:[#allocation2 + $0x8] sm:$0x1] %v992
      %v994 = vld [vmem:[#allocation2 + $0x14] sm:$0x1]
      %v995 = vsel %vm990, %v939, %v994
      %996 = vst [vmem:[#allocation2 + $0x14] sm:$0x1] %v995
      %v997 = vld [vmem:[#allocation2 + $0x20] sm:$0x1]
      %v998 = vsel %vm990, %v941, %v997
      %999 = vst [vmem:[#allocation2 + $0x20] sm:$0x1] %v998
      %v1000 = vld [vmem:[#allocation2 + $0x2c] sm:$0x1]
      %v1001 = vsel %vm990, %v943, %v1000
      %1002 = vst [vmem:[#allocation2 + $0x2c] sm:$0x1] %v1001
      %v1003 = vld [vmem:[#allocation2 + $0x38] sm:$0x1]
      %v1004 = vsel %vm990, %v945, %v1003
      %1005 = vst [vmem:[#allocation2 + $0x38] sm:$0x1] %v1004
      %v1006 = vld [vmem:[#allocation2 + $0x44] sm:$0x1]
      %v1007 = vsel %vm990, %v947, %v1006
      %1008 = vst [vmem:[#allocation2 + $0x44] sm:$0x1] %v1007
      %v1009 = vld [vmem:[#allocation2 + $0x50] sm:$0x1]
      %v1010 = vsel %vm990, %v949, %v1009
      %1011 = vst [vmem:[#allocation2 + $0x50] sm:$0x1] %v1010
      %v1012 = vld [vmem:[#allocation2 + $0x5c] sm:$0x1]
      %v1013 = vsel %vm990, %v951, %v1012
      %1014 = vst [vmem:[#allocation2 + $0x5c] sm:$0x1] %v1013
      %v1015 = vld [vmem:[#allocation2 + $0x68] sm:$0x1]
      %v1016 = vsel %vm990, %v953, %v1015
      %1017 = vst [vmem:[#allocation2 + $0x68] sm:$0x1] %v1016
      %v1018 = vld [vmem:[#allocation2 + $0x74] sm:$0x1]
      %v1019 = vsel %vm990, %v955, %v1018
      %1020 = vst [vmem:[#allocation2 + $0x74] sm:$0x1] %v1019
      %v1021 = vld [vmem:[#allocation2 + $0x80] sm:$0x1]
      %v1022 = vsel %vm990, %v957, %v1021
      %1023 = vst [vmem:[#allocation2 + $0x80] sm:$0x1] %v1022
      %v1024 = vld [vmem:[#allocation2 + $0x8c] sm:$0x1]
      %v1025 = vsel %vm990, %v959, %v1024
      %1026 = vst [vmem:[#allocation2 + $0x8c] sm:$0x1] %v1025
      %v1027 = vld [vmem:[#allocation2 + $0x98] sm:$0x1]
      %v1028 = vsel %vm990, %v961, %v1027
      %1029 = vst [vmem:[#allocation2 + $0x98] sm:$0x1] %v1028
      %v1030 = vld [vmem:[#allocation2 + $0xa4] sm:$0x1]
      %v1031 = vsel %vm990, %v963, %v1030
      %1032 = vst [vmem:[#allocation2 + $0xa4] sm:$0x1] %v1031
      %v1033 = vld [vmem:[#allocation2 + $0xb0] sm:$0x1]
      %v1034 = vsel %vm990, %v965, %v1033
      %1035 = vst [vmem:[#allocation2 + $0xb0] sm:$0x1] %v1034
      %v1036 = vld [vmem:[#allocation2 + $0xbc] sm:$0x1]
      %v1037 = vsel %vm990, %v967, %v1036
      %1038 = vst [vmem:[#allocation2 + $0xbc] sm:$0x1] %v1037
      %v1039 = vld [vmem:[#allocation2 + $0xc8] sm:$0x1]
      %v1040 = vsel %vm990, %v969, %v1039
      %1041 = vst [vmem:[#allocation2 + $0xc8] sm:$0x1] %v1040
      %v1042 = vld [vmem:[#allocation2 + $0xd4] sm:$0x1]
      %v1043 = vsel %vm990, %v971, %v1042
      %1044 = vst [vmem:[#allocation2 + $0xd4] sm:$0x1] %v1043
      %v1045 = vld [vmem:[#allocation2] sm:$0xf]
      %v1046 = vld [vmem:[#allocation2 + $0x4] sm:$0xf]
      %v1047 = vld [vmem:[#allocation2 + $0xc] sm:$0xf]
      %v1048 = vld [vmem:[#allocation2 + $0x10] sm:$0xf]
      %v1049 = vld [vmem:[#allocation2 + $0x18] sm:$0xf]
      %v1050 = vld [vmem:[#allocation2 + $0x1c] sm:$0xf]
      %v1051 = vld [vmem:[#allocation2 + $0x24] sm:$0xf]
      %v1052 = vld [vmem:[#allocation2 + $0x28] sm:$0xf]
      %v1053 = vld [vmem:[#allocation2 + $0x30] sm:$0xf]
      %v1054 = vld [vmem:[#allocation2 + $0x34] sm:$0xf]
      %v1055 = vld [vmem:[#allocation2 + $0x3c] sm:$0xf]
      %v1056 = vld [vmem:[#allocation2 + $0x40] sm:$0xf]
      %v1057 = vld [vmem:[#allocation2 + $0x48] sm:$0xf]
      %v1058 = vld [vmem:[#allocation2 + $0x4c] sm:$0xf]
      %v1059 = vld [vmem:[#allocation2 + $0x54] sm:$0xf]
      %v1060 = vld [vmem:[#allocation2 + $0x58] sm:$0xf]
      %v1061 = vld [vmem:[#allocation2 + $0x60] sm:$0xf]
      %v1062 = vld [vmem:[#allocation2 + $0x64] sm:$0xf]
      %v1063 = vld [vmem:[#allocation2 + $0x6c] sm:$0xf]
      %v1064 = vld [vmem:[#allocation2 + $0x70] sm:$0xf]
      %v1065 = vld [vmem:[#allocation2 + $0x78] sm:$0xf]
      %v1066 = vld [vmem:[#allocation2 + $0x7c] sm:$0xf]
      %v1067 = vld [vmem:[#allocation2 + $0x84] sm:$0xf]
      %v1068 = vld [vmem:[#allocation2 + $0x88] sm:$0xf]
      %v1069 = vld [vmem:[#allocation2 + $0x90] sm:$0xf]
      %v1070 = vld [vmem:[#allocation2 + $0x94] sm:$0xf]
      %v1071 = vld [vmem:[#allocation2 + $0x9c] sm:$0xf]
      %v1072 = vld [vmem:[#allocation2 + $0xa0] sm:$0xf]
      %v1073 = vld [vmem:[#allocation2 + $0xa8] sm:$0xf]
      %v1074 = vld [vmem:[#allocation2 + $0xac] sm:$0xf]
      %v1075 = vld [vmem:[#allocation2 + $0xb4] sm:$0xf]
      %v1076 = vld [vmem:[#allocation2 + $0xb8] sm:$0xf]
      %v1077 = vld [vmem:[#allocation2 + $0xc0] sm:$0xf]
      %v1078 = vld [vmem:[#allocation2 + $0xc4] sm:$0xf]
      %v1079 = vld [vmem:[#allocation2 + $0xcc] sm:$0xf]
      %v1080 = vld [vmem:[#allocation2 + $0xd0] sm:$0xf]
      %v1081 = vld [vmem:[%s1] sm:$0xf]
      %v1082 = vld [vmem:[%s1 + $0x4] sm:$0xf]
      %v1083 = vld [vmem:[%s1 + $0x8] sm:$0xf]
      %v1084 = vld [vmem:[%s1 + $0xc] sm:$0xf]
      %v1085 = vld [vmem:[%s1 + $0x10] sm:$0xf]
      %v1086 = vld [vmem:[%s1 + $0x14] sm:$0xf]
      %v1087 = vld [vmem:[%s1 + $0x18] sm:$0xf]
      %v1088 = vld [vmem:[%s1 + $0x1c] sm:$0xf]
      %v1089 = vld [vmem:[%s1 + $0x20] sm:$0xf]
      %v1090 = vld [vmem:[%s1 + $0x24] sm:$0xf]
      %v1091 = vld [vmem:[%s1 + $0x28] sm:$0xf]
      %v1092 = vld [vmem:[%s1 + $0x2c] sm:$0xf]
      %v1093 = vld [vmem:[%s1 + $0x30] sm:$0xf]
      %v1094 = vld [vmem:[%s1 + $0x34] sm:$0xf]
      %v1095 = vld [vmem:[%s1 + $0x38] sm:$0xf]
      %v1096 = vld [vmem:[%s1 + $0x3c] sm:$0xf]
      %s1097 = scalar_lea.vmem %s1, 192
      %v1098 = vld [vmem:[%s1097] sm:$0xf]
      %v1099 = vld [vmem:[%s1097 + $0x4] sm:$0xf]
      %v1100 = vld [vmem:[%s1097 + $0x8] sm:$0xf]
      %v1101 = vld [vmem:[%s1097 + $0xc] sm:$0xf]
      %v1102 = vld [vmem:[%s1097 + $0x10] sm:$0xf]
      %v1103 = vld [vmem:[%s1097 + $0x14] sm:$0xf]
      %v1104 = vld [vmem:[%s1097 + $0x18] sm:$0xf]
      %v1105 = vld [vmem:[%s1097 + $0x1c] sm:$0xf]
      %v1106 = vld [vmem:[%s1097 + $0x20] sm:$0xf]
      %v1107 = vld [vmem:[%s1097 + $0x24] sm:$0xf]
      %v1108 = vld [vmem:[%s1097 + $0x28] sm:$0xf]
      %v1109 = vld [vmem:[%s1097 + $0x2c] sm:$0xf]
      %v1110 = vld [vmem:[%s1097 + $0x30] sm:$0xf]
      %v1111 = vld [vmem:[%s1097 + $0x34] sm:$0xf]
      %v1112 = vld [vmem:[%s1097 + $0x38] sm:$0xf]
      %v1113 = vld [vmem:[%s1097 + $0x3c] sm:$0xf]
      %v1146 = vunpack.c.l.b16 %v1047
      %v1147 = vunpack.c.l.b16 %v1048
      %v1148 = vunpack.c.l.b16 %v1049
      %v1149 = vunpack.c.l.b16 %v1050
      %v1150 = vunpack.c.l.b16 %v1051
      %v1151 = vunpack.c.l.b16 %v1052
      %v1152 = vunpack.c.l.b16 %v1053
      %v1153 = vunpack.c.l.b16 %v1054
      %v1154 = vunpack.c.l.b16 %v1055
      %v1155 = vunpack.c.l.b16 %v1056
      %v1156 = vunpack.c.l.b16 %v1057
      %v1157 = vunpack.c.l.b16 %v1058
      %v1158 = vunpack.c.l.b16 %v1059
      %v1159 = vunpack.c.l.b16 %v1060
      %v1160 = vunpack.c.l.b16 %v1061
      %v1161 = vunpack.c.l.b16 %v1062
      %v1162 = vunpack.c.l.b16 %v1063
      %v1163 = vunpack.c.l.b16 %v1064
      %v1164 = vunpack.c.l.b16 %v1065
      %v1165 = vunpack.c.l.b16 %v1066
      %v1166 = vunpack.c.l.b16 %v1067
      %v1167 = vunpack.c.l.b16 %v1068
      %v1168 = vunpack.c.l.b16 %v1069
      %v1169 = vunpack.c.l.b16 %v1070
      %v1170 = vunpack.c.l.b16 %v1071
      %v1171 = vunpack.c.l.b16 %v1072
      %v1172 = vunpack.c.l.b16 %v1073
      %v1173 = vunpack.c.l.b16 %v1074
      %v1174 = vunpack.c.l.b16 %v1075
      %v1175 = vunpack.c.l.b16 %v1076
      %v1176 = vunpack.c.l.b16 %v1077
      %v1177 = vunpack.c.l.b16 %v1078
      %v1178 = vpack.c.b16 %v1147, %v1146
      %v1179 = vpack.c.b16 %v1149, %v1148
      %v1180 = vpack.c.b16 %v1151, %v1150
      %v1181 = vpack.c.b16 %v1153, %v1152
      %v1182 = vpack.c.b16 %v1155, %v1154
      %v1183 = vpack.c.b16 %v1157, %v1156
      %v1184 = vpack.c.b16 %v1159, %v1158
      %v1185 = vpack.c.b16 %v1161, %v1160
      %v1186 = vpack.c.b16 %v1163, %v1162
      %v1187 = vpack.c.b16 %v1165, %v1164
      %v1188 = vpack.c.b16 %v1167, %v1166
      %v1189 = vpack.c.b16 %v1169, %v1168
      %v1190 = vpack.c.b16 %v1171, %v1170
      %v1191 = vpack.c.b16 %v1173, %v1172
      %v1192 = vpack.c.b16 %v1175, %v1174
      %v1193 = vpack.c.b16 %v1177, %v1176
      %v1226 = vunpack.c.l.b16 %v1098
      %v1227 = vunpack.c.l.b16 %v1099
      %v1228 = vunpack.c.l.b16 %v1100
      %v1229 = vunpack.c.l.b16 %v1101
      %v1230 = vunpack.c.l.b16 %v1102
      %v1231 = vunpack.c.l.b16 %v1103
      %v1232 = vunpack.c.l.b16 %v1104
      %v1233 = vunpack.c.l.b16 %v1105
      %v1234 = vunpack.c.l.b16 %v1106
      %v1235 = vunpack.c.l.b16 %v1107
      %v1236 = vunpack.c.l.b16 %v1108
      %v1237 = vunpack.c.l.b16 %v1109
      %v1238 = vunpack.c.l.b16 %v1110
      %v1239 = vunpack.c.l.b16 %v1111
      %v1240 = vunpack.c.l.b16 %v1112
      %v1241 = vunpack.c.l.b16 %v1113
      %v1242 = vpack.c.b16 %v1227, %v1226
      %v1243 = vpack.c.b16 %v1229, %v1228
      %v1244 = vpack.c.b16 %v1231, %v1230
      %v1245 = vpack.c.b16 %v1233, %v1232
      %v1246 = vpack.c.b16 %v1235, %v1234
      %v1247 = vpack.c.b16 %v1237, %v1236
      %v1248 = vpack.c.b16 %v1239, %v1238
      %v1249 = vpack.c.b16 %v1241, %v1240
      %1258 = vmatprep.subr.bf16.mxu0 0
      %1259 = vmatpush1.bf16.msra.mxu0 %v1249
      %1260 = vmatprep.subr.bf16.mxu0 0
      %1261 = vmatpush1.bf16.msra.mxu0 %v1248
      %1262 = vmatprep.subr.bf16.mxu0 0
      %1263 = vmatpush1.bf16.msra.mxu0 %v1247
      %1264 = vmatprep.subr.bf16.mxu0 0
      %1265 = vmatpush1.bf16.msra.mxu0 %v1246
      %1266 = vmatprep.subr.bf16.mxu0 0
      %1267 = vmatpush1.bf16.msra.mxu0 %v1245
      %1268 = vmatprep.subr.bf16.mxu0 0
      %1269 = vmatpush1.bf16.msra.mxu0 %v1244
      %1270 = vmatprep.subr.bf16.mxu0 0
      %1271 = vmatpush1.bf16.msra.mxu0 %v1243
      %1272 = vmatprep.subr.bf16.mxu0 0
      %1273 = vmatpush1.bf16.msra.mxu0 %v1242
      %1274 = vmatprep.subr.bf16.mxu0 0
      %1275 = vmatpush2.bf16.msra.mxu0 0
      %1276 = vmatprep.subr.bf16.mxu0 0
      %1277 = vmatpush2.bf16.msra.mxu0 0
      %1278 = vmatprep.subr.bf16.mxu0 0
      %1279 = vmatpush2.bf16.msra.mxu0 0
      %1280 = vmatprep.subr.bf16.mxu0 0
      %1281 = vmatpush2.bf16.msra.mxu0 0
      %1282 = vmatprep.subr.bf16.mxu0 0
      %1283 = vmatpush2.bf16.msra.mxu0 0
      %1284 = vmatprep.subr.bf16.mxu0 0
      %1285 = vmatpush2.bf16.msra.mxu0 0
      %1286 = vmatprep.subr.bf16.mxu0 0
      %1287 = vmatpush2.bf16.msra.mxu0 0
      %1288 = vmatprep.subr.bf16.mxu0 0
      %1289 = vmatpush2.bf16.msra.mxu0 0
      %1290 = vmatprep.mubr.bf16.mxu0 0
      %1291 = vmatmul.mubr.bf16.gmra.mxu0 %v1178
      %v1292 = vpop.f32.mrf.mxu0
      %v1293 = vadd.f32 0.0, %v1292
      %v1294 = vpop.f32.mrf.mxu0
      %v1295 = vpop.f32.mrf.mxu0
      %v1296 = vadd.f32 0.0, %v1295
      %v1297 = vpop.f32.mrf.mxu0
      %1298 = vmatprep.mubr.bf16.mxu0 0
      %1299 = vmatmul.mubr.bf16.gmra.mxu0 %v1179
      %v1300 = vpop.f32.mrf.mxu0
      %v1301 = vadd.f32 0.0, %v1300
      %v1302 = vpop.f32.mrf.mxu0
      %v1303 = vpop.f32.mrf.mxu0
      %v1304 = vadd.f32 0.0, %v1303
      %v1305 = vpop.f32.mrf.mxu0
      %1306 = vmatprep.mubr.bf16.mxu0 0
      %1307 = vmatmul.mubr.bf16.gmra.mxu0 %v1180
      %v1308 = vpop.f32.mrf.mxu0
      %v1309 = vadd.f32 0.0, %v1308
      %v1310 = vpop.f32.mrf.mxu0
      %v1311 = vpop.f32.mrf.mxu0
      %v1312 = vadd.f32 0.0, %v1311
      %v1313 = vpop.f32.mrf.mxu0
      %1314 = vmatprep.mubr.bf16.mxu0 0
      %1315 = vmatmul.mubr.bf16.gmra.mxu0 %v1181
      %v1316 = vpop.f32.mrf.mxu0
      %v1317 = vadd.f32 0.0, %v1316
      %v1318 = vpop.f32.mrf.mxu0
      %v1319 = vpop.f32.mrf.mxu0
      %v1320 = vadd.f32 0.0, %v1319
      %v1321 = vpop.f32.mrf.mxu0
      %1322 = vmatprep.mubr.bf16.mxu0 0
      %1323 = vmatmul.mubr.bf16.gmra.mxu0 %v1182
      %v1324 = vpop.f32.mrf.mxu0
      %v1325 = vadd.f32 0.0, %v1324
      %v1326 = vpop.f32.mrf.mxu0
      %v1327 = vpop.f32.mrf.mxu0
      %v1328 = vadd.f32 0.0, %v1327
      %v1329 = vpop.f32.mrf.mxu0
      %1330 = vmatprep.mubr.bf16.mxu0 0
      %1331 = vmatmul.mubr.bf16.gmra.mxu0 %v1183
      %v1332 = vpop.f32.mrf.mxu0
      %v1333 = vadd.f32 0.0, %v1332
      %v1334 = vpop.f32.mrf.mxu0
      %v1335 = vpop.f32.mrf.mxu0
      %v1336 = vadd.f32 0.0, %v1335
      %v1337 = vpop.f32.mrf.mxu0
      %1338 = vmatprep.mubr.bf16.mxu0 0
      %1339 = vmatmul.mubr.bf16.gmra.mxu0 %v1184
      %v1340 = vpop.f32.mrf.mxu0
      %v1341 = vadd.f32 0.0, %v1340
      %v1342 = vpop.f32.mrf.mxu0
      %v1343 = vpop.f32.mrf.mxu0
      %v1344 = vadd.f32 0.0, %v1343
      %v1345 = vpop.f32.mrf.mxu0
      %1346 = vmatprep.mubr.bf16.mxu0 0
      %1347 = vmatmul.mubr.bf16.gmra.mxu0 %v1185
      %v1348 = vpop.f32.mrf.mxu0
      %v1349 = vadd.f32 0.0, %v1348
      %v1350 = vpop.f32.mrf.mxu0
      %v1351 = vpop.f32.mrf.mxu0
      %v1352 = vadd.f32 0.0, %v1351
      %v1353 = vpop.f32.mrf.mxu0
      %1354 = vmatprep.mubr.bf16.mxu0 0
      %1355 = vmatmul.mubr.bf16.gmra.mxu0 %v1186
      %v1356 = vpop.f32.mrf.mxu0
      %v1357 = vadd.f32 0.0, %v1356
      %v1358 = vpop.f32.mrf.mxu0
      %v1359 = vpop.f32.mrf.mxu0
      %v1360 = vadd.f32 0.0, %v1359
      %v1361 = vpop.f32.mrf.mxu0
      %1362 = vmatprep.mubr.bf16.mxu0 0
      %1363 = vmatmul.mubr.bf16.gmra.mxu0 %v1187
      %v1364 = vpop.f32.mrf.mxu0
      %v1365 = vadd.f32 0.0, %v1364
      %v1366 = vpop.f32.mrf.mxu0
      %v1367 = vpop.f32.mrf.mxu0
      %v1368 = vadd.f32 0.0, %v1367
      %v1369 = vpop.f32.mrf.mxu0
      %1370 = vmatprep.mubr.bf16.mxu0 0
      %1371 = vmatmul.mubr.bf16.gmra.mxu0 %v1188
      %v1372 = vpop.f32.mrf.mxu0
      %v1373 = vadd.f32 0.0, %v1372
      %v1374 = vpop.f32.mrf.mxu0
      %v1375 = vpop.f32.mrf.mxu0
      %v1376 = vadd.f32 0.0, %v1375
      %v1377 = vpop.f32.mrf.mxu0
      %1378 = vmatprep.mubr.bf16.mxu0 0
      %1379 = vmatmul.mubr.bf16.gmra.mxu0 %v1189
      %v1380 = vpop.f32.mrf.mxu0
      %v1381 = vadd.f32 0.0, %v1380
      %v1382 = vpop.f32.mrf.mxu0
      %v1383 = vpop.f32.mrf.mxu0
      %v1384 = vadd.f32 0.0, %v1383
      %v1385 = vpop.f32.mrf.mxu0
      %1386 = vmatprep.mubr.bf16.mxu0 0
      %1387 = vmatmul.mubr.bf16.gmra.mxu0 %v1190
      %v1388 = vpop.f32.mrf.mxu0
      %v1389 = vadd.f32 0.0, %v1388
      %v1390 = vpop.f32.mrf.mxu0
      %v1391 = vpop.f32.mrf.mxu0
      %v1392 = vadd.f32 0.0, %v1391
      %v1393 = vpop.f32.mrf.mxu0
      %1394 = vmatprep.mubr.bf16.mxu0 0
      %1395 = vmatmul.mubr.bf16.gmra.mxu0 %v1191
      %v1396 = vpop.f32.mrf.mxu0
      %v1397 = vadd.f32 0.0, %v1396
      %v1398 = vpop.f32.mrf.mxu0
      %v1399 = vpop.f32.mrf.mxu0
      %v1400 = vadd.f32 0.0, %v1399
      %v1401 = vpop.f32.mrf.mxu0
      %1402 = vmatprep.mubr.bf16.mxu0 0
      %1403 = vmatmul.mubr.bf16.gmra.mxu0 %v1192
      %v1404 = vpop.f32.mrf.mxu0
      %v1405 = vadd.f32 0.0, %v1404
      %v1406 = vpop.f32.mrf.mxu0
      %v1407 = vpop.f32.mrf.mxu0
      %v1408 = vadd.f32 0.0, %v1407
      %v1409 = vpop.f32.mrf.mxu0
      %1410 = vmatprep.mubr.bf16.mxu0 0
      %1411 = vmatmul.mubr.bf16.gmra.mxu0 %v1193
      %v1412 = vpop.f32.mrf.mxu0
      %v1413 = vadd.f32 0.0, %v1412
      %v1414 = vpop.f32.mrf.mxu0
      %v1415 = vpop.f32.mrf.mxu0
      %v1416 = vadd.f32 0.0, %v1415
      %v1417 = vpop.f32.mrf.mxu0
      %1418 = vdwg.mxu0
      %v1421 = vunpack.c.l.b16 %v1045
      %v1422 = vunpack.c.l.b16 %v1046
      %v1423 = vpack.c.b16 %v1422, %v1421
      %v1441 = vunpack.c.l.b16 %v1081
      %v1442 = vunpack.c.l.b16 %v1082
      %v1443 = vunpack.c.l.b16 %v1083
      %v1444 = vunpack.c.l.b16 %v1084
      %v1445 = vunpack.c.l.b16 %v1085
      %v1446 = vunpack.c.l.b16 %v1086
      %v1447 = vunpack.c.l.b16 %v1087
      %v1448 = vunpack.c.l.b16 %v1088
      %v1449 = vunpack.c.l.b16 %v1089
      %v1450 = vunpack.c.l.b16 %v1090
      %v1451 = vunpack.c.l.b16 %v1091
      %v1452 = vunpack.c.l.b16 %v1092
      %v1453 = vunpack.c.l.b16 %v1093
      %v1454 = vunpack.c.l.b16 %v1094
      %v1455 = vunpack.c.l.b16 %v1095
      %v1456 = vunpack.c.l.b16 %v1096
      %v1457 = vpack.c.b16 %v1442, %v1441
      %v1458 = vpack.c.b16 %v1444, %v1443
      %v1459 = vpack.c.b16 %v1446, %v1445
      %v1460 = vpack.c.b16 %v1448, %v1447
      %v1461 = vpack.c.b16 %v1450, %v1449
      %v1462 = vpack.c.b16 %v1452, %v1451
      %v1463 = vpack.c.b16 %v1454, %v1453
      %v1464 = vpack.c.b16 %v1456, %v1455
      %1473 = vmatprep.subr.bf16.mxu0 0
      %1474 = vmatpush1.bf16.msra.mxu0 %v1464
      %1475 = vmatprep.subr.bf16.mxu0 0
      %1476 = vmatpush1.bf16.msra.mxu0 %v1463
      %1477 = vmatprep.subr.bf16.mxu0 0
      %1478 = vmatpush1.bf16.msra.mxu0 %v1462
      %1479 = vmatprep.subr.bf16.mxu0 0
      %1480 = vmatpush1.bf16.msra.mxu0 %v1461
      %1481 = vmatprep.subr.bf16.mxu0 0
      %1482 = vmatpush1.bf16.msra.mxu0 %v1460
      %1483 = vmatprep.subr.bf16.mxu0 0
      %1484 = vmatpush1.bf16.msra.mxu0 %v1459
      %1485 = vmatprep.subr.bf16.mxu0 0
      %1486 = vmatpush1.bf16.msra.mxu0 %v1458
      %1487 = vmatprep.subr.bf16.mxu0 0
      %1488 = vmatpush1.bf16.msra.mxu0 %v1457
      %1489 = vmatprep.subr.bf16.mxu0 0
      %1490 = vmatpush2.bf16.msra.mxu0 0
      %1491 = vmatprep.subr.bf16.mxu0 0
      %1492 = vmatpush2.bf16.msra.mxu0 0
      %1493 = vmatprep.subr.bf16.mxu0 0
      %1494 = vmatpush2.bf16.msra.mxu0 0
      %1495 = vmatprep.subr.bf16.mxu0 0
      %1496 = vmatpush2.bf16.msra.mxu0 0
      %1497 = vmatprep.subr.bf16.mxu0 0
      %1498 = vmatpush2.bf16.msra.mxu0 0
      %1499 = vmatprep.subr.bf16.mxu0 0
      %1500 = vmatpush2.bf16.msra.mxu0 0
      %1501 = vmatprep.subr.bf16.mxu0 0
      %1502 = vmatpush2.bf16.msra.mxu0 0
      %1503 = vmatprep.subr.bf16.mxu0 0
      %1504 = vmatpush2.bf16.msra.mxu0 0
      %1505 = vmatprep.mubr.bf16.mxu0 0
      %1506 = vmatmul.mubr.bf16.gmra.mxu0 %v1423
      %v1507 = vpop.f32.mrf.mxu0
      %v1508 = vadd.f32 %v1293, %v1507
      %v1509 = vpop.f32.mrf.mxu0
      %v1510 = vpop.f32.mrf.mxu0
      %v1511 = vadd.f32 %v1296, %v1510
      %v1512 = vpop.f32.mrf.mxu0
      %1513 = vmatprep.mubr.bf16.mxu0 0
      %1514 = vmatmul.mubr.bf16.gmra.mxu0 %v1178
      %v1515 = vpop.f32.mrf.mxu0
      %v1516 = vadd.f32 %v1301, %v1515
      %v1517 = vpop.f32.mrf.mxu0
      %v1518 = vpop.f32.mrf.mxu0
      %v1519 = vadd.f32 %v1304, %v1518
      %v1520 = vpop.f32.mrf.mxu0
      %1521 = vmatprep.mubr.bf16.mxu0 0
      %1522 = vmatmul.mubr.bf16.gmra.mxu0 %v1179
      %v1523 = vpop.f32.mrf.mxu0
      %v1524 = vadd.f32 %v1309, %v1523
      %v1525 = vpop.f32.mrf.mxu0
      %v1526 = vpop.f32.mrf.mxu0
      %v1527 = vadd.f32 %v1312, %v1526
      %v1528 = vpop.f32.mrf.mxu0
      %1529 = vmatprep.mubr.bf16.mxu0 0
      %1530 = vmatmul.mubr.bf16.gmra.mxu0 %v1180
      %v1531 = vpop.f32.mrf.mxu0
      %v1532 = vadd.f32 %v1317, %v1531
      %v1533 = vpop.f32.mrf.mxu0
      %v1534 = vpop.f32.mrf.mxu0
      %v1535 = vadd.f32 %v1320, %v1534
      %v1536 = vpop.f32.mrf.mxu0
      %1537 = vmatprep.mubr.bf16.mxu0 0
      %1538 = vmatmul.mubr.bf16.gmra.mxu0 %v1181
      %v1539 = vpop.f32.mrf.mxu0
      %v1540 = vadd.f32 %v1325, %v1539
      %v1541 = vpop.f32.mrf.mxu0
      %v1542 = vpop.f32.mrf.mxu0
      %v1543 = vadd.f32 %v1328, %v1542
      %v1544 = vpop.f32.mrf.mxu0
      %1545 = vmatprep.mubr.bf16.mxu0 0
      %1546 = vmatmul.mubr.bf16.gmra.mxu0 %v1182
      %v1547 = vpop.f32.mrf.mxu0
      %v1548 = vadd.f32 %v1333, %v1547
      %v1549 = vpop.f32.mrf.mxu0
      %v1550 = vpop.f32.mrf.mxu0
      %v1551 = vadd.f32 %v1336, %v1550
      %v1552 = vpop.f32.mrf.mxu0
      %1553 = vmatprep.mubr.bf16.mxu0 0
      %1554 = vmatmul.mubr.bf16.gmra.mxu0 %v1183
      %v1555 = vpop.f32.mrf.mxu0
      %v1556 = vadd.f32 %v1341, %v1555
      %v1557 = vpop.f32.mrf.mxu0
      %v1558 = vpop.f32.mrf.mxu0
      %v1559 = vadd.f32 %v1344, %v1558
      %v1560 = vpop.f32.mrf.mxu0
      %1561 = vmatprep.mubr.bf16.mxu0 0
      %1562 = vmatmul.mubr.bf16.gmra.mxu0 %v1184
      %v1563 = vpop.f32.mrf.mxu0
      %v1564 = vadd.f32 %v1349, %v1563
      %v1565 = vpop.f32.mrf.mxu0
      %v1566 = vpop.f32.mrf.mxu0
      %v1567 = vadd.f32 %v1352, %v1566
      %v1568 = vpop.f32.mrf.mxu0
      %1569 = vmatprep.mubr.bf16.mxu0 0
      %1570 = vmatmul.mubr.bf16.gmra.mxu0 %v1185
      %v1571 = vpop.f32.mrf.mxu0
      %v1572 = vadd.f32 %v1357, %v1571
      %v1573 = vpop.f32.mrf.mxu0
      %v1574 = vpop.f32.mrf.mxu0
      %v1575 = vadd.f32 %v1360, %v1574
      %v1576 = vpop.f32.mrf.mxu0
      %1577 = vmatprep.mubr.bf16.mxu0 0
      %1578 = vmatmul.mubr.bf16.gmra.mxu0 %v1186
      %v1579 = vpop.f32.mrf.mxu0
      %v1580 = vadd.f32 %v1365, %v1579
      %v1581 = vpop.f32.mrf.mxu0
      %v1582 = vpop.f32.mrf.mxu0
      %v1583 = vadd.f32 %v1368, %v1582
      %v1584 = vpop.f32.mrf.mxu0
      %1585 = vmatprep.mubr.bf16.mxu0 0
      %1586 = vmatmul.mubr.bf16.gmra.mxu0 %v1187
      %v1587 = vpop.f32.mrf.mxu0
      %v1588 = vadd.f32 %v1373, %v1587
      %v1589 = vpop.f32.mrf.mxu0
      %v1590 = vpop.f32.mrf.mxu0
      %v1591 = vadd.f32 %v1376, %v1590
      %v1592 = vpop.f32.mrf.mxu0
      %1593 = vmatprep.mubr.bf16.mxu0 0
      %1594 = vmatmul.mubr.bf16.gmra.mxu0 %v1188
      %v1595 = vpop.f32.mrf.mxu0
      %v1596 = vadd.f32 %v1381, %v1595
      %v1597 = vpop.f32.mrf.mxu0
      %v1598 = vpop.f32.mrf.mxu0
      %v1599 = vadd.f32 %v1384, %v1598
      %v1600 = vpop.f32.mrf.mxu0
      %1601 = vmatprep.mubr.bf16.mxu0 0
      %1602 = vmatmul.mubr.bf16.gmra.mxu0 %v1189
      %v1603 = vpop.f32.mrf.mxu0
      %v1604 = vadd.f32 %v1389, %v1603
      %v1605 = vpop.f32.mrf.mxu0
      %v1606 = vpop.f32.mrf.mxu0
      %v1607 = vadd.f32 %v1392, %v1606
      %v1608 = vpop.f32.mrf.mxu0
      %1609 = vmatprep.mubr.bf16.mxu0 0
      %1610 = vmatmul.mubr.bf16.gmra.mxu0 %v1190
      %v1611 = vpop.f32.mrf.mxu0
      %v1612 = vadd.f32 %v1397, %v1611
      %v1613 = vpop.f32.mrf.mxu0
      %v1614 = vpop.f32.mrf.mxu0
      %v1615 = vadd.f32 %v1400, %v1614
      %v1616 = vpop.f32.mrf.mxu0
      %1617 = vmatprep.mubr.bf16.mxu0 0
      %1618 = vmatmul.mubr.bf16.gmra.mxu0 %v1191
      %v1619 = vpop.f32.mrf.mxu0
      %v1620 = vadd.f32 %v1405, %v1619
      %v1621 = vpop.f32.mrf.mxu0
      %v1622 = vpop.f32.mrf.mxu0
      %v1623 = vadd.f32 %v1408, %v1622
      %v1624 = vpop.f32.mrf.mxu0
      %1625 = vmatprep.mubr.bf16.mxu0 0
      %1626 = vmatmul.mubr.bf16.gmra.mxu0 %v1192
      %v1627 = vpop.f32.mrf.mxu0
      %v1628 = vadd.f32 %v1413, %v1627
      %v1629 = vpop.f32.mrf.mxu0
      %v1630 = vpop.f32.mrf.mxu0
      %v1631 = vadd.f32 %v1416, %v1630
      %v1632 = vpop.f32.mrf.mxu0
      %1633 = vdwg.mxu0
      %s1634 = scalar_lea.vmem %s1, 384
      %v1635 = vld [vmem:[%s1634] sm:$0xf]
      %v1636 = vld [vmem:[%s1634 + $0x4] sm:$0xf]
      %v1637 = vld [vmem:[%s1634 + $0x8] sm:$0xf]
      %v1638 = vld [vmem:[%s1634 + $0xc] sm:$0xf]
      %v1639 = vld [vmem:[%s1634 + $0x10] sm:$0xf]
      %v1640 = vld [vmem:[%s1634 + $0x14] sm:$0xf]
      %v1641 = vld [vmem:[%s1634 + $0x18] sm:$0xf]
      %v1642 = vld [vmem:[%s1634 + $0x1c] sm:$0xf]
      %v1643 = vld [vmem:[%s1634 + $0x20] sm:$0xf]
      %v1644 = vld [vmem:[%s1634 + $0x24] sm:$0xf]
      %v1645 = vld [vmem:[%s1634 + $0x28] sm:$0xf]
      %v1646 = vld [vmem:[%s1634 + $0x2c] sm:$0xf]
      %v1647 = vld [vmem:[%s1634 + $0x30] sm:$0xf]
      %v1648 = vld [vmem:[%s1634 + $0x34] sm:$0xf]
      %v1649 = vld [vmem:[%s1634 + $0x38] sm:$0xf]
      %v1650 = vld [vmem:[%s1634 + $0x3c] sm:$0xf]
      %v1653 = vunpack.c.l.b16 %v1079
      %v1654 = vunpack.c.l.b16 %v1080
      %v1655 = vpack.c.b16 %v1654, %v1653
      %v1673 = vunpack.c.l.b16 %v1635
      %v1674 = vunpack.c.l.b16 %v1636
      %v1675 = vunpack.c.l.b16 %v1637
      %v1676 = vunpack.c.l.b16 %v1638
      %v1677 = vunpack.c.l.b16 %v1639
      %v1678 = vunpack.c.l.b16 %v1640
      %v1679 = vunpack.c.l.b16 %v1641
      %v1680 = vunpack.c.l.b16 %v1642
      %v1681 = vunpack.c.l.b16 %v1643
      %v1682 = vunpack.c.l.b16 %v1644
      %v1683 = vunpack.c.l.b16 %v1645
      %v1684 = vunpack.c.l.b16 %v1646
      %v1685 = vunpack.c.l.b16 %v1647
      %v1686 = vunpack.c.l.b16 %v1648
      %v1687 = vunpack.c.l.b16 %v1649
      %v1688 = vunpack.c.l.b16 %v1650
      %v1689 = vpack.c.b16 %v1674, %v1673
      %v1690 = vpack.c.b16 %v1676, %v1675
      %v1691 = vpack.c.b16 %v1678, %v1677
      %v1692 = vpack.c.b16 %v1680, %v1679
      %v1693 = vpack.c.b16 %v1682, %v1681
      %v1694 = vpack.c.b16 %v1684, %v1683
      %v1695 = vpack.c.b16 %v1686, %v1685
      %v1696 = vpack.c.b16 %v1688, %v1687
      %1705 = vmatprep.subr.bf16.mxu0 0
      %1706 = vmatpush1.bf16.msra.mxu0 %v1696
      %1707 = vmatprep.subr.bf16.mxu0 0
      %1708 = vmatpush1.bf16.msra.mxu0 %v1695
      %1709 = vmatprep.subr.bf16.mxu0 0
      %1710 = vmatpush1.bf16.msra.mxu0 %v1694
      %1711 = vmatprep.subr.bf16.mxu0 0
      %1712 = vmatpush1.bf16.msra.mxu0 %v1693
      %1713 = vmatprep.subr.bf16.mxu0 0
      %1714 = vmatpush1.bf16.msra.mxu0 %v1692
      %1715 = vmatprep.subr.bf16.mxu0 0
      %1716 = vmatpush1.bf16.msra.mxu0 %v1691
      %1717 = vmatprep.subr.bf16.mxu0 0
      %1718 = vmatpush1.bf16.msra.mxu0 %v1690
      %1719 = vmatprep.subr.bf16.mxu0 0
      %1720 = vmatpush1.bf16.msra.mxu0 %v1689
      %1721 = vmatprep.subr.bf16.mxu0 0
      %1722 = vmatpush2.bf16.msra.mxu0 0
      %1723 = vmatprep.subr.bf16.mxu0 0
      %1724 = vmatpush2.bf16.msra.mxu0 0
      %1725 = vmatprep.subr.bf16.mxu0 0
      %1726 = vmatpush2.bf16.msra.mxu0 0
      %1727 = vmatprep.subr.bf16.mxu0 0
      %1728 = vmatpush2.bf16.msra.mxu0 0
      %1729 = vmatprep.subr.bf16.mxu0 0
      %1730 = vmatpush2.bf16.msra.mxu0 0
      %1731 = vmatprep.subr.bf16.mxu0 0
      %1732 = vmatpush2.bf16.msra.mxu0 0
      %1733 = vmatprep.subr.bf16.mxu0 0
      %1734 = vmatpush2.bf16.msra.mxu0 0
      %1735 = vmatprep.subr.bf16.mxu0 0
      %1736 = vmatpush2.bf16.msra.mxu0 0
      %1737 = vmatprep.mubr.bf16.mxu0 0
      %1738 = vmatmul.mubr.bf16.gmra.mxu0 %v1179
      %v1739 = vpop.f32.mrf.mxu0
      %v1740 = vadd.f32 0.0, %v1739
      %v1741 = vpop.f32.mrf.mxu0
      %v1742 = vpop.f32.mrf.mxu0
      %v1743 = vadd.f32 0.0, %v1742
      %v1744 = vpop.f32.mrf.mxu0
      %1745 = vmatprep.mubr.bf16.mxu0 0
      %1746 = vmatmul.mubr.bf16.gmra.mxu0 %v1180
      %v1747 = vpop.f32.mrf.mxu0
      %v1748 = vadd.f32 0.0, %v1747
      %v1749 = vpop.f32.mrf.mxu0
      %v1750 = vpop.f32.mrf.mxu0
      %v1751 = vadd.f32 0.0, %v1750
      %v1752 = vpop.f32.mrf.mxu0
      %1753 = vmatprep.mubr.bf16.mxu0 0
      %1754 = vmatmul.mubr.bf16.gmra.mxu0 %v1181
      %v1755 = vpop.f32.mrf.mxu0
      %v1756 = vadd.f32 0.0, %v1755
      %v1757 = vpop.f32.mrf.mxu0
      %v1758 = vpop.f32.mrf.mxu0
      %v1759 = vadd.f32 0.0, %v1758
      %v1760 = vpop.f32.mrf.mxu0
      %1761 = vmatprep.mubr.bf16.mxu0 0
      %1762 = vmatmul.mubr.bf16.gmra.mxu0 %v1182
      %v1763 = vpop.f32.mrf.mxu0
      %v1764 = vadd.f32 0.0, %v1763
      %v1765 = vpop.f32.mrf.mxu0
      %v1766 = vpop.f32.mrf.mxu0
      %v1767 = vadd.f32 0.0, %v1766
      %v1768 = vpop.f32.mrf.mxu0
      %1769 = vmatprep.mubr.bf16.mxu0 0
      %1770 = vmatmul.mubr.bf16.gmra.mxu0 %v1183
      %v1771 = vpop.f32.mrf.mxu0
      %v1772 = vadd.f32 0.0, %v1771
      %v1773 = vpop.f32.mrf.mxu0
      %v1774 = vpop.f32.mrf.mxu0
      %v1775 = vadd.f32 0.0, %v1774
      %v1776 = vpop.f32.mrf.mxu0
      %1777 = vmatprep.mubr.bf16.mxu0 0
      %1778 = vmatmul.mubr.bf16.gmra.mxu0 %v1184
      %v1779 = vpop.f32.mrf.mxu0
      %v1780 = vadd.f32 0.0, %v1779
      %v1781 = vpop.f32.mrf.mxu0
      %v1782 = vpop.f32.mrf.mxu0
      %v1783 = vadd.f32 0.0, %v1782
      %v1784 = vpop.f32.mrf.mxu0
      %1785 = vmatprep.mubr.bf16.mxu0 0
      %1786 = vmatmul.mubr.bf16.gmra.mxu0 %v1185
      %v1787 = vpop.f32.mrf.mxu0
      %v1788 = vadd.f32 0.0, %v1787
      %v1789 = vpop.f32.mrf.mxu0
      %v1790 = vpop.f32.mrf.mxu0
      %v1791 = vadd.f32 0.0, %v1790
      %v1792 = vpop.f32.mrf.mxu0
      %1793 = vmatprep.mubr.bf16.mxu0 0
      %1794 = vmatmul.mubr.bf16.gmra.mxu0 %v1186
      %v1795 = vpop.f32.mrf.mxu0
      %v1796 = vadd.f32 0.0, %v1795
      %v1797 = vpop.f32.mrf.mxu0
      %v1798 = vpop.f32.mrf.mxu0
      %v1799 = vadd.f32 0.0, %v1798
      %v1800 = vpop.f32.mrf.mxu0
      %1801 = vmatprep.mubr.bf16.mxu0 0
      %1802 = vmatmul.mubr.bf16.gmra.mxu0 %v1187
      %v1803 = vpop.f32.mrf.mxu0
      %v1804 = vadd.f32 0.0, %v1803
      %v1805 = vpop.f32.mrf.mxu0
      %v1806 = vpop.f32.mrf.mxu0
      %v1807 = vadd.f32 0.0, %v1806
      %v1808 = vpop.f32.mrf.mxu0
      %1809 = vmatprep.mubr.bf16.mxu0 0
      %1810 = vmatmul.mubr.bf16.gmra.mxu0 %v1188
      %v1811 = vpop.f32.mrf.mxu0
      %v1812 = vadd.f32 0.0, %v1811
      %v1813 = vpop.f32.mrf.mxu0
      %v1814 = vpop.f32.mrf.mxu0
      %v1815 = vadd.f32 0.0, %v1814
      %v1816 = vpop.f32.mrf.mxu0
      %1817 = vmatprep.mubr.bf16.mxu0 0
      %1818 = vmatmul.mubr.bf16.gmra.mxu0 %v1189
      %v1819 = vpop.f32.mrf.mxu0
      %v1820 = vadd.f32 0.0, %v1819
      %v1821 = vpop.f32.mrf.mxu0
      %v1822 = vpop.f32.mrf.mxu0
      %v1823 = vadd.f32 0.0, %v1822
      %v1824 = vpop.f32.mrf.mxu0
      %1825 = vmatprep.mubr.bf16.mxu0 0
      %1826 = vmatmul.mubr.bf16.gmra.mxu0 %v1190
      %v1827 = vpop.f32.mrf.mxu0
      %v1828 = vadd.f32 0.0, %v1827
      %v1829 = vpop.f32.mrf.mxu0
      %v1830 = vpop.f32.mrf.mxu0
      %v1831 = vadd.f32 0.0, %v1830
      %v1832 = vpop.f32.mrf.mxu0
      %1833 = vmatprep.mubr.bf16.mxu0 0
      %1834 = vmatmul.mubr.bf16.gmra.mxu0 %v1191
      %v1835 = vpop.f32.mrf.mxu0
      %v1836 = vadd.f32 0.0, %v1835
      %v1837 = vpop.f32.mrf.mxu0
      %v1838 = vpop.f32.mrf.mxu0
      %v1839 = vadd.f32 0.0, %v1838
      %v1840 = vpop.f32.mrf.mxu0
      %1841 = vmatprep.mubr.bf16.mxu0 0
      %1842 = vmatmul.mubr.bf16.gmra.mxu0 %v1192
      %v1843 = vpop.f32.mrf.mxu0
      %v1844 = vadd.f32 0.0, %v1843
      %v1845 = vpop.f32.mrf.mxu0
      %v1846 = vpop.f32.mrf.mxu0
      %v1847 = vadd.f32 0.0, %v1846
      %v1848 = vpop.f32.mrf.mxu0
      %1849 = vmatprep.mubr.bf16.mxu0 0
      %1850 = vmatmul.mubr.bf16.gmra.mxu0 %v1193
      %v1851 = vpop.f32.mrf.mxu0
      %v1852 = vadd.f32 0.0, %v1851
      %v1853 = vpop.f32.mrf.mxu0
      %v1854 = vpop.f32.mrf.mxu0
      %v1855 = vadd.f32 0.0, %v1854
      %v1856 = vpop.f32.mrf.mxu0
      %1857 = vmatprep.mubr.bf16.mxu0 0
      %1858 = vmatmul.mubr.bf16.gmra.mxu0 %v1655
      %v1859 = vpop.f32.mrf.mxu0
      %v1860 = vadd.f32 0.0, %v1859
      %v1861 = vpop.f32.mrf.mxu0
      %v1862 = vpop.f32.mrf.mxu0
      %v1863 = vadd.f32 0.0, %v1862
      %v1864 = vpop.f32.mrf.mxu0
      %1865 = vdwg.mxu0
      %v1866 = vadd.f32 %v1508, %v1740
      %v1867 = vadd.f32 %v1511, %v1743
      %v1868 = vadd.f32 %v1516, %v1748
      %v1869 = vadd.f32 %v1519, %v1751
      %v1870 = vadd.f32 %v1524, %v1756
      %v1871 = vadd.f32 %v1527, %v1759
      %v1872 = vadd.f32 %v1532, %v1764
      %v1873 = vadd.f32 %v1535, %v1767
      %v1874 = vadd.f32 %v1540, %v1772
      %v1875 = vadd.f32 %v1543, %v1775
      %v1876 = vadd.f32 %v1548, %v1780
      %v1877 = vadd.f32 %v1551, %v1783
      %v1878 = vadd.f32 %v1556, %v1788
      %v1879 = vadd.f32 %v1559, %v1791
      %v1880 = vadd.f32 %v1564, %v1796
      %v1881 = vadd.f32 %v1567, %v1799
      %v1882 = vadd.f32 %v1572, %v1804
      %v1883 = vadd.f32 %v1575, %v1807
      %v1884 = vadd.f32 %v1580, %v1812
      %v1885 = vadd.f32 %v1583, %v1815
      %v1886 = vadd.f32 %v1588, %v1820
      %v1887 = vadd.f32 %v1591, %v1823
      %v1888 = vadd.f32 %v1596, %v1828
      %v1889 = vadd.f32 %v1599, %v1831
      %v1890 = vadd.f32 %v1604, %v1836
      %v1891 = vadd.f32 %v1607, %v1839
      %v1892 = vadd.f32 %v1612, %v1844
      %v1893 = vadd.f32 %v1615, %v1847
      %v1894 = vadd.f32 %v1620, %v1852
      %v1895 = vadd.f32 %v1623, %v1855
      %v1896 = vadd.f32 %v1628, %v1860
      %v1897 = vadd.f32 %v1631, %v1863
      %v1898 = vld [vmem:[#allocation2] sm:$0xf]
      %v1899 = vld [vmem:[#allocation2 + $0x4] sm:$0xf]
      %v1900 = vld [vmem:[#allocation2 + $0x8] sm:$0x1]
      %v1901 = vld [vmem:[#allocation2 + $0xc] sm:$0xf]
      %v1902 = vld [vmem:[#allocation2 + $0x10] sm:$0xf]
      %v1903 = vld [vmem:[#allocation2 + $0x14] sm:$0x1]
      %v1904 = vld [vmem:[#allocation2 + $0x18] sm:$0xf]
      %v1905 = vld [vmem:[#allocation2 + $0x1c] sm:$0xf]
      %v1906 = vld [vmem:[#allocation2 + $0x20] sm:$0x1]
      %v1907 = vld [vmem:[#allocation2 + $0x24] sm:$0xf]
      %v1908 = vld [vmem:[#allocation2 + $0x28] sm:$0xf]
      %v1909 = vld [vmem:[#allocation2 + $0x2c] sm:$0x1]
      %v1910 = vld [vmem:[#allocation2 + $0x30] sm:$0xf]
      %v1911 = vld [vmem:[#allocation2 + $0x34] sm:$0xf]
      %v1912 = vld [vmem:[#allocation2 + $0x38] sm:$0x1]
      %v1913 = vld [vmem:[#allocation2 + $0x3c] sm:$0xf]
      %v1914 = vld [vmem:[#allocation2 + $0x40] sm:$0xf]
      %v1915 = vld [vmem:[#allocation2 + $0x44] sm:$0x1]
      %v1916 = vld [vmem:[#allocation2 + $0x48] sm:$0xf]
      %v1917 = vld [vmem:[#allocation2 + $0x4c] sm:$0xf]
      %v1918 = vld [vmem:[#allocation2 + $0x50] sm:$0x1]
      %v1919 = vld [vmem:[#allocation2 + $0x54] sm:$0xf]
      %v1920 = vld [vmem:[#allocation2 + $0x58] sm:$0xf]
      %v1921 = vld [vmem:[#allocation2 + $0x5c] sm:$0x1]
      %v1922 = vld [vmem:[#allocation2 + $0x60] sm:$0xf]
      %v1923 = vld [vmem:[#allocation2 + $0x64] sm:$0xf]
      %v1924 = vld [vmem:[#allocation2 + $0x68] sm:$0x1]
      %v1925 = vld [vmem:[#allocation2 + $0x6c] sm:$0xf]
      %v1926 = vld [vmem:[#allocation2 + $0x70] sm:$0xf]
      %v1927 = vld [vmem:[#allocation2 + $0x74] sm:$0x1]
      %v1928 = vld [vmem:[#allocation2 + $0x78] sm:$0xf]
      %v1929 = vld [vmem:[#allocation2 + $0x7c] sm:$0xf]
      %v1930 = vld [vmem:[#allocation2 + $0x80] sm:$0x1]
      %v1931 = vld [vmem:[#allocation2 + $0x84] sm:$0xf]
      %v1932 = vld [vmem:[#allocation2 + $0x88] sm:$0xf]
      %v1933 = vld [vmem:[#allocation2 + $0x8c] sm:$0x1]
      %v1934 = vld [vmem:[#allocation2 + $0x90] sm:$0xf]
      %v1935 = vld [vmem:[#allocation2 + $0x94] sm:$0xf]
      %v1936 = vld [vmem:[#allocation2 + $0x98] sm:$0x1]
      %v1937 = vld [vmem:[#allocation2 + $0x9c] sm:$0xf]
      %v1938 = vld [vmem:[#allocation2 + $0xa0] sm:$0xf]
      %v1939 = vld [vmem:[#allocation2 + $0xa4] sm:$0x1]
      %v1940 = vld [vmem:[#allocation2 + $0xa8] sm:$0xf]
      %v1941 = vld [vmem:[#allocation2 + $0xac] sm:$0xf]
      %v1942 = vld [vmem:[#allocation2 + $0xb0] sm:$0x1]
      %v1943 = vld [vmem:[#allocation2 + $0xb4] sm:$0xf]
      %v1944 = vld [vmem:[#allocation2 + $0xb8] sm:$0xf]
      %v1945 = vld [vmem:[#allocation2 + $0xbc] sm:$0x1]
      %v1946 = vld [vmem:[#allocation2 + $0xc0] sm:$0xf]
      %v1947 = vld [vmem:[#allocation2 + $0xc4] sm:$0xf]
      %v1948 = vld [vmem:[#allocation2 + $0xc8] sm:$0x1]
      %v1949 = vld [vmem:[#allocation2 + $0xcc] sm:$0xf]
      %v1950 = vld [vmem:[#allocation2 + $0xd0] sm:$0xf]
      %v1951 = vld [vmem:[#allocation2 + $0xd4] sm:$0x1]
      %vm1952 = vsmask.f32 3328
      %vm1953 = vsmask.f32 7440
      %vm1954 = vmor %vm1952, %vm1953
      %v1956 = vshrl.u32 %v1898, 16
      %v1958 = vrot.slane %v1956, 4
      %v1959 = vshll.u32 %v1898, 16
      %v1961 = vrot.slane %v1959, 5
      %v1962 = vor.u32 %v1958, %v1961
      %v1963 = vrot.slane %v1962, 4
      %v1965 = vshll.u32 %v1899, 16
      %v1967 = vrot.slane %v1965, 5
      %v1968 = vsel %vm1954, %v1963, %v1967
      %v1969 = vshrl.u32 %v1899, 16
      %v1971 = vrot.slane %v1969, 4
      %v1972 = vor.u32 %v1971, %v1967
      %v1973 = vrot.slane %v1972, 4
      %v1975 = vshll.u32 %v1900, 16
      %v1977 = vrot.slane %v1975, 5
      %v1978 = vsel %vm1954, %v1973, %v1977
      %v1980 = vshrl.u32 %v1901, 16
      %v1982 = vrot.slane %v1980, 4
      %v1983 = vshll.u32 %v1901, 16
      %v1985 = vrot.slane %v1983, 5
      %v1986 = vor.u32 %v1982, %v1985
      %v1987 = vrot.slane %v1986, 4
      %v1989 = vshll.u32 %v1902, 16
      %v1991 = vrot.slane %v1989, 5
      %v1992 = vsel %vm1954, %v1987, %v1991
      %v1993 = vshrl.u32 %v1902, 16
      %v1995 = vrot.slane %v1993, 4
      %v1996 = vor.u32 %v1995, %v1991
      %v1997 = vrot.slane %v1996, 4
      %v1999 = vshll.u32 %v1903, 16
      %v2001 = vrot.slane %v1999, 5
      %v2002 = vsel %vm1954, %v1997, %v2001
      %v2004 = vshrl.u32 %v1904, 16
      %v2006 = vrot.slane %v2004, 4
      %v2007 = vshll.u32 %v1904, 16
      %v2009 = vrot.slane %v2007, 5
      %v2010 = vor.u32 %v2006, %v2009
      %v2011 = vrot.slane %v2010, 4
      %v2013 = vshll.u32 %v1905, 16
      %v2015 = vrot.slane %v2013, 5
      %v2016 = vsel %vm1954, %v2011, %v2015
      %v2017 = vshrl.u32 %v1905, 16
      %v2019 = vrot.slane %v2017, 4
      %v2020 = vor.u32 %v2019, %v2015
      %v2021 = vrot.slane %v2020, 4
      %v2023 = vshll.u32 %v1906, 16
      %v2025 = vrot.slane %v2023, 5
      %v2026 = vsel %vm1954, %v2021, %v2025
      %v2028 = vshrl.u32 %v1907, 16
      %v2030 = vrot.slane %v2028, 4
      %v2031 = vshll.u32 %v1907, 16
      %v2033 = vrot.slane %v2031, 5
      %v2034 = vor.u32 %v2030, %v2033
      %v2035 = vrot.slane %v2034, 4
      %v2037 = vshll.u32 %v1908, 16
      %v2039 = vrot.slane %v2037, 5
      %v2040 = vsel %vm1954, %v2035, %v2039
      %v2041 = vshrl.u32 %v1908, 16
      %v2043 = vrot.slane %v2041, 4
      %v2044 = vor.u32 %v2043, %v2039
      %v2045 = vrot.slane %v2044, 4
      %v2047 = vshll.u32 %v1909, 16
      %v2049 = vrot.slane %v2047, 5
      %v2050 = vsel %vm1954, %v2045, %v2049
      %v2052 = vshrl.u32 %v1910, 16
      %v2054 = vrot.slane %v2052, 4
      %v2055 = vshll.u32 %v1910, 16
      %v2057 = vrot.slane %v2055, 5
      %v2058 = vor.u32 %v2054, %v2057
      %v2059 = vrot.slane %v2058, 4
      %v2061 = vshll.u32 %v1911, 16
      %v2063 = vrot.slane %v2061, 5
      %v2064 = vsel %vm1954, %v2059, %v2063
      %v2065 = vshrl.u32 %v1911, 16
      %v2067 = vrot.slane %v2065, 4
      %v2068 = vor.u32 %v2067, %v2063
      %v2069 = vrot.slane %v2068, 4
      %v2071 = vshll.u32 %v1912, 16
      %v2073 = vrot.slane %v2071, 5
      %v2074 = vsel %vm1954, %v2069, %v2073
      %v2076 = vshrl.u32 %v1913, 16
      %v2078 = vrot.slane %v2076, 4
      %v2079 = vshll.u32 %v1913, 16
      %v2081 = vrot.slane %v2079, 5
      %v2082 = vor.u32 %v2078, %v2081
      %v2083 = vrot.slane %v2082, 4
      %v2085 = vshll.u32 %v1914, 16
      %v2087 = vrot.slane %v2085, 5
      %v2088 = vsel %vm1954, %v2083, %v2087
      %v2089 = vshrl.u32 %v1914, 16
      %v2091 = vrot.slane %v2089, 4
      %v2092 = vor.u32 %v2091, %v2087
      %v2093 = vrot.slane %v2092, 4
      %v2095 = vshll.u32 %v1915, 16
      %v2097 = vrot.slane %v2095, 5
      %v2098 = vsel %vm1954, %v2093, %v2097
      %v2100 = vshrl.u32 %v1916, 16
      %v2102 = vrot.slane %v2100, 4
      %v2103 = vshll.u32 %v1916, 16
      %v2105 = vrot.slane %v2103, 5
      %v2106 = vor.u32 %v2102, %v2105
      %v2107 = vrot.slane %v2106, 4
      %v2109 = vshll.u32 %v1917, 16
      %v2111 = vrot.slane %v2109, 5
      %v2112 = vsel %vm1954, %v2107, %v2111
      %v2113 = vshrl.u32 %v1917, 16
      %v2115 = vrot.slane %v2113, 4
      %v2116 = vor.u32 %v2115, %v2111
      %v2117 = vrot.slane %v2116, 4
      %v2119 = vshll.u32 %v1918, 16
      %v2121 = vrot.slane %v2119, 5
      %v2122 = vsel %vm1954, %v2117, %v2121
      %v2124 = vshrl.u32 %v1919, 16
      %v2126 = vrot.slane %v2124, 4
      %v2127 = vshll.u32 %v1919, 16
      %v2129 = vrot.slane %v2127, 5
      %v2130 = vor.u32 %v2126, %v2129
      %v2131 = vrot.slane %v2130, 4
      %v2133 = vshll.u32 %v1920, 16
      %v2135 = vrot.slane %v2133, 5
      %v2136 = vsel %vm1954, %v2131, %v2135
      %v2137 = vshrl.u32 %v1920, 16
      %v2139 = vrot.slane %v2137, 4
      %v2140 = vor.u32 %v2139, %v2135
      %v2141 = vrot.slane %v2140, 4
      %v2143 = vshll.u32 %v1921, 16
      %v2145 = vrot.slane %v2143, 5
      %v2146 = vsel %vm1954, %v2141, %v2145
      %v2148 = vshrl.u32 %v1922, 16
      %v2150 = vrot.slane %v2148, 4
      %v2151 = vshll.u32 %v1922, 16
      %v2153 = vrot.slane %v2151, 5
      %v2154 = vor.u32 %v2150, %v2153
      %v2155 = vrot.slane %v2154, 4
      %v2157 = vshll.u32 %v1923, 16
      %v2159 = vrot.slane %v2157, 5
      %v2160 = vsel %vm1954, %v2155, %v2159
      %v2161 = vshrl.u32 %v1923, 16
      %v2163 = vrot.slane %v2161, 4
      %v2164 = vor.u32 %v2163, %v2159
      %v2165 = vrot.slane %v2164, 4
      %v2167 = vshll.u32 %v1924, 16
      %v2169 = vrot.slane %v2167, 5
      %v2170 = vsel %vm1954, %v2165, %v2169
      %v2172 = vshrl.u32 %v1925, 16
      %v2174 = vrot.slane %v2172, 4
      %v2175 = vshll.u32 %v1925, 16
      %v2177 = vrot.slane %v2175, 5
      %v2178 = vor.u32 %v2174, %v2177
      %v2179 = vrot.slane %v2178, 4
      %v2181 = vshll.u32 %v1926, 16
      %v2183 = vrot.slane %v2181, 5
      %v2184 = vsel %vm1954, %v2179, %v2183
      %v2185 = vshrl.u32 %v1926, 16
      %v2187 = vrot.slane %v2185, 4
      %v2188 = vor.u32 %v2187, %v2183
      %v2189 = vrot.slane %v2188, 4
      %v2191 = vshll.u32 %v1927, 16
      %v2193 = vrot.slane %v2191, 5
      %v2194 = vsel %vm1954, %v2189, %v2193
      %v2196 = vshrl.u32 %v1928, 16
      %v2198 = vrot.slane %v2196, 4
      %v2199 = vshll.u32 %v1928, 16
      %v2201 = vrot.slane %v2199, 5
      %v2202 = vor.u32 %v2198, %v2201
      %v2203 = vrot.slane %v2202, 4
      %v2205 = vshll.u32 %v1929, 16
      %v2207 = vrot.slane %v2205, 5
      %v2208 = vsel %vm1954, %v2203, %v2207
      %v2209 = vshrl.u32 %v1929, 16
      %v2211 = vrot.slane %v2209, 4
      %v2212 = vor.u32 %v2211, %v2207
      %v2213 = vrot.slane %v2212, 4
      %v2215 = vshll.u32 %v1930, 16
      %v2217 = vrot.slane %v2215, 5
      %v2218 = vsel %vm1954, %v2213, %v2217
      %v2220 = vshrl.u32 %v1931, 16
      %v2222 = vrot.slane %v2220, 4
      %v2223 = vshll.u32 %v1931, 16
      %v2225 = vrot.slane %v2223, 5
      %v2226 = vor.u32 %v2222, %v2225
      %v2227 = vrot.slane %v2226, 4
      %v2229 = vshll.u32 %v1932, 16
      %v2231 = vrot.slane %v2229, 5
      %v2232 = vsel %vm1954, %v2227, %v2231
      %v2233 = vshrl.u32 %v1932, 16
      %v2235 = vrot.slane %v2233, 4
      %v2236 = vor.u32 %v2235, %v2231
      %v2237 = vrot.slane %v2236, 4
      %v2239 = vshll.u32 %v1933, 16
      %v2241 = vrot.slane %v2239, 5
      %v2242 = vsel %vm1954, %v2237, %v2241
      %v2244 = vshrl.u32 %v1934, 16
      %v2246 = vrot.slane %v2244, 4
      %v2247 = vshll.u32 %v1934, 16
      %v2249 = vrot.slane %v2247, 5
      %v2250 = vor.u32 %v2246, %v2249
      %v2251 = vrot.slane %v2250, 4
      %v2253 = vshll.u32 %v1935, 16
      %v2255 = vrot.slane %v2253, 5
      %v2256 = vsel %vm1954, %v2251, %v2255
      %v2257 = vshrl.u32 %v1935, 16
      %v2259 = vrot.slane %v2257, 4
      %v2260 = vor.u32 %v2259, %v2255
      %v2261 = vrot.slane %v2260, 4
      %v2263 = vshll.u32 %v1936, 16
      %v2265 = vrot.slane %v2263, 5
      %v2266 = vsel %vm1954, %v2261, %v2265
      %v2268 = vshrl.u32 %v1937, 16
      %v2270 = vrot.slane %v2268, 4
      %v2271 = vshll.u32 %v1937, 16
      %v2273 = vrot.slane %v2271, 5
      %v2274 = vor.u32 %v2270, %v2273
      %v2275 = vrot.slane %v2274, 4
      %v2277 = vshll.u32 %v1938, 16
      %v2279 = vrot.slane %v2277, 5
      %v2280 = vsel %vm1954, %v2275, %v2279
      %v2281 = vshrl.u32 %v1938, 16
      %v2283 = vrot.slane %v2281, 4
      %v2284 = vor.u32 %v2283, %v2279
      %v2285 = vrot.slane %v2284, 4
      %v2287 = vshll.u32 %v1939, 16
      %v2289 = vrot.slane %v2287, 5
      %v2290 = vsel %vm1954, %v2285, %v2289
      %v2292 = vshrl.u32 %v1940, 16
      %v2294 = vrot.slane %v2292, 4
      %v2295 = vshll.u32 %v1940, 16
      %v2297 = vrot.slane %v2295, 5
      %v2298 = vor.u32 %v2294, %v2297
      %v2299 = vrot.slane %v2298, 4
      %v2301 = vshll.u32 %v1941, 16
      %v2303 = vrot.slane %v2301, 5
      %v2304 = vsel %vm1954, %v2299, %v2303
      %v2305 = vshrl.u32 %v1941, 16
      %v2307 = vrot.slane %v2305, 4
      %v2308 = vor.u32 %v2307, %v2303
      %v2309 = vrot.slane %v2308, 4
      %v2311 = vshll.u32 %v1942, 16
      %v2313 = vrot.slane %v2311, 5
      %v2314 = vsel %vm1954, %v2309, %v2313
      %v2316 = vshrl.u32 %v1943, 16
      %v2318 = vrot.slane %v2316, 4
      %v2319 = vshll.u32 %v1943, 16
      %v2321 = vrot.slane %v2319, 5
      %v2322 = vor.u32 %v2318, %v2321
      %v2323 = vrot.slane %v2322, 4
      %v2325 = vshll.u32 %v1944, 16
      %v2327 = vrot.slane %v2325, 5
      %v2328 = vsel %vm1954, %v2323, %v2327
      %v2329 = vshrl.u32 %v1944, 16
      %v2331 = vrot.slane %v2329, 4
      %v2332 = vor.u32 %v2331, %v2327
      %v2333 = vrot.slane %v2332, 4
      %v2335 = vshll.u32 %v1945, 16
      %v2337 = vrot.slane %v2335, 5
      %v2338 = vsel %vm1954, %v2333, %v2337
      %s2339 = scalar_lea.vmem %s1, 64
      %v2340 = vld [vmem:[%s2339] sm:$0xf]
      %v2341 = vld [vmem:[%s2339 + $0x4] sm:$0xf]
      %v2342 = vld [vmem:[%s2339 + $0x8] sm:$0xf]
      %v2343 = vld [vmem:[%s2339 + $0xc] sm:$0xf]
      %v2344 = vld [vmem:[%s2339 + $0x10] sm:$0xf]
      %v2345 = vld [vmem:[%s2339 + $0x14] sm:$0xf]
      %v2346 = vld [vmem:[%s2339 + $0x18] sm:$0xf]
      %v2347 = vld [vmem:[%s2339 + $0x1c] sm:$0xf]
      %v2348 = vld [vmem:[%s2339 + $0x20] sm:$0xf]
      %v2349 = vld [vmem:[%s2339 + $0x24] sm:$0xf]
      %v2350 = vld [vmem:[%s2339 + $0x28] sm:$0xf]
      %v2351 = vld [vmem:[%s2339 + $0x2c] sm:$0xf]
      %v2352 = vld [vmem:[%s2339 + $0x30] sm:$0xf]
      %v2353 = vld [vmem:[%s2339 + $0x34] sm:$0xf]
      %v2354 = vld [vmem:[%s2339 + $0x38] sm:$0xf]
      %v2355 = vld [vmem:[%s2339 + $0x3c] sm:$0xf]
      %v2356 = vunpack.c.l.b16 %v1968
      %v2357 = vunpack.c.l.b16 %v1978
      %v2358 = vunpack.c.l.b16 %v1992
      %v2359 = vunpack.c.l.b16 %v2002
      %v2360 = vunpack.c.l.b16 %v2016
      %v2361 = vunpack.c.l.b16 %v2026
      %v2362 = vunpack.c.l.b16 %v2040
      %v2363 = vunpack.c.l.b16 %v2050
      %v2364 = vunpack.c.l.b16 %v2064
      %v2365 = vunpack.c.l.b16 %v2074
      %v2366 = vunpack.c.l.b16 %v2088
      %v2367 = vunpack.c.l.b16 %v2098
      %v2368 = vunpack.c.l.b16 %v2112
      %v2369 = vunpack.c.l.b16 %v2122
      %v2370 = vunpack.c.l.b16 %v2136
      %v2371 = vunpack.c.l.b16 %v2146
      %v2372 = vunpack.c.l.b16 %v2160
      %v2373 = vunpack.c.l.b16 %v2170
      %v2374 = vunpack.c.l.b16 %v2184
      %v2375 = vunpack.c.l.b16 %v2194
      %v2376 = vunpack.c.l.b16 %v2208
      %v2377 = vunpack.c.l.b16 %v2218
      %v2378 = vunpack.c.l.b16 %v2232
      %v2379 = vunpack.c.l.b16 %v2242
      %v2380 = vunpack.c.l.b16 %v2256
      %v2381 = vunpack.c.l.b16 %v2266
      %v2382 = vunpack.c.l.b16 %v2280
      %v2383 = vunpack.c.l.b16 %v2290
      %v2384 = vunpack.c.l.b16 %v2304
      %v2385 = vunpack.c.l.b16 %v2314
      %v2386 = vunpack.c.l.b16 %v2328
      %v2387 = vunpack.c.l.b16 %v2338
      %v2388 = vpack.c.b16 %v2357, %v2356
      %v2389 = vpack.c.b16 %v2359, %v2358
      %v2390 = vpack.c.b16 %v2361, %v2360
      %v2391 = vpack.c.b16 %v2363, %v2362
      %v2392 = vpack.c.b16 %v2365, %v2364
      %v2393 = vpack.c.b16 %v2367, %v2366
      %v2394 = vpack.c.b16 %v2369, %v2368
      %v2395 = vpack.c.b16 %v2371, %v2370
      %v2396 = vpack.c.b16 %v2373, %v2372
      %v2397 = vpack.c.b16 %v2375, %v2374
      %v2398 = vpack.c.b16 %v2377, %v2376
      %v2399 = vpack.c.b16 %v2379, %v2378
      %v2400 = vpack.c.b16 %v2381, %v2380
      %v2401 = vpack.c.b16 %v2383, %v2382
      %v2402 = vpack.c.b16 %v2385, %v2384
      %v2403 = vpack.c.b16 %v2387, %v2386
      %v2436 = vunpack.c.l.b16 %v2340
      %v2437 = vunpack.c.l.b16 %v2341
      %v2438 = vunpack.c.l.b16 %v2342
      %v2439 = vunpack.c.l.b16 %v2343
      %v2440 = vunpack.c.l.b16 %v2344
      %v2441 = vunpack.c.l.b16 %v2345
      %v2442 = vunpack.c.l.b16 %v2346
      %v2443 = vunpack.c.l.b16 %v2347
      %v2444 = vunpack.c.l.b16 %v2348
      %v2445 = vunpack.c.l.b16 %v2349
      %v2446 = vunpack.c.l.b16 %v2350
      %v2447 = vunpack.c.l.b16 %v2351
      %v2448 = vunpack.c.l.b16 %v2352
      %v2449 = vunpack.c.l.b16 %v2353
      %v2450 = vunpack.c.l.b16 %v2354
      %v2451 = vunpack.c.l.b16 %v2355
      %v2452 = vpack.c.b16 %v2437, %v2436
      %v2453 = vpack.c.b16 %v2439, %v2438
      %v2454 = vpack.c.b16 %v2441, %v2440
      %v2455 = vpack.c.b16 %v2443, %v2442
      %v2456 = vpack.c.b16 %v2445, %v2444
      %v2457 = vpack.c.b16 %v2447, %v2446
      %v2458 = vpack.c.b16 %v2449, %v2448
      %v2459 = vpack.c.b16 %v2451, %v2450
      %2468 = vmatprep.subr.bf16.mxu0 0
      %2469 = vmatpush1.bf16.msra.mxu0 %v2459
      %2470 = vmatprep.subr.bf16.mxu0 0
      %2471 = vmatpush1.bf16.msra.mxu0 %v2458
      %2472 = vmatprep.subr.bf16.mxu0 0
      %2473 = vmatpush1.bf16.msra.mxu0 %v2457
      %2474 = vmatprep.subr.bf16.mxu0 0
      %2475 = vmatpush1.bf16.msra.mxu0 %v2456
      %2476 = vmatprep.subr.bf16.mxu0 0
      %2477 = vmatpush1.bf16.msra.mxu0 %v2455
      %2478 = vmatprep.subr.bf16.mxu0 0
      %2479 = vmatpush1.bf16.msra.mxu0 %v2454
      %2480 = vmatprep.subr.bf16.mxu0 0
      %2481 = vmatpush1.bf16.msra.mxu0 %v2453
      %2482 = vmatprep.subr.bf16.mxu0 0
      %2483 = vmatpush1.bf16.msra.mxu0 %v2452
      %2484 = vmatprep.subr.bf16.mxu0 0
      %2485 = vmatpush2.bf16.msra.mxu0 0
      %2486 = vmatprep.subr.bf16.mxu0 0
      %2487 = vmatpush2.bf16.msra.mxu0 0
      %2488 = vmatprep.subr.bf16.mxu0 0
      %2489 = vmatpush2.bf16.msra.mxu0 0
      %2490 = vmatprep.subr.bf16.mxu0 0
      %2491 = vmatpush2.bf16.msra.mxu0 0
      %2492 = vmatprep.subr.bf16.mxu0 0
      %2493 = vmatpush2.bf16.msra.mxu0 0
      %2494 = vmatprep.subr.bf16.mxu0 0
      %2495 = vmatpush2.bf16.msra.mxu0 0
      %2496 = vmatprep.subr.bf16.mxu0 0
      %2497 = vmatpush2.bf16.msra.mxu0 0
      %2498 = vmatprep.subr.bf16.mxu0 0
      %2499 = vmatpush2.bf16.msra.mxu0 0
      %2500 = vmatprep.mubr.bf16.mxu0 0
      %2501 = vmatmul.mubr.bf16.gmra.mxu0 %v2388
      %v2502 = vpop.f32.mrf.mxu0
      %v2503 = vadd.f32 0.0, %v2502
      %v2504 = vpop.f32.mrf.mxu0
      %v2505 = vpop.f32.mrf.mxu0
      %v2506 = vadd.f32 0.0, %v2505
      %v2507 = vpop.f32.mrf.mxu0
      %2508 = vmatprep.mubr.bf16.mxu0 0
      %2509 = vmatmul.mubr.bf16.gmra.mxu0 %v2389
      %v2510 = vpop.f32.mrf.mxu0
      %v2511 = vadd.f32 0.0, %v2510
      %v2512 = vpop.f32.mrf.mxu0
      %v2513 = vpop.f32.mrf.mxu0
      %v2514 = vadd.f32 0.0, %v2513
      %v2515 = vpop.f32.mrf.mxu0
      %2516 = vmatprep.mubr.bf16.mxu0 0
      %2517 = vmatmul.mubr.bf16.gmra.mxu0 %v2390
      %v2518 = vpop.f32.mrf.mxu0
      %v2519 = vadd.f32 0.0, %v2518
      %v2520 = vpop.f32.mrf.mxu0
      %v2521 = vpop.f32.mrf.mxu0
      %v2522 = vadd.f32 0.0, %v2521
      %v2523 = vpop.f32.mrf.mxu0
      %2524 = vmatprep.mubr.bf16.mxu0 0
      %2525 = vmatmul.mubr.bf16.gmra.mxu0 %v2391
      %v2526 = vpop.f32.mrf.mxu0
      %v2527 = vadd.f32 0.0, %v2526
      %v2528 = vpop.f32.mrf.mxu0
      %v2529 = vpop.f32.mrf.mxu0
      %v2530 = vadd.f32 0.0, %v2529
      %v2531 = vpop.f32.mrf.mxu0
      %2532 = vmatprep.mubr.bf16.mxu0 0
      %2533 = vmatmul.mubr.bf16.gmra.mxu0 %v2392
      %v2534 = vpop.f32.mrf.mxu0
      %v2535 = vadd.f32 0.0, %v2534
      %v2536 = vpop.f32.mrf.mxu0
      %v2537 = vpop.f32.mrf.mxu0
      %v2538 = vadd.f32 0.0, %v2537
      %v2539 = vpop.f32.mrf.mxu0
      %2540 = vmatprep.mubr.bf16.mxu0 0
      %2541 = vmatmul.mubr.bf16.gmra.mxu0 %v2393
      %v2542 = vpop.f32.mrf.mxu0
      %v2543 = vadd.f32 0.0, %v2542
      %v2544 = vpop.f32.mrf.mxu0
      %v2545 = vpop.f32.mrf.mxu0
      %v2546 = vadd.f32 0.0, %v2545
      %v2547 = vpop.f32.mrf.mxu0
      %2548 = vmatprep.mubr.bf16.mxu0 0
      %2549 = vmatmul.mubr.bf16.gmra.mxu0 %v2394
      %v2550 = vpop.f32.mrf.mxu0
      %v2551 = vadd.f32 0.0, %v2550
      %v2552 = vpop.f32.mrf.mxu0
      %v2553 = vpop.f32.mrf.mxu0
      %v2554 = vadd.f32 0.0, %v2553
      %v2555 = vpop.f32.mrf.mxu0
      %2556 = vmatprep.mubr.bf16.mxu0 0
      %2557 = vmatmul.mubr.bf16.gmra.mxu0 %v2395
      %v2558 = vpop.f32.mrf.mxu0
      %v2559 = vadd.f32 0.0, %v2558
      %v2560 = vpop.f32.mrf.mxu0
      %v2561 = vpop.f32.mrf.mxu0
      %v2562 = vadd.f32 0.0, %v2561
      %v2563 = vpop.f32.mrf.mxu0
      %2564 = vmatprep.mubr.bf16.mxu0 0
      %2565 = vmatmul.mubr.bf16.gmra.mxu0 %v2396
      %v2566 = vpop.f32.mrf.mxu0
      %v2567 = vadd.f32 0.0, %v2566
      %v2568 = vpop.f32.mrf.mxu0
      %v2569 = vpop.f32.mrf.mxu0
      %v2570 = vadd.f32 0.0, %v2569
      %v2571 = vpop.f32.mrf.mxu0
      %2572 = vmatprep.mubr.bf16.mxu0 0
      %2573 = vmatmul.mubr.bf16.gmra.mxu0 %v2397
      %v2574 = vpop.f32.mrf.mxu0
      %v2575 = vadd.f32 0.0, %v2574
      %v2576 = vpop.f32.mrf.mxu0
      %v2577 = vpop.f32.mrf.mxu0
      %v2578 = vadd.f32 0.0, %v2577
      %v2579 = vpop.f32.mrf.mxu0
      %2580 = vmatprep.mubr.bf16.mxu0 0
      %2581 = vmatmul.mubr.bf16.gmra.mxu0 %v2398
      %v2582 = vpop.f32.mrf.mxu0
      %v2583 = vadd.f32 0.0, %v2582
      %v2584 = vpop.f32.mrf.mxu0
      %v2585 = vpop.f32.mrf.mxu0
      %v2586 = vadd.f32 0.0, %v2585
      %v2587 = vpop.f32.mrf.mxu0
      %2588 = vmatprep.mubr.bf16.mxu0 0
      %2589 = vmatmul.mubr.bf16.gmra.mxu0 %v2399
      %v2590 = vpop.f32.mrf.mxu0
      %v2591 = vadd.f32 0.0, %v2590
      %v2592 = vpop.f32.mrf.mxu0
      %v2593 = vpop.f32.mrf.mxu0
      %v2594 = vadd.f32 0.0, %v2593
      %v2595 = vpop.f32.mrf.mxu0
      %2596 = vmatprep.mubr.bf16.mxu0 0
      %2597 = vmatmul.mubr.bf16.gmra.mxu0 %v2400
      %v2598 = vpop.f32.mrf.mxu0
      %v2599 = vadd.f32 0.0, %v2598
      %v2600 = vpop.f32.mrf.mxu0
      %v2601 = vpop.f32.mrf.mxu0
      %v2602 = vadd.f32 0.0, %v2601
      %v2603 = vpop.f32.mrf.mxu0
      %2604 = vmatprep.mubr.bf16.mxu0 0
      %2605 = vmatmul.mubr.bf16.gmra.mxu0 %v2401
      %v2606 = vpop.f32.mrf.mxu0
      %v2607 = vadd.f32 0.0, %v2606
      %v2608 = vpop.f32.mrf.mxu0
      %v2609 = vpop.f32.mrf.mxu0
      %v2610 = vadd.f32 0.0, %v2609
      %v2611 = vpop.f32.mrf.mxu0
      %2612 = vmatprep.mubr.bf16.mxu0 0
      %2613 = vmatmul.mubr.bf16.gmra.mxu0 %v2402
      %v2614 = vpop.f32.mrf.mxu0
      %v2615 = vadd.f32 0.0, %v2614
      %v2616 = vpop.f32.mrf.mxu0
      %v2617 = vpop.f32.mrf.mxu0
      %v2618 = vadd.f32 0.0, %v2617
      %v2619 = vpop.f32.mrf.mxu0
      %2620 = vmatprep.mubr.bf16.mxu0 0
      %2621 = vmatmul.mubr.bf16.gmra.mxu0 %v2403
      %v2622 = vpop.f32.mrf.mxu0
      %v2623 = vadd.f32 0.0, %v2622
      %v2624 = vpop.f32.mrf.mxu0
      %v2625 = vpop.f32.mrf.mxu0
      %v2626 = vadd.f32 0.0, %v2625
      %v2627 = vpop.f32.mrf.mxu0
      %2628 = vdwg.mxu0
      %v2629 = vadd.f32 %v1866, %v2503
      %v2630 = vadd.f32 %v1867, %v2506
      %v2631 = vadd.f32 %v1868, %v2511
      %v2632 = vadd.f32 %v1869, %v2514
      %v2633 = vadd.f32 %v1870, %v2519
      %v2634 = vadd.f32 %v1871, %v2522
      %v2635 = vadd.f32 %v1872, %v2527
      %v2636 = vadd.f32 %v1873, %v2530
      %v2637 = vadd.f32 %v1874, %v2535
      %v2638 = vadd.f32 %v1875, %v2538
      %v2639 = vadd.f32 %v1876, %v2543
      %v2640 = vadd.f32 %v1877, %v2546
      %v2641 = vadd.f32 %v1878, %v2551
      %v2642 = vadd.f32 %v1879, %v2554
      %v2643 = vadd.f32 %v1880, %v2559
      %v2644 = vadd.f32 %v1881, %v2562
      %v2645 = vadd.f32 %v1882, %v2567
      %v2646 = vadd.f32 %v1883, %v2570
      %v2647 = vadd.f32 %v1884, %v2575
      %v2648 = vadd.f32 %v1885, %v2578
      %v2649 = vadd.f32 %v1886, %v2583
      %v2650 = vadd.f32 %v1887, %v2586
      %v2651 = vadd.f32 %v1888, %v2591
      %v2652 = vadd.f32 %v1889, %v2594
      %v2653 = vadd.f32 %v1890, %v2599
      %v2654 = vadd.f32 %v1891, %v2602
      %v2655 = vadd.f32 %v1892, %v2607
      %v2656 = vadd.f32 %v1893, %v2610
      %v2657 = vadd.f32 %v1894, %v2615
      %v2658 = vadd.f32 %v1895, %v2618
      %v2659 = vadd.f32 %v1896, %v2623
      %v2660 = vadd.f32 %v1897, %v2626
      %v2662 = vshrl.u32 %v1946, 16
      %v2664 = vrot.slane %v2662, 4
      %v2665 = vshll.u32 %v1946, 16
      %v2667 = vrot.slane %v2665, 5
      %v2668 = vor.u32 %v2664, %v2667
      %v2669 = vrot.slane %v2668, 4
      %v2671 = vshll.u32 %v1947, 16
      %v2673 = vrot.slane %v2671, 5
      %v2674 = vsel %vm1954, %v2669, %v2673
      %v2675 = vshrl.u32 %v1947, 16
      %v2677 = vrot.slane %v2675, 4
      %v2678 = vor.u32 %v2677, %v2673
      %v2679 = vrot.slane %v2678, 4
      %v2681 = vshll.u32 %v1948, 16
      %v2683 = vrot.slane %v2681, 5
      %v2684 = vsel %vm1954, %v2679, %v2683
      %s2685 = scalar_lea.vmem %s1, 256
      %v2686 = vld [vmem:[%s2685] sm:$0xf]
      %v2687 = vld [vmem:[%s2685 + $0x4] sm:$0xf]
      %v2688 = vld [vmem:[%s2685 + $0x8] sm:$0xf]
      %v2689 = vld [vmem:[%s2685 + $0xc] sm:$0xf]
      %v2690 = vld [vmem:[%s2685 + $0x10] sm:$0xf]
      %v2691 = vld [vmem:[%s2685 + $0x14] sm:$0xf]
      %v2692 = vld [vmem:[%s2685 + $0x18] sm:$0xf]
      %v2693 = vld [vmem:[%s2685 + $0x1c] sm:$0xf]
      %v2694 = vld [vmem:[%s2685 + $0x20] sm:$0xf]
      %v2695 = vld [vmem:[%s2685 + $0x24] sm:$0xf]
      %v2696 = vld [vmem:[%s2685 + $0x28] sm:$0xf]
      %v2697 = vld [vmem:[%s2685 + $0x2c] sm:$0xf]
      %v2698 = vld [vmem:[%s2685 + $0x30] sm:$0xf]
      %v2699 = vld [vmem:[%s2685 + $0x34] sm:$0xf]
      %v2700 = vld [vmem:[%s2685 + $0x38] sm:$0xf]
      %v2701 = vld [vmem:[%s2685 + $0x3c] sm:$0xf]
      %v2702 = vunpack.c.l.b16 %v2674
      %v2703 = vunpack.c.l.b16 %v2684
      %v2704 = vpack.c.b16 %v2703, %v2702
      %v2722 = vunpack.c.l.b16 %v2686
      %v2723 = vunpack.c.l.b16 %v2687
      %v2724 = vunpack.c.l.b16 %v2688
      %v2725 = vunpack.c.l.b16 %v2689
      %v2726 = vunpack.c.l.b16 %v2690
      %v2727 = vunpack.c.l.b16 %v2691
      %v2728 = vunpack.c.l.b16 %v2692
      %v2729 = vunpack.c.l.b16 %v2693
      %v2730 = vunpack.c.l.b16 %v2694
      %v2731 = vunpack.c.l.b16 %v2695
      %v2732 = vunpack.c.l.b16 %v2696
      %v2733 = vunpack.c.l.b16 %v2697
      %v2734 = vunpack.c.l.b16 %v2698
      %v2735 = vunpack.c.l.b16 %v2699
      %v2736 = vunpack.c.l.b16 %v2700
      %v2737 = vunpack.c.l.b16 %v2701
      %v2738 = vpack.c.b16 %v2723, %v2722
      %v2739 = vpack.c.b16 %v2725, %v2724
      %v2740 = vpack.c.b16 %v2727, %v2726
      %v2741 = vpack.c.b16 %v2729, %v2728
      %v2742 = vpack.c.b16 %v2731, %v2730
      %v2743 = vpack.c.b16 %v2733, %v2732
      %v2744 = vpack.c.b16 %v2735, %v2734
      %v2745 = vpack.c.b16 %v2737, %v2736
      %2754 = vmatprep.subr.bf16.mxu0 0
      %2755 = vmatpush1.bf16.msra.mxu0 %v2745
      %2756 = vmatprep.subr.bf16.mxu0 0
      %2757 = vmatpush1.bf16.msra.mxu0 %v2744
      %2758 = vmatprep.subr.bf16.mxu0 0
      %2759 = vmatpush1.bf16.msra.mxu0 %v2743
      %2760 = vmatprep.subr.bf16.mxu0 0
      %2761 = vmatpush1.bf16.msra.mxu0 %v2742
      %2762 = vmatprep.subr.bf16.mxu0 0
      %2763 = vmatpush1.bf16.msra.mxu0 %v2741
      %2764 = vmatprep.subr.bf16.mxu0 0
      %2765 = vmatpush1.bf16.msra.mxu0 %v2740
      %2766 = vmatprep.subr.bf16.mxu0 0
      %2767 = vmatpush1.bf16.msra.mxu0 %v2739
      %2768 = vmatprep.subr.bf16.mxu0 0
      %2769 = vmatpush1.bf16.msra.mxu0 %v2738
      %2770 = vmatprep.subr.bf16.mxu0 0
      %2771 = vmatpush2.bf16.msra.mxu0 0
      %2772 = vmatprep.subr.bf16.mxu0 0
      %2773 = vmatpush2.bf16.msra.mxu0 0
      %2774 = vmatprep.subr.bf16.mxu0 0
      %2775 = vmatpush2.bf16.msra.mxu0 0
      %2776 = vmatprep.subr.bf16.mxu0 0
      %2777 = vmatpush2.bf16.msra.mxu0 0
      %2778 = vmatprep.subr.bf16.mxu0 0
      %2779 = vmatpush2.bf16.msra.mxu0 0
      %2780 = vmatprep.subr.bf16.mxu0 0
      %2781 = vmatpush2.bf16.msra.mxu0 0
      %2782 = vmatprep.subr.bf16.mxu0 0
      %2783 = vmatpush2.bf16.msra.mxu0 0
      %2784 = vmatprep.subr.bf16.mxu0 0
      %2785 = vmatpush2.bf16.msra.mxu0 0
      %2786 = vmatprep.mubr.bf16.mxu0 0
      %2787 = vmatmul.mubr.bf16.gmra.mxu0 %v2389
      %v2788 = vpop.f32.mrf.mxu0
      %v2789 = vadd.f32 0.0, %v2788
      %v2790 = vpop.f32.mrf.mxu0
      %v2791 = vpop.f32.mrf.mxu0
      %v2792 = vadd.f32 0.0, %v2791
      %v2793 = vpop.f32.mrf.mxu0
      %2794 = vmatprep.mubr.bf16.mxu0 0
      %2795 = vmatmul.mubr.bf16.gmra.mxu0 %v2390
      %v2796 = vpop.f32.mrf.mxu0
      %v2797 = vadd.f32 0.0, %v2796
      %v2798 = vpop.f32.mrf.mxu0
      %v2799 = vpop.f32.mrf.mxu0
      %v2800 = vadd.f32 0.0, %v2799
      %v2801 = vpop.f32.mrf.mxu0
      %2802 = vmatprep.mubr.bf16.mxu0 0
      %2803 = vmatmul.mubr.bf16.gmra.mxu0 %v2391
      %v2804 = vpop.f32.mrf.mxu0
      %v2805 = vadd.f32 0.0, %v2804
      %v2806 = vpop.f32.mrf.mxu0
      %v2807 = vpop.f32.mrf.mxu0
      %v2808 = vadd.f32 0.0, %v2807
      %v2809 = vpop.f32.mrf.mxu0
      %2810 = vmatprep.mubr.bf16.mxu0 0
      %2811 = vmatmul.mubr.bf16.gmra.mxu0 %v2392
      %v2812 = vpop.f32.mrf.mxu0
      %v2813 = vadd.f32 0.0, %v2812
      %v2814 = vpop.f32.mrf.mxu0
      %v2815 = vpop.f32.mrf.mxu0
      %v2816 = vadd.f32 0.0, %v2815
      %v2817 = vpop.f32.mrf.mxu0
      %2818 = vmatprep.mubr.bf16.mxu0 0
      %2819 = vmatmul.mubr.bf16.gmra.mxu0 %v2393
      %v2820 = vpop.f32.mrf.mxu0
      %v2821 = vadd.f32 0.0, %v2820
      %v2822 = vpop.f32.mrf.mxu0
      %v2823 = vpop.f32.mrf.mxu0
      %v2824 = vadd.f32 0.0, %v2823
      %v2825 = vpop.f32.mrf.mxu0
      %2826 = vmatprep.mubr.bf16.mxu0 0
      %2827 = vmatmul.mubr.bf16.gmra.mxu0 %v2394
      %v2828 = vpop.f32.mrf.mxu0
      %v2829 = vadd.f32 0.0, %v2828
      %v2830 = vpop.f32.mrf.mxu0
      %v2831 = vpop.f32.mrf.mxu0
      %v2832 = vadd.f32 0.0, %v2831
      %v2833 = vpop.f32.mrf.mxu0
      %2834 = vmatprep.mubr.bf16.mxu0 0
      %2835 = vmatmul.mubr.bf16.gmra.mxu0 %v2395
      %v2836 = vpop.f32.mrf.mxu0
      %v2837 = vadd.f32 0.0, %v2836
      %v2838 = vpop.f32.mrf.mxu0
      %v2839 = vpop.f32.mrf.mxu0
      %v2840 = vadd.f32 0.0, %v2839
      %v2841 = vpop.f32.mrf.mxu0
      %2842 = vmatprep.mubr.bf16.mxu0 0
      %2843 = vmatmul.mubr.bf16.gmra.mxu0 %v2396
      %v2844 = vpop.f32.mrf.mxu0
      %v2845 = vadd.f32 0.0, %v2844
      %v2846 = vpop.f32.mrf.mxu0
      %v2847 = vpop.f32.mrf.mxu0
      %v2848 = vadd.f32 0.0, %v2847
      %v2849 = vpop.f32.mrf.mxu0
      %2850 = vmatprep.mubr.bf16.mxu0 0
      %2851 = vmatmul.mubr.bf16.gmra.mxu0 %v2397
      %v2852 = vpop.f32.mrf.mxu0
      %v2853 = vadd.f32 0.0, %v2852
      %v2854 = vpop.f32.mrf.mxu0
      %v2855 = vpop.f32.mrf.mxu0
      %v2856 = vadd.f32 0.0, %v2855
      %v2857 = vpop.f32.mrf.mxu0
      %2858 = vmatprep.mubr.bf16.mxu0 0
      %2859 = vmatmul.mubr.bf16.gmra.mxu0 %v2398
      %v2860 = vpop.f32.mrf.mxu0
      %v2861 = vadd.f32 0.0, %v2860
      %v2862 = vpop.f32.mrf.mxu0
      %v2863 = vpop.f32.mrf.mxu0
      %v2864 = vadd.f32 0.0, %v2863
      %v2865 = vpop.f32.mrf.mxu0
      %2866 = vmatprep.mubr.bf16.mxu0 0
      %2867 = vmatmul.mubr.bf16.gmra.mxu0 %v2399
      %v2868 = vpop.f32.mrf.mxu0
      %v2869 = vadd.f32 0.0, %v2868
      %v2870 = vpop.f32.mrf.mxu0
      %v2871 = vpop.f32.mrf.mxu0
      %v2872 = vadd.f32 0.0, %v2871
      %v2873 = vpop.f32.mrf.mxu0
      %2874 = vmatprep.mubr.bf16.mxu0 0
      %2875 = vmatmul.mubr.bf16.gmra.mxu0 %v2400
      %v2876 = vpop.f32.mrf.mxu0
      %v2877 = vadd.f32 0.0, %v2876
      %v2878 = vpop.f32.mrf.mxu0
      %v2879 = vpop.f32.mrf.mxu0
      %v2880 = vadd.f32 0.0, %v2879
      %v2881 = vpop.f32.mrf.mxu0
      %2882 = vmatprep.mubr.bf16.mxu0 0
      %2883 = vmatmul.mubr.bf16.gmra.mxu0 %v2401
      %v2884 = vpop.f32.mrf.mxu0
      %v2885 = vadd.f32 0.0, %v2884
      %v2886 = vpop.f32.mrf.mxu0
      %v2887 = vpop.f32.mrf.mxu0
      %v2888 = vadd.f32 0.0, %v2887
      %v2889 = vpop.f32.mrf.mxu0
      %2890 = vmatprep.mubr.bf16.mxu0 0
      %2891 = vmatmul.mubr.bf16.gmra.mxu0 %v2402
      %v2892 = vpop.f32.mrf.mxu0
      %v2893 = vadd.f32 0.0, %v2892
      %v2894 = vpop.f32.mrf.mxu0
      %v2895 = vpop.f32.mrf.mxu0
      %v2896 = vadd.f32 0.0, %v2895
      %v2897 = vpop.f32.mrf.mxu0
      %2898 = vmatprep.mubr.bf16.mxu0 0
      %2899 = vmatmul.mubr.bf16.gmra.mxu0 %v2403
      %v2900 = vpop.f32.mrf.mxu0
      %v2901 = vadd.f32 0.0, %v2900
      %v2902 = vpop.f32.mrf.mxu0
      %v2903 = vpop.f32.mrf.mxu0
      %v2904 = vadd.f32 0.0, %v2903
      %v2905 = vpop.f32.mrf.mxu0
      %2906 = vmatprep.mubr.bf16.mxu0 0
      %2907 = vmatmul.mubr.bf16.gmra.mxu0 %v2704
      %v2908 = vpop.f32.mrf.mxu0
      %v2909 = vadd.f32 0.0, %v2908
      %v2910 = vpop.f32.mrf.mxu0
      %v2911 = vpop.f32.mrf.mxu0
      %v2912 = vadd.f32 0.0, %v2911
      %v2913 = vpop.f32.mrf.mxu0
      %2914 = vdwg.mxu0
      %v2915 = vadd.f32 %v2629, %v2789
      %v2916 = vadd.f32 %v2630, %v2792
      %v2917 = vadd.f32 %v2631, %v2797
      %v2918 = vadd.f32 %v2632, %v2800
      %v2919 = vadd.f32 %v2633, %v2805
      %v2920 = vadd.f32 %v2634, %v2808
      %v2921 = vadd.f32 %v2635, %v2813
      %v2922 = vadd.f32 %v2636, %v2816
      %v2923 = vadd.f32 %v2637, %v2821
      %v2924 = vadd.f32 %v2638, %v2824
      %v2925 = vadd.f32 %v2639, %v2829
      %v2926 = vadd.f32 %v2640, %v2832
      %v2927 = vadd.f32 %v2641, %v2837
      %v2928 = vadd.f32 %v2642, %v2840
      %v2929 = vadd.f32 %v2643, %v2845
      %v2930 = vadd.f32 %v2644, %v2848
      %v2931 = vadd.f32 %v2645, %v2853
      %v2932 = vadd.f32 %v2646, %v2856
      %v2933 = vadd.f32 %v2647, %v2861
      %v2934 = vadd.f32 %v2648, %v2864
      %v2935 = vadd.f32 %v2649, %v2869
      %v2936 = vadd.f32 %v2650, %v2872
      %v2937 = vadd.f32 %v2651, %v2877
      %v2938 = vadd.f32 %v2652, %v2880
      %v2939 = vadd.f32 %v2653, %v2885
      %v2940 = vadd.f32 %v2654, %v2888
      %v2941 = vadd.f32 %v2655, %v2893
      %v2942 = vadd.f32 %v2656, %v2896
      %v2943 = vadd.f32 %v2657, %v2901
      %v2944 = vadd.f32 %v2658, %v2904
      %v2945 = vadd.f32 %v2659, %v2909
      %v2946 = vadd.f32 %v2660, %v2912
      %v2948 = vshrl.u32 %v1949, 16
      %v2950 = vrot.slane %v2948, 4
      %v2951 = vshll.u32 %v1949, 16
      %v2953 = vrot.slane %v2951, 5
      %v2954 = vor.u32 %v2950, %v2953
      %v2955 = vrot.slane %v2954, 4
      %v2957 = vshll.u32 %v1950, 16
      %v2959 = vrot.slane %v2957, 5
      %v2960 = vsel %vm1954, %v2955, %v2959
      %v2961 = vshrl.u32 %v1950, 16
      %v2963 = vrot.slane %v2961, 4
      %v2964 = vor.u32 %v2963, %v2959
      %v2965 = vrot.slane %v2964, 4
      %v2967 = vshll.u32 %v1951, 16
      %v2969 = vrot.slane %v2967, 5
      %v2970 = vsel %vm1954, %v2965, %v2969
      %s2971 = scalar_lea.vmem %s1, 448
      %v2972 = vld [vmem:[%s2971] sm:$0xf]
      %v2973 = vld [vmem:[%s2971 + $0x4] sm:$0xf]
      %v2974 = vld [vmem:[%s2971 + $0x8] sm:$0xf]
      %v2975 = vld [vmem:[%s2971 + $0xc] sm:$0xf]
      %v2976 = vld [vmem:[%s2971 + $0x10] sm:$0xf]
      %v2977 = vld [vmem:[%s2971 + $0x14] sm:$0xf]
      %v2978 = vld [vmem:[%s2971 + $0x18] sm:$0xf]
      %v2979 = vld [vmem:[%s2971 + $0x1c] sm:$0xf]
      %v2980 = vld [vmem:[%s2971 + $0x20] sm:$0xf]
      %v2981 = vld [vmem:[%s2971 + $0x24] sm:$0xf]
      %v2982 = vld [vmem:[%s2971 + $0x28] sm:$0xf]
      %v2983 = vld [vmem:[%s2971 + $0x2c] sm:$0xf]
      %v2984 = vld [vmem:[%s2971 + $0x30] sm:$0xf]
      %v2985 = vld [vmem:[%s2971 + $0x34] sm:$0xf]
      %v2986 = vld [vmem:[%s2971 + $0x38] sm:$0xf]
      %v2987 = vld [vmem:[%s2971 + $0x3c] sm:$0xf]
      %v2988 = vunpack.c.l.b16 %v2960
      %v2989 = vunpack.c.l.b16 %v2970
      %v2990 = vpack.c.b16 %v2989, %v2988
      %v3008 = vunpack.c.l.b16 %v2972
      %v3009 = vunpack.c.l.b16 %v2973
      %v3010 = vunpack.c.l.b16 %v2974
      %v3011 = vunpack.c.l.b16 %v2975
      %v3012 = vunpack.c.l.b16 %v2976
      %v3013 = vunpack.c.l.b16 %v2977
      %v3014 = vunpack.c.l.b16 %v2978
      %v3015 = vunpack.c.l.b16 %v2979
      %v3016 = vunpack.c.l.b16 %v2980
      %v3017 = vunpack.c.l.b16 %v2981
      %v3018 = vunpack.c.l.b16 %v2982
      %v3019 = vunpack.c.l.b16 %v2983
      %v3020 = vunpack.c.l.b16 %v2984
      %v3021 = vunpack.c.l.b16 %v2985
      %v3022 = vunpack.c.l.b16 %v2986
      %v3023 = vunpack.c.l.b16 %v2987
      %v3024 = vpack.c.b16 %v3009, %v3008
      %v3025 = vpack.c.b16 %v3011, %v3010
      %v3026 = vpack.c.b16 %v3013, %v3012
      %v3027 = vpack.c.b16 %v3015, %v3014
      %v3028 = vpack.c.b16 %v3017, %v3016
      %v3029 = vpack.c.b16 %v3019, %v3018
      %v3030 = vpack.c.b16 %v3021, %v3020
      %v3031 = vpack.c.b16 %v3023, %v3022
      %3040 = vmatprep.subr.bf16.mxu0 0
      %3041 = vmatpush1.bf16.msra.mxu0 %v3031
      %3042 = vmatprep.subr.bf16.mxu0 0
      %3043 = vmatpush1.bf16.msra.mxu0 %v3030
      %3044 = vmatprep.subr.bf16.mxu0 0
      %3045 = vmatpush1.bf16.msra.mxu0 %v3029
      %3046 = vmatprep.subr.bf16.mxu0 0
      %3047 = vmatpush1.bf16.msra.mxu0 %v3028
      %3048 = vmatprep.subr.bf16.mxu0 0
      %3049 = vmatpush1.bf16.msra.mxu0 %v3027
      %3050 = vmatprep.subr.bf16.mxu0 0
      %3051 = vmatpush1.bf16.msra.mxu0 %v3026
      %3052 = vmatprep.subr.bf16.mxu0 0
      %3053 = vmatpush1.bf16.msra.mxu0 %v3025
      %3054 = vmatprep.subr.bf16.mxu0 0
      %3055 = vmatpush1.bf16.msra.mxu0 %v3024
      %3056 = vmatprep.subr.bf16.mxu0 0
      %3057 = vmatpush2.bf16.msra.mxu0 0
      %3058 = vmatprep.subr.bf16.mxu0 0
      %3059 = vmatpush2.bf16.msra.mxu0 0
      %3060 = vmatprep.subr.bf16.mxu0 0
      %3061 = vmatpush2.bf16.msra.mxu0 0
      %3062 = vmatprep.subr.bf16.mxu0 0
      %3063 = vmatpush2.bf16.msra.mxu0 0
      %3064 = vmatprep.subr.bf16.mxu0 0
      %3065 = vmatpush2.bf16.msra.mxu0 0
      %3066 = vmatprep.subr.bf16.mxu0 0
      %3067 = vmatpush2.bf16.msra.mxu0 0
      %3068 = vmatprep.subr.bf16.mxu0 0
      %3069 = vmatpush2.bf16.msra.mxu0 0
      %3070 = vmatprep.subr.bf16.mxu0 0
      %3071 = vmatpush2.bf16.msra.mxu0 0
      %3072 = vmatprep.mubr.bf16.mxu0 0
      %3073 = vmatmul.mubr.bf16.gmra.mxu0 %v2390
      %v3074 = vpop.f32.mrf.mxu0
      %v3075 = vadd.f32 0.0, %v3074
      %v3076 = vpop.f32.mrf.mxu0
      %v3077 = vpop.f32.mrf.mxu0
      %v3078 = vadd.f32 0.0, %v3077
      %v3079 = vpop.f32.mrf.mxu0
      %3080 = vmatprep.mubr.bf16.mxu0 0
      %3081 = vmatmul.mubr.bf16.gmra.mxu0 %v2391
      %v3082 = vpop.f32.mrf.mxu0
      %v3083 = vadd.f32 0.0, %v3082
      %v3084 = vpop.f32.mrf.mxu0
      %v3085 = vpop.f32.mrf.mxu0
      %v3086 = vadd.f32 0.0, %v3085
      %v3087 = vpop.f32.mrf.mxu0
      %3088 = vmatprep.mubr.bf16.mxu0 0
      %3089 = vmatmul.mubr.bf16.gmra.mxu0 %v2392
      %v3090 = vpop.f32.mrf.mxu0
      %v3091 = vadd.f32 0.0, %v3090
      %v3092 = vpop.f32.mrf.mxu0
      %v3093 = vpop.f32.mrf.mxu0
      %v3094 = vadd.f32 0.0, %v3093
      %v3095 = vpop.f32.mrf.mxu0
      %3096 = vmatprep.mubr.bf16.mxu0 0
      %3097 = vmatmul.mubr.bf16.gmra.mxu0 %v2393
      %v3098 = vpop.f32.mrf.mxu0
      %v3099 = vadd.f32 0.0, %v3098
      %v3100 = vpop.f32.mrf.mxu0
      %v3101 = vpop.f32.mrf.mxu0
      %v3102 = vadd.f32 0.0, %v3101
      %v3103 = vpop.f32.mrf.mxu0
      %3104 = vmatprep.mubr.bf16.mxu0 0
      %3105 = vmatmul.mubr.bf16.gmra.mxu0 %v2394
      %v3106 = vpop.f32.mrf.mxu0
      %v3107 = vadd.f32 0.0, %v3106
      %v3108 = vpop.f32.mrf.mxu0
      %v3109 = vpop.f32.mrf.mxu0
      %v3110 = vadd.f32 0.0, %v3109
      %v3111 = vpop.f32.mrf.mxu0
      %3112 = vmatprep.mubr.bf16.mxu0 0
      %3113 = vmatmul.mubr.bf16.gmra.mxu0 %v2395
      %v3114 = vpop.f32.mrf.mxu0
      %v3115 = vadd.f32 0.0, %v3114
      %v3116 = vpop.f32.mrf.mxu0
      %v3117 = vpop.f32.mrf.mxu0
      %v3118 = vadd.f32 0.0, %v3117
      %v3119 = vpop.f32.mrf.mxu0
      %3120 = vmatprep.mubr.bf16.mxu0 0
      %3121 = vmatmul.mubr.bf16.gmra.mxu0 %v2396
      %v3122 = vpop.f32.mrf.mxu0
      %v3123 = vadd.f32 0.0, %v3122
      %v3124 = vpop.f32.mrf.mxu0
      %v3125 = vpop.f32.mrf.mxu0
      %v3126 = vadd.f32 0.0, %v3125
      %v3127 = vpop.f32.mrf.mxu0
      %3128 = vmatprep.mubr.bf16.mxu0 0
      %3129 = vmatmul.mubr.bf16.gmra.mxu0 %v2397
      %v3130 = vpop.f32.mrf.mxu0
      %v3131 = vadd.f32 0.0, %v3130
      %v3132 = vpop.f32.mrf.mxu0
      %v3133 = vpop.f32.mrf.mxu0
      %v3134 = vadd.f32 0.0, %v3133
      %v3135 = vpop.f32.mrf.mxu0
      %3136 = vmatprep.mubr.bf16.mxu0 0
      %3137 = vmatmul.mubr.bf16.gmra.mxu0 %v2398
      %v3138 = vpop.f32.mrf.mxu0
      %v3139 = vadd.f32 0.0, %v3138
      %v3140 = vpop.f32.mrf.mxu0
      %v3141 = vpop.f32.mrf.mxu0
      %v3142 = vadd.f32 0.0, %v3141
      %v3143 = vpop.f32.mrf.mxu0
      %3144 = vmatprep.mubr.bf16.mxu0 0
      %3145 = vmatmul.mubr.bf16.gmra.mxu0 %v2399
      %v3146 = vpop.f32.mrf.mxu0
      %v3147 = vadd.f32 0.0, %v3146
      %v3148 = vpop.f32.mrf.mxu0
      %v3149 = vpop.f32.mrf.mxu0
      %v3150 = vadd.f32 0.0, %v3149
      %v3151 = vpop.f32.mrf.mxu0
      %3152 = vmatprep.mubr.bf16.mxu0 0
      %3153 = vmatmul.mubr.bf16.gmra.mxu0 %v2400
      %v3154 = vpop.f32.mrf.mxu0
      %v3155 = vadd.f32 0.0, %v3154
      %v3156 = vpop.f32.mrf.mxu0
      %v3157 = vpop.f32.mrf.mxu0
      %v3158 = vadd.f32 0.0, %v3157
      %v3159 = vpop.f32.mrf.mxu0
      %3160 = vmatprep.mubr.bf16.mxu0 0
      %3161 = vmatmul.mubr.bf16.gmra.mxu0 %v2401
      %v3162 = vpop.f32.mrf.mxu0
      %v3163 = vadd.f32 0.0, %v3162
      %v3164 = vpop.f32.mrf.mxu0
      %v3165 = vpop.f32.mrf.mxu0
      %v3166 = vadd.f32 0.0, %v3165
      %v3167 = vpop.f32.mrf.mxu0
      %3168 = vmatprep.mubr.bf16.mxu0 0
      %3169 = vmatmul.mubr.bf16.gmra.mxu0 %v2402
      %v3170 = vpop.f32.mrf.mxu0
      %v3171 = vadd.f32 0.0, %v3170
      %v3172 = vpop.f32.mrf.mxu0
      %v3173 = vpop.f32.mrf.mxu0
      %v3174 = vadd.f32 0.0, %v3173
      %v3175 = vpop.f32.mrf.mxu0
      %3176 = vmatprep.mubr.bf16.mxu0 0
      %3177 = vmatmul.mubr.bf16.gmra.mxu0 %v2403
      %v3178 = vpop.f32.mrf.mxu0
      %v3179 = vadd.f32 0.0, %v3178
      %v3180 = vpop.f32.mrf.mxu0
      %v3181 = vpop.f32.mrf.mxu0
      %v3182 = vadd.f32 0.0, %v3181
      %v3183 = vpop.f32.mrf.mxu0
      %3184 = vmatprep.mubr.bf16.mxu0 0
      %3185 = vmatmul.mubr.bf16.gmra.mxu0 %v2704
      %v3186 = vpop.f32.mrf.mxu0
      %v3187 = vadd.f32 0.0, %v3186
      %v3188 = vpop.f32.mrf.mxu0
      %v3189 = vpop.f32.mrf.mxu0
      %v3190 = vadd.f32 0.0, %v3189
      %v3191 = vpop.f32.mrf.mxu0
      %3192 = vmatprep.mubr.bf16.mxu0 0
      %3193 = vmatmul.mubr.bf16.gmra.mxu0 %v2990
      %v3194 = vpop.f32.mrf.mxu0
      %v3195 = vadd.f32 0.0, %v3194
      %v3196 = vpop.f32.mrf.mxu0
      %v3197 = vpop.f32.mrf.mxu0
      %v3198 = vadd.f32 0.0, %v3197
      %v3199 = vpop.f32.mrf.mxu0
      %3200 = vdwg.mxu0
      %v3201 = vadd.f32 %v2915, %v3075
      %v3202 = vadd.f32 %v2916, %v3078
      %v3203 = vadd.f32 %v2917, %v3083
      %v3204 = vadd.f32 %v2918, %v3086
      %v3205 = vadd.f32 %v2919, %v3091
      %v3206 = vadd.f32 %v2920, %v3094
      %v3207 = vadd.f32 %v2921, %v3099
      %v3208 = vadd.f32 %v2922, %v3102
      %v3209 = vadd.f32 %v2923, %v3107
      %v3210 = vadd.f32 %v2924, %v3110
      %v3211 = vadd.f32 %v2925, %v3115
      %v3212 = vadd.f32 %v2926, %v3118
      %v3213 = vadd.f32 %v2927, %v3123
      %v3214 = vadd.f32 %v2928, %v3126
      %v3215 = vadd.f32 %v2929, %v3131
      %v3216 = vadd.f32 %v2930, %v3134
      %v3217 = vadd.f32 %v2931, %v3139
      %v3218 = vadd.f32 %v2932, %v3142
      %v3219 = vadd.f32 %v2933, %v3147
      %v3220 = vadd.f32 %v2934, %v3150
      %v3221 = vadd.f32 %v2935, %v3155
      %v3222 = vadd.f32 %v2936, %v3158
      %v3223 = vadd.f32 %v2937, %v3163
      %v3224 = vadd.f32 %v2938, %v3166
      %v3225 = vadd.f32 %v2939, %v3171
      %v3226 = vadd.f32 %v2940, %v3174
      %v3227 = vadd.f32 %v2941, %v3179
      %v3228 = vadd.f32 %v2942, %v3182
      %v3229 = vadd.f32 %v2943, %v3187
      %v3230 = vadd.f32 %v2944, %v3190
      %v3231 = vadd.f32 %v2945, %v3195
      %v3232 = vadd.f32 %v2946, %v3198
      %v3233 = vld [vmem:[#allocation2] sm:$0xe]
      %v3234 = vld [vmem:[#allocation2 + $0xc] sm:$0xe]
      %v3235 = vld [vmem:[#allocation2 + $0x18] sm:$0xe]
      %v3236 = vld [vmem:[#allocation2 + $0x24] sm:$0xe]
      %v3237 = vld [vmem:[#allocation2 + $0x30] sm:$0xe]
      %v3238 = vld [vmem:[#allocation2 + $0x3c] sm:$0xe]
      %v3239 = vld [vmem:[#allocation2 + $0x48] sm:$0xe]
      %v3240 = vld [vmem:[#allocation2 + $0x54] sm:$0xe]
      %v3241 = vld [vmem:[#allocation2 + $0x60] sm:$0xe]
      %v3242 = vld [vmem:[#allocation2 + $0x6c] sm:$0xe]
      %v3243 = vld [vmem:[#allocation2 + $0x78] sm:$0xe]
      %v3244 = vld [vmem:[#allocation2 + $0x84] sm:$0xe]
      %v3245 = vld [vmem:[#allocation2 + $0x90] sm:$0xe]
      %v3246 = vld [vmem:[#allocation2 + $0x9c] sm:$0xe]
      %v3247 = vld [vmem:[#allocation2 + $0xa8] sm:$0xe]
      %v3248 = vld [vmem:[#allocation2 + $0xb4] sm:$0xe]
      %v3249 = vld [vmem:[#allocation2 + $0xc0] sm:$0xe]
      %v3250 = vld [vmem:[#allocation2 + $0xcc] sm:$0xe]
      %vm3299 = vcmask 1042432
      %vm3300 = vcmask 1046532
      %vm3301 = vmor %vm3299, %vm3300
      %v3302 = vrot.slane %v3233, 5
      %v3303 = vrot.slane %v3302, 4
      %v3304 = vrot.slane %v1899, 5
      %v3305 = vsel %vm3301, %v3303, %v3304
      %v3306 = vrot.slane %v3304, 4
      %v3307 = vrot.slane %v1900, 5
      %v3308 = vsel %vm3301, %v3306, %v3307
      %v3309 = vrot.slane %v3234, 5
      %v3310 = vrot.slane %v3309, 4
      %v3311 = vrot.slane %v1902, 5
      %v3312 = vsel %vm3301, %v3310, %v3311
      %v3313 = vrot.slane %v3311, 4
      %v3314 = vrot.slane %v1903, 5
      %v3315 = vsel %vm3301, %v3313, %v3314
      %v3316 = vrot.slane %v3235, 5
      %v3317 = vrot.slane %v3316, 4
      %v3318 = vrot.slane %v1905, 5
      %v3319 = vsel %vm3301, %v3317, %v3318
      %v3320 = vrot.slane %v3318, 4
      %v3321 = vrot.slane %v1906, 5
      %v3322 = vsel %vm3301, %v3320, %v3321
      %v3323 = vrot.slane %v3236, 5
      %v3324 = vrot.slane %v3323, 4
      %v3325 = vrot.slane %v1908, 5
      %v3326 = vsel %vm3301, %v3324, %v3325
      %v3327 = vrot.slane %v3325, 4
      %v3328 = vrot.slane %v1909, 5
      %v3329 = vsel %vm3301, %v3327, %v3328
      %v3330 = vrot.slane %v3237, 5
      %v3331 = vrot.slane %v3330, 4
      %v3332 = vrot.slane %v1911, 5
      %v3333 = vsel %vm3301, %v3331, %v3332
      %v3334 = vrot.slane %v3332, 4
      %v3335 = vrot.slane %v1912, 5
      %v3336 = vsel %vm3301, %v3334, %v3335
      %v3337 = vrot.slane %v3238, 5
      %v3338 = vrot.slane %v3337, 4
      %v3339 = vrot.slane %v1914, 5
      %v3340 = vsel %vm3301, %v3338, %v3339
      %v3341 = vrot.slane %v3339, 4
      %v3342 = vrot.slane %v1915, 5
      %v3343 = vsel %vm3301, %v3341, %v3342
      %v3344 = vrot.slane %v3239, 5
      %v3345 = vrot.slane %v3344, 4
      %v3346 = vrot.slane %v1917, 5
      %v3347 = vsel %vm3301, %v3345, %v3346
      %v3348 = vrot.slane %v3346, 4
      %v3349 = vrot.slane %v1918, 5
      %v3350 = vsel %vm3301, %v3348, %v3349
      %v3351 = vrot.slane %v3240, 5
      %v3352 = vrot.slane %v3351, 4
      %v3353 = vrot.slane %v1920, 5
      %v3354 = vsel %vm3301, %v3352, %v3353
      %v3355 = vrot.slane %v3353, 4
      %v3356 = vrot.slane %v1921, 5
      %v3357 = vsel %vm3301, %v3355, %v3356
      %v3358 = vrot.slane %v3241, 5
      %v3359 = vrot.slane %v3358, 4
      %v3360 = vrot.slane %v1923, 5
      %v3361 = vsel %vm3301, %v3359, %v3360
      %v3362 = vrot.slane %v3360, 4
      %v3363 = vrot.slane %v1924, 5
      %v3364 = vsel %vm3301, %v3362, %v3363
      %v3365 = vrot.slane %v3242, 5
      %v3366 = vrot.slane %v3365, 4
      %v3367 = vrot.slane %v1926, 5
      %v3368 = vsel %vm3301, %v3366, %v3367
      %v3369 = vrot.slane %v3367, 4
      %v3370 = vrot.slane %v1927, 5
      %v3371 = vsel %vm3301, %v3369, %v3370
      %v3372 = vrot.slane %v3243, 5
      %v3373 = vrot.slane %v3372, 4
      %v3374 = vrot.slane %v1929, 5
      %v3375 = vsel %vm3301, %v3373, %v3374
      %v3376 = vrot.slane %v3374, 4
      %v3377 = vrot.slane %v1930, 5
      %v3378 = vsel %vm3301, %v3376, %v3377
      %v3379 = vrot.slane %v3244, 5
      %v3380 = vrot.slane %v3379, 4
      %v3381 = vrot.slane %v1932, 5
      %v3382 = vsel %vm3301, %v3380, %v3381
      %v3383 = vrot.slane %v3381, 4
      %v3384 = vrot.slane %v1933, 5
      %v3385 = vsel %vm3301, %v3383, %v3384
      %v3386 = vrot.slane %v3245, 5
      %v3387 = vrot.slane %v3386, 4
      %v3388 = vrot.slane %v1935, 5
      %v3389 = vsel %vm3301, %v3387, %v3388
      %v3390 = vrot.slane %v3388, 4
      %v3391 = vrot.slane %v1936, 5
      %v3392 = vsel %vm3301, %v3390, %v3391
      %v3393 = vrot.slane %v3246, 5
      %v3394 = vrot.slane %v3393, 4
      %v3395 = vrot.slane %v1938, 5
      %v3396 = vsel %vm3301, %v3394, %v3395
      %v3397 = vrot.slane %v3395, 4
      %v3398 = vrot.slane %v1939, 5
      %v3399 = vsel %vm3301, %v3397, %v3398
      %v3400 = vrot.slane %v3247, 5
      %v3401 = vrot.slane %v3400, 4
      %v3402 = vrot.slane %v1941, 5
      %v3403 = vsel %vm3301, %v3401, %v3402
      %v3404 = vrot.slane %v3402, 4
      %v3405 = vrot.slane %v1942, 5
      %v3406 = vsel %vm3301, %v3404, %v3405
      %v3407 = vrot.slane %v3248, 5
      %v3408 = vrot.slane %v3407, 4
      %v3409 = vrot.slane %v1944, 5
      %v3410 = vsel %vm3301, %v3408, %v3409
      %v3411 = vrot.slane %v3409, 4
      %v3412 = vrot.slane %v1945, 5
      %v3413 = vsel %vm3301, %v3411, %v3412
      %s3414 = scalar_lea.vmem %s1, 128
      %v3415 = vld [vmem:[%s3414] sm:$0xf]
      %v3416 = vld [vmem:[%s3414 + $0x4] sm:$0xf]
      %v3417 = vld [vmem:[%s3414 + $0x8] sm:$0xf]
      %v3418 = vld [vmem:[%s3414 + $0xc] sm:$0xf]
      %v3419 = vld [vmem:[%s3414 + $0x10] sm:$0xf]
      %v3420 = vld [vmem:[%s3414 + $0x14] sm:$0xf]
      %v3421 = vld [vmem:[%s3414 + $0x18] sm:$0xf]
      %v3422 = vld [vmem:[%s3414 + $0x1c] sm:$0xf]
      %v3423 = vld [vmem:[%s3414 + $0x20] sm:$0xf]
      %v3424 = vld [vmem:[%s3414 + $0x24] sm:$0xf]
      %v3425 = vld [vmem:[%s3414 + $0x28] sm:$0xf]
      %v3426 = vld [vmem:[%s3414 + $0x2c] sm:$0xf]
      %v3427 = vld [vmem:[%s3414 + $0x30] sm:$0xf]
      %v3428 = vld [vmem:[%s3414 + $0x34] sm:$0xf]
      %v3429 = vld [vmem:[%s3414 + $0x38] sm:$0xf]
      %v3430 = vld [vmem:[%s3414 + $0x3c] sm:$0xf]
      %v3431 = vunpack.c.l.b16 %v3305
      %v3432 = vunpack.c.l.b16 %v3308
      %v3433 = vunpack.c.l.b16 %v3312
      %v3434 = vunpack.c.l.b16 %v3315
      %v3435 = vunpack.c.l.b16 %v3319
      %v3436 = vunpack.c.l.b16 %v3322
      %v3437 = vunpack.c.l.b16 %v3326
      %v3438 = vunpack.c.l.b16 %v3329
      %v3439 = vunpack.c.l.b16 %v3333
      %v3440 = vunpack.c.l.b16 %v3336
      %v3441 = vunpack.c.l.b16 %v3340
      %v3442 = vunpack.c.l.b16 %v3343
      %v3443 = vunpack.c.l.b16 %v3347
      %v3444 = vunpack.c.l.b16 %v3350
      %v3445 = vunpack.c.l.b16 %v3354
      %v3446 = vunpack.c.l.b16 %v3357
      %v3447 = vunpack.c.l.b16 %v3361
      %v3448 = vunpack.c.l.b16 %v3364
      %v3449 = vunpack.c.l.b16 %v3368
      %v3450 = vunpack.c.l.b16 %v3371
      %v3451 = vunpack.c.l.b16 %v3375
      %v3452 = vunpack.c.l.b16 %v3378
      %v3453 = vunpack.c.l.b16 %v3382
      %v3454 = vunpack.c.l.b16 %v3385
      %v3455 = vunpack.c.l.b16 %v3389
      %v3456 = vunpack.c.l.b16 %v3392
      %v3457 = vunpack.c.l.b16 %v3396
      %v3458 = vunpack.c.l.b16 %v3399
      %v3459 = vunpack.c.l.b16 %v3403
      %v3460 = vunpack.c.l.b16 %v3406
      %v3461 = vunpack.c.l.b16 %v3410
      %v3462 = vunpack.c.l.b16 %v3413
      %v3463 = vpack.c.b16 %v3432, %v3431
      %v3464 = vpack.c.b16 %v3434, %v3433
      %v3465 = vpack.c.b16 %v3436, %v3435
      %v3466 = vpack.c.b16 %v3438, %v3437
      %v3467 = vpack.c.b16 %v3440, %v3439
      %v3468 = vpack.c.b16 %v3442, %v3441
      %v3469 = vpack.c.b16 %v3444, %v3443
      %v3470 = vpack.c.b16 %v3446, %v3445
      %v3471 = vpack.c.b16 %v3448, %v3447
      %v3472 = vpack.c.b16 %v3450, %v3449
      %v3473 = vpack.c.b16 %v3452, %v3451
      %v3474 = vpack.c.b16 %v3454, %v3453
      %v3475 = vpack.c.b16 %v3456, %v3455
      %v3476 = vpack.c.b16 %v3458, %v3457
      %v3477 = vpack.c.b16 %v3460, %v3459
      %v3478 = vpack.c.b16 %v3462, %v3461
      %v3511 = vunpack.c.l.b16 %v3415
      %v3512 = vunpack.c.l.b16 %v3416
      %v3513 = vunpack.c.l.b16 %v3417
      %v3514 = vunpack.c.l.b16 %v3418
      %v3515 = vunpack.c.l.b16 %v3419
      %v3516 = vunpack.c.l.b16 %v3420
      %v3517 = vunpack.c.l.b16 %v3421
      %v3518 = vunpack.c.l.b16 %v3422
      %v3519 = vunpack.c.l.b16 %v3423
      %v3520 = vunpack.c.l.b16 %v3424
      %v3521 = vunpack.c.l.b16 %v3425
      %v3522 = vunpack.c.l.b16 %v3426
      %v3523 = vunpack.c.l.b16 %v3427
      %v3524 = vunpack.c.l.b16 %v3428
      %v3525 = vunpack.c.l.b16 %v3429
      %v3526 = vunpack.c.l.b16 %v3430
      %v3527 = vpack.c.b16 %v3512, %v3511
      %v3528 = vpack.c.b16 %v3514, %v3513
      %v3529 = vpack.c.b16 %v3516, %v3515
      %v3530 = vpack.c.b16 %v3518, %v3517
      %v3531 = vpack.c.b16 %v3520, %v3519
      %v3532 = vpack.c.b16 %v3522, %v3521
      %v3533 = vpack.c.b16 %v3524, %v3523
      %v3534 = vpack.c.b16 %v3526, %v3525
      %3543 = vmatprep.subr.bf16.mxu0 0
      %3544 = vmatpush1.bf16.msra.mxu0 %v3534
      %3545 = vmatprep.subr.bf16.mxu0 0
      %3546 = vmatpush1.bf16.msra.mxu0 %v3533
      %3547 = vmatprep.subr.bf16.mxu0 0
      %3548 = vmatpush1.bf16.msra.mxu0 %v3532
      %3549 = vmatprep.subr.bf16.mxu0 0
      %3550 = vmatpush1.bf16.msra.mxu0 %v3531
      %3551 = vmatprep.subr.bf16.mxu0 0
      %3552 = vmatpush1.bf16.msra.mxu0 %v3530
      %3553 = vmatprep.subr.bf16.mxu0 0
      %3554 = vmatpush1.bf16.msra.mxu0 %v3529
      %3555 = vmatprep.subr.bf16.mxu0 0
      %3556 = vmatpush1.bf16.msra.mxu0 %v3528
      %3557 = vmatprep.subr.bf16.mxu0 0
      %3558 = vmatpush1.bf16.msra.mxu0 %v3527
      %3559 = vmatprep.subr.bf16.mxu0 0
      %3560 = vmatpush2.bf16.msra.mxu0 0
      %3561 = vmatprep.subr.bf16.mxu0 0
      %3562 = vmatpush2.bf16.msra.mxu0 0
      %3563 = vmatprep.subr.bf16.mxu0 0
      %3564 = vmatpush2.bf16.msra.mxu0 0
      %3565 = vmatprep.subr.bf16.mxu0 0
      %3566 = vmatpush2.bf16.msra.mxu0 0
      %3567 = vmatprep.subr.bf16.mxu0 0
      %3568 = vmatpush2.bf16.msra.mxu0 0
      %3569 = vmatprep.subr.bf16.mxu0 0
      %3570 = vmatpush2.bf16.msra.mxu0 0
      %3571 = vmatprep.subr.bf16.mxu0 0
      %3572 = vmatpush2.bf16.msra.mxu0 0
      %3573 = vmatprep.subr.bf16.mxu0 0
      %3574 = vmatpush2.bf16.msra.mxu0 0
      %3575 = vmatprep.mubr.bf16.mxu0 0
      %3576 = vmatmul.mubr.bf16.gmra.mxu0 %v3463
      %v3577 = vpop.f32.mrf.mxu0
      %v3578 = vadd.f32 0.0, %v3577
      %v3579 = vpop.f32.mrf.mxu0
      %v3580 = vpop.f32.mrf.mxu0
      %v3581 = vadd.f32 0.0, %v3580
      %v3582 = vpop.f32.mrf.mxu0
      %3583 = vmatprep.mubr.bf16.mxu0 0
      %3584 = vmatmul.mubr.bf16.gmra.mxu0 %v3464
      %v3585 = vpop.f32.mrf.mxu0
      %v3586 = vadd.f32 0.0, %v3585
      %v3587 = vpop.f32.mrf.mxu0
      %v3588 = vpop.f32.mrf.mxu0
      %v3589 = vadd.f32 0.0, %v3588
      %v3590 = vpop.f32.mrf.mxu0
      %3591 = vmatprep.mubr.bf16.mxu0 0
      %3592 = vmatmul.mubr.bf16.gmra.mxu0 %v3465
      %v3593 = vpop.f32.mrf.mxu0
      %v3594 = vadd.f32 0.0, %v3593
      %v3595 = vpop.f32.mrf.mxu0
      %v3596 = vpop.f32.mrf.mxu0
      %v3597 = vadd.f32 0.0, %v3596
      %v3598 = vpop.f32.mrf.mxu0
      %3599 = vmatprep.mubr.bf16.mxu0 0
      %3600 = vmatmul.mubr.bf16.gmra.mxu0 %v3466
      %v3601 = vpop.f32.mrf.mxu0
      %v3602 = vadd.f32 0.0, %v3601
      %v3603 = vpop.f32.mrf.mxu0
      %v3604 = vpop.f32.mrf.mxu0
      %v3605 = vadd.f32 0.0, %v3604
      %v3606 = vpop.f32.mrf.mxu0
      %3607 = vmatprep.mubr.bf16.mxu0 0
      %3608 = vmatmul.mubr.bf16.gmra.mxu0 %v3467
      %v3609 = vpop.f32.mrf.mxu0
      %v3610 = vadd.f32 0.0, %v3609
      %v3611 = vpop.f32.mrf.mxu0
      %v3612 = vpop.f32.mrf.mxu0
      %v3613 = vadd.f32 0.0, %v3612
      %v3614 = vpop.f32.mrf.mxu0
      %3615 = vmatprep.mubr.bf16.mxu0 0
      %3616 = vmatmul.mubr.bf16.gmra.mxu0 %v3468
      %v3617 = vpop.f32.mrf.mxu0
      %v3618 = vadd.f32 0.0, %v3617
      %v3619 = vpop.f32.mrf.mxu0
      %v3620 = vpop.f32.mrf.mxu0
      %v3621 = vadd.f32 0.0, %v3620
      %v3622 = vpop.f32.mrf.mxu0
      %3623 = vmatprep.mubr.bf16.mxu0 0
      %3624 = vmatmul.mubr.bf16.gmra.mxu0 %v3469
      %v3625 = vpop.f32.mrf.mxu0
      %v3626 = vadd.f32 0.0, %v3625
      %v3627 = vpop.f32.mrf.mxu0
      %v3628 = vpop.f32.mrf.mxu0
      %v3629 = vadd.f32 0.0, %v3628
      %v3630 = vpop.f32.mrf.mxu0
      %3631 = vmatprep.mubr.bf16.mxu0 0
      %3632 = vmatmul.mubr.bf16.gmra.mxu0 %v3470
      %v3633 = vpop.f32.mrf.mxu0
      %v3634 = vadd.f32 0.0, %v3633
      %v3635 = vpop.f32.mrf.mxu0
      %v3636 = vpop.f32.mrf.mxu0
      %v3637 = vadd.f32 0.0, %v3636
      %v3638 = vpop.f32.mrf.mxu0
      %3639 = vmatprep.mubr.bf16.mxu0 0
      %3640 = vmatmul.mubr.bf16.gmra.mxu0 %v3471
      %v3641 = vpop.f32.mrf.mxu0
      %v3642 = vadd.f32 0.0, %v3641
      %v3643 = vpop.f32.mrf.mxu0
      %v3644 = vpop.f32.mrf.mxu0
      %v3645 = vadd.f32 0.0, %v3644
      %v3646 = vpop.f32.mrf.mxu0
      %3647 = vmatprep.mubr.bf16.mxu0 0
      %3648 = vmatmul.mubr.bf16.gmra.mxu0 %v3472
      %v3649 = vpop.f32.mrf.mxu0
      %v3650 = vadd.f32 0.0, %v3649
      %v3651 = vpop.f32.mrf.mxu0
      %v3652 = vpop.f32.mrf.mxu0
      %v3653 = vadd.f32 0.0, %v3652
      %v3654 = vpop.f32.mrf.mxu0
      %3655 = vmatprep.mubr.bf16.mxu0 0
      %3656 = vmatmul.mubr.bf16.gmra.mxu0 %v3473
      %v3657 = vpop.f32.mrf.mxu0
      %v3658 = vadd.f32 0.0, %v3657
      %v3659 = vpop.f32.mrf.mxu0
      %v3660 = vpop.f32.mrf.mxu0
      %v3661 = vadd.f32 0.0, %v3660
      %v3662 = vpop.f32.mrf.mxu0
      %3663 = vmatprep.mubr.bf16.mxu0 0
      %3664 = vmatmul.mubr.bf16.gmra.mxu0 %v3474
      %v3665 = vpop.f32.mrf.mxu0
      %v3666 = vadd.f32 0.0, %v3665
      %v3667 = vpop.f32.mrf.mxu0
      %v3668 = vpop.f32.mrf.mxu0
      %v3669 = vadd.f32 0.0, %v3668
      %v3670 = vpop.f32.mrf.mxu0
      %3671 = vmatprep.mubr.bf16.mxu0 0
      %3672 = vmatmul.mubr.bf16.gmra.mxu0 %v3475
      %v3673 = vpop.f32.mrf.mxu0
      %v3674 = vadd.f32 0.0, %v3673
      %v3675 = vpop.f32.mrf.mxu0
      %v3676 = vpop.f32.mrf.mxu0
      %v3677 = vadd.f32 0.0, %v3676
      %v3678 = vpop.f32.mrf.mxu0
      %3679 = vmatprep.mubr.bf16.mxu0 0
      %3680 = vmatmul.mubr.bf16.gmra.mxu0 %v3476
      %v3681 = vpop.f32.mrf.mxu0
      %v3682 = vadd.f32 0.0, %v3681
      %v3683 = vpop.f32.mrf.mxu0
      %v3684 = vpop.f32.mrf.mxu0
      %v3685 = vadd.f32 0.0, %v3684
      %v3686 = vpop.f32.mrf.mxu0
      %3687 = vmatprep.mubr.bf16.mxu0 0
      %3688 = vmatmul.mubr.bf16.gmra.mxu0 %v3477
      %v3689 = vpop.f32.mrf.mxu0
      %v3690 = vadd.f32 0.0, %v3689
      %v3691 = vpop.f32.mrf.mxu0
      %v3692 = vpop.f32.mrf.mxu0
      %v3693 = vadd.f32 0.0, %v3692
      %v3694 = vpop.f32.mrf.mxu0
      %3695 = vmatprep.mubr.bf16.mxu0 0
      %3696 = vmatmul.mubr.bf16.gmra.mxu0 %v3478
      %v3697 = vpop.f32.mrf.mxu0
      %v3698 = vadd.f32 0.0, %v3697
      %v3699 = vpop.f32.mrf.mxu0
      %v3700 = vpop.f32.mrf.mxu0
      %v3701 = vadd.f32 0.0, %v3700
      %v3702 = vpop.f32.mrf.mxu0
      %3703 = vdwg.mxu0
      %v3704 = vadd.f32 %v3201, %v3578
      %v3705 = vadd.f32 %v3202, %v3581
      %v3706 = vadd.f32 %v3203, %v3586
      %v3707 = vadd.f32 %v3204, %v3589
      %v3708 = vadd.f32 %v3205, %v3594
      %v3709 = vadd.f32 %v3206, %v3597
      %v3710 = vadd.f32 %v3207, %v3602
      %v3711 = vadd.f32 %v3208, %v3605
      %v3712 = vadd.f32 %v3209, %v3610
      %v3713 = vadd.f32 %v3210, %v3613
      %v3714 = vadd.f32 %v3211, %v3618
      %v3715 = vadd.f32 %v3212, %v3621
      %v3716 = vadd.f32 %v3213, %v3626
      %v3717 = vadd.f32 %v3214, %v3629
      %v3718 = vadd.f32 %v3215, %v3634
      %v3719 = vadd.f32 %v3216, %v3637
      %v3720 = vadd.f32 %v3217, %v3642
      %v3721 = vadd.f32 %v3218, %v3645
      %v3722 = vadd.f32 %v3219, %v3650
      %v3723 = vadd.f32 %v3220, %v3653
      %v3724 = vadd.f32 %v3221, %v3658
      %v3725 = vadd.f32 %v3222, %v3661
      %v3726 = vadd.f32 %v3223, %v3666
      %v3727 = vadd.f32 %v3224, %v3669
      %v3728 = vadd.f32 %v3225, %v3674
      %v3729 = vadd.f32 %v3226, %v3677
      %v3730 = vadd.f32 %v3227, %v3682
      %v3731 = vadd.f32 %v3228, %v3685
      %v3732 = vadd.f32 %v3229, %v3690
      %v3733 = vadd.f32 %v3230, %v3693
      %v3734 = vadd.f32 %v3231, %v3698
      %v3735 = vadd.f32 %v3232, %v3701
      %v3739 = vrot.slane %v3249, 5
      %v3740 = vrot.slane %v3739, 4
      %v3741 = vrot.slane %v1947, 5
      %v3742 = vsel %vm3301, %v3740, %v3741
      %v3743 = vrot.slane %v3741, 4
      %v3744 = vrot.slane %v1948, 5
      %v3745 = vsel %vm3301, %v3743, %v3744
      %s3746 = scalar_lea.vmem %s1, 320
      %v3747 = vld [vmem:[%s3746] sm:$0xf]
      %v3748 = vld [vmem:[%s3746 + $0x4] sm:$0xf]
      %v3749 = vld [vmem:[%s3746 + $0x8] sm:$0xf]
      %v3750 = vld [vmem:[%s3746 + $0xc] sm:$0xf]
      %v3751 = vld [vmem:[%s3746 + $0x10] sm:$0xf]
      %v3752 = vld [vmem:[%s3746 + $0x14] sm:$0xf]
      %v3753 = vld [vmem:[%s3746 + $0x18] sm:$0xf]
      %v3754 = vld [vmem:[%s3746 + $0x1c] sm:$0xf]
      %v3755 = vld [vmem:[%s3746 + $0x20] sm:$0xf]
      %v3756 = vld [vmem:[%s3746 + $0x24] sm:$0xf]
      %v3757 = vld [vmem:[%s3746 + $0x28] sm:$0xf]
      %v3758 = vld [vmem:[%s3746 + $0x2c] sm:$0xf]
      %v3759 = vld [vmem:[%s3746 + $0x30] sm:$0xf]
      %v3760 = vld [vmem:[%s3746 + $0x34] sm:$0xf]
      %v3761 = vld [vmem:[%s3746 + $0x38] sm:$0xf]
      %v3762 = vld [vmem:[%s3746 + $0x3c] sm:$0xf]
      %v3763 = vunpack.c.l.b16 %v3742
      %v3764 = vunpack.c.l.b16 %v3745
      %v3765 = vpack.c.b16 %v3764, %v3763
      %v3783 = vunpack.c.l.b16 %v3747
      %v3784 = vunpack.c.l.b16 %v3748
      %v3785 = vunpack.c.l.b16 %v3749
      %v3786 = vunpack.c.l.b16 %v3750
      %v3787 = vunpack.c.l.b16 %v3751
      %v3788 = vunpack.c.l.b16 %v3752
      %v3789 = vunpack.c.l.b16 %v3753
      %v3790 = vunpack.c.l.b16 %v3754
      %v3791 = vunpack.c.l.b16 %v3755
      %v3792 = vunpack.c.l.b16 %v3756
      %v3793 = vunpack.c.l.b16 %v3757
      %v3794 = vunpack.c.l.b16 %v3758
      %v3795 = vunpack.c.l.b16 %v3759
      %v3796 = vunpack.c.l.b16 %v3760
      %v3797 = vunpack.c.l.b16 %v3761
      %v3798 = vunpack.c.l.b16 %v3762
      %v3799 = vpack.c.b16 %v3784, %v3783
      %v3800 = vpack.c.b16 %v3786, %v3785
      %v3801 = vpack.c.b16 %v3788, %v3787
      %v3802 = vpack.c.b16 %v3790, %v3789
      %v3803 = vpack.c.b16 %v3792, %v3791
      %v3804 = vpack.c.b16 %v3794, %v3793
      %v3805 = vpack.c.b16 %v3796, %v3795
      %v3806 = vpack.c.b16 %v3798, %v3797
      %3815 = vmatprep.subr.bf16.mxu0 0
      %3816 = vmatpush1.bf16.msra.mxu0 %v3806
      %3817 = vmatprep.subr.bf16.mxu0 0
      %3818 = vmatpush1.bf16.msra.mxu0 %v3805
      %3819 = vmatprep.subr.bf16.mxu0 0
      %3820 = vmatpush1.bf16.msra.mxu0 %v3804
      %3821 = vmatprep.subr.bf16.mxu0 0
      %3822 = vmatpush1.bf16.msra.mxu0 %v3803
      %3823 = vmatprep.subr.bf16.mxu0 0
      %3824 = vmatpush1.bf16.msra.mxu0 %v3802
      %3825 = vmatprep.subr.bf16.mxu0 0
      %3826 = vmatpush1.bf16.msra.mxu0 %v3801
      %3827 = vmatprep.subr.bf16.mxu0 0
      %3828 = vmatpush1.bf16.msra.mxu0 %v3800
      %3829 = vmatprep.subr.bf16.mxu0 0
      %3830 = vmatpush1.bf16.msra.mxu0 %v3799
      %3831 = vmatprep.subr.bf16.mxu0 0
      %3832 = vmatpush2.bf16.msra.mxu0 0
      %3833 = vmatprep.subr.bf16.mxu0 0
      %3834 = vmatpush2.bf16.msra.mxu0 0
      %3835 = vmatprep.subr.bf16.mxu0 0
      %3836 = vmatpush2.bf16.msra.mxu0 0
      %3837 = vmatprep.subr.bf16.mxu0 0
      %3838 = vmatpush2.bf16.msra.mxu0 0
      %3839 = vmatprep.subr.bf16.mxu0 0
      %3840 = vmatpush2.bf16.msra.mxu0 0
      %3841 = vmatprep.subr.bf16.mxu0 0
      %3842 = vmatpush2.bf16.msra.mxu0 0
      %3843 = vmatprep.subr.bf16.mxu0 0
      %3844 = vmatpush2.bf16.msra.mxu0 0
      %3845 = vmatprep.subr.bf16.mxu0 0
      %3846 = vmatpush2.bf16.msra.mxu0 0
      %3847 = vmatprep.mubr.bf16.mxu0 0
      %3848 = vmatmul.mubr.bf16.gmra.mxu0 %v3464
      %v3849 = vpop.f32.mrf.mxu0
      %v3850 = vadd.f32 0.0, %v3849
      %v3851 = vpop.f32.mrf.mxu0
      %v3852 = vpop.f32.mrf.mxu0
      %v3853 = vadd.f32 0.0, %v3852
      %v3854 = vpop.f32.mrf.mxu0
      %3855 = vmatprep.mubr.bf16.mxu0 0
      %3856 = vmatmul.mubr.bf16.gmra.mxu0 %v3465
      %v3857 = vpop.f32.mrf.mxu0
      %v3858 = vadd.f32 0.0, %v3857
      %v3859 = vpop.f32.mrf.mxu0
      %v3860 = vpop.f32.mrf.mxu0
      %v3861 = vadd.f32 0.0, %v3860
      %v3862 = vpop.f32.mrf.mxu0
      %3863 = vmatprep.mubr.bf16.mxu0 0
      %3864 = vmatmul.mubr.bf16.gmra.mxu0 %v3466
      %v3865 = vpop.f32.mrf.mxu0
      %v3866 = vadd.f32 0.0, %v3865
      %v3867 = vpop.f32.mrf.mxu0
      %v3868 = vpop.f32.mrf.mxu0
      %v3869 = vadd.f32 0.0, %v3868
      %v3870 = vpop.f32.mrf.mxu0
      %3871 = vmatprep.mubr.bf16.mxu0 0
      %3872 = vmatmul.mubr.bf16.gmra.mxu0 %v3467
      %v3873 = vpop.f32.mrf.mxu0
      %v3874 = vadd.f32 0.0, %v3873
      %v3875 = vpop.f32.mrf.mxu0
      %v3876 = vpop.f32.mrf.mxu0
      %v3877 = vadd.f32 0.0, %v3876
      %v3878 = vpop.f32.mrf.mxu0
      %3879 = vmatprep.mubr.bf16.mxu0 0
      %3880 = vmatmul.mubr.bf16.gmra.mxu0 %v3468
      %v3881 = vpop.f32.mrf.mxu0
      %v3882 = vadd.f32 0.0, %v3881
      %v3883 = vpop.f32.mrf.mxu0
      %v3884 = vpop.f32.mrf.mxu0
      %v3885 = vadd.f32 0.0, %v3884
      %v3886 = vpop.f32.mrf.mxu0
      %3887 = vmatprep.mubr.bf16.mxu0 0
      %3888 = vmatmul.mubr.bf16.gmra.mxu0 %v3469
      %v3889 = vpop.f32.mrf.mxu0
      %v3890 = vadd.f32 0.0, %v3889
      %v3891 = vpop.f32.mrf.mxu0
      %v3892 = vpop.f32.mrf.mxu0
      %v3893 = vadd.f32 0.0, %v3892
      %v3894 = vpop.f32.mrf.mxu0
      %3895 = vmatprep.mubr.bf16.mxu0 0
      %3896 = vmatmul.mubr.bf16.gmra.mxu0 %v3470
      %v3897 = vpop.f32.mrf.mxu0
      %v3898 = vadd.f32 0.0, %v3897
      %v3899 = vpop.f32.mrf.mxu0
      %v3900 = vpop.f32.mrf.mxu0
      %v3901 = vadd.f32 0.0, %v3900
      %v3902 = vpop.f32.mrf.mxu0
      %3903 = vmatprep.mubr.bf16.mxu0 0
      %3904 = vmatmul.mubr.bf16.gmra.mxu0 %v3471
      %v3905 = vpop.f32.mrf.mxu0
      %v3906 = vadd.f32 0.0, %v3905
      %v3907 = vpop.f32.mrf.mxu0
      %v3908 = vpop.f32.mrf.mxu0
      %v3909 = vadd.f32 0.0, %v3908
      %v3910 = vpop.f32.mrf.mxu0
      %3911 = vmatprep.mubr.bf16.mxu0 0
      %3912 = vmatmul.mubr.bf16.gmra.mxu0 %v3472
      %v3913 = vpop.f32.mrf.mxu0
      %v3914 = vadd.f32 0.0, %v3913
      %v3915 = vpop.f32.mrf.mxu0
      %v3916 = vpop.f32.mrf.mxu0
      %v3917 = vadd.f32 0.0, %v3916
      %v3918 = vpop.f32.mrf.mxu0
      %3919 = vmatprep.mubr.bf16.mxu0 0
      %3920 = vmatmul.mubr.bf16.gmra.mxu0 %v3473
      %v3921 = vpop.f32.mrf.mxu0
      %v3922 = vadd.f32 0.0, %v3921
      %v3923 = vpop.f32.mrf.mxu0
      %v3924 = vpop.f32.mrf.mxu0
      %v3925 = vadd.f32 0.0, %v3924
      %v3926 = vpop.f32.mrf.mxu0
      %3927 = vmatprep.mubr.bf16.mxu0 0
      %3928 = vmatmul.mubr.bf16.gmra.mxu0 %v3474
      %v3929 = vpop.f32.mrf.mxu0
      %v3930 = vadd.f32 0.0, %v3929
      %v3931 = vpop.f32.mrf.mxu0
      %v3932 = vpop.f32.mrf.mxu0
      %v3933 = vadd.f32 0.0, %v3932
      %v3934 = vpop.f32.mrf.mxu0
      %3935 = vmatprep.mubr.bf16.mxu0 0
      %3936 = vmatmul.mubr.bf16.gmra.mxu0 %v3475
      %v3937 = vpop.f32.mrf.mxu0
      %v3938 = vadd.f32 0.0, %v3937
      %v3939 = vpop.f32.mrf.mxu0
      %v3940 = vpop.f32.mrf.mxu0
      %v3941 = vadd.f32 0.0, %v3940
      %v3942 = vpop.f32.mrf.mxu0
      %3943 = vmatprep.mubr.bf16.mxu0 0
      %3944 = vmatmul.mubr.bf16.gmra.mxu0 %v3476
      %v3945 = vpop.f32.mrf.mxu0
      %v3946 = vadd.f32 0.0, %v3945
      %v3947 = vpop.f32.mrf.mxu0
      %v3948 = vpop.f32.mrf.mxu0
      %v3949 = vadd.f32 0.0, %v3948
      %v3950 = vpop.f32.mrf.mxu0
      %3951 = vmatprep.mubr.bf16.mxu0 0
      %3952 = vmatmul.mubr.bf16.gmra.mxu0 %v3477
      %v3953 = vpop.f32.mrf.mxu0
      %v3954 = vadd.f32 0.0, %v3953
      %v3955 = vpop.f32.mrf.mxu0
      %v3956 = vpop.f32.mrf.mxu0
      %v3957 = vadd.f32 0.0, %v3956
      %v3958 = vpop.f32.mrf.mxu0
      %3959 = vmatprep.mubr.bf16.mxu0 0
      %3960 = vmatmul.mubr.bf16.gmra.mxu0 %v3478
      %v3961 = vpop.f32.mrf.mxu0
      %v3962 = vadd.f32 0.0, %v3961
      %v3963 = vpop.f32.mrf.mxu0
      %v3964 = vpop.f32.mrf.mxu0
      %v3965 = vadd.f32 0.0, %v3964
      %v3966 = vpop.f32.mrf.mxu0
      %3967 = vmatprep.mubr.bf16.mxu0 0
      %3968 = vmatmul.mubr.bf16.gmra.mxu0 %v3765
      %v3969 = vpop.f32.mrf.mxu0
      %v3970 = vadd.f32 0.0, %v3969
      %v3971 = vpop.f32.mrf.mxu0
      %v3972 = vpop.f32.mrf.mxu0
      %v3973 = vadd.f32 0.0, %v3972
      %v3974 = vpop.f32.mrf.mxu0
      %3975 = vdwg.mxu0
      %v3976 = vadd.f32 %v3704, %v3850
      %v3977 = vadd.f32 %v3705, %v3853
      %v3978 = vadd.f32 %v3706, %v3858
      %v3979 = vadd.f32 %v3707, %v3861
      %v3980 = vadd.f32 %v3708, %v3866
      %v3981 = vadd.f32 %v3709, %v3869
      %v3982 = vadd.f32 %v3710, %v3874
      %v3983 = vadd.f32 %v3711, %v3877
      %v3984 = vadd.f32 %v3712, %v3882
      %v3985 = vadd.f32 %v3713, %v3885
      %v3986 = vadd.f32 %v3714, %v3890
      %v3987 = vadd.f32 %v3715, %v3893
      %v3988 = vadd.f32 %v3716, %v3898
      %v3989 = vadd.f32 %v3717, %v3901
      %v3990 = vadd.f32 %v3718, %v3906
      %v3991 = vadd.f32 %v3719, %v3909
      %v3992 = vadd.f32 %v3720, %v3914
      %v3993 = vadd.f32 %v3721, %v3917
      %v3994 = vadd.f32 %v3722, %v3922
      %v3995 = vadd.f32 %v3723, %v3925
      %v3996 = vadd.f32 %v3724, %v3930
      %v3997 = vadd.f32 %v3725, %v3933
      %v3998 = vadd.f32 %v3726, %v3938
      %v3999 = vadd.f32 %v3727, %v3941
      %v4000 = vadd.f32 %v3728, %v3946
      %v4001 = vadd.f32 %v3729, %v3949
      %v4002 = vadd.f32 %v3730, %v3954
      %v4003 = vadd.f32 %v3731, %v3957
      %v4004 = vadd.f32 %v3732, %v3962
      %v4005 = vadd.f32 %v3733, %v3965
      %v4006 = vadd.f32 %v3734, %v3970
      %v4007 = vadd.f32 %v3735, %v3973
      %v4011 = vrot.slane %v3250, 5
      %v4012 = vrot.slane %v4011, 4
      %v4013 = vrot.slane %v1950, 5
      %v4014 = vsel %vm3301, %v4012, %v4013
      %v4015 = vrot.slane %v4013, 4
      %v4016 = vrot.slane %v1951, 5
      %v4017 = vsel %vm3301, %v4015, %v4016
      %s4018 = scalar_lea.vmem %s1, 512
      %v4019 = vld [vmem:[%s4018] sm:$0xf]
      %v4020 = vld [vmem:[%s4018 + $0x4] sm:$0xf]
      %v4021 = vld [vmem:[%s4018 + $0x8] sm:$0xf]
      %v4022 = vld [vmem:[%s4018 + $0xc] sm:$0xf]
      %v4023 = vld [vmem:[%s4018 + $0x10] sm:$0xf]
      %v4024 = vld [vmem:[%s4018 + $0x14] sm:$0xf]
      %v4025 = vld [vmem:[%s4018 + $0x18] sm:$0xf]
      %v4026 = vld [vmem:[%s4018 + $0x1c] sm:$0xf]
      %v4027 = vld [vmem:[%s4018 + $0x20] sm:$0xf]
      %v4028 = vld [vmem:[%s4018 + $0x24] sm:$0xf]
      %v4029 = vld [vmem:[%s4018 + $0x28] sm:$0xf]
      %v4030 = vld [vmem:[%s4018 + $0x2c] sm:$0xf]
      %v4031 = vld [vmem:[%s4018 + $0x30] sm:$0xf]
      %v4032 = vld [vmem:[%s4018 + $0x34] sm:$0xf]
      %v4033 = vld [vmem:[%s4018 + $0x38] sm:$0xf]
      %v4034 = vld [vmem:[%s4018 + $0x3c] sm:$0xf]
      %v4035 = vunpack.c.l.b16 %v4014
      %v4036 = vunpack.c.l.b16 %v4017
      %v4037 = vpack.c.b16 %v4036, %v4035
      %v4055 = vunpack.c.l.b16 %v4019
      %v4056 = vunpack.c.l.b16 %v4020
      %v4057 = vunpack.c.l.b16 %v4021
      %v4058 = vunpack.c.l.b16 %v4022
      %v4059 = vunpack.c.l.b16 %v4023
      %v4060 = vunpack.c.l.b16 %v4024
      %v4061 = vunpack.c.l.b16 %v4025
      %v4062 = vunpack.c.l.b16 %v4026
      %v4063 = vunpack.c.l.b16 %v4027
      %v4064 = vunpack.c.l.b16 %v4028
      %v4065 = vunpack.c.l.b16 %v4029
      %v4066 = vunpack.c.l.b16 %v4030
      %v4067 = vunpack.c.l.b16 %v4031
      %v4068 = vunpack.c.l.b16 %v4032
      %v4069 = vunpack.c.l.b16 %v4033
      %v4070 = vunpack.c.l.b16 %v4034
      %v4071 = vpack.c.b16 %v4056, %v4055
      %v4072 = vpack.c.b16 %v4058, %v4057
      %v4073 = vpack.c.b16 %v4060, %v4059
      %v4074 = vpack.c.b16 %v4062, %v4061
      %v4075 = vpack.c.b16 %v4064, %v4063
      %v4076 = vpack.c.b16 %v4066, %v4065
      %v4077 = vpack.c.b16 %v4068, %v4067
      %v4078 = vpack.c.b16 %v4070, %v4069
      %4087 = vmatprep.subr.bf16.mxu0 0
      %4088 = vmatpush1.bf16.msra.mxu0 %v4078
      %4089 = vmatprep.subr.bf16.mxu0 0
      %4090 = vmatpush1.bf16.msra.mxu0 %v4077
      %4091 = vmatprep.subr.bf16.mxu0 0
      %4092 = vmatpush1.bf16.msra.mxu0 %v4076
      %4093 = vmatprep.subr.bf16.mxu0 0
      %4094 = vmatpush1.bf16.msra.mxu0 %v4075
      %4095 = vmatprep.subr.bf16.mxu0 0
      %4096 = vmatpush1.bf16.msra.mxu0 %v4074
      %4097 = vmatprep.subr.bf16.mxu0 0
      %4098 = vmatpush1.bf16.msra.mxu0 %v4073
      %4099 = vmatprep.subr.bf16.mxu0 0
      %4100 = vmatpush1.bf16.msra.mxu0 %v4072
      %4101 = vmatprep.subr.bf16.mxu0 0
      %4102 = vmatpush1.bf16.msra.mxu0 %v4071
      %4103 = vmatprep.subr.bf16.mxu0 0
      %4104 = vmatpush2.bf16.msra.mxu0 0
      %4105 = vmatprep.subr.bf16.mxu0 0
      %4106 = vmatpush2.bf16.msra.mxu0 0
      %4107 = vmatprep.subr.bf16.mxu0 0
      %4108 = vmatpush2.bf16.msra.mxu0 0
      %4109 = vmatprep.subr.bf16.mxu0 0
      %4110 = vmatpush2.bf16.msra.mxu0 0
      %4111 = vmatprep.subr.bf16.mxu0 0
      %4112 = vmatpush2.bf16.msra.mxu0 0
      %4113 = vmatprep.subr.bf16.mxu0 0
      %4114 = vmatpush2.bf16.msra.mxu0 0
      %4115 = vmatprep.subr.bf16.mxu0 0
      %4116 = vmatpush2.bf16.msra.mxu0 0
      %4117 = vmatprep.subr.bf16.mxu0 0
      %4118 = vmatpush2.bf16.msra.mxu0 0
      %4119 = vmatprep.mubr.bf16.mxu0 0
      %4120 = vmatmul.mubr.bf16.gmra.mxu0 %v3465
      %v4121 = vpop.f32.mrf.mxu0
      %v4122 = vadd.f32 0.0, %v4121
      %v4123 = vpop.f32.mrf.mxu0
      %v4124 = vpop.f32.mrf.mxu0
      %v4125 = vadd.f32 0.0, %v4124
      %v4126 = vpop.f32.mrf.mxu0
      %4127 = vmatprep.mubr.bf16.mxu0 0
      %4128 = vmatmul.mubr.bf16.gmra.mxu0 %v3466
      %v4129 = vpop.f32.mrf.mxu0
      %v4130 = vadd.f32 0.0, %v4129
      %v4131 = vpop.f32.mrf.mxu0
      %v4132 = vpop.f32.mrf.mxu0
      %v4133 = vadd.f32 0.0, %v4132
      %v4134 = vpop.f32.mrf.mxu0
      %4135 = vmatprep.mubr.bf16.mxu0 0
      %4136 = vmatmul.mubr.bf16.gmra.mxu0 %v3467
      %v4137 = vpop.f32.mrf.mxu0
      %v4138 = vadd.f32 0.0, %v4137
      %v4139 = vpop.f32.mrf.mxu0
      %v4140 = vpop.f32.mrf.mxu0
      %v4141 = vadd.f32 0.0, %v4140
      %v4142 = vpop.f32.mrf.mxu0
      %4143 = vmatprep.mubr.bf16.mxu0 0
      %4144 = vmatmul.mubr.bf16.gmra.mxu0 %v3468
      %v4145 = vpop.f32.mrf.mxu0
      %v4146 = vadd.f32 0.0, %v4145
      %v4147 = vpop.f32.mrf.mxu0
      %v4148 = vpop.f32.mrf.mxu0
      %v4149 = vadd.f32 0.0, %v4148
      %v4150 = vpop.f32.mrf.mxu0
      %4151 = vmatprep.mubr.bf16.mxu0 0
      %4152 = vmatmul.mubr.bf16.gmra.mxu0 %v3469
      %v4153 = vpop.f32.mrf.mxu0
      %v4154 = vadd.f32 0.0, %v4153
      %v4155 = vpop.f32.mrf.mxu0
      %v4156 = vpop.f32.mrf.mxu0
      %v4157 = vadd.f32 0.0, %v4156
      %v4158 = vpop.f32.mrf.mxu0
      %4159 = vmatprep.mubr.bf16.mxu0 0
      %4160 = vmatmul.mubr.bf16.gmra.mxu0 %v3470
      %v4161 = vpop.f32.mrf.mxu0
      %v4162 = vadd.f32 0.0, %v4161
      %v4163 = vpop.f32.mrf.mxu0
      %v4164 = vpop.f32.mrf.mxu0
      %v4165 = vadd.f32 0.0, %v4164
      %v4166 = vpop.f32.mrf.mxu0
      %4167 = vmatprep.mubr.bf16.mxu0 0
      %4168 = vmatmul.mubr.bf16.gmra.mxu0 %v3471
      %v4169 = vpop.f32.mrf.mxu0
      %v4170 = vadd.f32 0.0, %v4169
      %v4171 = vpop.f32.mrf.mxu0
      %v4172 = vpop.f32.mrf.mxu0
      %v4173 = vadd.f32 0.0, %v4172
      %v4174 = vpop.f32.mrf.mxu0
      %4175 = vmatprep.mubr.bf16.mxu0 0
      %4176 = vmatmul.mubr.bf16.gmra.mxu0 %v3472
      %v4177 = vpop.f32.mrf.mxu0
      %v4178 = vadd.f32 0.0, %v4177
      %v4179 = vpop.f32.mrf.mxu0
      %v4180 = vpop.f32.mrf.mxu0
      %v4181 = vadd.f32 0.0, %v4180
      %v4182 = vpop.f32.mrf.mxu0
      %4183 = vmatprep.mubr.bf16.mxu0 0
      %4184 = vmatmul.mubr.bf16.gmra.mxu0 %v3473
      %v4185 = vpop.f32.mrf.mxu0
      %v4186 = vadd.f32 0.0, %v4185
      %v4187 = vpop.f32.mrf.mxu0
      %v4188 = vpop.f32.mrf.mxu0
      %v4189 = vadd.f32 0.0, %v4188
      %v4190 = vpop.f32.mrf.mxu0
      %4191 = vmatprep.mubr.bf16.mxu0 0
      %4192 = vmatmul.mubr.bf16.gmra.mxu0 %v3474
      %v4193 = vpop.f32.mrf.mxu0
      %v4194 = vadd.f32 0.0, %v4193
      %v4195 = vpop.f32.mrf.mxu0
      %v4196 = vpop.f32.mrf.mxu0
      %v4197 = vadd.f32 0.0, %v4196
      %v4198 = vpop.f32.mrf.mxu0
      %4199 = vmatprep.mubr.bf16.mxu0 0
      %4200 = vmatmul.mubr.bf16.gmra.mxu0 %v3475
      %v4201 = vpop.f32.mrf.mxu0
      %v4202 = vadd.f32 0.0, %v4201
      %v4203 = vpop.f32.mrf.mxu0
      %v4204 = vpop.f32.mrf.mxu0
      %v4205 = vadd.f32 0.0, %v4204
      %v4206 = vpop.f32.mrf.mxu0
      %4207 = vmatprep.mubr.bf16.mxu0 0
      %4208 = vmatmul.mubr.bf16.gmra.mxu0 %v3476
      %v4209 = vpop.f32.mrf.mxu0
      %v4210 = vadd.f32 0.0, %v4209
      %v4211 = vpop.f32.mrf.mxu0
      %v4212 = vpop.f32.mrf.mxu0
      %v4213 = vadd.f32 0.0, %v4212
      %v4214 = vpop.f32.mrf.mxu0
      %4215 = vmatprep.mubr.bf16.mxu0 0
      %4216 = vmatmul.mubr.bf16.gmra.mxu0 %v3477
      %v4217 = vpop.f32.mrf.mxu0
      %v4218 = vadd.f32 0.0, %v4217
      %v4219 = vpop.f32.mrf.mxu0
      %v4220 = vpop.f32.mrf.mxu0
      %v4221 = vadd.f32 0.0, %v4220
      %v4222 = vpop.f32.mrf.mxu0
      %4223 = vmatprep.mubr.bf16.mxu0 0
      %4224 = vmatmul.mubr.bf16.gmra.mxu0 %v3478
      %v4225 = vpop.f32.mrf.mxu0
      %v4226 = vadd.f32 0.0, %v4225
      %v4227 = vpop.f32.mrf.mxu0
      %v4228 = vpop.f32.mrf.mxu0
      %v4229 = vadd.f32 0.0, %v4228
      %v4230 = vpop.f32.mrf.mxu0
      %4231 = vmatprep.mubr.bf16.mxu0 0
      %4232 = vmatmul.mubr.bf16.gmra.mxu0 %v3765
      %v4233 = vpop.f32.mrf.mxu0
      %v4234 = vadd.f32 0.0, %v4233
      %v4235 = vpop.f32.mrf.mxu0
      %v4236 = vpop.f32.mrf.mxu0
      %v4237 = vadd.f32 0.0, %v4236
      %v4238 = vpop.f32.mrf.mxu0
      %4239 = vmatprep.mubr.bf16.mxu0 0
      %4240 = vmatmul.mubr.bf16.gmra.mxu0 %v4037
      %v4241 = vpop.f32.mrf.mxu0
      %v4242 = vadd.f32 0.0, %v4241
      %v4243 = vpop.f32.mrf.mxu0
      %v4244 = vpop.f32.mrf.mxu0
      %v4245 = vadd.f32 0.0, %v4244
      %v4246 = vpop.f32.mrf.mxu0
      %4247 = vdwg.mxu0
      %v4248 = vadd.f32 %v3976, %v4122
      %v4249 = vadd.f32 %v3977, %v4125
      %v4250 = vadd.f32 %v3978, %v4130
      %v4251 = vadd.f32 %v3979, %v4133
      %v4252 = vadd.f32 %v3980, %v4138
      %v4253 = vadd.f32 %v3981, %v4141
      %v4254 = vadd.f32 %v3982, %v4146
      %v4255 = vadd.f32 %v3983, %v4149
      %v4256 = vadd.f32 %v3984, %v4154
      %v4257 = vadd.f32 %v3985, %v4157
      %v4258 = vadd.f32 %v3986, %v4162
      %v4259 = vadd.f32 %v3987, %v4165
      %v4260 = vadd.f32 %v3988, %v4170
      %v4261 = vadd.f32 %v3989, %v4173
      %v4262 = vadd.f32 %v3990, %v4178
      %v4263 = vadd.f32 %v3991, %v4181
      %v4264 = vadd.f32 %v3992, %v4186
      %v4265 = vadd.f32 %v3993, %v4189
      %v4266 = vadd.f32 %v3994, %v4194
      %v4267 = vadd.f32 %v3995, %v4197
      %v4268 = vadd.f32 %v3996, %v4202
      %v4269 = vadd.f32 %v3997, %v4205
      %v4270 = vadd.f32 %v3998, %v4210
      %v4271 = vadd.f32 %v3999, %v4213
      %v4272 = vadd.f32 %v4000, %v4218
      %v4273 = vadd.f32 %v4001, %v4221
      %v4274 = vadd.f32 %v4002, %v4226
      %v4275 = vadd.f32 %v4003, %v4229
      %v4276 = vadd.f32 %v4004, %v4234
      %v4277 = vadd.f32 %v4005, %v4237
      %v4278 = vadd.f32 %v4006, %v4242
      %v4279 = vadd.f32 %v4007, %v4245
      %v4280 = vadd.f32 %v4248, %v4249
      %v4281 = vadd.f32 %v4280, %v4250
      %v4282 = vadd.f32 %v4281, %v4251
      %v4283 = vadd.f32 %v4282, %v4252
      %v4284 = vadd.f32 %v4283, %v4253
      %v4285 = vadd.f32 %v4284, %v4254
      %v4286 = vadd.f32 %v4285, %v4255
      %v4287 = vadd.f32 %v4286, %v4256
      %v4288 = vadd.f32 %v4287, %v4257
      %v4289 = vadd.f32 %v4288, %v4258
      %v4290 = vadd.f32 %v4289, %v4259
      %v4291 = vadd.f32 %v4290, %v4260
      %v4292 = vadd.f32 %v4291, %v4261
      %v4293 = vadd.f32 %v4292, %v4262
      %v4294 = vadd.f32 %v4293, %v4263
      %v4295 = vadd.f32 %v4294, %v4264
      %v4296 = vadd.f32 %v4295, %v4265
      %v4297 = vadd.f32 %v4296, %v4266
      %v4298 = vadd.f32 %v4297, %v4267
      %v4299 = vadd.f32 %v4298, %v4268
      %v4300 = vadd.f32 %v4299, %v4269
      %v4301 = vadd.f32 %v4300, %v4270
      %v4302 = vadd.f32 %v4301, %v4271
      %v4303 = vadd.f32 %v4302, %v4272
      %v4304 = vadd.f32 %v4303, %v4273
      %v4305 = vadd.f32 %v4304, %v4274
      %v4306 = vadd.f32 %v4305, %v4275
      %v4307 = vadd.f32 %v4306, %v4276
      %v4308 = vadd.f32 %v4307, %v4277
      %v4309 = vadd.f32 %v4308, %v4278
      %v4310 = vadd.f32 %v4309, %v4279
      %v4311 = vrot.slane %v4310, 4
      %v4312 = vadd.f32 %v4310, %v4311
      %v4313 = vrot.slane %v4312, 2
      %v4314 = vadd.f32 %v4312, %v4313
      %v4315 = vrot.slane %v4314, 1
      %v4316 = vadd.f32 %v4314, %v4315
      %v4317 = vmul.f32 %v4316, 0.00390625
      %v4318 = vmul.f32 %v4248, %v4248
      %v4319 = vmul.f32 %v4249, %v4249
      %v4320 = vmul.f32 %v4250, %v4250
      %v4321 = vmul.f32 %v4251, %v4251
      %v4322 = vmul.f32 %v4252, %v4252
      %v4323 = vmul.f32 %v4253, %v4253
      %v4324 = vmul.f32 %v4254, %v4254
      %v4325 = vmul.f32 %v4255, %v4255
      %v4326 = vmul.f32 %v4256, %v4256
      %v4327 = vmul.f32 %v4257, %v4257
      %v4328 = vmul.f32 %v4258, %v4258
      %v4329 = vmul.f32 %v4259, %v4259
      %v4330 = vmul.f32 %v4260, %v4260
      %v4331 = vmul.f32 %v4261, %v4261
      %v4332 = vmul.f32 %v4262, %v4262
      %v4333 = vmul.f32 %v4263, %v4263
      %v4334 = vmul.f32 %v4264, %v4264
      %v4335 = vmul.f32 %v4265, %v4265
      %v4336 = vmul.f32 %v4266, %v4266
      %v4337 = vmul.f32 %v4267, %v4267
      %v4338 = vmul.f32 %v4268, %v4268
      %v4339 = vmul.f32 %v4269, %v4269
      %v4340 = vmul.f32 %v4270, %v4270
      %v4341 = vmul.f32 %v4271, %v4271
      %v4342 = vmul.f32 %v4272, %v4272
      %v4343 = vmul.f32 %v4273, %v4273
      %v4344 = vmul.f32 %v4274, %v4274
      %v4345 = vmul.f32 %v4275, %v4275
      %v4346 = vmul.f32 %v4276, %v4276
      %v4347 = vmul.f32 %v4277, %v4277
      %v4348 = vmul.f32 %v4278, %v4278
      %v4349 = vmul.f32 %v4279, %v4279
      %v4350 = vadd.f32 %v4318, %v4319
      %v4351 = vadd.f32 %v4350, %v4320
      %v4352 = vadd.f32 %v4351, %v4321
      %v4353 = vadd.f32 %v4352, %v4322
      %v4354 = vadd.f32 %v4353, %v4323
      %v4355 = vadd.f32 %v4354, %v4324
      %v4356 = vadd.f32 %v4355, %v4325
      %v4357 = vadd.f32 %v4356, %v4326
      %v4358 = vadd.f32 %v4357, %v4327
      %v4359 = vadd.f32 %v4358, %v4328
      %v4360 = vadd.f32 %v4359, %v4329
      %v4361 = vadd.f32 %v4360, %v4330
      %v4362 = vadd.f32 %v4361, %v4331
      %v4363 = vadd.f32 %v4362, %v4332
      %v4364 = vadd.f32 %v4363, %v4333
      %v4365 = vadd.f32 %v4364, %v4334
      %v4366 = vadd.f32 %v4365, %v4335
      %v4367 = vadd.f32 %v4366, %v4336
      %v4368 = vadd.f32 %v4367, %v4337
      %v4369 = vadd.f32 %v4368, %v4338
      %v4370 = vadd.f32 %v4369, %v4339
      %v4371 = vadd.f32 %v4370, %v4340
      %v4372 = vadd.f32 %v4371, %v4341
      %v4373 = vadd.f32 %v4372, %v4342
      %v4374 = vadd.f32 %v4373, %v4343
      %v4375 = vadd.f32 %v4374, %v4344
      %v4376 = vadd.f32 %v4375, %v4345
      %v4377 = vadd.f32 %v4376, %v4346
      %v4378 = vadd.f32 %v4377, %v4347
      %v4379 = vadd.f32 %v4378, %v4348
      %v4380 = vadd.f32 %v4379, %v4349
      %v4381 = vrot.slane %v4380, 4
      %v4382 = vadd.f32 %v4380, %v4381
      %v4383 = vrot.slane %v4382, 2
      %v4384 = vadd.f32 %v4382, %v4383
      %v4385 = vrot.slane %v4384, 1
      %v4386 = vadd.f32 %v4384, %v4385
      %v4387 = vmul.f32 %v4386, 0.00390625
      %v4388 = vmul.f32 %v4317, %v4317
      %v4389 = vsub.f32 %v4387, %v4388
      %v4390 = vmax.f32 %v4389, 0.0
      %v4391 = vsub.f32 %v4248, %v4317
      %v4392 = vsub.f32 %v4249, %v4317
      %v4393 = vsub.f32 %v4250, %v4317
      %v4394 = vsub.f32 %v4251, %v4317
      %v4395 = vsub.f32 %v4252, %v4317
      %v4396 = vsub.f32 %v4253, %v4317
      %v4397 = vsub.f32 %v4254, %v4317
      %v4398 = vsub.f32 %v4255, %v4317
      %v4399 = vsub.f32 %v4256, %v4317
      %v4400 = vsub.f32 %v4257, %v4317
      %v4401 = vsub.f32 %v4258, %v4317
      %v4402 = vsub.f32 %v4259, %v4317
      %v4403 = vsub.f32 %v4260, %v4317
      %v4404 = vsub.f32 %v4261, %v4317
      %v4405 = vsub.f32 %v4262, %v4317
      %v4406 = vsub.f32 %v4263, %v4317
      %v4407 = vsub.f32 %v4264, %v4317
      %v4408 = vsub.f32 %v4265, %v4317
      %v4409 = vsub.f32 %v4266, %v4317
      %v4410 = vsub.f32 %v4267, %v4317
      %v4411 = vsub.f32 %v4268, %v4317
      %v4412 = vsub.f32 %v4269, %v4317
      %v4413 = vsub.f32 %v4270, %v4317
      %v4414 = vsub.f32 %v4271, %v4317
      %v4415 = vsub.f32 %v4272, %v4317
      %v4416 = vsub.f32 %v4273, %v4317
      %v4417 = vsub.f32 %v4274, %v4317
      %v4418 = vsub.f32 %v4275, %v4317
      %v4419 = vsub.f32 %v4276, %v4317
      %v4420 = vsub.f32 %v4277, %v4317
      %v4421 = vsub.f32 %v4278, %v4317
      %v4422 = vsub.f32 %v4279, %v4317
      %v4423 = vadd.f32 %v4390, 1e-05
      %v4424 = vrsqrt.pop %v4423
      %v4425 = vmul.f32 %v4391, %v4424
      %v4426 = vmul.f32 %v4392, %v4424
      %v4427 = vmul.f32 %v4393, %v4424
      %v4428 = vmul.f32 %v4394, %v4424
      %v4429 = vmul.f32 %v4395, %v4424
      %v4430 = vmul.f32 %v4396, %v4424
      %v4431 = vmul.f32 %v4397, %v4424
      %v4432 = vmul.f32 %v4398, %v4424
      %v4433 = vmul.f32 %v4399, %v4424
      %v4434 = vmul.f32 %v4400, %v4424
      %v4435 = vmul.f32 %v4401, %v4424
      %v4436 = vmul.f32 %v4402, %v4424
      %v4437 = vmul.f32 %v4403, %v4424
      %v4438 = vmul.f32 %v4404, %v4424
      %v4439 = vmul.f32 %v4405, %v4424
      %v4440 = vmul.f32 %v4406, %v4424
      %v4441 = vmul.f32 %v4407, %v4424
      %v4442 = vmul.f32 %v4408, %v4424
      %v4443 = vmul.f32 %v4409, %v4424
      %v4444 = vmul.f32 %v4410, %v4424
      %v4445 = vmul.f32 %v4411, %v4424
      %v4446 = vmul.f32 %v4412, %v4424
      %v4447 = vmul.f32 %v4413, %v4424
      %v4448 = vmul.f32 %v4414, %v4424
      %v4449 = vmul.f32 %v4415, %v4424
      %v4450 = vmul.f32 %v4416, %v4424
      %v4451 = vmul.f32 %v4417, %v4424
      %v4452 = vmul.f32 %v4418, %v4424
      %v4453 = vmul.f32 %v4419, %v4424
      %v4454 = vmul.f32 %v4420, %v4424
      %v4455 = vmul.f32 %v4421, %v4424
      %v4456 = vmul.f32 %v4422, %v4424
      %v4457 = vmax.f32 %v4425, 0.0
      %v4458 = vmax.f32 %v4426, 0.0
      %v4459 = vmax.f32 %v4427, 0.0
      %v4460 = vmax.f32 %v4428, 0.0
      %v4461 = vmax.f32 %v4429, 0.0
      %v4462 = vmax.f32 %v4430, 0.0
      %v4463 = vmax.f32 %v4431, 0.0
      %v4464 = vmax.f32 %v4432, 0.0
      %v4465 = vmax.f32 %v4433, 0.0
      %v4466 = vmax.f32 %v4434, 0.0
      %v4467 = vmax.f32 %v4435, 0.0
      %v4468 = vmax.f32 %v4436, 0.0
      %v4469 = vmax.f32 %v4437, 0.0
      %v4470 = vmax.f32 %v4438, 0.0
      %v4471 = vmax.f32 %v4439, 0.0
      %v4472 = vmax.f32 %v4440, 0.0
      %v4473 = vmax.f32 %v4441, 0.0
      %v4474 = vmax.f32 %v4442, 0.0
      %v4475 = vmax.f32 %v4443, 0.0
      %v4476 = vmax.f32 %v4444, 0.0
      %v4477 = vmax.f32 %v4445, 0.0
      %v4478 = vmax.f32 %v4446, 0.0
      %v4479 = vmax.f32 %v4447, 0.0
      %v4480 = vmax.f32 %v4448, 0.0
      %v4481 = vmax.f32 %v4449, 0.0
      %v4482 = vmax.f32 %v4450, 0.0
      %v4483 = vmax.f32 %v4451, 0.0
      %v4484 = vmax.f32 %v4452, 0.0
      %v4485 = vmax.f32 %v4453, 0.0
      %v4486 = vmax.f32 %v4454, 0.0
      %v4487 = vmax.f32 %v4455, 0.0
      %v4488 = vmax.f32 %v4456, 0.0
      %v4489 = vpack.c.bf16 %v4458, %v4457
      %v4490 = vpack.c.bf16 %v4460, %v4459
      %v4491 = vpack.c.bf16 %v4462, %v4461
      %v4492 = vpack.c.bf16 %v4464, %v4463
      %v4493 = vpack.c.bf16 %v4466, %v4465
      %v4494 = vpack.c.bf16 %v4468, %v4467
      %v4495 = vpack.c.bf16 %v4470, %v4469
      %v4496 = vpack.c.bf16 %v4472, %v4471
      %v4497 = vpack.c.bf16 %v4474, %v4473
      %v4498 = vpack.c.bf16 %v4476, %v4475
      %v4499 = vpack.c.bf16 %v4478, %v4477
      %v4500 = vpack.c.bf16 %v4480, %v4479
      %v4501 = vpack.c.bf16 %v4482, %v4481
      %v4502 = vpack.c.bf16 %v4484, %v4483
      %v4503 = vpack.c.bf16 %v4486, %v4485
      %v4504 = vpack.c.bf16 %v4488, %v4487
      %v4521 = vunpack.c.l.b16 %v4489
      %v4522 = vunpack.c.h.b16 %v4489
      %v4523 = vunpack.c.l.b16 %v4490
      %v4524 = vunpack.c.h.b16 %v4490
      %v4525 = vunpack.c.l.b16 %v4491
      %v4526 = vunpack.c.h.b16 %v4491
      %v4527 = vunpack.c.l.b16 %v4492
      %v4528 = vunpack.c.h.b16 %v4492
      %v4529 = vunpack.c.l.b16 %v4493
      %v4530 = vunpack.c.h.b16 %v4493
      %v4531 = vunpack.c.l.b16 %v4494
      %v4532 = vunpack.c.h.b16 %v4494
      %v4533 = vunpack.c.l.b16 %v4495
      %v4534 = vunpack.c.h.b16 %v4495
      %v4535 = vunpack.c.l.b16 %v4496
      %v4536 = vunpack.c.h.b16 %v4496
      %v4537 = vunpack.c.l.b16 %v4497
      %v4538 = vunpack.c.h.b16 %v4497
      %v4539 = vunpack.c.l.b16 %v4498
      %v4540 = vunpack.c.h.b16 %v4498
      %v4541 = vunpack.c.l.b16 %v4499
      %v4542 = vunpack.c.h.b16 %v4499
      %v4543 = vunpack.c.l.b16 %v4500
      %v4544 = vunpack.c.h.b16 %v4500
      %v4545 = vunpack.c.l.b16 %v4501
      %v4546 = vunpack.c.h.b16 %v4501
      %v4547 = vunpack.c.l.b16 %v4502
      %v4548 = vunpack.c.h.b16 %v4502
      %v4549 = vunpack.c.l.b16 %v4503
      %v4550 = vunpack.c.h.b16 %v4503
      %v4551 = vunpack.c.l.b16 %v4504
      %v4552 = vunpack.c.h.b16 %v4504
      %v4553 = vpack.c.b16 %v4521, %v4521
      %v4554 = vpack.c.b16 %v4522, %v4522
      %v4555 = vpack.c.b16 %v4523, %v4523
      %v4556 = vpack.c.b16 %v4524, %v4524
      %v4557 = vpack.c.b16 %v4525, %v4525
      %v4558 = vpack.c.b16 %v4526, %v4526
      %v4559 = vpack.c.b16 %v4527, %v4527
      %v4560 = vpack.c.b16 %v4528, %v4528
      %v4561 = vpack.c.b16 %v4529, %v4529
      %v4562 = vpack.c.b16 %v4530, %v4530
      %v4563 = vpack.c.b16 %v4531, %v4531
      %v4564 = vpack.c.b16 %v4532, %v4532
      %v4565 = vpack.c.b16 %v4533, %v4533
      %v4566 = vpack.c.b16 %v4534, %v4534
      %v4567 = vpack.c.b16 %v4535, %v4535
      %v4568 = vpack.c.b16 %v4536, %v4536
      %v4569 = vpack.c.b16 %v4537, %v4537
      %v4570 = vpack.c.b16 %v4538, %v4538
      %v4571 = vpack.c.b16 %v4539, %v4539
      %v4572 = vpack.c.b16 %v4540, %v4540
      %v4573 = vpack.c.b16 %v4541, %v4541
      %v4574 = vpack.c.b16 %v4542, %v4542
      %v4575 = vpack.c.b16 %v4543, %v4543
      %v4576 = vpack.c.b16 %v4544, %v4544
      %v4577 = vpack.c.b16 %v4545, %v4545
      %v4578 = vpack.c.b16 %v4546, %v4546
      %v4579 = vpack.c.b16 %v4547, %v4547
      %v4580 = vpack.c.b16 %v4548, %v4548
      %v4581 = vpack.c.b16 %v4549, %v4549
      %v4582 = vpack.c.b16 %v4550, %v4550
      %v4583 = vpack.c.b16 %v4551, %v4551
      %v4584 = vpack.c.b16 %v4552, %v4552
      %v4586 = vshrl.u32 %v4553, 16
      %v4588 = vrot.slane %v4586, 7
      %v4589 = vshll.u32 %v4553, 16
      %v4591 = vor.u32 %v4588, %v4589
      %v4592 = vrot.slane %v4588, 4
      %v4594 = vshrl.u32 %v4554, 16
      %v4596 = vrot.slane %v4594, 7
      %v4597 = vshll.u32 %v4554, 16
      %v4599 = vor.u32 %v4596, %v4597
      %v4600 = vsel %vm302, %v4592, %v4599
      %v4601 = vrot.slane %v4596, 4
      %v4603 = vshrl.u32 %v4555, 16
      %v4605 = vrot.slane %v4603, 7
      %v4606 = vshll.u32 %v4555, 16
      %v4608 = vor.u32 %v4605, %v4606
      %v4609 = vrot.slane %v4605, 4
      %v4611 = vshrl.u32 %v4556, 16
      %v4613 = vrot.slane %v4611, 7
      %v4614 = vshll.u32 %v4556, 16
      %v4616 = vor.u32 %v4613, %v4614
      %v4617 = vsel %vm302, %v4609, %v4616
      %v4618 = vrot.slane %v4613, 4
      %v4620 = vshrl.u32 %v4557, 16
      %v4622 = vrot.slane %v4620, 7
      %v4623 = vshll.u32 %v4557, 16
      %v4625 = vor.u32 %v4622, %v4623
      %v4626 = vrot.slane %v4622, 4
      %v4628 = vshrl.u32 %v4558, 16
      %v4630 = vrot.slane %v4628, 7
      %v4631 = vshll.u32 %v4558, 16
      %v4633 = vor.u32 %v4630, %v4631
      %v4634 = vsel %vm302, %v4626, %v4633
      %v4635 = vrot.slane %v4630, 4
      %v4637 = vshrl.u32 %v4559, 16
      %v4639 = vrot.slane %v4637, 7
      %v4640 = vshll.u32 %v4559, 16
      %v4642 = vor.u32 %v4639, %v4640
      %v4643 = vrot.slane %v4639, 4
      %v4645 = vshrl.u32 %v4560, 16
      %v4647 = vrot.slane %v4645, 7
      %v4648 = vshll.u32 %v4560, 16
      %v4650 = vor.u32 %v4647, %v4648
      %v4651 = vsel %vm302, %v4643, %v4650
      %v4652 = vrot.slane %v4647, 4
      %v4654 = vshrl.u32 %v4561, 16
      %v4656 = vrot.slane %v4654, 7
      %v4657 = vshll.u32 %v4561, 16
      %v4659 = vor.u32 %v4656, %v4657
      %v4660 = vrot.slane %v4656, 4
      %v4662 = vshrl.u32 %v4562, 16
      %v4664 = vrot.slane %v4662, 7
      %v4665 = vshll.u32 %v4562, 16
      %v4667 = vor.u32 %v4664, %v4665
      %v4668 = vsel %vm302, %v4660, %v4667
      %v4669 = vrot.slane %v4664, 4
      %v4671 = vshrl.u32 %v4563, 16
      %v4673 = vrot.slane %v4671, 7
      %v4674 = vshll.u32 %v4563, 16
      %v4676 = vor.u32 %v4673, %v4674
      %v4677 = vrot.slane %v4673, 4
      %v4679 = vshrl.u32 %v4564, 16
      %v4681 = vrot.slane %v4679, 7
      %v4682 = vshll.u32 %v4564, 16
      %v4684 = vor.u32 %v4681, %v4682
      %v4685 = vsel %vm302, %v4677, %v4684
      %v4686 = vrot.slane %v4681, 4
      %v4688 = vshrl.u32 %v4565, 16
      %v4690 = vrot.slane %v4688, 7
      %v4691 = vshll.u32 %v4565, 16
      %v4693 = vor.u32 %v4690, %v4691
      %v4694 = vrot.slane %v4690, 4
      %v4696 = vshrl.u32 %v4566, 16
      %v4698 = vrot.slane %v4696, 7
      %v4699 = vshll.u32 %v4566, 16
      %v4701 = vor.u32 %v4698, %v4699
      %v4702 = vsel %vm302, %v4694, %v4701
      %v4703 = vrot.slane %v4698, 4
      %v4705 = vshrl.u32 %v4567, 16
      %v4707 = vrot.slane %v4705, 7
      %v4708 = vshll.u32 %v4567, 16
      %v4710 = vor.u32 %v4707, %v4708
      %v4711 = vrot.slane %v4707, 4
      %v4713 = vshrl.u32 %v4568, 16
      %v4715 = vrot.slane %v4713, 7
      %v4716 = vshll.u32 %v4568, 16
      %v4718 = vor.u32 %v4715, %v4716
      %v4719 = vsel %vm302, %v4711, %v4718
      %v4720 = vrot.slane %v4715, 4
      %v4722 = vshrl.u32 %v4569, 16
      %v4724 = vrot.slane %v4722, 7
      %v4725 = vshll.u32 %v4569, 16
      %v4727 = vor.u32 %v4724, %v4725
      %v4728 = vrot.slane %v4724, 4
      %v4730 = vshrl.u32 %v4570, 16
      %v4732 = vrot.slane %v4730, 7
      %v4733 = vshll.u32 %v4570, 16
      %v4735 = vor.u32 %v4732, %v4733
      %v4736 = vsel %vm302, %v4728, %v4735
      %v4737 = vrot.slane %v4732, 4
      %v4739 = vshrl.u32 %v4571, 16
      %v4741 = vrot.slane %v4739, 7
      %v4742 = vshll.u32 %v4571, 16
      %v4744 = vor.u32 %v4741, %v4742
      %v4745 = vrot.slane %v4741, 4
      %v4747 = vshrl.u32 %v4572, 16
      %v4749 = vrot.slane %v4747, 7
      %v4750 = vshll.u32 %v4572, 16
      %v4752 = vor.u32 %v4749, %v4750
      %v4753 = vsel %vm302, %v4745, %v4752
      %v4754 = vrot.slane %v4749, 4
      %v4756 = vshrl.u32 %v4573, 16
      %v4758 = vrot.slane %v4756, 7
      %v4759 = vshll.u32 %v4573, 16
      %v4761 = vor.u32 %v4758, %v4759
      %v4762 = vrot.slane %v4758, 4
      %v4764 = vshrl.u32 %v4574, 16
      %v4766 = vrot.slane %v4764, 7
      %v4767 = vshll.u32 %v4574, 16
      %v4769 = vor.u32 %v4766, %v4767
      %v4770 = vsel %vm302, %v4762, %v4769
      %v4771 = vrot.slane %v4766, 4
      %v4773 = vshrl.u32 %v4575, 16
      %v4775 = vrot.slane %v4773, 7
      %v4776 = vshll.u32 %v4575, 16
      %v4778 = vor.u32 %v4775, %v4776
      %v4779 = vrot.slane %v4775, 4
      %v4781 = vshrl.u32 %v4576, 16
      %v4783 = vrot.slane %v4781, 7
      %v4784 = vshll.u32 %v4576, 16
      %v4786 = vor.u32 %v4783, %v4784
      %v4787 = vsel %vm302, %v4779, %v4786
      %v4788 = vrot.slane %v4783, 4
      %v4790 = vshrl.u32 %v4577, 16
      %v4792 = vrot.slane %v4790, 7
      %v4793 = vshll.u32 %v4577, 16
      %v4795 = vor.u32 %v4792, %v4793
      %v4796 = vrot.slane %v4792, 4
      %v4798 = vshrl.u32 %v4578, 16
      %v4800 = vrot.slane %v4798, 7
      %v4801 = vshll.u32 %v4578, 16
      %v4803 = vor.u32 %v4800, %v4801
      %v4804 = vsel %vm302, %v4796, %v4803
      %v4805 = vrot.slane %v4800, 4
      %v4807 = vshrl.u32 %v4579, 16
      %v4809 = vrot.slane %v4807, 7
      %v4810 = vshll.u32 %v4579, 16
      %v4812 = vor.u32 %v4809, %v4810
      %v4813 = vrot.slane %v4809, 4
      %v4815 = vshrl.u32 %v4580, 16
      %v4817 = vrot.slane %v4815, 7
      %v4818 = vshll.u32 %v4580, 16
      %v4820 = vor.u32 %v4817, %v4818
      %v4821 = vsel %vm302, %v4813, %v4820
      %v4822 = vrot.slane %v4817, 4
      %v4824 = vshrl.u32 %v4581, 16
      %v4826 = vrot.slane %v4824, 7
      %v4827 = vshll.u32 %v4581, 16
      %v4829 = vor.u32 %v4826, %v4827
      %v4830 = vrot.slane %v4826, 4
      %v4832 = vshrl.u32 %v4582, 16
      %v4834 = vrot.slane %v4832, 7
      %v4835 = vshll.u32 %v4582, 16
      %v4837 = vor.u32 %v4834, %v4835
      %v4838 = vsel %vm302, %v4830, %v4837
      %v4839 = vrot.slane %v4834, 4
      %v4841 = vshrl.u32 %v4583, 16
      %v4843 = vrot.slane %v4841, 7
      %v4844 = vshll.u32 %v4583, 16
      %v4846 = vor.u32 %v4843, %v4844
      %v4847 = vrot.slane %v4843, 4
      %v4849 = vshrl.u32 %v4584, 16
      %v4851 = vrot.slane %v4849, 7
      %v4852 = vshll.u32 %v4584, 16
      %v4854 = vor.u32 %v4851, %v4852
      %v4855 = vsel %vm302, %v4847, %v4854
      %v4856 = vrot.slane %v4851, 4
      %v4905 = vld [vmem:[%s623] sm:$0xf]
      %v4906 = vsel %vm626, %v4591, %v4905
      %4907 = vst [vmem:[%s623] sm:$0xf] %v4906
      %4908 = vst [vmem:[%s623 + $0x4] sm:$0xf] %v4600
      %v4909 = vld [vmem:[%s623 + $0x8] sm:$0x1]
      %v4910 = vsel %vm632, %v4601, %v4909
      %4911 = vst [vmem:[%s623 + $0x8] sm:$0x1] %v4910
      %v4912 = vld [vmem:[%s623 + $0xc] sm:$0xf]
      %v4913 = vsel %vm626, %v4608, %v4912
      %4914 = vst [vmem:[%s623 + $0xc] sm:$0xf] %v4913
      %4915 = vst [vmem:[%s623 + $0x10] sm:$0xf] %v4617
      %v4916 = vld [vmem:[%s623 + $0x14] sm:$0x1]
      %v4917 = vsel %vm632, %v4618, %v4916
      %4918 = vst [vmem:[%s623 + $0x14] sm:$0x1] %v4917
      %v4919 = vld [vmem:[%s623 + $0x18] sm:$0xf]
      %v4920 = vsel %vm626, %v4625, %v4919
      %4921 = vst [vmem:[%s623 + $0x18] sm:$0xf] %v4920
      %4922 = vst [vmem:[%s623 + $0x1c] sm:$0xf] %v4634
      %v4923 = vld [vmem:[%s623 + $0x20] sm:$0x1]
      %v4924 = vsel %vm632, %v4635, %v4923
      %4925 = vst [vmem:[%s623 + $0x20] sm:$0x1] %v4924
      %v4926 = vld [vmem:[%s623 + $0x24] sm:$0xf]
      %v4927 = vsel %vm626, %v4642, %v4926
      %4928 = vst [vmem:[%s623 + $0x24] sm:$0xf] %v4927
      %4929 = vst [vmem:[%s623 + $0x28] sm:$0xf] %v4651
      %v4930 = vld [vmem:[%s623 + $0x2c] sm:$0x1]
      %v4931 = vsel %vm632, %v4652, %v4930
      %4932 = vst [vmem:[%s623 + $0x2c] sm:$0x1] %v4931
      %v4933 = vld [vmem:[%s623 + $0x30] sm:$0xf]
      %v4934 = vsel %vm626, %v4659, %v4933
      %4935 = vst [vmem:[%s623 + $0x30] sm:$0xf] %v4934
      %4936 = vst [vmem:[%s623 + $0x34] sm:$0xf] %v4668
      %v4937 = vld [vmem:[%s623 + $0x38] sm:$0x1]
      %v4938 = vsel %vm632, %v4669, %v4937
      %4939 = vst [vmem:[%s623 + $0x38] sm:$0x1] %v4938
      %v4940 = vld [vmem:[%s623 + $0x3c] sm:$0xf]
      %v4941 = vsel %vm626, %v4676, %v4940
      %4942 = vst [vmem:[%s623 + $0x3c] sm:$0xf] %v4941
      %4943 = vst [vmem:[%s623 + $0x40] sm:$0xf] %v4685
      %v4944 = vld [vmem:[%s623 + $0x44] sm:$0x1]
      %v4945 = vsel %vm632, %v4686, %v4944
      %4946 = vst [vmem:[%s623 + $0x44] sm:$0x1] %v4945
      %v4947 = vld [vmem:[%s623 + $0x48] sm:$0xf]
      %v4948 = vsel %vm626, %v4693, %v4947
      %4949 = vst [vmem:[%s623 + $0x48] sm:$0xf] %v4948
      %4950 = vst [vmem:[%s623 + $0x4c] sm:$0xf] %v4702
      %v4951 = vld [vmem:[%s623 + $0x50] sm:$0x1]
      %v4952 = vsel %vm632, %v4703, %v4951
      %4953 = vst [vmem:[%s623 + $0x50] sm:$0x1] %v4952
      %v4954 = vld [vmem:[%s623 + $0x54] sm:$0xf]
      %v4955 = vsel %vm626, %v4710, %v4954
      %4956 = vst [vmem:[%s623 + $0x54] sm:$0xf] %v4955
      %4957 = vst [vmem:[%s623 + $0x58] sm:$0xf] %v4719
      %v4958 = vld [vmem:[%s623 + $0x5c] sm:$0x1]
      %v4959 = vsel %vm632, %v4720, %v4958
      %4960 = vst [vmem:[%s623 + $0x5c] sm:$0x1] %v4959
      %v4961 = vld [vmem:[%s623 + $0x60] sm:$0xf]
      %v4962 = vsel %vm626, %v4727, %v4961
      %4963 = vst [vmem:[%s623 + $0x60] sm:$0xf] %v4962
      %4964 = vst [vmem:[%s623 + $0x64] sm:$0xf] %v4736
      %v4965 = vld [vmem:[%s623 + $0x68] sm:$0x1]
      %v4966 = vsel %vm632, %v4737, %v4965
      %4967 = vst [vmem:[%s623 + $0x68] sm:$0x1] %v4966
      %v4968 = vld [vmem:[%s623 + $0x6c] sm:$0xf]
      %v4969 = vsel %vm626, %v4744, %v4968
      %4970 = vst [vmem:[%s623 + $0x6c] sm:$0xf] %v4969
      %4971 = vst [vmem:[%s623 + $0x70] sm:$0xf] %v4753
      %v4972 = vld [vmem:[%s623 + $0x74] sm:$0x1]
      %v4973 = vsel %vm632, %v4754, %v4972
      %4974 = vst [vmem:[%s623 + $0x74] sm:$0x1] %v4973
      %v4975 = vld [vmem:[%s623 + $0x78] sm:$0xf]
      %v4976 = vsel %vm626, %v4761, %v4975
      %4977 = vst [vmem:[%s623 + $0x78] sm:$0xf] %v4976
      %4978 = vst [vmem:[%s623 + $0x7c] sm:$0xf] %v4770
      %v4979 = vld [vmem:[%s623 + $0x80] sm:$0x1]
      %v4980 = vsel %vm632, %v4771, %v4979
      %4981 = vst [vmem:[%s623 + $0x80] sm:$0x1] %v4980
      %v4982 = vld [vmem:[%s623 + $0x84] sm:$0xf]
      %v4983 = vsel %vm626, %v4778, %v4982
      %4984 = vst [vmem:[%s623 + $0x84] sm:$0xf] %v4983
      %4985 = vst [vmem:[%s623 + $0x88] sm:$0xf] %v4787
      %v4986 = vld [vmem:[%s623 + $0x8c] sm:$0x1]
      %v4987 = vsel %vm632, %v4788, %v4986
      %4988 = vst [vmem:[%s623 + $0x8c] sm:$0x1] %v4987
      %v4989 = vld [vmem:[%s623 + $0x90] sm:$0xf]
      %v4990 = vsel %vm626, %v4795, %v4989
      %4991 = vst [vmem:[%s623 + $0x90] sm:$0xf] %v4990
      %4992 = vst [vmem:[%s623 + $0x94] sm:$0xf] %v4804
      %v4993 = vld [vmem:[%s623 + $0x98] sm:$0x1]
      %v4994 = vsel %vm632, %v4805, %v4993
      %4995 = vst [vmem:[%s623 + $0x98] sm:$0x1] %v4994
      %v4996 = vld [vmem:[%s623 + $0x9c] sm:$0xf]
      %v4997 = vsel %vm626, %v4812, %v4996
      %4998 = vst [vmem:[%s623 + $0x9c] sm:$0xf] %v4997
      %4999 = vst [vmem:[%s623 + $0xa0] sm:$0xf] %v4821
      %v5000 = vld [vmem:[%s623 + $0xa4] sm:$0x1]
      %v5001 = vsel %vm632, %v4822, %v5000
      %5002 = vst [vmem:[%s623 + $0xa4] sm:$0x1] %v5001
      %v5003 = vld [vmem:[%s623 + $0xa8] sm:$0xf]
      %v5004 = vsel %vm626, %v4829, %v5003
      %5005 = vst [vmem:[%s623 + $0xa8] sm:$0xf] %v5004
      %5006 = vst [vmem:[%s623 + $0xac] sm:$0xf] %v4838
      %v5007 = vld [vmem:[%s623 + $0xb0] sm:$0x1]
      %v5008 = vsel %vm632, %v4839, %v5007
      %5009 = vst [vmem:[%s623 + $0xb0] sm:$0x1] %v5008
      %v5010 = vld [vmem:[%s623 + $0xb4] sm:$0xf]
      %v5011 = vsel %vm626, %v4846, %v5010
      %5012 = vst [vmem:[%s623 + $0xb4] sm:$0xf] %v5011
      %5013 = vst [vmem:[%s623 + $0xb8] sm:$0xf] %v4855
      %v5014 = vld [vmem:[%s623 + $0xbc] sm:$0x1]
      %v5015 = vsel %vm632, %v4856, %v5014
      %5016 = vst [vmem:[%s623 + $0xbc] sm:$0x1] %v5015
      %v5017 = vld [vmem:[#allocation2] sm:$0xf]
      %v5018 = vsel %vm626, %v4608, %v5017
      %5019 = vst [vmem:[#allocation2] sm:$0xf] %v5018
      %5020 = vst [vmem:[#allocation2 + $0x4] sm:$0xf] %v4617
      %v5021 = vld [vmem:[#allocation2 + $0x8] sm:$0x1]
      %v5022 = vsel %vm632, %v4618, %v5021
      %5023 = vst [vmem:[#allocation2 + $0x8] sm:$0x1] %v5022
      %v5024 = vld [vmem:[%s748] sm:$0xf]
      %v5025 = vsel %vm626, %v4829, %v5024
      %5026 = vst [vmem:[%s748] sm:$0xf] %v5025
      %5027 = vst [vmem:[%s748 + $0x4] sm:$0xf] %v4838
      %v5028 = vld [vmem:[%s748 + $0x8] sm:$0x1]
      %v5029 = vsel %vm632, %v4839, %v5028
      %5030 = vst [vmem:[%s748 + $0x8] sm:$0x1] %v5029
      %v5031 = vld [vmem:[#allocation2] sm:$0x2]
      %v5032 = vld [vmem:[#allocation2 + $0xc] sm:$0x2]
      %v5033 = vld [vmem:[#allocation2 + $0x18] sm:$0x2]
      %v5034 = vld [vmem:[#allocation2 + $0x24] sm:$0x2]
      %v5035 = vld [vmem:[#allocation2 + $0x30] sm:$0x2]
      %v5036 = vld [vmem:[#allocation2 + $0x3c] sm:$0x2]
      %v5037 = vld [vmem:[#allocation2 + $0x48] sm:$0x2]
      %v5038 = vld [vmem:[#allocation2 + $0x54] sm:$0x2]
      %v5039 = vld [vmem:[#allocation2 + $0x60] sm:$0x2]
      %v5040 = vld [vmem:[#allocation2 + $0x6c] sm:$0x2]
      %v5041 = vld [vmem:[#allocation2 + $0x78] sm:$0x2]
      %v5042 = vld [vmem:[#allocation2 + $0x84] sm:$0x2]
      %v5043 = vld [vmem:[#allocation2 + $0x90] sm:$0x2]
      %v5044 = vld [vmem:[#allocation2 + $0x9c] sm:$0x2]
      %v5045 = vld [vmem:[#allocation2 + $0xa8] sm:$0x2]
      %v5046 = vld [vmem:[#allocation2 + $0xb4] sm:$0x2]
      %v5047 = vld [vmem:[#allocation2 + $0xc0] sm:$0x2]
      %v5048 = vld [vmem:[#allocation2 + $0xcc] sm:$0x2]
      %v5067 = vrot.slane %v5031, 5
      %v5068 = vrot.slane %v5067, 4
      %v5069 = vrot.slane %v5032, 5
      %v5070 = vrot.slane %v5069, 4
      %v5071 = vrot.slane %v5033, 5
      %v5072 = vrot.slane %v5071, 4
      %v5073 = vrot.slane %v5034, 5
      %v5074 = vrot.slane %v5073, 4
      %v5075 = vrot.slane %v5035, 5
      %v5076 = vrot.slane %v5075, 4
      %v5077 = vrot.slane %v5036, 5
      %v5078 = vrot.slane %v5077, 4
      %v5079 = vrot.slane %v5037, 5
      %v5080 = vrot.slane %v5079, 4
      %v5081 = vrot.slane %v5038, 5
      %v5082 = vrot.slane %v5081, 4
      %v5083 = vrot.slane %v5039, 5
      %v5084 = vrot.slane %v5083, 4
      %v5085 = vrot.slane %v5040, 5
      %v5086 = vrot.slane %v5085, 4
      %v5087 = vrot.slane %v5041, 5
      %v5088 = vrot.slane %v5087, 4
      %v5089 = vrot.slane %v5042, 5
      %v5090 = vrot.slane %v5089, 4
      %v5091 = vrot.slane %v5043, 5
      %v5092 = vrot.slane %v5091, 4
      %v5093 = vrot.slane %v5044, 5
      %v5094 = vrot.slane %v5093, 4
      %v5095 = vrot.slane %v5045, 5
      %v5096 = vrot.slane %v5095, 4
      %v5097 = vrot.slane %v5046, 5
      %v5098 = vrot.slane %v5097, 4
      %v5099 = vrot.slane %v5047, 5
      %v5100 = vrot.slane %v5099, 4
      %v5101 = vrot.slane %v5048, 5
      %v5102 = vrot.slane %v5101, 4
      %v5121 = vld [vmem:[#allocation2] sm:$0x1]
      %v5122 = vsel %vm632, %v5068, %v5121
      %5123 = vst [vmem:[#allocation2] sm:$0x1] %v5122
      %v5124 = vld [vmem:[#allocation2 + $0xc] sm:$0x1]
      %v5125 = vsel %vm632, %v5070, %v5124
      %5126 = vst [vmem:[#allocation2 + $0xc] sm:$0x1] %v5125
      %v5127 = vld [vmem:[#allocation2 + $0x18] sm:$0x1]
      %v5128 = vsel %vm632, %v5072, %v5127
      %5129 = vst [vmem:[#allocation2 + $0x18] sm:$0x1] %v5128
      %v5130 = vld [vmem:[#allocation2 + $0x24] sm:$0x1]
      %v5131 = vsel %vm632, %v5074, %v5130
      %5132 = vst [vmem:[#allocation2 + $0x24] sm:$0x1] %v5131
      %v5133 = vld [vmem:[#allocation2 + $0x30] sm:$0x1]
      %v5134 = vsel %vm632, %v5076, %v5133
      %5135 = vst [vmem:[#allocation2 + $0x30] sm:$0x1] %v5134
      %v5136 = vld [vmem:[#allocation2 + $0x3c] sm:$0x1]
      %v5137 = vsel %vm632, %v5078, %v5136
      %5138 = vst [vmem:[#allocation2 + $0x3c] sm:$0x1] %v5137
      %v5139 = vld [vmem:[#allocation2 + $0x48] sm:$0x1]
      %v5140 = vsel %vm632, %v5080, %v5139
      %5141 = vst [vmem:[#allocation2 + $0x48] sm:$0x1] %v5140
      %v5142 = vld [vmem:[#allocation2 + $0x54] sm:$0x1]
      %v5143 = vsel %vm632, %v5082, %v5142
      %5144 = vst [vmem:[#allocation2 + $0x54] sm:$0x1] %v5143
      %v5145 = vld [vmem:[#allocation2 + $0x60] sm:$0x1]
      %v5146 = vsel %vm632, %v5084, %v5145
      %5147 = vst [vmem:[#allocation2 + $0x60] sm:$0x1] %v5146
      %v5148 = vld [vmem:[#allocation2 + $0x6c] sm:$0x1]
      %v5149 = vsel %vm632, %v5086, %v5148
      %5150 = vst [vmem:[#allocation2 + $0x6c] sm:$0x1] %v5149
      %v5151 = vld [vmem:[#allocation2 + $0x78] sm:$0x1]
      %v5152 = vsel %vm632, %v5088, %v5151
      %5153 = vst [vmem:[#allocation2 + $0x78] sm:$0x1] %v5152
      %v5154 = vld [vmem:[#allocation2 + $0x84] sm:$0x1]
      %v5155 = vsel %vm632, %v5090, %v5154
      %5156 = vst [vmem:[#allocation2 + $0x84] sm:$0x1] %v5155
      %v5157 = vld [vmem:[#allocation2 + $0x90] sm:$0x1]
      %v5158 = vsel %vm632, %v5092, %v5157
      %5159 = vst [vmem:[#allocation2 + $0x90] sm:$0x1] %v5158
      %v5160 = vld [vmem:[#allocation2 + $0x9c] sm:$0x1]
      %v5161 = vsel %vm632, %v5094, %v5160
      %5162 = vst [vmem:[#allocation2 + $0x9c] sm:$0x1] %v5161
      %v5163 = vld [vmem:[#allocation2 + $0xa8] sm:$0x1]
      %v5164 = vsel %vm632, %v5096, %v5163
      %5165 = vst [vmem:[#allocation2 + $0xa8] sm:$0x1] %v5164
      %v5166 = vld [vmem:[#allocation2 + $0xb4] sm:$0x1]
      %v5167 = vsel %vm632, %v5098, %v5166
      %5168 = vst [vmem:[#allocation2 + $0xb4] sm:$0x1] %v5167
      %v5169 = vld [vmem:[#allocation2 + $0xc0] sm:$0x1]
      %v5170 = vsel %vm632, %v5100, %v5169
      %5171 = vst [vmem:[#allocation2 + $0xc0] sm:$0x1] %v5170
      %v5172 = vld [vmem:[#allocation2 + $0xcc] sm:$0x1]
      %v5173 = vsel %vm632, %v5102, %v5172
      %5174 = vst [vmem:[#allocation2 + $0xcc] sm:$0x1] %v5173
      %v5175 = vld [vmem:[#allocation2 + $0x4] sm:$0x8]
      %v5176 = vld [vmem:[#allocation2 + $0x10] sm:$0x8]
      %v5177 = vld [vmem:[#allocation2 + $0x1c] sm:$0x8]
      %v5178 = vld [vmem:[#allocation2 + $0x28] sm:$0x8]
      %v5179 = vld [vmem:[#allocation2 + $0x34] sm:$0x8]
      %v5180 = vld [vmem:[#allocation2 + $0x40] sm:$0x8]
      %v5181 = vld [vmem:[#allocation2 + $0x4c] sm:$0x8]
      %v5182 = vld [vmem:[#allocation2 + $0x58] sm:$0x8]
      %v5183 = vld [vmem:[#allocation2 + $0x64] sm:$0x8]
      %v5184 = vld [vmem:[#allocation2 + $0x70] sm:$0x8]
      %v5185 = vld [vmem:[#allocation2 + $0x7c] sm:$0x8]
      %v5186 = vld [vmem:[#allocation2 + $0x88] sm:$0x8]
      %v5187 = vld [vmem:[#allocation2 + $0x94] sm:$0x8]
      %v5188 = vld [vmem:[#allocation2 + $0xa0] sm:$0x8]
      %v5189 = vld [vmem:[#allocation2 + $0xac] sm:$0x8]
      %v5190 = vld [vmem:[#allocation2 + $0xb8] sm:$0x8]
      %v5191 = vld [vmem:[#allocation2 + $0xc4] sm:$0x8]
      %v5192 = vld [vmem:[#allocation2 + $0xd0] sm:$0x8]
      %v5211 = vrot.slane %v5175, 7
      %v5212 = vrot.slane %v5211, 4
      %v5213 = vrot.slane %v5176, 7
      %v5214 = vrot.slane %v5213, 4
      %v5215 = vrot.slane %v5177, 7
      %v5216 = vrot.slane %v5215, 4
      %v5217 = vrot.slane %v5178, 7
      %v5218 = vrot.slane %v5217, 4
      %v5219 = vrot.slane %v5179, 7
      %v5220 = vrot.slane %v5219, 4
      %v5221 = vrot.slane %v5180, 7
      %v5222 = vrot.slane %v5221, 4
      %v5223 = vrot.slane %v5181, 7
      %v5224 = vrot.slane %v5223, 4
      %v5225 = vrot.slane %v5182, 7
      %v5226 = vrot.slane %v5225, 4
      %v5227 = vrot.slane %v5183, 7
      %v5228 = vrot.slane %v5227, 4
      %v5229 = vrot.slane %v5184, 7
      %v5230 = vrot.slane %v5229, 4
      %v5231 = vrot.slane %v5185, 7
      %v5232 = vrot.slane %v5231, 4
      %v5233 = vrot.slane %v5186, 7
      %v5234 = vrot.slane %v5233, 4
      %v5235 = vrot.slane %v5187, 7
      %v5236 = vrot.slane %v5235, 4
      %v5237 = vrot.slane %v5188, 7
      %v5238 = vrot.slane %v5237, 4
      %v5239 = vrot.slane %v5189, 7
      %v5240 = vrot.slane %v5239, 4
      %v5241 = vrot.slane %v5190, 7
      %v5242 = vrot.slane %v5241, 4
      %v5243 = vrot.slane %v5191, 7
      %v5244 = vrot.slane %v5243, 4
      %v5245 = vrot.slane %v5192, 7
      %v5246 = vrot.slane %v5245, 4
      %v5265 = vld [vmem:[#allocation2 + $0x8] sm:$0x1]
      %v5266 = vsel %vm990, %v5212, %v5265
      %5267 = vst [vmem:[#allocation2 + $0x8] sm:$0x1] %v5266
      %v5268 = vld [vmem:[#allocation2 + $0x14] sm:$0x1]
      %v5269 = vsel %vm990, %v5214, %v5268
      %5270 = vst [vmem:[#allocation2 + $0x14] sm:$0x1] %v5269
      %v5271 = vld [vmem:[#allocation2 + $0x20] sm:$0x1]
      %v5272 = vsel %vm990, %v5216, %v5271
      %5273 = vst [vmem:[#allocation2 + $0x20] sm:$0x1] %v5272
      %v5274 = vld [vmem:[#allocation2 + $0x2c] sm:$0x1]
      %v5275 = vsel %vm990, %v5218, %v5274
      %5276 = vst [vmem:[#allocation2 + $0x2c] sm:$0x1] %v5275
      %v5277 = vld [vmem:[#allocation2 + $0x38] sm:$0x1]
      %v5278 = vsel %vm990, %v5220, %v5277
      %5279 = vst [vmem:[#allocation2 + $0x38] sm:$0x1] %v5278
      %v5280 = vld [vmem:[#allocation2 + $0x44] sm:$0x1]
      %v5281 = vsel %vm990, %v5222, %v5280
      %5282 = vst [vmem:[#allocation2 + $0x44] sm:$0x1] %v5281
      %v5283 = vld [vmem:[#allocation2 + $0x50] sm:$0x1]
      %v5284 = vsel %vm990, %v5224, %v5283
      %5285 = vst [vmem:[#allocation2 + $0x50] sm:$0x1] %v5284
      %v5286 = vld [vmem:[#allocation2 + $0x5c] sm:$0x1]
      %v5287 = vsel %vm990, %v5226, %v5286
      %5288 = vst [vmem:[#allocation2 + $0x5c] sm:$0x1] %v5287
      %v5289 = vld [vmem:[#allocation2 + $0x68] sm:$0x1]
      %v5290 = vsel %vm990, %v5228, %v5289
      %5291 = vst [vmem:[#allocation2 + $0x68] sm:$0x1] %v5290
      %v5292 = vld [vmem:[#allocation2 + $0x74] sm:$0x1]
      %v5293 = vsel %vm990, %v5230, %v5292
      %5294 = vst [vmem:[#allocation2 + $0x74] sm:$0x1] %v5293
      %v5295 = vld [vmem:[#allocation2 + $0x80] sm:$0x1]
      %v5296 = vsel %vm990, %v5232, %v5295
      %5297 = vst [vmem:[#allocation2 + $0x80] sm:$0x1] %v5296
      %v5298 = vld [vmem:[#allocation2 + $0x8c] sm:$0x1]
      %v5299 = vsel %vm990, %v5234, %v5298
      %5300 = vst [vmem:[#allocation2 + $0x8c] sm:$0x1] %v5299
      %v5301 = vld [vmem:[#allocation2 + $0x98] sm:$0x1]
      %v5302 = vsel %vm990, %v5236, %v5301
      %5303 = vst [vmem:[#allocation2 + $0x98] sm:$0x1] %v5302
      %v5304 = vld [vmem:[#allocation2 + $0xa4] sm:$0x1]
      %v5305 = vsel %vm990, %v5238, %v5304
      %5306 = vst [vmem:[#allocation2 + $0xa4] sm:$0x1] %v5305
      %v5307 = vld [vmem:[#allocation2 + $0xb0] sm:$0x1]
      %v5308 = vsel %vm990, %v5240, %v5307
      %5309 = vst [vmem:[#allocation2 + $0xb0] sm:$0x1] %v5308
      %v5310 = vld [vmem:[#allocation2 + $0xbc] sm:$0x1]
      %v5311 = vsel %vm990, %v5242, %v5310
      %5312 = vst [vmem:[#allocation2 + $0xbc] sm:$0x1] %v5311
      %v5313 = vld [vmem:[#allocation2 + $0xc8] sm:$0x1]
      %v5314 = vsel %vm990, %v5244, %v5313
      %5315 = vst [vmem:[#allocation2 + $0xc8] sm:$0x1] %v5314
      %v5316 = vld [vmem:[#allocation2 + $0xd4] sm:$0x1]
      %v5317 = vsel %vm990, %v5246, %v5316
      %5318 = vst [vmem:[#allocation2 + $0xd4] sm:$0x1] %v5317
      %v5319 = vld [vmem:[#allocation2] sm:$0xf]
      %v5320 = vld [vmem:[#allocation2 + $0x4] sm:$0xf]
      %v5321 = vld [vmem:[#allocation2 + $0xc] sm:$0xf]
      %v5322 = vld [vmem:[#allocation2 + $0x10] sm:$0xf]
      %v5323 = vld [vmem:[#allocation2 + $0x18] sm:$0xf]
      %v5324 = vld [vmem:[#allocation2 + $0x1c] sm:$0xf]
      %v5325 = vld [vmem:[#allocation2 + $0x24] sm:$0xf]
      %v5326 = vld [vmem:[#allocation2 + $0x28] sm:$0xf]
      %v5327 = vld [vmem:[#allocation2 + $0x30] sm:$0xf]
      %v5328 = vld [vmem:[#allocation2 + $0x34] sm:$0xf]
      %v5329 = vld [vmem:[#allocation2 + $0x3c] sm:$0xf]
      %v5330 = vld [vmem:[#allocation2 + $0x40] sm:$0xf]
      %v5331 = vld [vmem:[#allocation2 + $0x48] sm:$0xf]
      %v5332 = vld [vmem:[#allocation2 + $0x4c] sm:$0xf]
      %v5333 = vld [vmem:[#allocation2 + $0x54] sm:$0xf]
      %v5334 = vld [vmem:[#allocation2 + $0x58] sm:$0xf]
      %v5335 = vld [vmem:[#allocation2 + $0x60] sm:$0xf]
      %v5336 = vld [vmem:[#allocation2 + $0x64] sm:$0xf]
      %v5337 = vld [vmem:[#allocation2 + $0x6c] sm:$0xf]
      %v5338 = vld [vmem:[#allocation2 + $0x70] sm:$0xf]
      %v5339 = vld [vmem:[#allocation2 + $0x78] sm:$0xf]
      %v5340 = vld [vmem:[#allocation2 + $0x7c] sm:$0xf]
      %v5341 = vld [vmem:[#allocation2 + $0x84] sm:$0xf]
      %v5342 = vld [vmem:[#allocation2 + $0x88] sm:$0xf]
      %v5343 = vld [vmem:[#allocation2 + $0x90] sm:$0xf]
      %v5344 = vld [vmem:[#allocation2 + $0x94] sm:$0xf]
      %v5345 = vld [vmem:[#allocation2 + $0x9c] sm:$0xf]
      %v5346 = vld [vmem:[#allocation2 + $0xa0] sm:$0xf]
      %v5347 = vld [vmem:[#allocation2 + $0xa8] sm:$0xf]
      %v5348 = vld [vmem:[#allocation2 + $0xac] sm:$0xf]
      %v5349 = vld [vmem:[#allocation2 + $0xb4] sm:$0xf]
      %v5350 = vld [vmem:[#allocation2 + $0xb8] sm:$0xf]
      %v5351 = vld [vmem:[#allocation2 + $0xc0] sm:$0xf]
      %v5352 = vld [vmem:[#allocation2 + $0xc4] sm:$0xf]
      %v5353 = vld [vmem:[#allocation2 + $0xcc] sm:$0xf]
      %v5354 = vld [vmem:[#allocation2 + $0xd0] sm:$0xf]
      %v5355 = vld [vmem:[%s2] sm:$0xf]
      %v5356 = vld [vmem:[%s2 + $0x4] sm:$0xf]
      %v5357 = vld [vmem:[%s2 + $0x8] sm:$0xf]
      %v5358 = vld [vmem:[%s2 + $0xc] sm:$0xf]
      %v5359 = vld [vmem:[%s2 + $0x10] sm:$0xf]
      %v5360 = vld [vmem:[%s2 + $0x14] sm:$0xf]
      %v5361 = vld [vmem:[%s2 + $0x18] sm:$0xf]
      %v5362 = vld [vmem:[%s2 + $0x1c] sm:$0xf]
      %v5363 = vld [vmem:[%s2 + $0x20] sm:$0xf]
      %v5364 = vld [vmem:[%s2 + $0x24] sm:$0xf]
      %v5365 = vld [vmem:[%s2 + $0x28] sm:$0xf]
      %v5366 = vld [vmem:[%s2 + $0x2c] sm:$0xf]
      %v5367 = vld [vmem:[%s2 + $0x30] sm:$0xf]
      %v5368 = vld [vmem:[%s2 + $0x34] sm:$0xf]
      %v5369 = vld [vmem:[%s2 + $0x38] sm:$0xf]
      %v5370 = vld [vmem:[%s2 + $0x3c] sm:$0xf]
      %s5371 = scalar_lea.vmem %s2, 192
      %v5372 = vld [vmem:[%s5371] sm:$0xf]
      %v5373 = vld [vmem:[%s5371 + $0x4] sm:$0xf]
      %v5374 = vld [vmem:[%s5371 + $0x8] sm:$0xf]
      %v5375 = vld [vmem:[%s5371 + $0xc] sm:$0xf]
      %v5376 = vld [vmem:[%s5371 + $0x10] sm:$0xf]
      %v5377 = vld [vmem:[%s5371 + $0x14] sm:$0xf]
      %v5378 = vld [vmem:[%s5371 + $0x18] sm:$0xf]
      %v5379 = vld [vmem:[%s5371 + $0x1c] sm:$0xf]
      %v5380 = vld [vmem:[%s5371 + $0x20] sm:$0xf]
      %v5381 = vld [vmem:[%s5371 + $0x24] sm:$0xf]
      %v5382 = vld [vmem:[%s5371 + $0x28] sm:$0xf]
      %v5383 = vld [vmem:[%s5371 + $0x2c] sm:$0xf]
      %v5384 = vld [vmem:[%s5371 + $0x30] sm:$0xf]
      %v5385 = vld [vmem:[%s5371 + $0x34] sm:$0xf]
      %v5386 = vld [vmem:[%s5371 + $0x38] sm:$0xf]
      %v5387 = vld [vmem:[%s5371 + $0x3c] sm:$0xf]
      %v5420 = vunpack.c.l.b16 %v5321
      %v5421 = vunpack.c.l.b16 %v5322
      %v5422 = vunpack.c.l.b16 %v5323
      %v5423 = vunpack.c.l.b16 %v5324
      %v5424 = vunpack.c.l.b16 %v5325
      %v5425 = vunpack.c.l.b16 %v5326
      %v5426 = vunpack.c.l.b16 %v5327
      %v5427 = vunpack.c.l.b16 %v5328
      %v5428 = vunpack.c.l.b16 %v5329
      %v5429 = vunpack.c.l.b16 %v5330
      %v5430 = vunpack.c.l.b16 %v5331
      %v5431 = vunpack.c.l.b16 %v5332
      %v5432 = vunpack.c.l.b16 %v5333
      %v5433 = vunpack.c.l.b16 %v5334
      %v5434 = vunpack.c.l.b16 %v5335
      %v5435 = vunpack.c.l.b16 %v5336
      %v5436 = vunpack.c.l.b16 %v5337
      %v5437 = vunpack.c.l.b16 %v5338
      %v5438 = vunpack.c.l.b16 %v5339
      %v5439 = vunpack.c.l.b16 %v5340
      %v5440 = vunpack.c.l.b16 %v5341
      %v5441 = vunpack.c.l.b16 %v5342
      %v5442 = vunpack.c.l.b16 %v5343
      %v5443 = vunpack.c.l.b16 %v5344
      %v5444 = vunpack.c.l.b16 %v5345
      %v5445 = vunpack.c.l.b16 %v5346
      %v5446 = vunpack.c.l.b16 %v5347
      %v5447 = vunpack.c.l.b16 %v5348
      %v5448 = vunpack.c.l.b16 %v5349
      %v5449 = vunpack.c.l.b16 %v5350
      %v5450 = vunpack.c.l.b16 %v5351
      %v5451 = vunpack.c.l.b16 %v5352
      %v5452 = vpack.c.b16 %v5421, %v5420
      %v5453 = vpack.c.b16 %v5423, %v5422
      %v5454 = vpack.c.b16 %v5425, %v5424
      %v5455 = vpack.c.b16 %v5427, %v5426
      %v5456 = vpack.c.b16 %v5429, %v5428
      %v5457 = vpack.c.b16 %v5431, %v5430
      %v5458 = vpack.c.b16 %v5433, %v5432
      %v5459 = vpack.c.b16 %v5435, %v5434
      %v5460 = vpack.c.b16 %v5437, %v5436
      %v5461 = vpack.c.b16 %v5439, %v5438
      %v5462 = vpack.c.b16 %v5441, %v5440
      %v5463 = vpack.c.b16 %v5443, %v5442
      %v5464 = vpack.c.b16 %v5445, %v5444
      %v5465 = vpack.c.b16 %v5447, %v5446
      %v5466 = vpack.c.b16 %v5449, %v5448
      %v5467 = vpack.c.b16 %v5451, %v5450
      %v5500 = vunpack.c.l.b16 %v5372
      %v5501 = vunpack.c.l.b16 %v5373
      %v5502 = vunpack.c.l.b16 %v5374
      %v5503 = vunpack.c.l.b16 %v5375
      %v5504 = vunpack.c.l.b16 %v5376
      %v5505 = vunpack.c.l.b16 %v5377
      %v5506 = vunpack.c.l.b16 %v5378
      %v5507 = vunpack.c.l.b16 %v5379
      %v5508 = vunpack.c.l.b16 %v5380
      %v5509 = vunpack.c.l.b16 %v5381
      %v5510 = vunpack.c.l.b16 %v5382
      %v5511 = vunpack.c.l.b16 %v5383
      %v5512 = vunpack.c.l.b16 %v5384
      %v5513 = vunpack.c.l.b16 %v5385
      %v5514 = vunpack.c.l.b16 %v5386
      %v5515 = vunpack.c.l.b16 %v5387
      %v5516 = vpack.c.b16 %v5501, %v5500
      %v5517 = vpack.c.b16 %v5503, %v5502
      %v5518 = vpack.c.b16 %v5505, %v5504
      %v5519 = vpack.c.b16 %v5507, %v5506
      %v5520 = vpack.c.b16 %v5509, %v5508
      %v5521 = vpack.c.b16 %v5511, %v5510
      %v5522 = vpack.c.b16 %v5513, %v5512
      %v5523 = vpack.c.b16 %v5515, %v5514
      %5532 = vmatprep.subr.bf16.mxu0 0
      %5533 = vmatpush1.bf16.msra.mxu0 %v5523
      %5534 = vmatprep.subr.bf16.mxu0 0
      %5535 = vmatpush1.bf16.msra.mxu0 %v5522
      %5536 = vmatprep.subr.bf16.mxu0 0
      %5537 = vmatpush1.bf16.msra.mxu0 %v5521
      %5538 = vmatprep.subr.bf16.mxu0 0
      %5539 = vmatpush1.bf16.msra.mxu0 %v5520
      %5540 = vmatprep.subr.bf16.mxu0 0
      %5541 = vmatpush1.bf16.msra.mxu0 %v5519
      %5542 = vmatprep.subr.bf16.mxu0 0
      %5543 = vmatpush1.bf16.msra.mxu0 %v5518
      %5544 = vmatprep.subr.bf16.mxu0 0
      %5545 = vmatpush1.bf16.msra.mxu0 %v5517
      %5546 = vmatprep.subr.bf16.mxu0 0
      %5547 = vmatpush1.bf16.msra.mxu0 %v5516
      %5548 = vmatprep.subr.bf16.mxu0 0
      %5549 = vmatpush2.bf16.msra.mxu0 0
      %5550 = vmatprep.subr.bf16.mxu0 0
      %5551 = vmatpush2.bf16.msra.mxu0 0
      %5552 = vmatprep.subr.bf16.mxu0 0
      %5553 = vmatpush2.bf16.msra.mxu0 0
      %5554 = vmatprep.subr.bf16.mxu0 0
      %5555 = vmatpush2.bf16.msra.mxu0 0
      %5556 = vmatprep.subr.bf16.mxu0 0
      %5557 = vmatpush2.bf16.msra.mxu0 0
      %5558 = vmatprep.subr.bf16.mxu0 0
      %5559 = vmatpush2.bf16.msra.mxu0 0
      %5560 = vmatprep.subr.bf16.mxu0 0
      %5561 = vmatpush2.bf16.msra.mxu0 0
      %5562 = vmatprep.subr.bf16.mxu0 0
      %5563 = vmatpush2.bf16.msra.mxu0 0
      %5564 = vmatprep.mubr.bf16.mxu0 0
      %5565 = vmatmul.mubr.bf16.gmra.mxu0 %v5452
      %v5566 = vpop.f32.mrf.mxu0
      %v5567 = vadd.f32 0.0, %v5566
      %v5568 = vpop.f32.mrf.mxu0
      %v5569 = vpop.f32.mrf.mxu0
      %v5570 = vadd.f32 0.0, %v5569
      %v5571 = vpop.f32.mrf.mxu0
      %5572 = vmatprep.mubr.bf16.mxu0 0
      %5573 = vmatmul.mubr.bf16.gmra.mxu0 %v5453
      %v5574 = vpop.f32.mrf.mxu0
      %v5575 = vadd.f32 0.0, %v5574
      %v5576 = vpop.f32.mrf.mxu0
      %v5577 = vpop.f32.mrf.mxu0
      %v5578 = vadd.f32 0.0, %v5577
      %v5579 = vpop.f32.mrf.mxu0
      %5580 = vmatprep.mubr.bf16.mxu0 0
      %5581 = vmatmul.mubr.bf16.gmra.mxu0 %v5454
      %v5582 = vpop.f32.mrf.mxu0
      %v5583 = vadd.f32 0.0, %v5582
      %v5584 = vpop.f32.mrf.mxu0
      %v5585 = vpop.f32.mrf.mxu0
      %v5586 = vadd.f32 0.0, %v5585
      %v5587 = vpop.f32.mrf.mxu0
      %5588 = vmatprep.mubr.bf16.mxu0 0
      %5589 = vmatmul.mubr.bf16.gmra.mxu0 %v5455
      %v5590 = vpop.f32.mrf.mxu0
      %v5591 = vadd.f32 0.0, %v5590
      %v5592 = vpop.f32.mrf.mxu0
      %v5593 = vpop.f32.mrf.mxu0
      %v5594 = vadd.f32 0.0, %v5593
      %v5595 = vpop.f32.mrf.mxu0
      %5596 = vmatprep.mubr.bf16.mxu0 0
      %5597 = vmatmul.mubr.bf16.gmra.mxu0 %v5456
      %v5598 = vpop.f32.mrf.mxu0
      %v5599 = vadd.f32 0.0, %v5598
      %v5600 = vpop.f32.mrf.mxu0
      %v5601 = vpop.f32.mrf.mxu0
      %v5602 = vadd.f32 0.0, %v5601
      %v5603 = vpop.f32.mrf.mxu0
      %5604 = vmatprep.mubr.bf16.mxu0 0
      %5605 = vmatmul.mubr.bf16.gmra.mxu0 %v5457
      %v5606 = vpop.f32.mrf.mxu0
      %v5607 = vadd.f32 0.0, %v5606
      %v5608 = vpop.f32.mrf.mxu0
      %v5609 = vpop.f32.mrf.mxu0
      %v5610 = vadd.f32 0.0, %v5609
      %v5611 = vpop.f32.mrf.mxu0
      %5612 = vmatprep.mubr.bf16.mxu0 0
      %5613 = vmatmul.mubr.bf16.gmra.mxu0 %v5458
      %v5614 = vpop.f32.mrf.mxu0
      %v5615 = vadd.f32 0.0, %v5614
      %v5616 = vpop.f32.mrf.mxu0
      %v5617 = vpop.f32.mrf.mxu0
      %v5618 = vadd.f32 0.0, %v5617
      %v5619 = vpop.f32.mrf.mxu0
      %5620 = vmatprep.mubr.bf16.mxu0 0
      %5621 = vmatmul.mubr.bf16.gmra.mxu0 %v5459
      %v5622 = vpop.f32.mrf.mxu0
      %v5623 = vadd.f32 0.0, %v5622
      %v5624 = vpop.f32.mrf.mxu0
      %v5625 = vpop.f32.mrf.mxu0
      %v5626 = vadd.f32 0.0, %v5625
      %v5627 = vpop.f32.mrf.mxu0
      %5628 = vmatprep.mubr.bf16.mxu0 0
      %5629 = vmatmul.mubr.bf16.gmra.mxu0 %v5460
      %v5630 = vpop.f32.mrf.mxu0
      %v5631 = vadd.f32 0.0, %v5630
      %v5632 = vpop.f32.mrf.mxu0
      %v5633 = vpop.f32.mrf.mxu0
      %v5634 = vadd.f32 0.0, %v5633
      %v5635 = vpop.f32.mrf.mxu0
      %5636 = vmatprep.mubr.bf16.mxu0 0
      %5637 = vmatmul.mubr.bf16.gmra.mxu0 %v5461
      %v5638 = vpop.f32.mrf.mxu0
      %v5639 = vadd.f32 0.0, %v5638
      %v5640 = vpop.f32.mrf.mxu0
      %v5641 = vpop.f32.mrf.mxu0
      %v5642 = vadd.f32 0.0, %v5641
      %v5643 = vpop.f32.mrf.mxu0
      %5644 = vmatprep.mubr.bf16.mxu0 0
      %5645 = vmatmul.mubr.bf16.gmra.mxu0 %v5462
      %v5646 = vpop.f32.mrf.mxu0
      %v5647 = vadd.f32 0.0, %v5646
      %v5648 = vpop.f32.mrf.mxu0
      %v5649 = vpop.f32.mrf.mxu0
      %v5650 = vadd.f32 0.0, %v5649
      %v5651 = vpop.f32.mrf.mxu0
      %5652 = vmatprep.mubr.bf16.mxu0 0
      %5653 = vmatmul.mubr.bf16.gmra.mxu0 %v5463
      %v5654 = vpop.f32.mrf.mxu0
      %v5655 = vadd.f32 0.0, %v5654
      %v5656 = vpop.f32.mrf.mxu0
      %v5657 = vpop.f32.mrf.mxu0
      %v5658 = vadd.f32 0.0, %v5657
      %v5659 = vpop.f32.mrf.mxu0
      %5660 = vmatprep.mubr.bf16.mxu0 0
      %5661 = vmatmul.mubr.bf16.gmra.mxu0 %v5464
      %v5662 = vpop.f32.mrf.mxu0
      %v5663 = vadd.f32 0.0, %v5662
      %v5664 = vpop.f32.mrf.mxu0
      %v5665 = vpop.f32.mrf.mxu0
      %v5666 = vadd.f32 0.0, %v5665
      %v5667 = vpop.f32.mrf.mxu0
      %5668 = vmatprep.mubr.bf16.mxu0 0
      %5669 = vmatmul.mubr.bf16.gmra.mxu0 %v5465
      %v5670 = vpop.f32.mrf.mxu0
      %v5671 = vadd.f32 0.0, %v5670
      %v5672 = vpop.f32.mrf.mxu0
      %v5673 = vpop.f32.mrf.mxu0
      %v5674 = vadd.f32 0.0, %v5673
      %v5675 = vpop.f32.mrf.mxu0
      %5676 = vmatprep.mubr.bf16.mxu0 0
      %5677 = vmatmul.mubr.bf16.gmra.mxu0 %v5466
      %v5678 = vpop.f32.mrf.mxu0
      %v5679 = vadd.f32 0.0, %v5678
      %v5680 = vpop.f32.mrf.mxu0
      %v5681 = vpop.f32.mrf.mxu0
      %v5682 = vadd.f32 0.0, %v5681
      %v5683 = vpop.f32.mrf.mxu0
      %5684 = vmatprep.mubr.bf16.mxu0 0
      %5685 = vmatmul.mubr.bf16.gmra.mxu0 %v5467
      %v5686 = vpop.f32.mrf.mxu0
      %v5687 = vadd.f32 0.0, %v5686
      %v5688 = vpop.f32.mrf.mxu0
      %v5689 = vpop.f32.mrf.mxu0
      %v5690 = vadd.f32 0.0, %v5689
      %v5691 = vpop.f32.mrf.mxu0
      %5692 = vdwg.mxu0
      %v5695 = vunpack.c.l.b16 %v5319
      %v5696 = vunpack.c.l.b16 %v5320
      %v5697 = vpack.c.b16 %v5696, %v5695
      %v5715 = vunpack.c.l.b16 %v5355
      %v5716 = vunpack.c.l.b16 %v5356
      %v5717 = vunpack.c.l.b16 %v5357
      %v5718 = vunpack.c.l.b16 %v5358
      %v5719 = vunpack.c.l.b16 %v5359
      %v5720 = vunpack.c.l.b16 %v5360
      %v5721 = vunpack.c.l.b16 %v5361
      %v5722 = vunpack.c.l.b16 %v5362
      %v5723 = vunpack.c.l.b16 %v5363
      %v5724 = vunpack.c.l.b16 %v5364
      %v5725 = vunpack.c.l.b16 %v5365
      %v5726 = vunpack.c.l.b16 %v5366
      %v5727 = vunpack.c.l.b16 %v5367
      %v5728 = vunpack.c.l.b16 %v5368
      %v5729 = vunpack.c.l.b16 %v5369
      %v5730 = vunpack.c.l.b16 %v5370
      %v5731 = vpack.c.b16 %v5716, %v5715
      %v5732 = vpack.c.b16 %v5718, %v5717
      %v5733 = vpack.c.b16 %v5720, %v5719
      %v5734 = vpack.c.b16 %v5722, %v5721
      %v5735 = vpack.c.b16 %v5724, %v5723
      %v5736 = vpack.c.b16 %v5726, %v5725
      %v5737 = vpack.c.b16 %v5728, %v5727
      %v5738 = vpack.c.b16 %v5730, %v5729
      %5747 = vmatprep.subr.bf16.mxu0 0
      %5748 = vmatpush1.bf16.msra.mxu0 %v5738
      %5749 = vmatprep.subr.bf16.mxu0 0
      %5750 = vmatpush1.bf16.msra.mxu0 %v5737
      %5751 = vmatprep.subr.bf16.mxu0 0
      %5752 = vmatpush1.bf16.msra.mxu0 %v5736
      %5753 = vmatprep.subr.bf16.mxu0 0
      %5754 = vmatpush1.bf16.msra.mxu0 %v5735
      %5755 = vmatprep.subr.bf16.mxu0 0
      %5756 = vmatpush1.bf16.msra.mxu0 %v5734
      %5757 = vmatprep.subr.bf16.mxu0 0
      %5758 = vmatpush1.bf16.msra.mxu0 %v5733
      %5759 = vmatprep.subr.bf16.mxu0 0
      %5760 = vmatpush1.bf16.msra.mxu0 %v5732
      %5761 = vmatprep.subr.bf16.mxu0 0
      %5762 = vmatpush1.bf16.msra.mxu0 %v5731
      %5763 = vmatprep.subr.bf16.mxu0 0
      %5764 = vmatpush2.bf16.msra.mxu0 0
      %5765 = vmatprep.subr.bf16.mxu0 0
      %5766 = vmatpush2.bf16.msra.mxu0 0
      %5767 = vmatprep.subr.bf16.mxu0 0
      %5768 = vmatpush2.bf16.msra.mxu0 0
      %5769 = vmatprep.subr.bf16.mxu0 0
      %5770 = vmatpush2.bf16.msra.mxu0 0
      %5771 = vmatprep.subr.bf16.mxu0 0
      %5772 = vmatpush2.bf16.msra.mxu0 0
      %5773 = vmatprep.subr.bf16.mxu0 0
      %5774 = vmatpush2.bf16.msra.mxu0 0
      %5775 = vmatprep.subr.bf16.mxu0 0
      %5776 = vmatpush2.bf16.msra.mxu0 0
      %5777 = vmatprep.subr.bf16.mxu0 0
      %5778 = vmatpush2.bf16.msra.mxu0 0
      %5779 = vmatprep.mubr.bf16.mxu0 0
      %5780 = vmatmul.mubr.bf16.gmra.mxu0 %v5697
      %v5781 = vpop.f32.mrf.mxu0
      %v5782 = vadd.f32 %v5567, %v5781
      %v5783 = vpop.f32.mrf.mxu0
      %v5784 = vpop.f32.mrf.mxu0
      %v5785 = vadd.f32 %v5570, %v5784
      %v5786 = vpop.f32.mrf.mxu0
      %5787 = vmatprep.mubr.bf16.mxu0 0
      %5788 = vmatmul.mubr.bf16.gmra.mxu0 %v5452
      %v5789 = vpop.f32.mrf.mxu0
      %v5790 = vadd.f32 %v5575, %v5789
      %v5791 = vpop.f32.mrf.mxu0
      %v5792 = vpop.f32.mrf.mxu0
      %v5793 = vadd.f32 %v5578, %v5792
      %v5794 = vpop.f32.mrf.mxu0
      %5795 = vmatprep.mubr.bf16.mxu0 0
      %5796 = vmatmul.mubr.bf16.gmra.mxu0 %v5453
      %v5797 = vpop.f32.mrf.mxu0
      %v5798 = vadd.f32 %v5583, %v5797
      %v5799 = vpop.f32.mrf.mxu0
      %v5800 = vpop.f32.mrf.mxu0
      %v5801 = vadd.f32 %v5586, %v5800
      %v5802 = vpop.f32.mrf.mxu0
      %5803 = vmatprep.mubr.bf16.mxu0 0
      %5804 = vmatmul.mubr.bf16.gmra.mxu0 %v5454
      %v5805 = vpop.f32.mrf.mxu0
      %v5806 = vadd.f32 %v5591, %v5805
      %v5807 = vpop.f32.mrf.mxu0
      %v5808 = vpop.f32.mrf.mxu0
      %v5809 = vadd.f32 %v5594, %v5808
      %v5810 = vpop.f32.mrf.mxu0
      %5811 = vmatprep.mubr.bf16.mxu0 0
      %5812 = vmatmul.mubr.bf16.gmra.mxu0 %v5455
      %v5813 = vpop.f32.mrf.mxu0
      %v5814 = vadd.f32 %v5599, %v5813
      %v5815 = vpop.f32.mrf.mxu0
      %v5816 = vpop.f32.mrf.mxu0
      %v5817 = vadd.f32 %v5602, %v5816
      %v5818 = vpop.f32.mrf.mxu0
      %5819 = vmatprep.mubr.bf16.mxu0 0
      %5820 = vmatmul.mubr.bf16.gmra.mxu0 %v5456
      %v5821 = vpop.f32.mrf.mxu0
      %v5822 = vadd.f32 %v5607, %v5821
      %v5823 = vpop.f32.mrf.mxu0
      %v5824 = vpop.f32.mrf.mxu0
      %v5825 = vadd.f32 %v5610, %v5824
      %v5826 = vpop.f32.mrf.mxu0
      %5827 = vmatprep.mubr.bf16.mxu0 0
      %5828 = vmatmul.mubr.bf16.gmra.mxu0 %v5457
      %v5829 = vpop.f32.mrf.mxu0
      %v5830 = vadd.f32 %v5615, %v5829
      %v5831 = vpop.f32.mrf.mxu0
      %v5832 = vpop.f32.mrf.mxu0
      %v5833 = vadd.f32 %v5618, %v5832
      %v5834 = vpop.f32.mrf.mxu0
      %5835 = vmatprep.mubr.bf16.mxu0 0
      %5836 = vmatmul.mubr.bf16.gmra.mxu0 %v5458
      %v5837 = vpop.f32.mrf.mxu0
      %v5838 = vadd.f32 %v5623, %v5837
      %v5839 = vpop.f32.mrf.mxu0
      %v5840 = vpop.f32.mrf.mxu0
      %v5841 = vadd.f32 %v5626, %v5840
      %v5842 = vpop.f32.mrf.mxu0
      %5843 = vmatprep.mubr.bf16.mxu0 0
      %5844 = vmatmul.mubr.bf16.gmra.mxu0 %v5459
      %v5845 = vpop.f32.mrf.mxu0
      %v5846 = vadd.f32 %v5631, %v5845
      %v5847 = vpop.f32.mrf.mxu0
      %v5848 = vpop.f32.mrf.mxu0
      %v5849 = vadd.f32 %v5634, %v5848
      %v5850 = vpop.f32.mrf.mxu0
      %5851 = vmatprep.mubr.bf16.mxu0 0
      %5852 = vmatmul.mubr.bf16.gmra.mxu0 %v5460
      %v5853 = vpop.f32.mrf.mxu0
      %v5854 = vadd.f32 %v5639, %v5853
      %v5855 = vpop.f32.mrf.mxu0
      %v5856 = vpop.f32.mrf.mxu0
      %v5857 = vadd.f32 %v5642, %v5856
      %v5858 = vpop.f32.mrf.mxu0
      %5859 = vmatprep.mubr.bf16.mxu0 0
      %5860 = vmatmul.mubr.bf16.gmra.mxu0 %v5461
      %v5861 = vpop.f32.mrf.mxu0
      %v5862 = vadd.f32 %v5647, %v5861
      %v5863 = vpop.f32.mrf.mxu0
      %v5864 = vpop.f32.mrf.mxu0
      %v5865 = vadd.f32 %v5650, %v5864
      %v5866 = vpop.f32.mrf.mxu0
      %5867 = vmatprep.mubr.bf16.mxu0 0
      %5868 = vmatmul.mubr.bf16.gmra.mxu0 %v5462
      %v5869 = vpop.f32.mrf.mxu0
      %v5870 = vadd.f32 %v5655, %v5869
      %v5871 = vpop.f32.mrf.mxu0
      %v5872 = vpop.f32.mrf.mxu0
      %v5873 = vadd.f32 %v5658, %v5872
      %v5874 = vpop.f32.mrf.mxu0
      %5875 = vmatprep.mubr.bf16.mxu0 0
      %5876 = vmatmul.mubr.bf16.gmra.mxu0 %v5463
      %v5877 = vpop.f32.mrf.mxu0
      %v5878 = vadd.f32 %v5663, %v5877
      %v5879 = vpop.f32.mrf.mxu0
      %v5880 = vpop.f32.mrf.mxu0
      %v5881 = vadd.f32 %v5666, %v5880
      %v5882 = vpop.f32.mrf.mxu0
      %5883 = vmatprep.mubr.bf16.mxu0 0
      %5884 = vmatmul.mubr.bf16.gmra.mxu0 %v5464
      %v5885 = vpop.f32.mrf.mxu0
      %v5886 = vadd.f32 %v5671, %v5885
      %v5887 = vpop.f32.mrf.mxu0
      %v5888 = vpop.f32.mrf.mxu0
      %v5889 = vadd.f32 %v5674, %v5888
      %v5890 = vpop.f32.mrf.mxu0
      %5891 = vmatprep.mubr.bf16.mxu0 0
      %5892 = vmatmul.mubr.bf16.gmra.mxu0 %v5465
      %v5893 = vpop.f32.mrf.mxu0
      %v5894 = vadd.f32 %v5679, %v5893
      %v5895 = vpop.f32.mrf.mxu0
      %v5896 = vpop.f32.mrf.mxu0
      %v5897 = vadd.f32 %v5682, %v5896
      %v5898 = vpop.f32.mrf.mxu0
      %5899 = vmatprep.mubr.bf16.mxu0 0
      %5900 = vmatmul.mubr.bf16.gmra.mxu0 %v5466
      %v5901 = vpop.f32.mrf.mxu0
      %v5902 = vadd.f32 %v5687, %v5901
      %v5903 = vpop.f32.mrf.mxu0
      %v5904 = vpop.f32.mrf.mxu0
      %v5905 = vadd.f32 %v5690, %v5904
      %v5906 = vpop.f32.mrf.mxu0
      %5907 = vdwg.mxu0
      %s5908 = scalar_lea.vmem %s2, 384
      %v5909 = vld [vmem:[%s5908] sm:$0xf]
      %v5910 = vld [vmem:[%s5908 + $0x4] sm:$0xf]
      %v5911 = vld [vmem:[%s5908 + $0x8] sm:$0xf]
      %v5912 = vld [vmem:[%s5908 + $0xc] sm:$0xf]
      %v5913 = vld [vmem:[%s5908 + $0x10] sm:$0xf]
      %v5914 = vld [vmem:[%s5908 + $0x14] sm:$0xf]
      %v5915 = vld [vmem:[%s5908 + $0x18] sm:$0xf]
      %v5916 = vld [vmem:[%s5908 + $0x1c] sm:$0xf]
      %v5917 = vld [vmem:[%s5908 + $0x20] sm:$0xf]
      %v5918 = vld [vmem:[%s5908 + $0x24] sm:$0xf]
      %v5919 = vld [vmem:[%s5908 + $0x28] sm:$0xf]
      %v5920 = vld [vmem:[%s5908 + $0x2c] sm:$0xf]
      %v5921 = vld [vmem:[%s5908 + $0x30] sm:$0xf]
      %v5922 = vld [vmem:[%s5908 + $0x34] sm:$0xf]
      %v5923 = vld [vmem:[%s5908 + $0x38] sm:$0xf]
      %v5924 = vld [vmem:[%s5908 + $0x3c] sm:$0xf]
      %v5927 = vunpack.c.l.b16 %v5353
      %v5928 = vunpack.c.l.b16 %v5354
      %v5929 = vpack.c.b16 %v5928, %v5927
      %v5947 = vunpack.c.l.b16 %v5909
      %v5948 = vunpack.c.l.b16 %v5910
      %v5949 = vunpack.c.l.b16 %v5911
      %v5950 = vunpack.c.l.b16 %v5912
      %v5951 = vunpack.c.l.b16 %v5913
      %v5952 = vunpack.c.l.b16 %v5914
      %v5953 = vunpack.c.l.b16 %v5915
      %v5954 = vunpack.c.l.b16 %v5916
      %v5955 = vunpack.c.l.b16 %v5917
      %v5956 = vunpack.c.l.b16 %v5918
      %v5957 = vunpack.c.l.b16 %v5919
      %v5958 = vunpack.c.l.b16 %v5920
      %v5959 = vunpack.c.l.b16 %v5921
      %v5960 = vunpack.c.l.b16 %v5922
      %v5961 = vunpack.c.l.b16 %v5923
      %v5962 = vunpack.c.l.b16 %v5924
      %v5963 = vpack.c.b16 %v5948, %v5947
      %v5964 = vpack.c.b16 %v5950, %v5949
      %v5965 = vpack.c.b16 %v5952, %v5951
      %v5966 = vpack.c.b16 %v5954, %v5953
      %v5967 = vpack.c.b16 %v5956, %v5955
      %v5968 = vpack.c.b16 %v5958, %v5957
      %v5969 = vpack.c.b16 %v5960, %v5959
      %v5970 = vpack.c.b16 %v5962, %v5961
      %5979 = vmatprep.subr.bf16.mxu0 0
      %5980 = vmatpush1.bf16.msra.mxu0 %v5970
      %5981 = vmatprep.subr.bf16.mxu0 0
      %5982 = vmatpush1.bf16.msra.mxu0 %v5969
      %5983 = vmatprep.subr.bf16.mxu0 0
      %5984 = vmatpush1.bf16.msra.mxu0 %v5968
      %5985 = vmatprep.subr.bf16.mxu0 0
      %5986 = vmatpush1.bf16.msra.mxu0 %v5967
      %5987 = vmatprep.subr.bf16.mxu0 0
      %5988 = vmatpush1.bf16.msra.mxu0 %v5966
      %5989 = vmatprep.subr.bf16.mxu0 0
      %5990 = vmatpush1.bf16.msra.mxu0 %v5965
      %5991 = vmatprep.subr.bf16.mxu0 0
      %5992 = vmatpush1.bf16.msra.mxu0 %v5964
      %5993 = vmatprep.subr.bf16.mxu0 0
      %5994 = vmatpush1.bf16.msra.mxu0 %v5963
      %5995 = vmatprep.subr.bf16.mxu0 0
      %5996 = vmatpush2.bf16.msra.mxu0 0
      %5997 = vmatprep.subr.bf16.mxu0 0
      %5998 = vmatpush2.bf16.msra.mxu0 0
      %5999 = vmatprep.subr.bf16.mxu0 0
      %6000 = vmatpush2.bf16.msra.mxu0 0
      %6001 = vmatprep.subr.bf16.mxu0 0
      %6002 = vmatpush2.bf16.msra.mxu0 0
      %6003 = vmatprep.subr.bf16.mxu0 0
      %6004 = vmatpush2.bf16.msra.mxu0 0
      %6005 = vmatprep.subr.bf16.mxu0 0
      %6006 = vmatpush2.bf16.msra.mxu0 0
      %6007 = vmatprep.subr.bf16.mxu0 0
      %6008 = vmatpush2.bf16.msra.mxu0 0
      %6009 = vmatprep.subr.bf16.mxu0 0
      %6010 = vmatpush2.bf16.msra.mxu0 0
      %6011 = vmatprep.mubr.bf16.mxu0 0
      %6012 = vmatmul.mubr.bf16.gmra.mxu0 %v5453
      %v6013 = vpop.f32.mrf.mxu0
      %v6014 = vadd.f32 0.0, %v6013
      %v6015 = vpop.f32.mrf.mxu0
      %v6016 = vpop.f32.mrf.mxu0
      %v6017 = vadd.f32 0.0, %v6016
      %v6018 = vpop.f32.mrf.mxu0
      %6019 = vmatprep.mubr.bf16.mxu0 0
      %6020 = vmatmul.mubr.bf16.gmra.mxu0 %v5454
      %v6021 = vpop.f32.mrf.mxu0
      %v6022 = vadd.f32 0.0, %v6021
      %v6023 = vpop.f32.mrf.mxu0
      %v6024 = vpop.f32.mrf.mxu0
      %v6025 = vadd.f32 0.0, %v6024
      %v6026 = vpop.f32.mrf.mxu0
      %6027 = vmatprep.mubr.bf16.mxu0 0
      %6028 = vmatmul.mubr.bf16.gmra.mxu0 %v5455
      %v6029 = vpop.f32.mrf.mxu0
      %v6030 = vadd.f32 0.0, %v6029
      %v6031 = vpop.f32.mrf.mxu0
      %v6032 = vpop.f32.mrf.mxu0
      %v6033 = vadd.f32 0.0, %v6032
      %v6034 = vpop.f32.mrf.mxu0
      %6035 = vmatprep.mubr.bf16.mxu0 0
      %6036 = vmatmul.mubr.bf16.gmra.mxu0 %v5456
      %v6037 = vpop.f32.mrf.mxu0
      %v6038 = vadd.f32 0.0, %v6037
      %v6039 = vpop.f32.mrf.mxu0
      %v6040 = vpop.f32.mrf.mxu0
      %v6041 = vadd.f32 0.0, %v6040
      %v6042 = vpop.f32.mrf.mxu0
      %6043 = vmatprep.mubr.bf16.mxu0 0
      %6044 = vmatmul.mubr.bf16.gmra.mxu0 %v5457
      %v6045 = vpop.f32.mrf.mxu0
      %v6046 = vadd.f32 0.0, %v6045
      %v6047 = vpop.f32.mrf.mxu0
      %v6048 = vpop.f32.mrf.mxu0
      %v6049 = vadd.f32 0.0, %v6048
      %v6050 = vpop.f32.mrf.mxu0
      %6051 = vmatprep.mubr.bf16.mxu0 0
      %6052 = vmatmul.mubr.bf16.gmra.mxu0 %v5458
      %v6053 = vpop.f32.mrf.mxu0
      %v6054 = vadd.f32 0.0, %v6053
      %v6055 = vpop.f32.mrf.mxu0
      %v6056 = vpop.f32.mrf.mxu0
      %v6057 = vadd.f32 0.0, %v6056
      %v6058 = vpop.f32.mrf.mxu0
      %6059 = vmatprep.mubr.bf16.mxu0 0
      %6060 = vmatmul.mubr.bf16.gmra.mxu0 %v5459
      %v6061 = vpop.f32.mrf.mxu0
      %v6062 = vadd.f32 0.0, %v6061
      %v6063 = vpop.f32.mrf.mxu0
      %v6064 = vpop.f32.mrf.mxu0
      %v6065 = vadd.f32 0.0, %v6064
      %v6066 = vpop.f32.mrf.mxu0
      %6067 = vmatprep.mubr.bf16.mxu0 0
      %6068 = vmatmul.mubr.bf16.gmra.mxu0 %v5460
      %v6069 = vpop.f32.mrf.mxu0
      %v6070 = vadd.f32 0.0, %v6069
      %v6071 = vpop.f32.mrf.mxu0
      %v6072 = vpop.f32.mrf.mxu0
      %v6073 = vadd.f32 0.0, %v6072
      %v6074 = vpop.f32.mrf.mxu0
      %6075 = vmatprep.mubr.bf16.mxu0 0
      %6076 = vmatmul.mubr.bf16.gmra.mxu0 %v5461
      %v6077 = vpop.f32.mrf.mxu0
      %v6078 = vadd.f32 0.0, %v6077
      %v6079 = vpop.f32.mrf.mxu0
      %v6080 = vpop.f32.mrf.mxu0
      %v6081 = vadd.f32 0.0, %v6080
      %v6082 = vpop.f32.mrf.mxu0
      %6083 = vmatprep.mubr.bf16.mxu0 0
      %6084 = vmatmul.mubr.bf16.gmra.mxu0 %v5462
      %v6085 = vpop.f32.mrf.mxu0
      %v6086 = vadd.f32 0.0, %v6085
      %v6087 = vpop.f32.mrf.mxu0
      %v6088 = vpop.f32.mrf.mxu0
      %v6089 = vadd.f32 0.0, %v6088
      %v6090 = vpop.f32.mrf.mxu0
      %6091 = vmatprep.mubr.bf16.mxu0 0
      %6092 = vmatmul.mubr.bf16.gmra.mxu0 %v5463
      %v6093 = vpop.f32.mrf.mxu0
      %v6094 = vadd.f32 0.0, %v6093
      %v6095 = vpop.f32.mrf.mxu0
      %v6096 = vpop.f32.mrf.mxu0
      %v6097 = vadd.f32 0.0, %v6096
      %v6098 = vpop.f32.mrf.mxu0
      %6099 = vmatprep.mubr.bf16.mxu0 0
      %6100 = vmatmul.mubr.bf16.gmra.mxu0 %v5464
      %v6101 = vpop.f32.mrf.mxu0
      %v6102 = vadd.f32 0.0, %v6101
      %v6103 = vpop.f32.mrf.mxu0
      %v6104 = vpop.f32.mrf.mxu0
      %v6105 = vadd.f32 0.0, %v6104
      %v6106 = vpop.f32.mrf.mxu0
      %6107 = vmatprep.mubr.bf16.mxu0 0
      %6108 = vmatmul.mubr.bf16.gmra.mxu0 %v5465
      %v6109 = vpop.f32.mrf.mxu0
      %v6110 = vadd.f32 0.0, %v6109
      %v6111 = vpop.f32.mrf.mxu0
      %v6112 = vpop.f32.mrf.mxu0
      %v6113 = vadd.f32 0.0, %v6112
      %v6114 = vpop.f32.mrf.mxu0
      %6115 = vmatprep.mubr.bf16.mxu0 0
      %6116 = vmatmul.mubr.bf16.gmra.mxu0 %v5466
      %v6117 = vpop.f32.mrf.mxu0
      %v6118 = vadd.f32 0.0, %v6117
      %v6119 = vpop.f32.mrf.mxu0
      %v6120 = vpop.f32.mrf.mxu0
      %v6121 = vadd.f32 0.0, %v6120
      %v6122 = vpop.f32.mrf.mxu0
      %6123 = vmatprep.mubr.bf16.mxu0 0
      %6124 = vmatmul.mubr.bf16.gmra.mxu0 %v5467
      %v6125 = vpop.f32.mrf.mxu0
      %v6126 = vadd.f32 0.0, %v6125
      %v6127 = vpop.f32.mrf.mxu0
      %v6128 = vpop.f32.mrf.mxu0
      %v6129 = vadd.f32 0.0, %v6128
      %v6130 = vpop.f32.mrf.mxu0
      %6131 = vmatprep.mubr.bf16.mxu0 0
      %6132 = vmatmul.mubr.bf16.gmra.mxu0 %v5929
      %v6133 = vpop.f32.mrf.mxu0
      %v6134 = vadd.f32 0.0, %v6133
      %v6135 = vpop.f32.mrf.mxu0
      %v6136 = vpop.f32.mrf.mxu0
      %v6137 = vadd.f32 0.0, %v6136
      %v6138 = vpop.f32.mrf.mxu0
      %6139 = vdwg.mxu0
      %v6140 = vadd.f32 %v5782, %v6014
      %v6141 = vadd.f32 %v5785, %v6017
      %v6142 = vadd.f32 %v5790, %v6022
      %v6143 = vadd.f32 %v5793, %v6025
      %v6144 = vadd.f32 %v5798, %v6030
      %v6145 = vadd.f32 %v5801, %v6033
      %v6146 = vadd.f32 %v5806, %v6038
      %v6147 = vadd.f32 %v5809, %v6041
      %v6148 = vadd.f32 %v5814, %v6046
      %v6149 = vadd.f32 %v5817, %v6049
      %v6150 = vadd.f32 %v5822, %v6054
      %v6151 = vadd.f32 %v5825, %v6057
      %v6152 = vadd.f32 %v5830, %v6062
      %v6153 = vadd.f32 %v5833, %v6065
      %v6154 = vadd.f32 %v5838, %v6070
      %v6155 = vadd.f32 %v5841, %v6073
      %v6156 = vadd.f32 %v5846, %v6078
      %v6157 = vadd.f32 %v5849, %v6081
      %v6158 = vadd.f32 %v5854, %v6086
      %v6159 = vadd.f32 %v5857, %v6089
      %v6160 = vadd.f32 %v5862, %v6094
      %v6161 = vadd.f32 %v5865, %v6097
      %v6162 = vadd.f32 %v5870, %v6102
      %v6163 = vadd.f32 %v5873, %v6105
      %v6164 = vadd.f32 %v5878, %v6110
      %v6165 = vadd.f32 %v5881, %v6113
      %v6166 = vadd.f32 %v5886, %v6118
      %v6167 = vadd.f32 %v5889, %v6121
      %v6168 = vadd.f32 %v5894, %v6126
      %v6169 = vadd.f32 %v5897, %v6129
      %v6170 = vadd.f32 %v5902, %v6134
      %v6171 = vadd.f32 %v5905, %v6137
      %v6172 = vld [vmem:[#allocation2] sm:$0xf]
      %v6173 = vld [vmem:[#allocation2 + $0x4] sm:$0xf]
      %v6174 = vld [vmem:[#allocation2 + $0x8] sm:$0x1]
      %v6175 = vld [vmem:[#allocation2 + $0xc] sm:$0xf]
      %v6176 = vld [vmem:[#allocation2 + $0x10] sm:$0xf]
      %v6177 = vld [vmem:[#allocation2 + $0x14] sm:$0x1]
      %v6178 = vld [vmem:[#allocation2 + $0x18] sm:$0xf]
      %v6179 = vld [vmem:[#allocation2 + $0x1c] sm:$0xf]
      %v6180 = vld [vmem:[#allocation2 + $0x20] sm:$0x1]
      %v6181 = vld [vmem:[#allocation2 + $0x24] sm:$0xf]
      %v6182 = vld [vmem:[#allocation2 + $0x28] sm:$0xf]
      %v6183 = vld [vmem:[#allocation2 + $0x2c] sm:$0x1]
      %v6184 = vld [vmem:[#allocation2 + $0x30] sm:$0xf]
      %v6185 = vld [vmem:[#allocation2 + $0x34] sm:$0xf]
      %v6186 = vld [vmem:[#allocation2 + $0x38] sm:$0x1]
      %v6187 = vld [vmem:[#allocation2 + $0x3c] sm:$0xf]
      %v6188 = vld [vmem:[#allocation2 + $0x40] sm:$0xf]
      %v6189 = vld [vmem:[#allocation2 + $0x44] sm:$0x1]
      %v6190 = vld [vmem:[#allocation2 + $0x48] sm:$0xf]
      %v6191 = vld [vmem:[#allocation2 + $0x4c] sm:$0xf]
      %v6192 = vld [vmem:[#allocation2 + $0x50] sm:$0x1]
      %v6193 = vld [vmem:[#allocation2 + $0x54] sm:$0xf]
      %v6194 = vld [vmem:[#allocation2 + $0x58] sm:$0xf]
      %v6195 = vld [vmem:[#allocation2 + $0x5c] sm:$0x1]
      %v6196 = vld [vmem:[#allocation2 + $0x60] sm:$0xf]
      %v6197 = vld [vmem:[#allocation2 + $0x64] sm:$0xf]
      %v6198 = vld [vmem:[#allocation2 + $0x68] sm:$0x1]
      %v6199 = vld [vmem:[#allocation2 + $0x6c] sm:$0xf]
      %v6200 = vld [vmem:[#allocation2 + $0x70] sm:$0xf]
      %v6201 = vld [vmem:[#allocation2 + $0x74] sm:$0x1]
      %v6202 = vld [vmem:[#allocation2 + $0x78] sm:$0xf]
      %v6203 = vld [vmem:[#allocation2 + $0x7c] sm:$0xf]
      %v6204 = vld [vmem:[#allocation2 + $0x80] sm:$0x1]
      %v6205 = vld [vmem:[#allocation2 + $0x84] sm:$0xf]
      %v6206 = vld [vmem:[#allocation2 + $0x88] sm:$0xf]
      %v6207 = vld [vmem:[#allocation2 + $0x8c] sm:$0x1]
      %v6208 = vld [vmem:[#allocation2 + $0x90] sm:$0xf]
      %v6209 = vld [vmem:[#allocation2 + $0x94] sm:$0xf]
      %v6210 = vld [vmem:[#allocation2 + $0x98] sm:$0x1]
      %v6211 = vld [vmem:[#allocation2 + $0x9c] sm:$0xf]
      %v6212 = vld [vmem:[#allocation2 + $0xa0] sm:$0xf]
      %v6213 = vld [vmem:[#allocation2 + $0xa4] sm:$0x1]
      %v6214 = vld [vmem:[#allocation2 + $0xa8] sm:$0xf]
      %v6215 = vld [vmem:[#allocation2 + $0xac] sm:$0xf]
      %v6216 = vld [vmem:[#allocation2 + $0xb0] sm:$0x1]
      %v6217 = vld [vmem:[#allocation2 + $0xb4] sm:$0xf]
      %v6218 = vld [vmem:[#allocation2 + $0xb8] sm:$0xf]
      %v6219 = vld [vmem:[#allocation2 + $0xbc] sm:$0x1]
      %v6220 = vld [vmem:[#allocation2 + $0xc0] sm:$0xf]
      %v6221 = vld [vmem:[#allocation2 + $0xc4] sm:$0xf]
      %v6222 = vld [vmem:[#allocation2 + $0xc8] sm:$0x1]
      %v6223 = vld [vmem:[#allocation2 + $0xcc] sm:$0xf]
      %v6224 = vld [vmem:[#allocation2 + $0xd0] sm:$0xf]
      %v6225 = vld [vmem:[#allocation2 + $0xd4] sm:$0x1]
      %v6227 = vshrl.u32 %v6172, 16
      %v6229 = vrot.slane %v6227, 4
      %v6230 = vshll.u32 %v6172, 16
      %v6232 = vrot.slane %v6230, 5
      %v6233 = vor.u32 %v6229, %v6232
      %v6234 = vrot.slane %v6233, 4
      %v6236 = vshll.u32 %v6173, 16
      %v6238 = vrot.slane %v6236, 5
      %v6239 = vsel %vm1954, %v6234, %v6238
      %v6240 = vshrl.u32 %v6173, 16
      %v6242 = vrot.slane %v6240, 4
      %v6243 = vor.u32 %v6242, %v6238
      %v6244 = vrot.slane %v6243, 4
      %v6246 = vshll.u32 %v6174, 16
      %v6248 = vrot.slane %v6246, 5
      %v6249 = vsel %vm1954, %v6244, %v6248
      %v6251 = vshrl.u32 %v6175, 16
      %v6253 = vrot.slane %v6251, 4
      %v6254 = vshll.u32 %v6175, 16
      %v6256 = vrot.slane %v6254, 5
      %v6257 = vor.u32 %v6253, %v6256
      %v6258 = vrot.slane %v6257, 4
      %v6260 = vshll.u32 %v6176, 16
      %v6262 = vrot.slane %v6260, 5
      %v6263 = vsel %vm1954, %v6258, %v6262
      %v6264 = vshrl.u32 %v6176, 16
      %v6266 = vrot.slane %v6264, 4
      %v6267 = vor.u32 %v6266, %v6262
      %v6268 = vrot.slane %v6267, 4
      %v6270 = vshll.u32 %v6177, 16
      %v6272 = vrot.slane %v6270, 5
      %v6273 = vsel %vm1954, %v6268, %v6272
      %v6275 = vshrl.u32 %v6178, 16
      %v6277 = vrot.slane %v6275, 4
      %v6278 = vshll.u32 %v6178, 16
      %v6280 = vrot.slane %v6278, 5
      %v6281 = vor.u32 %v6277, %v6280
      %v6282 = vrot.slane %v6281, 4
      %v6284 = vshll.u32 %v6179, 16
      %v6286 = vrot.slane %v6284, 5
      %v6287 = vsel %vm1954, %v6282, %v6286
      %v6288 = vshrl.u32 %v6179, 16
      %v6290 = vrot.slane %v6288, 4
      %v6291 = vor.u32 %v6290, %v6286
      %v6292 = vrot.slane %v6291, 4
      %v6294 = vshll.u32 %v6180, 16
      %v6296 = vrot.slane %v6294, 5
      %v6297 = vsel %vm1954, %v6292, %v6296
      %v6299 = vshrl.u32 %v6181, 16
      %v6301 = vrot.slane %v6299, 4
      %v6302 = vshll.u32 %v6181, 16
      %v6304 = vrot.slane %v6302, 5
      %v6305 = vor.u32 %v6301, %v6304
      %v6306 = vrot.slane %v6305, 4
      %v6308 = vshll.u32 %v6182, 16
      %v6310 = vrot.slane %v6308, 5
      %v6311 = vsel %vm1954, %v6306, %v6310
      %v6312 = vshrl.u32 %v6182, 16
      %v6314 = vrot.slane %v6312, 4
      %v6315 = vor.u32 %v6314, %v6310
      %v6316 = vrot.slane %v6315, 4
      %v6318 = vshll.u32 %v6183, 16
      %v6320 = vrot.slane %v6318, 5
      %v6321 = vsel %vm1954, %v6316, %v6320
      %v6323 = vshrl.u32 %v6184, 16
      %v6325 = vrot.slane %v6323, 4
      %v6326 = vshll.u32 %v6184, 16
      %v6328 = vrot.slane %v6326, 5
      %v6329 = vor.u32 %v6325, %v6328
      %v6330 = vrot.slane %v6329, 4
      %v6332 = vshll.u32 %v6185, 16
      %v6334 = vrot.slane %v6332, 5
      %v6335 = vsel %vm1954, %v6330, %v6334
      %v6336 = vshrl.u32 %v6185, 16
      %v6338 = vrot.slane %v6336, 4
      %v6339 = vor.u32 %v6338, %v6334
      %v6340 = vrot.slane %v6339, 4
      %v6342 = vshll.u32 %v6186, 16
      %v6344 = vrot.slane %v6342, 5
      %v6345 = vsel %vm1954, %v6340, %v6344
      %v6347 = vshrl.u32 %v6187, 16
      %v6349 = vrot.slane %v6347, 4
      %v6350 = vshll.u32 %v6187, 16
      %v6352 = vrot.slane %v6350, 5
      %v6353 = vor.u32 %v6349, %v6352
      %v6354 = vrot.slane %v6353, 4
      %v6356 = vshll.u32 %v6188, 16
      %v6358 = vrot.slane %v6356, 5
      %v6359 = vsel %vm1954, %v6354, %v6358
      %v6360 = vshrl.u32 %v6188, 16
      %v6362 = vrot.slane %v6360, 4
      %v6363 = vor.u32 %v6362, %v6358
      %v6364 = vrot.slane %v6363, 4
      %v6366 = vshll.u32 %v6189, 16
      %v6368 = vrot.slane %v6366, 5
      %v6369 = vsel %vm1954, %v6364, %v6368
      %v6371 = vshrl.u32 %v6190, 16
      %v6373 = vrot.slane %v6371, 4
      %v6374 = vshll.u32 %v6190, 16
      %v6376 = vrot.slane %v6374, 5
      %v6377 = vor.u32 %v6373, %v6376
      %v6378 = vrot.slane %v6377, 4
      %v6380 = vshll.u32 %v6191, 16
      %v6382 = vrot.slane %v6380, 5
      %v6383 = vsel %vm1954, %v6378, %v6382
      %v6384 = vshrl.u32 %v6191, 16
      %v6386 = vrot.slane %v6384, 4
      %v6387 = vor.u32 %v6386, %v6382
      %v6388 = vrot.slane %v6387, 4
      %v6390 = vshll.u32 %v6192, 16
      %v6392 = vrot.slane %v6390, 5
      %v6393 = vsel %vm1954, %v6388, %v6392
      %v6395 = vshrl.u32 %v6193, 16
      %v6397 = vrot.slane %v6395, 4
      %v6398 = vshll.u32 %v6193, 16
      %v6400 = vrot.slane %v6398, 5
      %v6401 = vor.u32 %v6397, %v6400
      %v6402 = vrot.slane %v6401, 4
      %v6404 = vshll.u32 %v6194, 16
      %v6406 = vrot.slane %v6404, 5
      %v6407 = vsel %vm1954, %v6402, %v6406
      %v6408 = vshrl.u32 %v6194, 16
      %v6410 = vrot.slane %v6408, 4
      %v6411 = vor.u32 %v6410, %v6406
      %v6412 = vrot.slane %v6411, 4
      %v6414 = vshll.u32 %v6195, 16
      %v6416 = vrot.slane %v6414, 5
      %v6417 = vsel %vm1954, %v6412, %v6416
      %v6419 = vshrl.u32 %v6196, 16
      %v6421 = vrot.slane %v6419, 4
      %v6422 = vshll.u32 %v6196, 16
      %v6424 = vrot.slane %v6422, 5
      %v6425 = vor.u32 %v6421, %v6424
      %v6426 = vrot.slane %v6425, 4
      %v6428 = vshll.u32 %v6197, 16
      %v6430 = vrot.slane %v6428, 5
      %v6431 = vsel %vm1954, %v6426, %v6430
      %v6432 = vshrl.u32 %v6197, 16
      %v6434 = vrot.slane %v6432, 4
      %v6435 = vor.u32 %v6434, %v6430
      %v6436 = vrot.slane %v6435, 4
      %v6438 = vshll.u32 %v6198, 16
      %v6440 = vrot.slane %v6438, 5
      %v6441 = vsel %vm1954, %v6436, %v6440
      %v6443 = vshrl.u32 %v6199, 16
      %v6445 = vrot.slane %v6443, 4
      %v6446 = vshll.u32 %v6199, 16
      %v6448 = vrot.slane %v6446, 5
      %v6449 = vor.u32 %v6445, %v6448
      %v6450 = vrot.slane %v6449, 4
      %v6452 = vshll.u32 %v6200, 16
      %v6454 = vrot.slane %v6452, 5
      %v6455 = vsel %vm1954, %v6450, %v6454
      %v6456 = vshrl.u32 %v6200, 16
      %v6458 = vrot.slane %v6456, 4
      %v6459 = vor.u32 %v6458, %v6454
      %v6460 = vrot.slane %v6459, 4
      %v6462 = vshll.u32 %v6201, 16
      %v6464 = vrot.slane %v6462, 5
      %v6465 = vsel %vm1954, %v6460, %v6464
      %v6467 = vshrl.u32 %v6202, 16
      %v6469 = vrot.slane %v6467, 4
      %v6470 = vshll.u32 %v6202, 16
      %v6472 = vrot.slane %v6470, 5
      %v6473 = vor.u32 %v6469, %v6472
      %v6474 = vrot.slane %v6473, 4
      %v6476 = vshll.u32 %v6203, 16
      %v6478 = vrot.slane %v6476, 5
      %v6479 = vsel %vm1954, %v6474, %v6478
      %v6480 = vshrl.u32 %v6203, 16
      %v6482 = vrot.slane %v6480, 4
      %v6483 = vor.u32 %v6482, %v6478
      %v6484 = vrot.slane %v6483, 4
      %v6486 = vshll.u32 %v6204, 16
      %v6488 = vrot.slane %v6486, 5
      %v6489 = vsel %vm1954, %v6484, %v6488
      %v6491 = vshrl.u32 %v6205, 16
      %v6493 = vrot.slane %v6491, 4
      %v6494 = vshll.u32 %v6205, 16
      %v6496 = vrot.slane %v6494, 5
      %v6497 = vor.u32 %v6493, %v6496
      %v6498 = vrot.slane %v6497, 4
      %v6500 = vshll.u32 %v6206, 16
      %v6502 = vrot.slane %v6500, 5
      %v6503 = vsel %vm1954, %v6498, %v6502
      %v6504 = vshrl.u32 %v6206, 16
      %v6506 = vrot.slane %v6504, 4
      %v6507 = vor.u32 %v6506, %v6502
      %v6508 = vrot.slane %v6507, 4
      %v6510 = vshll.u32 %v6207, 16
      %v6512 = vrot.slane %v6510, 5
      %v6513 = vsel %vm1954, %v6508, %v6512
      %v6515 = vshrl.u32 %v6208, 16
      %v6517 = vrot.slane %v6515, 4
      %v6518 = vshll.u32 %v6208, 16
      %v6520 = vrot.slane %v6518, 5
      %v6521 = vor.u32 %v6517, %v6520
      %v6522 = vrot.slane %v6521, 4
      %v6524 = vshll.u32 %v6209, 16
      %v6526 = vrot.slane %v6524, 5
      %v6527 = vsel %vm1954, %v6522, %v6526
      %v6528 = vshrl.u32 %v6209, 16
      %v6530 = vrot.slane %v6528, 4
      %v6531 = vor.u32 %v6530, %v6526
      %v6532 = vrot.slane %v6531, 4
      %v6534 = vshll.u32 %v6210, 16
      %v6536 = vrot.slane %v6534, 5
      %v6537 = vsel %vm1954, %v6532, %v6536
      %v6539 = vshrl.u32 %v6211, 16
      %v6541 = vrot.slane %v6539, 4
      %v6542 = vshll.u32 %v6211, 16
      %v6544 = vrot.slane %v6542, 5
      %v6545 = vor.u32 %v6541, %v6544
      %v6546 = vrot.slane %v6545, 4
      %v6548 = vshll.u32 %v6212, 16
      %v6550 = vrot.slane %v6548, 5
      %v6551 = vsel %vm1954, %v6546, %v6550
      %v6552 = vshrl.u32 %v6212, 16
      %v6554 = vrot.slane %v6552, 4
      %v6555 = vor.u32 %v6554, %v6550
      %v6556 = vrot.slane %v6555, 4
      %v6558 = vshll.u32 %v6213, 16
      %v6560 = vrot.slane %v6558, 5
      %v6561 = vsel %vm1954, %v6556, %v6560
      %v6563 = vshrl.u32 %v6214, 16
      %v6565 = vrot.slane %v6563, 4
      %v6566 = vshll.u32 %v6214, 16
      %v6568 = vrot.slane %v6566, 5
      %v6569 = vor.u32 %v6565, %v6568
      %v6570 = vrot.slane %v6569, 4
      %v6572 = vshll.u32 %v6215, 16
      %v6574 = vrot.slane %v6572, 5
      %v6575 = vsel %vm1954, %v6570, %v6574
      %v6576 = vshrl.u32 %v6215, 16
      %v6578 = vrot.slane %v6576, 4
      %v6579 = vor.u32 %v6578, %v6574
      %v6580 = vrot.slane %v6579, 4
      %v6582 = vshll.u32 %v6216, 16
      %v6584 = vrot.slane %v6582, 5
      %v6585 = vsel %vm1954, %v6580, %v6584
      %v6587 = vshrl.u32 %v6217, 16
      %v6589 = vrot.slane %v6587, 4
      %v6590 = vshll.u32 %v6217, 16
      %v6592 = vrot.slane %v6590, 5
      %v6593 = vor.u32 %v6589, %v6592
      %v6594 = vrot.slane %v6593, 4
      %v6596 = vshll.u32 %v6218, 16
      %v6598 = vrot.slane %v6596, 5
      %v6599 = vsel %vm1954, %v6594, %v6598
      %v6600 = vshrl.u32 %v6218, 16
      %v6602 = vrot.slane %v6600, 4
      %v6603 = vor.u32 %v6602, %v6598
      %v6604 = vrot.slane %v6603, 4
      %v6606 = vshll.u32 %v6219, 16
      %v6608 = vrot.slane %v6606, 5
      %v6609 = vsel %vm1954, %v6604, %v6608
      %s6610 = scalar_lea.vmem %s2, 64
      %v6611 = vld [vmem:[%s6610] sm:$0xf]
      %v6612 = vld [vmem:[%s6610 + $0x4] sm:$0xf]
      %v6613 = vld [vmem:[%s6610 + $0x8] sm:$0xf]
      %v6614 = vld [vmem:[%s6610 + $0xc] sm:$0xf]
      %v6615 = vld [vmem:[%s6610 + $0x10] sm:$0xf]
      %v6616 = vld [vmem:[%s6610 + $0x14] sm:$0xf]
      %v6617 = vld [vmem:[%s6610 + $0x18] sm:$0xf]
      %v6618 = vld [vmem:[%s6610 + $0x1c] sm:$0xf]
      %v6619 = vld [vmem:[%s6610 + $0x20] sm:$0xf]
      %v6620 = vld [vmem:[%s6610 + $0x24] sm:$0xf]
      %v6621 = vld [vmem:[%s6610 + $0x28] sm:$0xf]
      %v6622 = vld [vmem:[%s6610 + $0x2c] sm:$0xf]
      %v6623 = vld [vmem:[%s6610 + $0x30] sm:$0xf]
      %v6624 = vld [vmem:[%s6610 + $0x34] sm:$0xf]
      %v6625 = vld [vmem:[%s6610 + $0x38] sm:$0xf]
      %v6626 = vld [vmem:[%s6610 + $0x3c] sm:$0xf]
      %v6627 = vunpack.c.l.b16 %v6239
      %v6628 = vunpack.c.l.b16 %v6249
      %v6629 = vunpack.c.l.b16 %v6263
      %v6630 = vunpack.c.l.b16 %v6273
      %v6631 = vunpack.c.l.b16 %v6287
      %v6632 = vunpack.c.l.b16 %v6297
      %v6633 = vunpack.c.l.b16 %v6311
      %v6634 = vunpack.c.l.b16 %v6321
      %v6635 = vunpack.c.l.b16 %v6335
      %v6636 = vunpack.c.l.b16 %v6345
      %v6637 = vunpack.c.l.b16 %v6359
      %v6638 = vunpack.c.l.b16 %v6369
      %v6639 = vunpack.c.l.b16 %v6383
      %v6640 = vunpack.c.l.b16 %v6393
      %v6641 = vunpack.c.l.b16 %v6407
      %v6642 = vunpack.c.l.b16 %v6417
      %v6643 = vunpack.c.l.b16 %v6431
      %v6644 = vunpack.c.l.b16 %v6441
      %v6645 = vunpack.c.l.b16 %v6455
      %v6646 = vunpack.c.l.b16 %v6465
      %v6647 = vunpack.c.l.b16 %v6479
      %v6648 = vunpack.c.l.b16 %v6489
      %v6649 = vunpack.c.l.b16 %v6503
      %v6650 = vunpack.c.l.b16 %v6513
      %v6651 = vunpack.c.l.b16 %v6527
      %v6652 = vunpack.c.l.b16 %v6537
      %v6653 = vunpack.c.l.b16 %v6551
      %v6654 = vunpack.c.l.b16 %v6561
      %v6655 = vunpack.c.l.b16 %v6575
      %v6656 = vunpack.c.l.b16 %v6585
      %v6657 = vunpack.c.l.b16 %v6599
      %v6658 = vunpack.c.l.b16 %v6609
      %v6659 = vpack.c.b16 %v6628, %v6627
      %v6660 = vpack.c.b16 %v6630, %v6629
      %v6661 = vpack.c.b16 %v6632, %v6631
      %v6662 = vpack.c.b16 %v6634, %v6633
      %v6663 = vpack.c.b16 %v6636, %v6635
      %v6664 = vpack.c.b16 %v6638, %v6637
      %v6665 = vpack.c.b16 %v6640, %v6639
      %v6666 = vpack.c.b16 %v6642, %v6641
      %v6667 = vpack.c.b16 %v6644, %v6643
      %v6668 = vpack.c.b16 %v6646, %v6645
      %v6669 = vpack.c.b16 %v6648, %v6647
      %v6670 = vpack.c.b16 %v6650, %v6649
      %v6671 = vpack.c.b16 %v6652, %v6651
      %v6672 = vpack.c.b16 %v6654, %v6653
      %v6673 = vpack.c.b16 %v6656, %v6655
      %v6674 = vpack.c.b16 %v6658, %v6657
      %v6707 = vunpack.c.l.b16 %v6611
      %v6708 = vunpack.c.l.b16 %v6612
      %v6709 = vunpack.c.l.b16 %v6613
      %v6710 = vunpack.c.l.b16 %v6614
      %v6711 = vunpack.c.l.b16 %v6615
      %v6712 = vunpack.c.l.b16 %v6616
      %v6713 = vunpack.c.l.b16 %v6617
      %v6714 = vunpack.c.l.b16 %v6618
      %v6715 = vunpack.c.l.b16 %v6619
      %v6716 = vunpack.c.l.b16 %v6620
      %v6717 = vunpack.c.l.b16 %v6621
      %v6718 = vunpack.c.l.b16 %v6622
      %v6719 = vunpack.c.l.b16 %v6623
      %v6720 = vunpack.c.l.b16 %v6624
      %v6721 = vunpack.c.l.b16 %v6625
      %v6722 = vunpack.c.l.b16 %v6626
      %v6723 = vpack.c.b16 %v6708, %v6707
      %v6724 = vpack.c.b16 %v6710, %v6709
      %v6725 = vpack.c.b16 %v6712, %v6711
      %v6726 = vpack.c.b16 %v6714, %v6713
      %v6727 = vpack.c.b16 %v6716, %v6715
      %v6728 = vpack.c.b16 %v6718, %v6717
      %v6729 = vpack.c.b16 %v6720, %v6719
      %v6730 = vpack.c.b16 %v6722, %v6721
      %6739 = vmatprep.subr.bf16.mxu0 0
      %6740 = vmatpush1.bf16.msra.mxu0 %v6730
      %6741 = vmatprep.subr.bf16.mxu0 0
      %6742 = vmatpush1.bf16.msra.mxu0 %v6729
      %6743 = vmatprep.subr.bf16.mxu0 0
      %6744 = vmatpush1.bf16.msra.mxu0 %v6728
      %6745 = vmatprep.subr.bf16.mxu0 0
      %6746 = vmatpush1.bf16.msra.mxu0 %v6727
      %6747 = vmatprep.subr.bf16.mxu0 0
      %6748 = vmatpush1.bf16.msra.mxu0 %v6726
      %6749 = vmatprep.subr.bf16.mxu0 0
      %6750 = vmatpush1.bf16.msra.mxu0 %v6725
      %6751 = vmatprep.subr.bf16.mxu0 0
      %6752 = vmatpush1.bf16.msra.mxu0 %v6724
      %6753 = vmatprep.subr.bf16.mxu0 0
      %6754 = vmatpush1.bf16.msra.mxu0 %v6723
      %6755 = vmatprep.subr.bf16.mxu0 0
      %6756 = vmatpush2.bf16.msra.mxu0 0
      %6757 = vmatprep.subr.bf16.mxu0 0
      %6758 = vmatpush2.bf16.msra.mxu0 0
      %6759 = vmatprep.subr.bf16.mxu0 0
      %6760 = vmatpush2.bf16.msra.mxu0 0
      %6761 = vmatprep.subr.bf16.mxu0 0
      %6762 = vmatpush2.bf16.msra.mxu0 0
      %6763 = vmatprep.subr.bf16.mxu0 0
      %6764 = vmatpush2.bf16.msra.mxu0 0
      %6765 = vmatprep.subr.bf16.mxu0 0
      %6766 = vmatpush2.bf16.msra.mxu0 0
      %6767 = vmatprep.subr.bf16.mxu0 0
      %6768 = vmatpush2.bf16.msra.mxu0 0
      %6769 = vmatprep.subr.bf16.mxu0 0
      %6770 = vmatpush2.bf16.msra.mxu0 0
      %6771 = vmatprep.mubr.bf16.mxu0 0
      %6772 = vmatmul.mubr.bf16.gmra.mxu0 %v6659
      %v6773 = vpop.f32.mrf.mxu0
      %v6774 = vadd.f32 0.0, %v6773
      %v6775 = vpop.f32.mrf.mxu0
      %v6776 = vpop.f32.mrf.mxu0
      %v6777 = vadd.f32 0.0, %v6776
      %v6778 = vpop.f32.mrf.mxu0
      %6779 = vmatprep.mubr.bf16.mxu0 0
      %6780 = vmatmul.mubr.bf16.gmra.mxu0 %v6660
      %v6781 = vpop.f32.mrf.mxu0
      %v6782 = vadd.f32 0.0, %v6781
      %v6783 = vpop.f32.mrf.mxu0
      %v6784 = vpop.f32.mrf.mxu0
      %v6785 = vadd.f32 0.0, %v6784
      %v6786 = vpop.f32.mrf.mxu0
      %6787 = vmatprep.mubr.bf16.mxu0 0
      %6788 = vmatmul.mubr.bf16.gmra.mxu0 %v6661
      %v6789 = vpop.f32.mrf.mxu0
      %v6790 = vadd.f32 0.0, %v6789
      %v6791 = vpop.f32.mrf.mxu0
      %v6792 = vpop.f32.mrf.mxu0
      %v6793 = vadd.f32 0.0, %v6792
      %v6794 = vpop.f32.mrf.mxu0
      %6795 = vmatprep.mubr.bf16.mxu0 0
      %6796 = vmatmul.mubr.bf16.gmra.mxu0 %v6662
      %v6797 = vpop.f32.mrf.mxu0
      %v6798 = vadd.f32 0.0, %v6797
      %v6799 = vpop.f32.mrf.mxu0
      %v6800 = vpop.f32.mrf.mxu0
      %v6801 = vadd.f32 0.0, %v6800
      %v6802 = vpop.f32.mrf.mxu0
      %6803 = vmatprep.mubr.bf16.mxu0 0
      %6804 = vmatmul.mubr.bf16.gmra.mxu0 %v6663
      %v6805 = vpop.f32.mrf.mxu0
      %v6806 = vadd.f32 0.0, %v6805
      %v6807 = vpop.f32.mrf.mxu0
      %v6808 = vpop.f32.mrf.mxu0
      %v6809 = vadd.f32 0.0, %v6808
      %v6810 = vpop.f32.mrf.mxu0
      %6811 = vmatprep.mubr.bf16.mxu0 0
      %6812 = vmatmul.mubr.bf16.gmra.mxu0 %v6664
      %v6813 = vpop.f32.mrf.mxu0
      %v6814 = vadd.f32 0.0, %v6813
      %v6815 = vpop.f32.mrf.mxu0
      %v6816 = vpop.f32.mrf.mxu0
      %v6817 = vadd.f32 0.0, %v6816
      %v6818 = vpop.f32.mrf.mxu0
      %6819 = vmatprep.mubr.bf16.mxu0 0
      %6820 = vmatmul.mubr.bf16.gmra.mxu0 %v6665
      %v6821 = vpop.f32.mrf.mxu0
      %v6822 = vadd.f32 0.0, %v6821
      %v6823 = vpop.f32.mrf.mxu0
      %v6824 = vpop.f32.mrf.mxu0
      %v6825 = vadd.f32 0.0, %v6824
      %v6826 = vpop.f32.mrf.mxu0
      %6827 = vmatprep.mubr.bf16.mxu0 0
      %6828 = vmatmul.mubr.bf16.gmra.mxu0 %v6666
      %v6829 = vpop.f32.mrf.mxu0
      %v6830 = vadd.f32 0.0, %v6829
      %v6831 = vpop.f32.mrf.mxu0
      %v6832 = vpop.f32.mrf.mxu0
      %v6833 = vadd.f32 0.0, %v6832
      %v6834 = vpop.f32.mrf.mxu0
      %6835 = vmatprep.mubr.bf16.mxu0 0
      %6836 = vmatmul.mubr.bf16.gmra.mxu0 %v6667
      %v6837 = vpop.f32.mrf.mxu0
      %v6838 = vadd.f32 0.0, %v6837
      %v6839 = vpop.f32.mrf.mxu0
      %v6840 = vpop.f32.mrf.mxu0
      %v6841 = vadd.f32 0.0, %v6840
      %v6842 = vpop.f32.mrf.mxu0
      %6843 = vmatprep.mubr.bf16.mxu0 0
      %6844 = vmatmul.mubr.bf16.gmra.mxu0 %v6668
      %v6845 = vpop.f32.mrf.mxu0
      %v6846 = vadd.f32 0.0, %v6845
      %v6847 = vpop.f32.mrf.mxu0
      %v6848 = vpop.f32.mrf.mxu0
      %v6849 = vadd.f32 0.0, %v6848
      %v6850 = vpop.f32.mrf.mxu0
      %6851 = vmatprep.mubr.bf16.mxu0 0
      %6852 = vmatmul.mubr.bf16.gmra.mxu0 %v6669
      %v6853 = vpop.f32.mrf.mxu0
      %v6854 = vadd.f32 0.0, %v6853
      %v6855 = vpop.f32.mrf.mxu0
      %v6856 = vpop.f32.mrf.mxu0
      %v6857 = vadd.f32 0.0, %v6856
      %v6858 = vpop.f32.mrf.mxu0
      %6859 = vmatprep.mubr.bf16.mxu0 0
      %6860 = vmatmul.mubr.bf16.gmra.mxu0 %v6670
      %v6861 = vpop.f32.mrf.mxu0
      %v6862 = vadd.f32 0.0, %v6861
      %v6863 = vpop.f32.mrf.mxu0
      %v6864 = vpop.f32.mrf.mxu0
      %v6865 = vadd.f32 0.0, %v6864
      %v6866 = vpop.f32.mrf.mxu0
      %6867 = vmatprep.mubr.bf16.mxu0 0
      %6868 = vmatmul.mubr.bf16.gmra.mxu0 %v6671
      %v6869 = vpop.f32.mrf.mxu0
      %v6870 = vadd.f32 0.0, %v6869
      %v6871 = vpop.f32.mrf.mxu0
      %v6872 = vpop.f32.mrf.mxu0
      %v6873 = vadd.f32 0.0, %v6872
      %v6874 = vpop.f32.mrf.mxu0
      %6875 = vmatprep.mubr.bf16.mxu0 0
      %6876 = vmatmul.mubr.bf16.gmra.mxu0 %v6672
      %v6877 = vpop.f32.mrf.mxu0
      %v6878 = vadd.f32 0.0, %v6877
      %v6879 = vpop.f32.mrf.mxu0
      %v6880 = vpop.f32.mrf.mxu0
      %v6881 = vadd.f32 0.0, %v6880
      %v6882 = vpop.f32.mrf.mxu0
      %6883 = vmatprep.mubr.bf16.mxu0 0
      %6884 = vmatmul.mubr.bf16.gmra.mxu0 %v6673
      %v6885 = vpop.f32.mrf.mxu0
      %v6886 = vadd.f32 0.0, %v6885
      %v6887 = vpop.f32.mrf.mxu0
      %v6888 = vpop.f32.mrf.mxu0
      %v6889 = vadd.f32 0.0, %v6888
      %v6890 = vpop.f32.mrf.mxu0
      %6891 = vmatprep.mubr.bf16.mxu0 0
      %6892 = vmatmul.mubr.bf16.gmra.mxu0 %v6674
      %v6893 = vpop.f32.mrf.mxu0
      %v6894 = vadd.f32 0.0, %v6893
      %v6895 = vpop.f32.mrf.mxu0
      %v6896 = vpop.f32.mrf.mxu0
      %v6897 = vadd.f32 0.0, %v6896
      %v6898 = vpop.f32.mrf.mxu0
      %6899 = vdwg.mxu0
      %v6900 = vadd.f32 %v6140, %v6774
      %v6901 = vadd.f32 %v6141, %v6777
      %v6902 = vadd.f32 %v6142, %v6782
      %v6903 = vadd.f32 %v6143, %v6785
      %v6904 = vadd.f32 %v6144, %v6790
      %v6905 = vadd.f32 %v6145, %v6793
      %v6906 = vadd.f32 %v6146, %v6798
      %v6907 = vadd.f32 %v6147, %v6801
      %v6908 = vadd.f32 %v6148, %v6806
      %v6909 = vadd.f32 %v6149, %v6809
      %v6910 = vadd.f32 %v6150, %v6814
      %v6911 = vadd.f32 %v6151, %v6817
      %v6912 = vadd.f32 %v6152, %v6822
      %v6913 = vadd.f32 %v6153, %v6825
      %v6914 = vadd.f32 %v6154, %v6830
      %v6915 = vadd.f32 %v6155, %v6833
      %v6916 = vadd.f32 %v6156, %v6838
      %v6917 = vadd.f32 %v6157, %v6841
      %v6918 = vadd.f32 %v6158, %v6846
      %v6919 = vadd.f32 %v6159, %v6849
      %v6920 = vadd.f32 %v6160, %v6854
      %v6921 = vadd.f32 %v6161, %v6857
      %v6922 = vadd.f32 %v6162, %v6862
      %v6923 = vadd.f32 %v6163, %v6865
      %v6924 = vadd.f32 %v6164, %v6870
      %v6925 = vadd.f32 %v6165, %v6873
      %v6926 = vadd.f32 %v6166, %v6878
      %v6927 = vadd.f32 %v6167, %v6881
      %v6928 = vadd.f32 %v6168, %v6886
      %v6929 = vadd.f32 %v6169, %v6889
      %v6930 = vadd.f32 %v6170, %v6894
      %v6931 = vadd.f32 %v6171, %v6897
      %v6933 = vshrl.u32 %v6220, 16
      %v6935 = vrot.slane %v6933, 4
      %v6936 = vshll.u32 %v6220, 16
      %v6938 = vrot.slane %v6936, 5
      %v6939 = vor.u32 %v6935, %v6938
      %v6940 = vrot.slane %v6939, 4
      %v6942 = vshll.u32 %v6221, 16
      %v6944 = vrot.slane %v6942, 5
      %v6945 = vsel %vm1954, %v6940, %v6944
      %v6946 = vshrl.u32 %v6221, 16
      %v6948 = vrot.slane %v6946, 4
      %v6949 = vor.u32 %v6948, %v6944
      %v6950 = vrot.slane %v6949, 4
      %v6952 = vshll.u32 %v6222, 16
      %v6954 = vrot.slane %v6952, 5
      %v6955 = vsel %vm1954, %v6950, %v6954
      %s6956 = scalar_lea.vmem %s2, 256
      %v6957 = vld [vmem:[%s6956] sm:$0xf]
      %v6958 = vld [vmem:[%s6956 + $0x4] sm:$0xf]
      %v6959 = vld [vmem:[%s6956 + $0x8] sm:$0xf]
      %v6960 = vld [vmem:[%s6956 + $0xc] sm:$0xf]
      %v6961 = vld [vmem:[%s6956 + $0x10] sm:$0xf]
      %v6962 = vld [vmem:[%s6956 + $0x14] sm:$0xf]
      %v6963 = vld [vmem:[%s6956 + $0x18] sm:$0xf]
      %v6964 = vld [vmem:[%s6956 + $0x1c] sm:$0xf]
      %v6965 = vld [vmem:[%s6956 + $0x20] sm:$0xf]
      %v6966 = vld [vmem:[%s6956 + $0x24] sm:$0xf]
      %v6967 = vld [vmem:[%s6956 + $0x28] sm:$0xf]
      %v6968 = vld [vmem:[%s6956 + $0x2c] sm:$0xf]
      %v6969 = vld [vmem:[%s6956 + $0x30] sm:$0xf]
      %v6970 = vld [vmem:[%s6956 + $0x34] sm:$0xf]
      %v6971 = vld [vmem:[%s6956 + $0x38] sm:$0xf]
      %v6972 = vld [vmem:[%s6956 + $0x3c] sm:$0xf]
      %v6973 = vunpack.c.l.b16 %v6945
      %v6974 = vunpack.c.l.b16 %v6955
      %v6975 = vpack.c.b16 %v6974, %v6973
      %v6993 = vunpack.c.l.b16 %v6957
      %v6994 = vunpack.c.l.b16 %v6958
      %v6995 = vunpack.c.l.b16 %v6959
      %v6996 = vunpack.c.l.b16 %v6960
      %v6997 = vunpack.c.l.b16 %v6961
      %v6998 = vunpack.c.l.b16 %v6962
      %v6999 = vunpack.c.l.b16 %v6963
      %v7000 = vunpack.c.l.b16 %v6964
      %v7001 = vunpack.c.l.b16 %v6965
      %v7002 = vunpack.c.l.b16 %v6966
      %v7003 = vunpack.c.l.b16 %v6967
      %v7004 = vunpack.c.l.b16 %v6968
      %v7005 = vunpack.c.l.b16 %v6969
      %v7006 = vunpack.c.l.b16 %v6970
      %v7007 = vunpack.c.l.b16 %v6971
      %v7008 = vunpack.c.l.b16 %v6972
      %v7009 = vpack.c.b16 %v6994, %v6993
      %v7010 = vpack.c.b16 %v6996, %v6995
      %v7011 = vpack.c.b16 %v6998, %v6997
      %v7012 = vpack.c.b16 %v7000, %v6999
      %v7013 = vpack.c.b16 %v7002, %v7001
      %v7014 = vpack.c.b16 %v7004, %v7003
      %v7015 = vpack.c.b16 %v7006, %v7005
      %v7016 = vpack.c.b16 %v7008, %v7007
      %7025 = vmatprep.subr.bf16.mxu0 0
      %7026 = vmatpush1.bf16.msra.mxu0 %v7016
      %7027 = vmatprep.subr.bf16.mxu0 0
      %7028 = vmatpush1.bf16.msra.mxu0 %v7015
      %7029 = vmatprep.subr.bf16.mxu0 0
      %7030 = vmatpush1.bf16.msra.mxu0 %v7014
      %7031 = vmatprep.subr.bf16.mxu0 0
      %7032 = vmatpush1.bf16.msra.mxu0 %v7013
      %7033 = vmatprep.subr.bf16.mxu0 0
      %7034 = vmatpush1.bf16.msra.mxu0 %v7012
      %7035 = vmatprep.subr.bf16.mxu0 0
      %7036 = vmatpush1.bf16.msra.mxu0 %v7011
      %7037 = vmatprep.subr.bf16.mxu0 0
      %7038 = vmatpush1.bf16.msra.mxu0 %v7010
      %7039 = vmatprep.subr.bf16.mxu0 0
      %7040 = vmatpush1.bf16.msra.mxu0 %v7009
      %7041 = vmatprep.subr.bf16.mxu0 0
      %7042 = vmatpush2.bf16.msra.mxu0 0
      %7043 = vmatprep.subr.bf16.mxu0 0
      %7044 = vmatpush2.bf16.msra.mxu0 0
      %7045 = vmatprep.subr.bf16.mxu0 0
      %7046 = vmatpush2.bf16.msra.mxu0 0
      %7047 = vmatprep.subr.bf16.mxu0 0
      %7048 = vmatpush2.bf16.msra.mxu0 0
      %7049 = vmatprep.subr.bf16.mxu0 0
      %7050 = vmatpush2.bf16.msra.mxu0 0
      %7051 = vmatprep.subr.bf16.mxu0 0
      %7052 = vmatpush2.bf16.msra.mxu0 0
      %7053 = vmatprep.subr.bf16.mxu0 0
      %7054 = vmatpush2.bf16.msra.mxu0 0
      %7055 = vmatprep.subr.bf16.mxu0 0
      %7056 = vmatpush2.bf16.msra.mxu0 0
      %7057 = vmatprep.mubr.bf16.mxu0 0
      %7058 = vmatmul.mubr.bf16.gmra.mxu0 %v6660
      %v7059 = vpop.f32.mrf.mxu0
      %v7060 = vadd.f32 0.0, %v7059
      %v7061 = vpop.f32.mrf.mxu0
      %v7062 = vpop.f32.mrf.mxu0
      %v7063 = vadd.f32 0.0, %v7062
      %v7064 = vpop.f32.mrf.mxu0
      %7065 = vmatprep.mubr.bf16.mxu0 0
      %7066 = vmatmul.mubr.bf16.gmra.mxu0 %v6661
      %v7067 = vpop.f32.mrf.mxu0
      %v7068 = vadd.f32 0.0, %v7067
      %v7069 = vpop.f32.mrf.mxu0
      %v7070 = vpop.f32.mrf.mxu0
      %v7071 = vadd.f32 0.0, %v7070
      %v7072 = vpop.f32.mrf.mxu0
      %7073 = vmatprep.mubr.bf16.mxu0 0
      %7074 = vmatmul.mubr.bf16.gmra.mxu0 %v6662
      %v7075 = vpop.f32.mrf.mxu0
      %v7076 = vadd.f32 0.0, %v7075
      %v7077 = vpop.f32.mrf.mxu0
      %v7078 = vpop.f32.mrf.mxu0
      %v7079 = vadd.f32 0.0, %v7078
      %v7080 = vpop.f32.mrf.mxu0
      %7081 = vmatprep.mubr.bf16.mxu0 0
      %7082 = vmatmul.mubr.bf16.gmra.mxu0 %v6663
      %v7083 = vpop.f32.mrf.mxu0
      %v7084 = vadd.f32 0.0, %v7083
      %v7085 = vpop.f32.mrf.mxu0
      %v7086 = vpop.f32.mrf.mxu0
      %v7087 = vadd.f32 0.0, %v7086
      %v7088 = vpop.f32.mrf.mxu0
      %7089 = vmatprep.mubr.bf16.mxu0 0
      %7090 = vmatmul.mubr.bf16.gmra.mxu0 %v6664
      %v7091 = vpop.f32.mrf.mxu0
      %v7092 = vadd.f32 0.0, %v7091
      %v7093 = vpop.f32.mrf.mxu0
      %v7094 = vpop.f32.mrf.mxu0
      %v7095 = vadd.f32 0.0, %v7094
      %v7096 = vpop.f32.mrf.mxu0
      %7097 = vmatprep.mubr.bf16.mxu0 0
      %7098 = vmatmul.mubr.bf16.gmra.mxu0 %v6665
      %v7099 = vpop.f32.mrf.mxu0
      %v7100 = vadd.f32 0.0, %v7099
      %v7101 = vpop.f32.mrf.mxu0
      %v7102 = vpop.f32.mrf.mxu0
      %v7103 = vadd.f32 0.0, %v7102
      %v7104 = vpop.f32.mrf.mxu0
      %7105 = vmatprep.mubr.bf16.mxu0 0
      %7106 = vmatmul.mubr.bf16.gmra.mxu0 %v6666
      %v7107 = vpop.f32.mrf.mxu0
      %v7108 = vadd.f32 0.0, %v7107
      %v7109 = vpop.f32.mrf.mxu0
      %v7110 = vpop.f32.mrf.mxu0
      %v7111 = vadd.f32 0.0, %v7110
      %v7112 = vpop.f32.mrf.mxu0
      %7113 = vmatprep.mubr.bf16.mxu0 0
      %7114 = vmatmul.mubr.bf16.gmra.mxu0 %v6667
      %v7115 = vpop.f32.mrf.mxu0
      %v7116 = vadd.f32 0.0, %v7115
      %v7117 = vpop.f32.mrf.mxu0
      %v7118 = vpop.f32.mrf.mxu0
      %v7119 = vadd.f32 0.0, %v7118
      %v7120 = vpop.f32.mrf.mxu0
      %7121 = vmatprep.mubr.bf16.mxu0 0
      %7122 = vmatmul.mubr.bf16.gmra.mxu0 %v6668
      %v7123 = vpop.f32.mrf.mxu0
      %v7124 = vadd.f32 0.0, %v7123
      %v7125 = vpop.f32.mrf.mxu0
      %v7126 = vpop.f32.mrf.mxu0
      %v7127 = vadd.f32 0.0, %v7126
      %v7128 = vpop.f32.mrf.mxu0
      %7129 = vmatprep.mubr.bf16.mxu0 0
      %7130 = vmatmul.mubr.bf16.gmra.mxu0 %v6669
      %v7131 = vpop.f32.mrf.mxu0
      %v7132 = vadd.f32 0.0, %v7131
      %v7133 = vpop.f32.mrf.mxu0
      %v7134 = vpop.f32.mrf.mxu0
      %v7135 = vadd.f32 0.0, %v7134
      %v7136 = vpop.f32.mrf.mxu0
      %7137 = vmatprep.mubr.bf16.mxu0 0
      %7138 = vmatmul.mubr.bf16.gmra.mxu0 %v6670
      %v7139 = vpop.f32.mrf.mxu0
      %v7140 = vadd.f32 0.0, %v7139
      %v7141 = vpop.f32.mrf.mxu0
      %v7142 = vpop.f32.mrf.mxu0
      %v7143 = vadd.f32 0.0, %v7142
      %v7144 = vpop.f32.mrf.mxu0
      %7145 = vmatprep.mubr.bf16.mxu0 0
      %7146 = vmatmul.mubr.bf16.gmra.mxu0 %v6671
      %v7147 = vpop.f32.mrf.mxu0
      %v7148 = vadd.f32 0.0, %v7147
      %v7149 = vpop.f32.mrf.mxu0
      %v7150 = vpop.f32.mrf.mxu0
      %v7151 = vadd.f32 0.0, %v7150
      %v7152 = vpop.f32.mrf.mxu0
      %7153 = vmatprep.mubr.bf16.mxu0 0
      %7154 = vmatmul.mubr.bf16.gmra.mxu0 %v6672
      %v7155 = vpop.f32.mrf.mxu0
      %v7156 = vadd.f32 0.0, %v7155
      %v7157 = vpop.f32.mrf.mxu0
      %v7158 = vpop.f32.mrf.mxu0
      %v7159 = vadd.f32 0.0, %v7158
      %v7160 = vpop.f32.mrf.mxu0
      %7161 = vmatprep.mubr.bf16.mxu0 0
      %7162 = vmatmul.mubr.bf16.gmra.mxu0 %v6673
      %v7163 = vpop.f32.mrf.mxu0
      %v7164 = vadd.f32 0.0, %v7163
      %v7165 = vpop.f32.mrf.mxu0
      %v7166 = vpop.f32.mrf.mxu0
      %v7167 = vadd.f32 0.0, %v7166
      %v7168 = vpop.f32.mrf.mxu0
      %7169 = vmatprep.mubr.bf16.mxu0 0
      %7170 = vmatmul.mubr.bf16.gmra.mxu0 %v6674
      %v7171 = vpop.f32.mrf.mxu0
      %v7172 = vadd.f32 0.0, %v7171
      %v7173 = vpop.f32.mrf.mxu0
      %v7174 = vpop.f32.mrf.mxu0
      %v7175 = vadd.f32 0.0, %v7174
      %v7176 = vpop.f32.mrf.mxu0
      %7177 = vmatprep.mubr.bf16.mxu0 0
      %7178 = vmatmul.mubr.bf16.gmra.mxu0 %v6975
      %v7179 = vpop.f32.mrf.mxu0
      %v7180 = vadd.f32 0.0, %v7179
      %v7181 = vpop.f32.mrf.mxu0
      %v7182 = vpop.f32.mrf.mxu0
      %v7183 = vadd.f32 0.0, %v7182
      %v7184 = vpop.f32.mrf.mxu0
      %7185 = vdwg.mxu0
      %v7186 = vadd.f32 %v6900, %v7060
      %v7187 = vadd.f32 %v6901, %v7063
      %v7188 = vadd.f32 %v6902, %v7068
      %v7189 = vadd.f32 %v6903, %v7071
      %v7190 = vadd.f32 %v6904, %v7076
      %v7191 = vadd.f32 %v6905, %v7079
      %v7192 = vadd.f32 %v6906, %v7084
      %v7193 = vadd.f32 %v6907, %v7087
      %v7194 = vadd.f32 %v6908, %v7092
      %v7195 = vadd.f32 %v6909, %v7095
      %v7196 = vadd.f32 %v6910, %v7100
      %v7197 = vadd.f32 %v6911, %v7103
      %v7198 = vadd.f32 %v6912, %v7108
      %v7199 = vadd.f32 %v6913, %v7111
      %v7200 = vadd.f32 %v6914, %v7116
      %v7201 = vadd.f32 %v6915, %v7119
      %v7202 = vadd.f32 %v6916, %v7124
      %v7203 = vadd.f32 %v6917, %v7127
      %v7204 = vadd.f32 %v6918, %v7132
      %v7205 = vadd.f32 %v6919, %v7135
      %v7206 = vadd.f32 %v6920, %v7140
      %v7207 = vadd.f32 %v6921, %v7143
      %v7208 = vadd.f32 %v6922, %v7148
      %v7209 = vadd.f32 %v6923, %v7151
      %v7210 = vadd.f32 %v6924, %v7156
      %v7211 = vadd.f32 %v6925, %v7159
      %v7212 = vadd.f32 %v6926, %v7164
      %v7213 = vadd.f32 %v6927, %v7167
      %v7214 = vadd.f32 %v6928, %v7172
      %v7215 = vadd.f32 %v6929, %v7175
      %v7216 = vadd.f32 %v6930, %v7180
      %v7217 = vadd.f32 %v6931, %v7183
      %v7219 = vshrl.u32 %v6223, 16
      %v7221 = vrot.slane %v7219, 4
      %v7222 = vshll.u32 %v6223, 16
      %v7224 = vrot.slane %v7222, 5
      %v7225 = vor.u32 %v7221, %v7224
      %v7226 = vrot.slane %v7225, 4
      %v7228 = vshll.u32 %v6224, 16
      %v7230 = vrot.slane %v7228, 5
      %v7231 = vsel %vm1954, %v7226, %v7230
      %v7232 = vshrl.u32 %v6224, 16
      %v7234 = vrot.slane %v7232, 4
      %v7235 = vor.u32 %v7234, %v7230
      %v7236 = vrot.slane %v7235, 4
      %v7238 = vshll.u32 %v6225, 16
      %v7240 = vrot.slane %v7238, 5
      %v7241 = vsel %vm1954, %v7236, %v7240
      %s7242 = scalar_lea.vmem %s2, 448
      %v7243 = vld [vmem:[%s7242] sm:$0xf]
      %v7244 = vld [vmem:[%s7242 + $0x4] sm:$0xf]
      %v7245 = vld [vmem:[%s7242 + $0x8] sm:$0xf]
      %v7246 = vld [vmem:[%s7242 + $0xc] sm:$0xf]
      %v7247 = vld [vmem:[%s7242 + $0x10] sm:$0xf]
      %v7248 = vld [vmem:[%s7242 + $0x14] sm:$0xf]
      %v7249 = vld [vmem:[%s7242 + $0x18] sm:$0xf]
      %v7250 = vld [vmem:[%s7242 + $0x1c] sm:$0xf]
      %v7251 = vld [vmem:[%s7242 + $0x20] sm:$0xf]
      %v7252 = vld [vmem:[%s7242 + $0x24] sm:$0xf]
      %v7253 = vld [vmem:[%s7242 + $0x28] sm:$0xf]
      %v7254 = vld [vmem:[%s7242 + $0x2c] sm:$0xf]
      %v7255 = vld [vmem:[%s7242 + $0x30] sm:$0xf]
      %v7256 = vld [vmem:[%s7242 + $0x34] sm:$0xf]
      %v7257 = vld [vmem:[%s7242 + $0x38] sm:$0xf]
      %v7258 = vld [vmem:[%s7242 + $0x3c] sm:$0xf]
      %v7259 = vunpack.c.l.b16 %v7231
      %v7260 = vunpack.c.l.b16 %v7241
      %v7261 = vpack.c.b16 %v7260, %v7259
      %v7279 = vunpack.c.l.b16 %v7243
      %v7280 = vunpack.c.l.b16 %v7244
      %v7281 = vunpack.c.l.b16 %v7245
      %v7282 = vunpack.c.l.b16 %v7246
      %v7283 = vunpack.c.l.b16 %v7247
      %v7284 = vunpack.c.l.b16 %v7248
      %v7285 = vunpack.c.l.b16 %v7249
      %v7286 = vunpack.c.l.b16 %v7250
      %v7287 = vunpack.c.l.b16 %v7251
      %v7288 = vunpack.c.l.b16 %v7252
      %v7289 = vunpack.c.l.b16 %v7253
      %v7290 = vunpack.c.l.b16 %v7254
      %v7291 = vunpack.c.l.b16 %v7255
      %v7292 = vunpack.c.l.b16 %v7256
      %v7293 = vunpack.c.l.b16 %v7257
      %v7294 = vunpack.c.l.b16 %v7258
      %v7295 = vpack.c.b16 %v7280, %v7279
      %v7296 = vpack.c.b16 %v7282, %v7281
      %v7297 = vpack.c.b16 %v7284, %v7283
      %v7298 = vpack.c.b16 %v7286, %v7285
      %v7299 = vpack.c.b16 %v7288, %v7287
      %v7300 = vpack.c.b16 %v7290, %v7289
      %v7301 = vpack.c.b16 %v7292, %v7291
      %v7302 = vpack.c.b16 %v7294, %v7293
      %7311 = vmatprep.subr.bf16.mxu0 0
      %7312 = vmatpush1.bf16.msra.mxu0 %v7302
      %7313 = vmatprep.subr.bf16.mxu0 0
      %7314 = vmatpush1.bf16.msra.mxu0 %v7301
      %7315 = vmatprep.subr.bf16.mxu0 0
      %7316 = vmatpush1.bf16.msra.mxu0 %v7300
      %7317 = vmatprep.subr.bf16.mxu0 0
      %7318 = vmatpush1.bf16.msra.mxu0 %v7299
      %7319 = vmatprep.subr.bf16.mxu0 0
      %7320 = vmatpush1.bf16.msra.mxu0 %v7298
      %7321 = vmatprep.subr.bf16.mxu0 0
      %7322 = vmatpush1.bf16.msra.mxu0 %v7297
      %7323 = vmatprep.subr.bf16.mxu0 0
      %7324 = vmatpush1.bf16.msra.mxu0 %v7296
      %7325 = vmatprep.subr.bf16.mxu0 0
      %7326 = vmatpush1.bf16.msra.mxu0 %v7295
      %7327 = vmatprep.subr.bf16.mxu0 0
      %7328 = vmatpush2.bf16.msra.mxu0 0
      %7329 = vmatprep.subr.bf16.mxu0 0
      %7330 = vmatpush2.bf16.msra.mxu0 0
      %7331 = vmatprep.subr.bf16.mxu0 0
      %7332 = vmatpush2.bf16.msra.mxu0 0
      %7333 = vmatprep.subr.bf16.mxu0 0
      %7334 = vmatpush2.bf16.msra.mxu0 0
      %7335 = vmatprep.subr.bf16.mxu0 0
      %7336 = vmatpush2.bf16.msra.mxu0 0
      %7337 = vmatprep.subr.bf16.mxu0 0
      %7338 = vmatpush2.bf16.msra.mxu0 0
      %7339 = vmatprep.subr.bf16.mxu0 0
      %7340 = vmatpush2.bf16.msra.mxu0 0
      %7341 = vmatprep.subr.bf16.mxu0 0
      %7342 = vmatpush2.bf16.msra.mxu0 0
      %7343 = vmatprep.mubr.bf16.mxu0 0
      %7344 = vmatmul.mubr.bf16.gmra.mxu0 %v6661
      %v7345 = vpop.f32.mrf.mxu0
      %v7346 = vadd.f32 0.0, %v7345
      %v7347 = vpop.f32.mrf.mxu0
      %v7348 = vpop.f32.mrf.mxu0
      %v7349 = vadd.f32 0.0, %v7348
      %v7350 = vpop.f32.mrf.mxu0
      %7351 = vmatprep.mubr.bf16.mxu0 0
      %7352 = vmatmul.mubr.bf16.gmra.mxu0 %v6662
      %v7353 = vpop.f32.mrf.mxu0
      %v7354 = vadd.f32 0.0, %v7353
      %v7355 = vpop.f32.mrf.mxu0
      %v7356 = vpop.f32.mrf.mxu0
      %v7357 = vadd.f32 0.0, %v7356
      %v7358 = vpop.f32.mrf.mxu0
      %7359 = vmatprep.mubr.bf16.mxu0 0
      %7360 = vmatmul.mubr.bf16.gmra.mxu0 %v6663
      %v7361 = vpop.f32.mrf.mxu0
      %v7362 = vadd.f32 0.0, %v7361
      %v7363 = vpop.f32.mrf.mxu0
      %v7364 = vpop.f32.mrf.mxu0
      %v7365 = vadd.f32 0.0, %v7364
      %v7366 = vpop.f32.mrf.mxu0
      %7367 = vmatprep.mubr.bf16.mxu0 0
      %7368 = vmatmul.mubr.bf16.gmra.mxu0 %v6664
      %v7369 = vpop.f32.mrf.mxu0
      %v7370 = vadd.f32 0.0, %v7369
      %v7371 = vpop.f32.mrf.mxu0
      %v7372 = vpop.f32.mrf.mxu0
      %v7373 = vadd.f32 0.0, %v7372
      %v7374 = vpop.f32.mrf.mxu0
      %7375 = vmatprep.mubr.bf16.mxu0 0
      %7376 = vmatmul.mubr.bf16.gmra.mxu0 %v6665
      %v7377 = vpop.f32.mrf.mxu0
      %v7378 = vadd.f32 0.0, %v7377
      %v7379 = vpop.f32.mrf.mxu0
      %v7380 = vpop.f32.mrf.mxu0
      %v7381 = vadd.f32 0.0, %v7380
      %v7382 = vpop.f32.mrf.mxu0
      %7383 = vmatprep.mubr.bf16.mxu0 0
      %7384 = vmatmul.mubr.bf16.gmra.mxu0 %v6666
      %v7385 = vpop.f32.mrf.mxu0
      %v7386 = vadd.f32 0.0, %v7385
      %v7387 = vpop.f32.mrf.mxu0
      %v7388 = vpop.f32.mrf.mxu0
      %v7389 = vadd.f32 0.0, %v7388
      %v7390 = vpop.f32.mrf.mxu0
      %7391 = vmatprep.mubr.bf16.mxu0 0
      %7392 = vmatmul.mubr.bf16.gmra.mxu0 %v6667
      %v7393 = vpop.f32.mrf.mxu0
      %v7394 = vadd.f32 0.0, %v7393
      %v7395 = vpop.f32.mrf.mxu0
      %v7396 = vpop.f32.mrf.mxu0
      %v7397 = vadd.f32 0.0, %v7396
      %v7398 = vpop.f32.mrf.mxu0
      %7399 = vmatprep.mubr.bf16.mxu0 0
      %7400 = vmatmul.mubr.bf16.gmra.mxu0 %v6668
      %v7401 = vpop.f32.mrf.mxu0
      %v7402 = vadd.f32 0.0, %v7401
      %v7403 = vpop.f32.mrf.mxu0
      %v7404 = vpop.f32.mrf.mxu0
      %v7405 = vadd.f32 0.0, %v7404
      %v7406 = vpop.f32.mrf.mxu0
      %7407 = vmatprep.mubr.bf16.mxu0 0
      %7408 = vmatmul.mubr.bf16.gmra.mxu0 %v6669
      %v7409 = vpop.f32.mrf.mxu0
      %v7410 = vadd.f32 0.0, %v7409
      %v7411 = vpop.f32.mrf.mxu0
      %v7412 = vpop.f32.mrf.mxu0
      %v7413 = vadd.f32 0.0, %v7412
      %v7414 = vpop.f32.mrf.mxu0
      %7415 = vmatprep.mubr.bf16.mxu0 0
      %7416 = vmatmul.mubr.bf16.gmra.mxu0 %v6670
      %v7417 = vpop.f32.mrf.mxu0
      %v7418 = vadd.f32 0.0, %v7417
      %v7419 = vpop.f32.mrf.mxu0
      %v7420 = vpop.f32.mrf.mxu0
      %v7421 = vadd.f32 0.0, %v7420
      %v7422 = vpop.f32.mrf.mxu0
      %7423 = vmatprep.mubr.bf16.mxu0 0
      %7424 = vmatmul.mubr.bf16.gmra.mxu0 %v6671
      %v7425 = vpop.f32.mrf.mxu0
      %v7426 = vadd.f32 0.0, %v7425
      %v7427 = vpop.f32.mrf.mxu0
      %v7428 = vpop.f32.mrf.mxu0
      %v7429 = vadd.f32 0.0, %v7428
      %v7430 = vpop.f32.mrf.mxu0
      %7431 = vmatprep.mubr.bf16.mxu0 0
      %7432 = vmatmul.mubr.bf16.gmra.mxu0 %v6672
      %v7433 = vpop.f32.mrf.mxu0
      %v7434 = vadd.f32 0.0, %v7433
      %v7435 = vpop.f32.mrf.mxu0
      %v7436 = vpop.f32.mrf.mxu0
      %v7437 = vadd.f32 0.0, %v7436
      %v7438 = vpop.f32.mrf.mxu0
      %7439 = vmatprep.mubr.bf16.mxu0 0
      %7440 = vmatmul.mubr.bf16.gmra.mxu0 %v6673
      %v7441 = vpop.f32.mrf.mxu0
      %v7442 = vadd.f32 0.0, %v7441
      %v7443 = vpop.f32.mrf.mxu0
      %v7444 = vpop.f32.mrf.mxu0
      %v7445 = vadd.f32 0.0, %v7444
      %v7446 = vpop.f32.mrf.mxu0
      %7447 = vmatprep.mubr.bf16.mxu0 0
      %7448 = vmatmul.mubr.bf16.gmra.mxu0 %v6674
      %v7449 = vpop.f32.mrf.mxu0
      %v7450 = vadd.f32 0.0, %v7449
      %v7451 = vpop.f32.mrf.mxu0
      %v7452 = vpop.f32.mrf.mxu0
      %v7453 = vadd.f32 0.0, %v7452
      %v7454 = vpop.f32.mrf.mxu0
      %7455 = vmatprep.mubr.bf16.mxu0 0
      %7456 = vmatmul.mubr.bf16.gmra.mxu0 %v6975
      %v7457 = vpop.f32.mrf.mxu0
      %v7458 = vadd.f32 0.0, %v7457
      %v7459 = vpop.f32.mrf.mxu0
      %v7460 = vpop.f32.mrf.mxu0
      %v7461 = vadd.f32 0.0, %v7460
      %v7462 = vpop.f32.mrf.mxu0
      %7463 = vmatprep.mubr.bf16.mxu0 0
      %7464 = vmatmul.mubr.bf16.gmra.mxu0 %v7261
      %v7465 = vpop.f32.mrf.mxu0
      %v7466 = vadd.f32 0.0, %v7465
      %v7467 = vpop.f32.mrf.mxu0
      %v7468 = vpop.f32.mrf.mxu0
      %v7469 = vadd.f32 0.0, %v7468
      %v7470 = vpop.f32.mrf.mxu0
      %7471 = vdwg.mxu0
      %v7472 = vadd.f32 %v7186, %v7346
      %v7473 = vadd.f32 %v7187, %v7349
      %v7474 = vadd.f32 %v7188, %v7354
      %v7475 = vadd.f32 %v7189, %v7357
      %v7476 = vadd.f32 %v7190, %v7362
      %v7477 = vadd.f32 %v7191, %v7365
      %v7478 = vadd.f32 %v7192, %v7370
      %v7479 = vadd.f32 %v7193, %v7373
      %v7480 = vadd.f32 %v7194, %v7378
      %v7481 = vadd.f32 %v7195, %v7381
      %v7482 = vadd.f32 %v7196, %v7386
      %v7483 = vadd.f32 %v7197, %v7389
      %v7484 = vadd.f32 %v7198, %v7394
      %v7485 = vadd.f32 %v7199, %v7397
      %v7486 = vadd.f32 %v7200, %v7402
      %v7487 = vadd.f32 %v7201, %v7405
      %v7488 = vadd.f32 %v7202, %v7410
      %v7489 = vadd.f32 %v7203, %v7413
      %v7490 = vadd.f32 %v7204, %v7418
      %v7491 = vadd.f32 %v7205, %v7421
      %v7492 = vadd.f32 %v7206, %v7426
      %v7493 = vadd.f32 %v7207, %v7429
      %v7494 = vadd.f32 %v7208, %v7434
      %v7495 = vadd.f32 %v7209, %v7437
      %v7496 = vadd.f32 %v7210, %v7442
      %v7497 = vadd.f32 %v7211, %v7445
      %v7498 = vadd.f32 %v7212, %v7450
      %v7499 = vadd.f32 %v7213, %v7453
      %v7500 = vadd.f32 %v7214, %v7458
      %v7501 = vadd.f32 %v7215, %v7461
      %v7502 = vadd.f32 %v7216, %v7466
      %v7503 = vadd.f32 %v7217, %v7469
      %v7504 = vld [vmem:[#allocation2] sm:$0xe]
      %v7505 = vld [vmem:[#allocation2 + $0xc] sm:$0xe]
      %v7506 = vld [vmem:[#allocation2 + $0x18] sm:$0xe]
      %v7507 = vld [vmem:[#allocation2 + $0x24] sm:$0xe]
      %v7508 = vld [vmem:[#allocation2 + $0x30] sm:$0xe]
      %v7509 = vld [vmem:[#allocation2 + $0x3c] sm:$0xe]
      %v7510 = vld [vmem:[#allocation2 + $0x48] sm:$0xe]
      %v7511 = vld [vmem:[#allocation2 + $0x54] sm:$0xe]
      %v7512 = vld [vmem:[#allocation2 + $0x60] sm:$0xe]
      %v7513 = vld [vmem:[#allocation2 + $0x6c] sm:$0xe]
      %v7514 = vld [vmem:[#allocation2 + $0x78] sm:$0xe]
      %v7515 = vld [vmem:[#allocation2 + $0x84] sm:$0xe]
      %v7516 = vld [vmem:[#allocation2 + $0x90] sm:$0xe]
      %v7517 = vld [vmem:[#allocation2 + $0x9c] sm:$0xe]
      %v7518 = vld [vmem:[#allocation2 + $0xa8] sm:$0xe]
      %v7519 = vld [vmem:[#allocation2 + $0xb4] sm:$0xe]
      %v7520 = vld [vmem:[#allocation2 + $0xc0] sm:$0xe]
      %v7521 = vld [vmem:[#allocation2 + $0xcc] sm:$0xe]
      %v7570 = vrot.slane %v7504, 5
      %v7571 = vrot.slane %v7570, 4
      %v7572 = vrot.slane %v6173, 5
      %v7573 = vsel %vm3301, %v7571, %v7572
      %v7574 = vrot.slane %v7572, 4
      %v7575 = vrot.slane %v6174, 5
      %v7576 = vsel %vm3301, %v7574, %v7575
      %v7577 = vrot.slane %v7505, 5
      %v7578 = vrot.slane %v7577, 4
      %v7579 = vrot.slane %v6176, 5
      %v7580 = vsel %vm3301, %v7578, %v7579
      %v7581 = vrot.slane %v7579, 4
      %v7582 = vrot.slane %v6177, 5
      %v7583 = vsel %vm3301, %v7581, %v7582
      %v7584 = vrot.slane %v7506, 5
      %v7585 = vrot.slane %v7584, 4
      %v7586 = vrot.slane %v6179, 5
      %v7587 = vsel %vm3301, %v7585, %v7586
      %v7588 = vrot.slane %v7586, 4
      %v7589 = vrot.slane %v6180, 5
      %v7590 = vsel %vm3301, %v7588, %v7589
      %v7591 = vrot.slane %v7507, 5
      %v7592 = vrot.slane %v7591, 4
      %v7593 = vrot.slane %v6182, 5
      %v7594 = vsel %vm3301, %v7592, %v7593
      %v7595 = vrot.slane %v7593, 4
      %v7596 = vrot.slane %v6183, 5
      %v7597 = vsel %vm3301, %v7595, %v7596
      %v7598 = vrot.slane %v7508, 5
      %v7599 = vrot.slane %v7598, 4
      %v7600 = vrot.slane %v6185, 5
      %v7601 = vsel %vm3301, %v7599, %v7600
      %v7602 = vrot.slane %v7600, 4
      %v7603 = vrot.slane %v6186, 5
      %v7604 = vsel %vm3301, %v7602, %v7603
      %v7605 = vrot.slane %v7509, 5
      %v7606 = vrot.slane %v7605, 4
      %v7607 = vrot.slane %v6188, 5
      %v7608 = vsel %vm3301, %v7606, %v7607
      %v7609 = vrot.slane %v7607, 4
      %v7610 = vrot.slane %v6189, 5
      %v7611 = vsel %vm3301, %v7609, %v7610
      %v7612 = vrot.slane %v7510, 5
      %v7613 = vrot.slane %v7612, 4
      %v7614 = vrot.slane %v6191, 5
      %v7615 = vsel %vm3301, %v7613, %v7614
      %v7616 = vrot.slane %v7614, 4
      %v7617 = vrot.slane %v6192, 5
      %v7618 = vsel %vm3301, %v7616, %v7617
      %v7619 = vrot.slane %v7511, 5
      %v7620 = vrot.slane %v7619, 4
      %v7621 = vrot.slane %v6194, 5
      %v7622 = vsel %vm3301, %v7620, %v7621
      %v7623 = vrot.slane %v7621, 4
      %v7624 = vrot.slane %v6195, 5
      %v7625 = vsel %vm3301, %v7623, %v7624
      %v7626 = vrot.slane %v7512, 5
      %v7627 = vrot.slane %v7626, 4
      %v7628 = vrot.slane %v6197, 5
      %v7629 = vsel %vm3301, %v7627, %v7628
      %v7630 = vrot.slane %v7628, 4
      %v7631 = vrot.slane %v6198, 5
      %v7632 = vsel %vm3301, %v7630, %v7631
      %v7633 = vrot.slane %v7513, 5
      %v7634 = vrot.slane %v7633, 4
      %v7635 = vrot.slane %v6200, 5
      %v7636 = vsel %vm3301, %v7634, %v7635
      %v7637 = vrot.slane %v7635, 4
      %v7638 = vrot.slane %v6201, 5
      %v7639 = vsel %vm3301, %v7637, %v7638
      %v7640 = vrot.slane %v7514, 5
      %v7641 = vrot.slane %v7640, 4
      %v7642 = vrot.slane %v6203, 5
      %v7643 = vsel %vm3301, %v7641, %v7642
      %v7644 = vrot.slane %v7642, 4
      %v7645 = vrot.slane %v6204, 5
      %v7646 = vsel %vm3301, %v7644, %v7645
      %v7647 = vrot.slane %v7515, 5
      %v7648 = vrot.slane %v7647, 4
      %v7649 = vrot.slane %v6206, 5
      %v7650 = vsel %vm3301, %v7648, %v7649
      %v7651 = vrot.slane %v7649, 4
      %v7652 = vrot.slane %v6207, 5
      %v7653 = vsel %vm3301, %v7651, %v7652
      %v7654 = vrot.slane %v7516, 5
      %v7655 = vrot.slane %v7654, 4
      %v7656 = vrot.slane %v6209, 5
      %v7657 = vsel %vm3301, %v7655, %v7656
      %v7658 = vrot.slane %v7656, 4
      %v7659 = vrot.slane %v6210, 5
      %v7660 = vsel %vm3301, %v7658, %v7659
      %v7661 = vrot.slane %v7517, 5
      %v7662 = vrot.slane %v7661, 4
      %v7663 = vrot.slane %v6212, 5
      %v7664 = vsel %vm3301, %v7662, %v7663
      %v7665 = vrot.slane %v7663, 4
      %v7666 = vrot.slane %v6213, 5
      %v7667 = vsel %vm3301, %v7665, %v7666
      %v7668 = vrot.slane %v7518, 5
      %v7669 = vrot.slane %v7668, 4
      %v7670 = vrot.slane %v6215, 5
      %v7671 = vsel %vm3301, %v7669, %v7670
      %v7672 = vrot.slane %v7670, 4
      %v7673 = vrot.slane %v6216, 5
      %v7674 = vsel %vm3301, %v7672, %v7673
      %v7675 = vrot.slane %v7519, 5
      %v7676 = vrot.slane %v7675, 4
      %v7677 = vrot.slane %v6218, 5
      %v7678 = vsel %vm3301, %v7676, %v7677
      %v7679 = vrot.slane %v7677, 4
      %v7680 = vrot.slane %v6219, 5
      %v7681 = vsel %vm3301, %v7679, %v7680
      %s7682 = scalar_lea.vmem %s2, 128
      %v7683 = vld [vmem:[%s7682] sm:$0xf]
      %v7684 = vld [vmem:[%s7682 + $0x4] sm:$0xf]
      %v7685 = vld [vmem:[%s7682 + $0x8] sm:$0xf]
      %v7686 = vld [vmem:[%s7682 + $0xc] sm:$0xf]
      %v7687 = vld [vmem:[%s7682 + $0x10] sm:$0xf]
      %v7688 = vld [vmem:[%s7682 + $0x14] sm:$0xf]
      %v7689 = vld [vmem:[%s7682 + $0x18] sm:$0xf]
      %v7690 = vld [vmem:[%s7682 + $0x1c] sm:$0xf]
      %v7691 = vld [vmem:[%s7682 + $0x20] sm:$0xf]
      %v7692 = vld [vmem:[%s7682 + $0x24] sm:$0xf]
      %v7693 = vld [vmem:[%s7682 + $0x28] sm:$0xf]
      %v7694 = vld [vmem:[%s7682 + $0x2c] sm:$0xf]
      %v7695 = vld [vmem:[%s7682 + $0x30] sm:$0xf]
      %v7696 = vld [vmem:[%s7682 + $0x34] sm:$0xf]
      %v7697 = vld [vmem:[%s7682 + $0x38] sm:$0xf]
      %v7698 = vld [vmem:[%s7682 + $0x3c] sm:$0xf]
      %v7699 = vunpack.c.l.b16 %v7573
      %v7700 = vunpack.c.l.b16 %v7576
      %v7701 = vunpack.c.l.b16 %v7580
      %v7702 = vunpack.c.l.b16 %v7583
      %v7703 = vunpack.c.l.b16 %v7587
      %v7704 = vunpack.c.l.b16 %v7590
      %v7705 = vunpack.c.l.b16 %v7594
      %v7706 = vunpack.c.l.b16 %v7597
      %v7707 = vunpack.c.l.b16 %v7601
      %v7708 = vunpack.c.l.b16 %v7604
      %v7709 = vunpack.c.l.b16 %v7608
      %v7710 = vunpack.c.l.b16 %v7611
      %v7711 = vunpack.c.l.b16 %v7615
      %v7712 = vunpack.c.l.b16 %v7618
      %v7713 = vunpack.c.l.b16 %v7622
      %v7714 = vunpack.c.l.b16 %v7625
      %v7715 = vunpack.c.l.b16 %v7629
      %v7716 = vunpack.c.l.b16 %v7632
      %v7717 = vunpack.c.l.b16 %v7636
      %v7718 = vunpack.c.l.b16 %v7639
      %v7719 = vunpack.c.l.b16 %v7643
      %v7720 = vunpack.c.l.b16 %v7646
      %v7721 = vunpack.c.l.b16 %v7650
      %v7722 = vunpack.c.l.b16 %v7653
      %v7723 = vunpack.c.l.b16 %v7657
      %v7724 = vunpack.c.l.b16 %v7660
      %v7725 = vunpack.c.l.b16 %v7664
      %v7726 = vunpack.c.l.b16 %v7667
      %v7727 = vunpack.c.l.b16 %v7671
      %v7728 = vunpack.c.l.b16 %v7674
      %v7729 = vunpack.c.l.b16 %v7678
      %v7730 = vunpack.c.l.b16 %v7681
      %v7731 = vpack.c.b16 %v7700, %v7699
      %v7732 = vpack.c.b16 %v7702, %v7701
      %v7733 = vpack.c.b16 %v7704, %v7703
      %v7734 = vpack.c.b16 %v7706, %v7705
      %v7735 = vpack.c.b16 %v7708, %v7707
      %v7736 = vpack.c.b16 %v7710, %v7709
      %v7737 = vpack.c.b16 %v7712, %v7711
      %v7738 = vpack.c.b16 %v7714, %v7713
      %v7739 = vpack.c.b16 %v7716, %v7715
      %v7740 = vpack.c.b16 %v7718, %v7717
      %v7741 = vpack.c.b16 %v7720, %v7719
      %v7742 = vpack.c.b16 %v7722, %v7721
      %v7743 = vpack.c.b16 %v7724, %v7723
      %v7744 = vpack.c.b16 %v7726, %v7725
      %v7745 = vpack.c.b16 %v7728, %v7727
      %v7746 = vpack.c.b16 %v7730, %v7729
      %v7779 = vunpack.c.l.b16 %v7683
      %v7780 = vunpack.c.l.b16 %v7684
      %v7781 = vunpack.c.l.b16 %v7685
      %v7782 = vunpack.c.l.b16 %v7686
      %v7783 = vunpack.c.l.b16 %v7687
      %v7784 = vunpack.c.l.b16 %v7688
      %v7785 = vunpack.c.l.b16 %v7689
      %v7786 = vunpack.c.l.b16 %v7690
      %v7787 = vunpack.c.l.b16 %v7691
      %v7788 = vunpack.c.l.b16 %v7692
      %v7789 = vunpack.c.l.b16 %v7693
      %v7790 = vunpack.c.l.b16 %v7694
      %v7791 = vunpack.c.l.b16 %v7695
      %v7792 = vunpack.c.l.b16 %v7696
      %v7793 = vunpack.c.l.b16 %v7697
      %v7794 = vunpack.c.l.b16 %v7698
      %v7795 = vpack.c.b16 %v7780, %v7779
      %v7796 = vpack.c.b16 %v7782, %v7781
      %v7797 = vpack.c.b16 %v7784, %v7783
      %v7798 = vpack.c.b16 %v7786, %v7785
      %v7799 = vpack.c.b16 %v7788, %v7787
      %v7800 = vpack.c.b16 %v7790, %v7789
      %v7801 = vpack.c.b16 %v7792, %v7791
      %v7802 = vpack.c.b16 %v7794, %v7793
      %7811 = vmatprep.subr.bf16.mxu0 0
      %7812 = vmatpush1.bf16.msra.mxu0 %v7802
      %7813 = vmatprep.subr.bf16.mxu0 0
      %7814 = vmatpush1.bf16.msra.mxu0 %v7801
      %7815 = vmatprep.subr.bf16.mxu0 0
      %7816 = vmatpush1.bf16.msra.mxu0 %v7800
      %7817 = vmatprep.subr.bf16.mxu0 0
      %7818 = vmatpush1.bf16.msra.mxu0 %v7799
      %7819 = vmatprep.subr.bf16.mxu0 0
      %7820 = vmatpush1.bf16.msra.mxu0 %v7798
      %7821 = vmatprep.subr.bf16.mxu0 0
      %7822 = vmatpush1.bf16.msra.mxu0 %v7797
      %7823 = vmatprep.subr.bf16.mxu0 0
      %7824 = vmatpush1.bf16.msra.mxu0 %v7796
      %7825 = vmatprep.subr.bf16.mxu0 0
      %7826 = vmatpush1.bf16.msra.mxu0 %v7795
      %7827 = vmatprep.subr.bf16.mxu0 0
      %7828 = vmatpush2.bf16.msra.mxu0 0
      %7829 = vmatprep.subr.bf16.mxu0 0
      %7830 = vmatpush2.bf16.msra.mxu0 0
      %7831 = vmatprep.subr.bf16.mxu0 0
      %7832 = vmatpush2.bf16.msra.mxu0 0
      %7833 = vmatprep.subr.bf16.mxu0 0
      %7834 = vmatpush2.bf16.msra.mxu0 0
      %7835 = vmatprep.subr.bf16.mxu0 0
      %7836 = vmatpush2.bf16.msra.mxu0 0
      %7837 = vmatprep.subr.bf16.mxu0 0
      %7838 = vmatpush2.bf16.msra.mxu0 0
      %7839 = vmatprep.subr.bf16.mxu0 0
      %7840 = vmatpush2.bf16.msra.mxu0 0
      %7841 = vmatprep.subr.bf16.mxu0 0
      %7842 = vmatpush2.bf16.msra.mxu0 0
      %7843 = vmatprep.mubr.bf16.mxu0 0
      %7844 = vmatmul.mubr.bf16.gmra.mxu0 %v7731
      %v7845 = vpop.f32.mrf.mxu0
      %v7846 = vadd.f32 0.0, %v7845
      %v7847 = vpop.f32.mrf.mxu0
      %v7848 = vpop.f32.mrf.mxu0
      %v7849 = vadd.f32 0.0, %v7848
      %v7850 = vpop.f32.mrf.mxu0
      %7851 = vmatprep.mubr.bf16.mxu0 0
      %7852 = vmatmul.mubr.bf16.gmra.mxu0 %v7732
      %v7853 = vpop.f32.mrf.mxu0
      %v7854 = vadd.f32 0.0, %v7853
      %v7855 = vpop.f32.mrf.mxu0
      %v7856 = vpop.f32.mrf.mxu0
      %v7857 = vadd.f32 0.0, %v7856
      %v7858 = vpop.f32.mrf.mxu0
      %7859 = vmatprep.mubr.bf16.mxu0 0
      %7860 = vmatmul.mubr.bf16.gmra.mxu0 %v7733
      %v7861 = vpop.f32.mrf.mxu0
      %v7862 = vadd.f32 0.0, %v7861
      %v7863 = vpop.f32.mrf.mxu0
      %v7864 = vpop.f32.mrf.mxu0
      %v7865 = vadd.f32 0.0, %v7864
      %v7866 = vpop.f32.mrf.mxu0
      %7867 = vmatprep.mubr.bf16.mxu0 0
      %7868 = vmatmul.mubr.bf16.gmra.mxu0 %v7734
      %v7869 = vpop.f32.mrf.mxu0
      %v7870 = vadd.f32 0.0, %v7869
      %v7871 = vpop.f32.mrf.mxu0
      %v7872 = vpop.f32.mrf.mxu0
      %v7873 = vadd.f32 0.0, %v7872
      %v7874 = vpop.f32.mrf.mxu0
      %7875 = vmatprep.mubr.bf16.mxu0 0
      %7876 = vmatmul.mubr.bf16.gmra.mxu0 %v7735
      %v7877 = vpop.f32.mrf.mxu0
      %v7878 = vadd.f32 0.0, %v7877
      %v7879 = vpop.f32.mrf.mxu0
      %v7880 = vpop.f32.mrf.mxu0
      %v7881 = vadd.f32 0.0, %v7880
      %v7882 = vpop.f32.mrf.mxu0
      %7883 = vmatprep.mubr.bf16.mxu0 0
      %7884 = vmatmul.mubr.bf16.gmra.mxu0 %v7736
      %v7885 = vpop.f32.mrf.mxu0
      %v7886 = vadd.f32 0.0, %v7885
      %v7887 = vpop.f32.mrf.mxu0
      %v7888 = vpop.f32.mrf.mxu0
      %v7889 = vadd.f32 0.0, %v7888
      %v7890 = vpop.f32.mrf.mxu0
      %7891 = vmatprep.mubr.bf16.mxu0 0
      %7892 = vmatmul.mubr.bf16.gmra.mxu0 %v7737
      %v7893 = vpop.f32.mrf.mxu0
      %v7894 = vadd.f32 0.0, %v7893
      %v7895 = vpop.f32.mrf.mxu0
      %v7896 = vpop.f32.mrf.mxu0
      %v7897 = vadd.f32 0.0, %v7896
      %v7898 = vpop.f32.mrf.mxu0
      %7899 = vmatprep.mubr.bf16.mxu0 0
      %7900 = vmatmul.mubr.bf16.gmra.mxu0 %v7738
      %v7901 = vpop.f32.mrf.mxu0
      %v7902 = vadd.f32 0.0, %v7901
      %v7903 = vpop.f32.mrf.mxu0
      %v7904 = vpop.f32.mrf.mxu0
      %v7905 = vadd.f32 0.0, %v7904
      %v7906 = vpop.f32.mrf.mxu0
      %7907 = vmatprep.mubr.bf16.mxu0 0
      %7908 = vmatmul.mubr.bf16.gmra.mxu0 %v7739
      %v7909 = vpop.f32.mrf.mxu0
      %v7910 = vadd.f32 0.0, %v7909
      %v7911 = vpop.f32.mrf.mxu0
      %v7912 = vpop.f32.mrf.mxu0
      %v7913 = vadd.f32 0.0, %v7912
      %v7914 = vpop.f32.mrf.mxu0
      %7915 = vmatprep.mubr.bf16.mxu0 0
      %7916 = vmatmul.mubr.bf16.gmra.mxu0 %v7740
      %v7917 = vpop.f32.mrf.mxu0
      %v7918 = vadd.f32 0.0, %v7917
      %v7919 = vpop.f32.mrf.mxu0
      %v7920 = vpop.f32.mrf.mxu0
      %v7921 = vadd.f32 0.0, %v7920
      %v7922 = vpop.f32.mrf.mxu0
      %7923 = vmatprep.mubr.bf16.mxu0 0
      %7924 = vmatmul.mubr.bf16.gmra.mxu0 %v7741
      %v7925 = vpop.f32.mrf.mxu0
      %v7926 = vadd.f32 0.0, %v7925
      %v7927 = vpop.f32.mrf.mxu0
      %v7928 = vpop.f32.mrf.mxu0
      %v7929 = vadd.f32 0.0, %v7928
      %v7930 = vpop.f32.mrf.mxu0
      %7931 = vmatprep.mubr.bf16.mxu0 0
      %7932 = vmatmul.mubr.bf16.gmra.mxu0 %v7742
      %v7933 = vpop.f32.mrf.mxu0
      %v7934 = vadd.f32 0.0, %v7933
      %v7935 = vpop.f32.mrf.mxu0
      %v7936 = vpop.f32.mrf.mxu0
      %v7937 = vadd.f32 0.0, %v7936
      %v7938 = vpop.f32.mrf.mxu0
      %7939 = vmatprep.mubr.bf16.mxu0 0
      %7940 = vmatmul.mubr.bf16.gmra.mxu0 %v7743
      %v7941 = vpop.f32.mrf.mxu0
      %v7942 = vadd.f32 0.0, %v7941
      %v7943 = vpop.f32.mrf.mxu0
      %v7944 = vpop.f32.mrf.mxu0
      %v7945 = vadd.f32 0.0, %v7944
      %v7946 = vpop.f32.mrf.mxu0
      %7947 = vmatprep.mubr.bf16.mxu0 0
      %7948 = vmatmul.mubr.bf16.gmra.mxu0 %v7744
      %v7949 = vpop.f32.mrf.mxu0
      %v7950 = vadd.f32 0.0, %v7949
      %v7951 = vpop.f32.mrf.mxu0
      %v7952 = vpop.f32.mrf.mxu0
      %v7953 = vadd.f32 0.0, %v7952
      %v7954 = vpop.f32.mrf.mxu0
      %7955 = vmatprep.mubr.bf16.mxu0 0
      %7956 = vmatmul.mubr.bf16.gmra.mxu0 %v7745
      %v7957 = vpop.f32.mrf.mxu0
      %v7958 = vadd.f32 0.0, %v7957
      %v7959 = vpop.f32.mrf.mxu0
      %v7960 = vpop.f32.mrf.mxu0
      %v7961 = vadd.f32 0.0, %v7960
      %v7962 = vpop.f32.mrf.mxu0
      %7963 = vmatprep.mubr.bf16.mxu0 0
      %7964 = vmatmul.mubr.bf16.gmra.mxu0 %v7746
      %v7965 = vpop.f32.mrf.mxu0
      %v7966 = vadd.f32 0.0, %v7965
      %v7967 = vpop.f32.mrf.mxu0
      %v7968 = vpop.f32.mrf.mxu0
      %v7969 = vadd.f32 0.0, %v7968
      %v7970 = vpop.f32.mrf.mxu0
      %7971 = vdwg.mxu0
      %v7972 = vadd.f32 %v7472, %v7846
      %v7973 = vadd.f32 %v7473, %v7849
      %v7974 = vadd.f32 %v7474, %v7854
      %v7975 = vadd.f32 %v7475, %v7857
      %v7976 = vadd.f32 %v7476, %v7862
      %v7977 = vadd.f32 %v7477, %v7865
      %v7978 = vadd.f32 %v7478, %v7870
      %v7979 = vadd.f32 %v7479, %v7873
      %v7980 = vadd.f32 %v7480, %v7878
      %v7981 = vadd.f32 %v7481, %v7881
      %v7982 = vadd.f32 %v7482, %v7886
      %v7983 = vadd.f32 %v7483, %v7889
      %v7984 = vadd.f32 %v7484, %v7894
      %v7985 = vadd.f32 %v7485, %v7897
      %v7986 = vadd.f32 %v7486, %v7902
      %v7987 = vadd.f32 %v7487, %v7905
      %v7988 = vadd.f32 %v7488, %v7910
      %v7989 = vadd.f32 %v7489, %v7913
      %v7990 = vadd.f32 %v7490, %v7918
      %v7991 = vadd.f32 %v7491, %v7921
      %v7992 = vadd.f32 %v7492, %v7926
      %v7993 = vadd.f32 %v7493, %v7929
      %v7994 = vadd.f32 %v7494, %v7934
      %v7995 = vadd.f32 %v7495, %v7937
      %v7996 = vadd.f32 %v7496, %v7942
      %v7997 = vadd.f32 %v7497, %v7945
      %v7998 = vadd.f32 %v7498, %v7950
      %v7999 = vadd.f32 %v7499, %v7953
      %v8000 = vadd.f32 %v7500, %v7958
      %v8001 = vadd.f32 %v7501, %v7961
      %v8002 = vadd.f32 %v7502, %v7966
      %v8003 = vadd.f32 %v7503, %v7969
      %v8007 = vrot.slane %v7520, 5
      %v8008 = vrot.slane %v8007, 4
      %v8009 = vrot.slane %v6221, 5
      %v8010 = vsel %vm3301, %v8008, %v8009
      %v8011 = vrot.slane %v8009, 4
      %v8012 = vrot.slane %v6222, 5
      %v8013 = vsel %vm3301, %v8011, %v8012
      %s8014 = scalar_lea.vmem %s2, 320
      %v8015 = vld [vmem:[%s8014] sm:$0xf]
      %v8016 = vld [vmem:[%s8014 + $0x4] sm:$0xf]
      %v8017 = vld [vmem:[%s8014 + $0x8] sm:$0xf]
      %v8018 = vld [vmem:[%s8014 + $0xc] sm:$0xf]
      %v8019 = vld [vmem:[%s8014 + $0x10] sm:$0xf]
      %v8020 = vld [vmem:[%s8014 + $0x14] sm:$0xf]
      %v8021 = vld [vmem:[%s8014 + $0x18] sm:$0xf]
      %v8022 = vld [vmem:[%s8014 + $0x1c] sm:$0xf]
      %v8023 = vld [vmem:[%s8014 + $0x20] sm:$0xf]
      %v8024 = vld [vmem:[%s8014 + $0x24] sm:$0xf]
      %v8025 = vld [vmem:[%s8014 + $0x28] sm:$0xf]
      %v8026 = vld [vmem:[%s8014 + $0x2c] sm:$0xf]
      %v8027 = vld [vmem:[%s8014 + $0x30] sm:$0xf]
      %v8028 = vld [vmem:[%s8014 + $0x34] sm:$0xf]
      %v8029 = vld [vmem:[%s8014 + $0x38] sm:$0xf]
      %v8030 = vld [vmem:[%s8014 + $0x3c] sm:$0xf]
      %v8031 = vunpack.c.l.b16 %v8010
      %v8032 = vunpack.c.l.b16 %v8013
      %v8033 = vpack.c.b16 %v8032, %v8031
      %v8051 = vunpack.c.l.b16 %v8015
      %v8052 = vunpack.c.l.b16 %v8016
      %v8053 = vunpack.c.l.b16 %v8017
      %v8054 = vunpack.c.l.b16 %v8018
      %v8055 = vunpack.c.l.b16 %v8019
      %v8056 = vunpack.c.l.b16 %v8020
      %v8057 = vunpack.c.l.b16 %v8021
      %v8058 = vunpack.c.l.b16 %v8022
      %v8059 = vunpack.c.l.b16 %v8023
      %v8060 = vunpack.c.l.b16 %v8024
      %v8061 = vunpack.c.l.b16 %v8025
      %v8062 = vunpack.c.l.b16 %v8026
      %v8063 = vunpack.c.l.b16 %v8027
      %v8064 = vunpack.c.l.b16 %v8028
      %v8065 = vunpack.c.l.b16 %v8029
      %v8066 = vunpack.c.l.b16 %v8030
      %v8067 = vpack.c.b16 %v8052, %v8051
      %v8068 = vpack.c.b16 %v8054, %v8053
      %v8069 = vpack.c.b16 %v8056, %v8055
      %v8070 = vpack.c.b16 %v8058, %v8057
      %v8071 = vpack.c.b16 %v8060, %v8059
      %v8072 = vpack.c.b16 %v8062, %v8061
      %v8073 = vpack.c.b16 %v8064, %v8063
      %v8074 = vpack.c.b16 %v8066, %v8065
      %8083 = vmatprep.subr.bf16.mxu0 0
      %8084 = vmatpush1.bf16.msra.mxu0 %v8074
      %8085 = vmatprep.subr.bf16.mxu0 0
      %8086 = vmatpush1.bf16.msra.mxu0 %v8073
      %8087 = vmatprep.subr.bf16.mxu0 0
      %8088 = vmatpush1.bf16.msra.mxu0 %v8072
      %8089 = vmatprep.subr.bf16.mxu0 0
      %8090 = vmatpush1.bf16.msra.mxu0 %v8071
      %8091 = vmatprep.subr.bf16.mxu0 0
      %8092 = vmatpush1.bf16.msra.mxu0 %v8070
      %8093 = vmatprep.subr.bf16.mxu0 0
      %8094 = vmatpush1.bf16.msra.mxu0 %v8069
      %8095 = vmatprep.subr.bf16.mxu0 0
      %8096 = vmatpush1.bf16.msra.mxu0 %v8068
      %8097 = vmatprep.subr.bf16.mxu0 0
      %8098 = vmatpush1.bf16.msra.mxu0 %v8067
      %8099 = vmatprep.subr.bf16.mxu0 0
      %8100 = vmatpush2.bf16.msra.mxu0 0
      %8101 = vmatprep.subr.bf16.mxu0 0
      %8102 = vmatpush2.bf16.msra.mxu0 0
      %8103 = vmatprep.subr.bf16.mxu0 0
      %8104 = vmatpush2.bf16.msra.mxu0 0
      %8105 = vmatprep.subr.bf16.mxu0 0
      %8106 = vmatpush2.bf16.msra.mxu0 0
      %8107 = vmatprep.subr.bf16.mxu0 0
      %8108 = vmatpush2.bf16.msra.mxu0 0
      %8109 = vmatprep.subr.bf16.mxu0 0
      %8110 = vmatpush2.bf16.msra.mxu0 0
      %8111 = vmatprep.subr.bf16.mxu0 0
      %8112 = vmatpush2.bf16.msra.mxu0 0
      %8113 = vmatprep.subr.bf16.mxu0 0
      %8114 = vmatpush2.bf16.msra.mxu0 0
      %8115 = vmatprep.mubr.bf16.mxu0 0
      %8116 = vmatmul.mubr.bf16.gmra.mxu0 %v7732
      %v8117 = vpop.f32.mrf.mxu0
      %v8118 = vadd.f32 0.0, %v8117
      %v8119 = vpop.f32.mrf.mxu0
      %v8120 = vpop.f32.mrf.mxu0
      %v8121 = vadd.f32 0.0, %v8120
      %v8122 = vpop.f32.mrf.mxu0
      %8123 = vmatprep.mubr.bf16.mxu0 0
      %8124 = vmatmul.mubr.bf16.gmra.mxu0 %v7733
      %v8125 = vpop.f32.mrf.mxu0
      %v8126 = vadd.f32 0.0, %v8125
      %v8127 = vpop.f32.mrf.mxu0
      %v8128 = vpop.f32.mrf.mxu0
      %v8129 = vadd.f32 0.0, %v8128
      %v8130 = vpop.f32.mrf.mxu0
      %8131 = vmatprep.mubr.bf16.mxu0 0
      %8132 = vmatmul.mubr.bf16.gmra.mxu0 %v7734
      %v8133 = vpop.f32.mrf.mxu0
      %v8134 = vadd.f32 0.0, %v8133
      %v8135 = vpop.f32.mrf.mxu0
      %v8136 = vpop.f32.mrf.mxu0
      %v8137 = vadd.f32 0.0, %v8136
      %v8138 = vpop.f32.mrf.mxu0
      %8139 = vmatprep.mubr.bf16.mxu0 0
      %8140 = vmatmul.mubr.bf16.gmra.mxu0 %v7735
      %v8141 = vpop.f32.mrf.mxu0
      %v8142 = vadd.f32 0.0, %v8141
      %v8143 = vpop.f32.mrf.mxu0
      %v8144 = vpop.f32.mrf.mxu0
      %v8145 = vadd.f32 0.0, %v8144
      %v8146 = vpop.f32.mrf.mxu0
      %8147 = vmatprep.mubr.bf16.mxu0 0
      %8148 = vmatmul.mubr.bf16.gmra.mxu0 %v7736
      %v8149 = vpop.f32.mrf.mxu0
      %v8150 = vadd.f32 0.0, %v8149
      %v8151 = vpop.f32.mrf.mxu0
      %v8152 = vpop.f32.mrf.mxu0
      %v8153 = vadd.f32 0.0, %v8152
      %v8154 = vpop.f32.mrf.mxu0
      %8155 = vmatprep.mubr.bf16.mxu0 0
      %8156 = vmatmul.mubr.bf16.gmra.mxu0 %v7737
      %v8157 = vpop.f32.mrf.mxu0
      %v8158 = vadd.f32 0.0, %v8157
      %v8159 = vpop.f32.mrf.mxu0
      %v8160 = vpop.f32.mrf.mxu0
      %v8161 = vadd.f32 0.0, %v8160
      %v8162 = vpop.f32.mrf.mxu0
      %8163 = vmatprep.mubr.bf16.mxu0 0
      %8164 = vmatmul.mubr.bf16.gmra.mxu0 %v7738
      %v8165 = vpop.f32.mrf.mxu0
      %v8166 = vadd.f32 0.0, %v8165
      %v8167 = vpop.f32.mrf.mxu0
      %v8168 = vpop.f32.mrf.mxu0
      %v8169 = vadd.f32 0.0, %v8168
      %v8170 = vpop.f32.mrf.mxu0
      %8171 = vmatprep.mubr.bf16.mxu0 0
      %8172 = vmatmul.mubr.bf16.gmra.mxu0 %v7739
      %v8173 = vpop.f32.mrf.mxu0
      %v8174 = vadd.f32 0.0, %v8173
      %v8175 = vpop.f32.mrf.mxu0
      %v8176 = vpop.f32.mrf.mxu0
      %v8177 = vadd.f32 0.0, %v8176
      %v8178 = vpop.f32.mrf.mxu0
      %8179 = vmatprep.mubr.bf16.mxu0 0
      %8180 = vmatmul.mubr.bf16.gmra.mxu0 %v7740
      %v8181 = vpop.f32.mrf.mxu0
      %v8182 = vadd.f32 0.0, %v8181
      %v8183 = vpop.f32.mrf.mxu0
      %v8184 = vpop.f32.mrf.mxu0
      %v8185 = vadd.f32 0.0, %v8184
      %v8186 = vpop.f32.mrf.mxu0
      %8187 = vmatprep.mubr.bf16.mxu0 0
      %8188 = vmatmul.mubr.bf16.gmra.mxu0 %v7741
      %v8189 = vpop.f32.mrf.mxu0
      %v8190 = vadd.f32 0.0, %v8189
      %v8191 = vpop.f32.mrf.mxu0
      %v8192 = vpop.f32.mrf.mxu0
      %v8193 = vadd.f32 0.0, %v8192
      %v8194 = vpop.f32.mrf.mxu0
      %8195 = vmatprep.mubr.bf16.mxu0 0
      %8196 = vmatmul.mubr.bf16.gmra.mxu0 %v7742
      %v8197 = vpop.f32.mrf.mxu0
      %v8198 = vadd.f32 0.0, %v8197
      %v8199 = vpop.f32.mrf.mxu0
      %v8200 = vpop.f32.mrf.mxu0
      %v8201 = vadd.f32 0.0, %v8200
      %v8202 = vpop.f32.mrf.mxu0
      %8203 = vmatprep.mubr.bf16.mxu0 0
      %8204 = vmatmul.mubr.bf16.gmra.mxu0 %v7743
      %v8205 = vpop.f32.mrf.mxu0
      %v8206 = vadd.f32 0.0, %v8205
      %v8207 = vpop.f32.mrf.mxu0
      %v8208 = vpop.f32.mrf.mxu0
      %v8209 = vadd.f32 0.0, %v8208
      %v8210 = vpop.f32.mrf.mxu0
      %8211 = vmatprep.mubr.bf16.mxu0 0
      %8212 = vmatmul.mubr.bf16.gmra.mxu0 %v7744
      %v8213 = vpop.f32.mrf.mxu0
      %v8214 = vadd.f32 0.0, %v8213
      %v8215 = vpop.f32.mrf.mxu0
      %v8216 = vpop.f32.mrf.mxu0
      %v8217 = vadd.f32 0.0, %v8216
      %v8218 = vpop.f32.mrf.mxu0
      %8219 = vmatprep.mubr.bf16.mxu0 0
      %8220 = vmatmul.mubr.bf16.gmra.mxu0 %v7745
      %v8221 = vpop.f32.mrf.mxu0
      %v8222 = vadd.f32 0.0, %v8221
      %v8223 = vpop.f32.mrf.mxu0
      %v8224 = vpop.f32.mrf.mxu0
      %v8225 = vadd.f32 0.0, %v8224
      %v8226 = vpop.f32.mrf.mxu0
      %8227 = vmatprep.mubr.bf16.mxu0 0
      %8228 = vmatmul.mubr.bf16.gmra.mxu0 %v7746
      %v8229 = vpop.f32.mrf.mxu0
      %v8230 = vadd.f32 0.0, %v8229
      %v8231 = vpop.f32.mrf.mxu0
      %v8232 = vpop.f32.mrf.mxu0
      %v8233 = vadd.f32 0.0, %v8232
      %v8234 = vpop.f32.mrf.mxu0
      %8235 = vmatprep.mubr.bf16.mxu0 0
      %8236 = vmatmul.mubr.bf16.gmra.mxu0 %v8033
      %v8237 = vpop.f32.mrf.mxu0
      %v8238 = vadd.f32 0.0, %v8237
      %v8239 = vpop.f32.mrf.mxu0
      %v8240 = vpop.f32.mrf.mxu0
      %v8241 = vadd.f32 0.0, %v8240
      %v8242 = vpop.f32.mrf.mxu0
      %8243 = vdwg.mxu0
      %v8244 = vadd.f32 %v7972, %v8118
      %v8245 = vadd.f32 %v7973, %v8121
      %v8246 = vadd.f32 %v7974, %v8126
      %v8247 = vadd.f32 %v7975, %v8129
      %v8248 = vadd.f32 %v7976, %v8134
      %v8249 = vadd.f32 %v7977, %v8137
      %v8250 = vadd.f32 %v7978, %v8142
      %v8251 = vadd.f32 %v7979, %v8145
      %v8252 = vadd.f32 %v7980, %v8150
      %v8253 = vadd.f32 %v7981, %v8153
      %v8254 = vadd.f32 %v7982, %v8158
      %v8255 = vadd.f32 %v7983, %v8161
      %v8256 = vadd.f32 %v7984, %v8166
      %v8257 = vadd.f32 %v7985, %v8169
      %v8258 = vadd.f32 %v7986, %v8174
      %v8259 = vadd.f32 %v7987, %v8177
      %v8260 = vadd.f32 %v7988, %v8182
      %v8261 = vadd.f32 %v7989, %v8185
      %v8262 = vadd.f32 %v7990, %v8190
      %v8263 = vadd.f32 %v7991, %v8193
      %v8264 = vadd.f32 %v7992, %v8198
      %v8265 = vadd.f32 %v7993, %v8201
      %v8266 = vadd.f32 %v7994, %v8206
      %v8267 = vadd.f32 %v7995, %v8209
      %v8268 = vadd.f32 %v7996, %v8214
      %v8269 = vadd.f32 %v7997, %v8217
      %v8270 = vadd.f32 %v7998, %v8222
      %v8271 = vadd.f32 %v7999, %v8225
      %v8272 = vadd.f32 %v8000, %v8230
      %v8273 = vadd.f32 %v8001, %v8233
      %v8274 = vadd.f32 %v8002, %v8238
      %v8275 = vadd.f32 %v8003, %v8241
      %v8279 = vrot.slane %v7521, 5
      %v8280 = vrot.slane %v8279, 4
      %v8281 = vrot.slane %v6224, 5
      %v8282 = vsel %vm3301, %v8280, %v8281
      %v8283 = vrot.slane %v8281, 4
      %v8284 = vrot.slane %v6225, 5
      %v8285 = vsel %vm3301, %v8283, %v8284
      %s8286 = scalar_lea.vmem %s2, 512
      %v8287 = vld [vmem:[%s8286] sm:$0xf]
      %v8288 = vld [vmem:[%s8286 + $0x4] sm:$0xf]
      %v8289 = vld [vmem:[%s8286 + $0x8] sm:$0xf]
      %v8290 = vld [vmem:[%s8286 + $0xc] sm:$0xf]
      %v8291 = vld [vmem:[%s8286 + $0x10] sm:$0xf]
      %v8292 = vld [vmem:[%s8286 + $0x14] sm:$0xf]
      %v8293 = vld [vmem:[%s8286 + $0x18] sm:$0xf]
      %v8294 = vld [vmem:[%s8286 + $0x1c] sm:$0xf]
      %v8295 = vld [vmem:[%s8286 + $0x20] sm:$0xf]
      %v8296 = vld [vmem:[%s8286 + $0x24] sm:$0xf]
      %v8297 = vld [vmem:[%s8286 + $0x28] sm:$0xf]
      %v8298 = vld [vmem:[%s8286 + $0x2c] sm:$0xf]
      %v8299 = vld [vmem:[%s8286 + $0x30] sm:$0xf]
      %v8300 = vld [vmem:[%s8286 + $0x34] sm:$0xf]
      %v8301 = vld [vmem:[%s8286 + $0x38] sm:$0xf]
      %v8302 = vld [vmem:[%s8286 + $0x3c] sm:$0xf]
      %v8303 = vunpack.c.l.b16 %v8282
      %v8304 = vunpack.c.l.b16 %v8285
      %v8305 = vpack.c.b16 %v8304, %v8303
      %v8323 = vunpack.c.l.b16 %v8287
      %v8324 = vunpack.c.l.b16 %v8288
      %v8325 = vunpack.c.l.b16 %v8289
      %v8326 = vunpack.c.l.b16 %v8290
      %v8327 = vunpack.c.l.b16 %v8291
      %v8328 = vunpack.c.l.b16 %v8292
      %v8329 = vunpack.c.l.b16 %v8293
      %v8330 = vunpack.c.l.b16 %v8294
      %v8331 = vunpack.c.l.b16 %v8295
      %v8332 = vunpack.c.l.b16 %v8296
      %v8333 = vunpack.c.l.b16 %v8297
      %v8334 = vunpack.c.l.b16 %v8298
      %v8335 = vunpack.c.l.b16 %v8299
      %v8336 = vunpack.c.l.b16 %v8300
      %v8337 = vunpack.c.l.b16 %v8301
      %v8338 = vunpack.c.l.b16 %v8302
      %v8339 = vpack.c.b16 %v8324, %v8323
      %v8340 = vpack.c.b16 %v8326, %v8325
      %v8341 = vpack.c.b16 %v8328, %v8327
      %v8342 = vpack.c.b16 %v8330, %v8329
      %v8343 = vpack.c.b16 %v8332, %v8331
      %v8344 = vpack.c.b16 %v8334, %v8333
      %v8345 = vpack.c.b16 %v8336, %v8335
      %v8346 = vpack.c.b16 %v8338, %v8337
      %8355 = vmatprep.subr.bf16.mxu0 0
      %8356 = vmatpush1.bf16.msra.mxu0 %v8346
      %8357 = vmatprep.subr.bf16.mxu0 0
      %8358 = vmatpush1.bf16.msra.mxu0 %v8345
      %8359 = vmatprep.subr.bf16.mxu0 0
      %8360 = vmatpush1.bf16.msra.mxu0 %v8344
      %8361 = vmatprep.subr.bf16.mxu0 0
      %8362 = vmatpush1.bf16.msra.mxu0 %v8343
      %8363 = vmatprep.subr.bf16.mxu0 0
      %8364 = vmatpush1.bf16.msra.mxu0 %v8342
      %8365 = vmatprep.subr.bf16.mxu0 0
      %8366 = vmatpush1.bf16.msra.mxu0 %v8341
      %8367 = vmatprep.subr.bf16.mxu0 0
      %8368 = vmatpush1.bf16.msra.mxu0 %v8340
      %8369 = vmatprep.subr.bf16.mxu0 0
      %8370 = vmatpush1.bf16.msra.mxu0 %v8339
      %8371 = vmatprep.subr.bf16.mxu0 0
      %8372 = vmatpush2.bf16.msra.mxu0 0
      %8373 = vmatprep.subr.bf16.mxu0 0
      %8374 = vmatpush2.bf16.msra.mxu0 0
      %8375 = vmatprep.subr.bf16.mxu0 0
      %8376 = vmatpush2.bf16.msra.mxu0 0
      %8377 = vmatprep.subr.bf16.mxu0 0
      %8378 = vmatpush2.bf16.msra.mxu0 0
      %8379 = vmatprep.subr.bf16.mxu0 0
      %8380 = vmatpush2.bf16.msra.mxu0 0
      %8381 = vmatprep.subr.bf16.mxu0 0
      %8382 = vmatpush2.bf16.msra.mxu0 0
      %8383 = vmatprep.subr.bf16.mxu0 0
      %8384 = vmatpush2.bf16.msra.mxu0 0
      %8385 = vmatprep.subr.bf16.mxu0 0
      %8386 = vmatpush2.bf16.msra.mxu0 0
      %8387 = vmatprep.mubr.bf16.mxu0 0
      %8388 = vmatmul.mubr.bf16.gmra.mxu0 %v7733
      %v8389 = vpop.f32.mrf.mxu0
      %v8390 = vadd.f32 0.0, %v8389
      %v8391 = vpop.f32.mrf.mxu0
      %v8392 = vpop.f32.mrf.mxu0
      %v8393 = vadd.f32 0.0, %v8392
      %v8394 = vpop.f32.mrf.mxu0
      %8395 = vmatprep.mubr.bf16.mxu0 0
      %8396 = vmatmul.mubr.bf16.gmra.mxu0 %v7734
      %v8397 = vpop.f32.mrf.mxu0
      %v8398 = vadd.f32 0.0, %v8397
      %v8399 = vpop.f32.mrf.mxu0
      %v8400 = vpop.f32.mrf.mxu0
      %v8401 = vadd.f32 0.0, %v8400
      %v8402 = vpop.f32.mrf.mxu0
      %8403 = vmatprep.mubr.bf16.mxu0 0
      %8404 = vmatmul.mubr.bf16.gmra.mxu0 %v7735
      %v8405 = vpop.f32.mrf.mxu0
      %v8406 = vadd.f32 0.0, %v8405
      %v8407 = vpop.f32.mrf.mxu0
      %v8408 = vpop.f32.mrf.mxu0
      %v8409 = vadd.f32 0.0, %v8408
      %v8410 = vpop.f32.mrf.mxu0
      %8411 = vmatprep.mubr.bf16.mxu0 0
      %8412 = vmatmul.mubr.bf16.gmra.mxu0 %v7736
      %v8413 = vpop.f32.mrf.mxu0
      %v8414 = vadd.f32 0.0, %v8413
      %v8415 = vpop.f32.mrf.mxu0
      %v8416 = vpop.f32.mrf.mxu0
      %v8417 = vadd.f32 0.0, %v8416
      %v8418 = vpop.f32.mrf.mxu0
      %8419 = vmatprep.mubr.bf16.mxu0 0
      %8420 = vmatmul.mubr.bf16.gmra.mxu0 %v7737
      %v8421 = vpop.f32.mrf.mxu0
      %v8422 = vadd.f32 0.0, %v8421
      %v8423 = vpop.f32.mrf.mxu0
      %v8424 = vpop.f32.mrf.mxu0
      %v8425 = vadd.f32 0.0, %v8424
      %v8426 = vpop.f32.mrf.mxu0
      %8427 = vmatprep.mubr.bf16.mxu0 0
      %8428 = vmatmul.mubr.bf16.gmra.mxu0 %v7738
      %v8429 = vpop.f32.mrf.mxu0
      %v8430 = vadd.f32 0.0, %v8429
      %v8431 = vpop.f32.mrf.mxu0
      %v8432 = vpop.f32.mrf.mxu0
      %v8433 = vadd.f32 0.0, %v8432
      %v8434 = vpop.f32.mrf.mxu0
      %8435 = vmatprep.mubr.bf16.mxu0 0
      %8436 = vmatmul.mubr.bf16.gmra.mxu0 %v7739
      %v8437 = vpop.f32.mrf.mxu0
      %v8438 = vadd.f32 0.0, %v8437
      %v8439 = vpop.f32.mrf.mxu0
      %v8440 = vpop.f32.mrf.mxu0
      %v8441 = vadd.f32 0.0, %v8440
      %v8442 = vpop.f32.mrf.mxu0
      %8443 = vmatprep.mubr.bf16.mxu0 0
      %8444 = vmatmul.mubr.bf16.gmra.mxu0 %v7740
      %v8445 = vpop.f32.mrf.mxu0
      %v8446 = vadd.f32 0.0, %v8445
      %v8447 = vpop.f32.mrf.mxu0
      %v8448 = vpop.f32.mrf.mxu0
      %v8449 = vadd.f32 0.0, %v8448
      %v8450 = vpop.f32.mrf.mxu0
      %8451 = vmatprep.mubr.bf16.mxu0 0
      %8452 = vmatmul.mubr.bf16.gmra.mxu0 %v7741
      %v8453 = vpop.f32.mrf.mxu0
      %v8454 = vadd.f32 0.0, %v8453
      %v8455 = vpop.f32.mrf.mxu0
      %v8456 = vpop.f32.mrf.mxu0
      %v8457 = vadd.f32 0.0, %v8456
      %v8458 = vpop.f32.mrf.mxu0
      %8459 = vmatprep.mubr.bf16.mxu0 0
      %8460 = vmatmul.mubr.bf16.gmra.mxu0 %v7742
      %v8461 = vpop.f32.mrf.mxu0
      %v8462 = vadd.f32 0.0, %v8461
      %v8463 = vpop.f32.mrf.mxu0
      %v8464 = vpop.f32.mrf.mxu0
      %v8465 = vadd.f32 0.0, %v8464
      %v8466 = vpop.f32.mrf.mxu0
      %8467 = vmatprep.mubr.bf16.mxu0 0
      %8468 = vmatmul.mubr.bf16.gmra.mxu0 %v7743
      %v8469 = vpop.f32.mrf.mxu0
      %v8470 = vadd.f32 0.0, %v8469
      %v8471 = vpop.f32.mrf.mxu0
      %v8472 = vpop.f32.mrf.mxu0
      %v8473 = vadd.f32 0.0, %v8472
      %v8474 = vpop.f32.mrf.mxu0
      %8475 = vmatprep.mubr.bf16.mxu0 0
      %8476 = vmatmul.mubr.bf16.gmra.mxu0 %v7744
      %v8477 = vpop.f32.mrf.mxu0
      %v8478 = vadd.f32 0.0, %v8477
      %v8479 = vpop.f32.mrf.mxu0
      %v8480 = vpop.f32.mrf.mxu0
      %v8481 = vadd.f32 0.0, %v8480
      %v8482 = vpop.f32.mrf.mxu0
      %8483 = vmatprep.mubr.bf16.mxu0 0
      %8484 = vmatmul.mubr.bf16.gmra.mxu0 %v7745
      %v8485 = vpop.f32.mrf.mxu0
      %v8486 = vadd.f32 0.0, %v8485
      %v8487 = vpop.f32.mrf.mxu0
      %v8488 = vpop.f32.mrf.mxu0
      %v8489 = vadd.f32 0.0, %v8488
      %v8490 = vpop.f32.mrf.mxu0
      %8491 = vmatprep.mubr.bf16.mxu0 0
      %8492 = vmatmul.mubr.bf16.gmra.mxu0 %v7746
      %v8493 = vpop.f32.mrf.mxu0
      %v8494 = vadd.f32 0.0, %v8493
      %v8495 = vpop.f32.mrf.mxu0
      %v8496 = vpop.f32.mrf.mxu0
      %v8497 = vadd.f32 0.0, %v8496
      %v8498 = vpop.f32.mrf.mxu0
      %8499 = vmatprep.mubr.bf16.mxu0 0
      %8500 = vmatmul.mubr.bf16.gmra.mxu0 %v8033
      %v8501 = vpop.f32.mrf.mxu0
      %v8502 = vadd.f32 0.0, %v8501
      %v8503 = vpop.f32.mrf.mxu0
      %v8504 = vpop.f32.mrf.mxu0
      %v8505 = vadd.f32 0.0, %v8504
      %v8506 = vpop.f32.mrf.mxu0
      %8507 = vmatprep.mubr.bf16.mxu0 0
      %8508 = vmatmul.mubr.bf16.gmra.mxu0 %v8305
      %v8509 = vpop.f32.mrf.mxu0
      %v8510 = vadd.f32 0.0, %v8509
      %v8511 = vpop.f32.mrf.mxu0
      %v8512 = vpop.f32.mrf.mxu0
      %v8513 = vadd.f32 0.0, %v8512
      %v8514 = vpop.f32.mrf.mxu0
      %8515 = vdwg.mxu0
      %v8516 = vadd.f32 %v8244, %v8390
      %v8517 = vadd.f32 %v8245, %v8393
      %v8518 = vadd.f32 %v8246, %v8398
      %v8519 = vadd.f32 %v8247, %v8401
      %v8520 = vadd.f32 %v8248, %v8406
      %v8521 = vadd.f32 %v8249, %v8409
      %v8522 = vadd.f32 %v8250, %v8414
      %v8523 = vadd.f32 %v8251, %v8417
      %v8524 = vadd.f32 %v8252, %v8422
      %v8525 = vadd.f32 %v8253, %v8425
      %v8526 = vadd.f32 %v8254, %v8430
      %v8527 = vadd.f32 %v8255, %v8433
      %v8528 = vadd.f32 %v8256, %v8438
      %v8529 = vadd.f32 %v8257, %v8441
      %v8530 = vadd.f32 %v8258, %v8446
      %v8531 = vadd.f32 %v8259, %v8449
      %v8532 = vadd.f32 %v8260, %v8454
      %v8533 = vadd.f32 %v8261, %v8457
      %v8534 = vadd.f32 %v8262, %v8462
      %v8535 = vadd.f32 %v8263, %v8465
      %v8536 = vadd.f32 %v8264, %v8470
      %v8537 = vadd.f32 %v8265, %v8473
      %v8538 = vadd.f32 %v8266, %v8478
      %v8539 = vadd.f32 %v8267, %v8481
      %v8540 = vadd.f32 %v8268, %v8486
      %v8541 = vadd.f32 %v8269, %v8489
      %v8542 = vadd.f32 %v8270, %v8494
      %v8543 = vadd.f32 %v8271, %v8497
      %v8544 = vadd.f32 %v8272, %v8502
      %v8545 = vadd.f32 %v8273, %v8505
      %v8546 = vadd.f32 %v8274, %v8510
      %v8547 = vadd.f32 %v8275, %v8513
      %v8548 = vadd.f32 %v8516, %v8517
      %v8549 = vadd.f32 %v8548, %v8518
      %v8550 = vadd.f32 %v8549, %v8519
      %v8551 = vadd.f32 %v8550, %v8520
      %v8552 = vadd.f32 %v8551, %v8521
      %v8553 = vadd.f32 %v8552, %v8522
      %v8554 = vadd.f32 %v8553, %v8523
      %v8555 = vadd.f32 %v8554, %v8524
      %v8556 = vadd.f32 %v8555, %v8525
      %v8557 = vadd.f32 %v8556, %v8526
      %v8558 = vadd.f32 %v8557, %v8527
      %v8559 = vadd.f32 %v8558, %v8528
      %v8560 = vadd.f32 %v8559, %v8529
      %v8561 = vadd.f32 %v8560, %v8530
      %v8562 = vadd.f32 %v8561, %v8531
      %v8563 = vadd.f32 %v8562, %v8532
      %v8564 = vadd.f32 %v8563, %v8533
      %v8565 = vadd.f32 %v8564, %v8534
      %v8566 = vadd.f32 %v8565, %v8535
      %v8567 = vadd.f32 %v8566, %v8536
      %v8568 = vadd.f32 %v8567, %v8537
      %v8569 = vadd.f32 %v8568, %v8538
      %v8570 = vadd.f32 %v8569, %v8539
      %v8571 = vadd.f32 %v8570, %v8540
      %v8572 = vadd.f32 %v8571, %v8541
      %v8573 = vadd.f32 %v8572, %v8542
      %v8574 = vadd.f32 %v8573, %v8543
      %v8575 = vadd.f32 %v8574, %v8544
      %v8576 = vadd.f32 %v8575, %v8545
      %v8577 = vadd.f32 %v8576, %v8546
      %v8578 = vadd.f32 %v8577, %v8547
      %v8579 = vrot.slane %v8578, 4
      %v8580 = vadd.f32 %v8578, %v8579
      %v8581 = vrot.slane %v8580, 2
      %v8582 = vadd.f32 %v8580, %v8581
      %v8583 = vrot.slane %v8582, 1
      %v8584 = vadd.f32 %v8582, %v8583
      %v8585 = vmul.f32 %v8584, 0.00390625
      %v8586 = vmul.f32 %v8516, %v8516
      %v8587 = vmul.f32 %v8517, %v8517
      %v8588 = vmul.f32 %v8518, %v8518
      %v8589 = vmul.f32 %v8519, %v8519
      %v8590 = vmul.f32 %v8520, %v8520
      %v8591 = vmul.f32 %v8521, %v8521
      %v8592 = vmul.f32 %v8522, %v8522
      %v8593 = vmul.f32 %v8523, %v8523
      %v8594 = vmul.f32 %v8524, %v8524
      %v8595 = vmul.f32 %v8525, %v8525
      %v8596 = vmul.f32 %v8526, %v8526
      %v8597 = vmul.f32 %v8527, %v8527
      %v8598 = vmul.f32 %v8528, %v8528
      %v8599 = vmul.f32 %v8529, %v8529
      %v8600 = vmul.f32 %v8530, %v8530
      %v8601 = vmul.f32 %v8531, %v8531
      %v8602 = vmul.f32 %v8532, %v8532
      %v8603 = vmul.f32 %v8533, %v8533
      %v8604 = vmul.f32 %v8534, %v8534
      %v8605 = vmul.f32 %v8535, %v8535
      %v8606 = vmul.f32 %v8536, %v8536
      %v8607 = vmul.f32 %v8537, %v8537
      %v8608 = vmul.f32 %v8538, %v8538
      %v8609 = vmul.f32 %v8539, %v8539
      %v8610 = vmul.f32 %v8540, %v8540
      %v8611 = vmul.f32 %v8541, %v8541
      %v8612 = vmul.f32 %v8542, %v8542
      %v8613 = vmul.f32 %v8543, %v8543
      %v8614 = vmul.f32 %v8544, %v8544
      %v8615 = vmul.f32 %v8545, %v8545
      %v8616 = vmul.f32 %v8546, %v8546
      %v8617 = vmul.f32 %v8547, %v8547
      %v8618 = vadd.f32 %v8586, %v8587
      %v8619 = vadd.f32 %v8618, %v8588
      %v8620 = vadd.f32 %v8619, %v8589
      %v8621 = vadd.f32 %v8620, %v8590
      %v8622 = vadd.f32 %v8621, %v8591
      %v8623 = vadd.f32 %v8622, %v8592
      %v8624 = vadd.f32 %v8623, %v8593
      %v8625 = vadd.f32 %v8624, %v8594
      %v8626 = vadd.f32 %v8625, %v8595
      %v8627 = vadd.f32 %v8626, %v8596
      %v8628 = vadd.f32 %v8627, %v8597
      %v8629 = vadd.f32 %v8628, %v8598
      %v8630 = vadd.f32 %v8629, %v8599
      %v8631 = vadd.f32 %v8630, %v8600
      %v8632 = vadd.f32 %v8631, %v8601
      %v8633 = vadd.f32 %v8632, %v8602
      %v8634 = vadd.f32 %v8633, %v8603
      %v8635 = vadd.f32 %v8634, %v8604
      %v8636 = vadd.f32 %v8635, %v8605
      %v8637 = vadd.f32 %v8636, %v8606
      %v8638 = vadd.f32 %v8637, %v8607
      %v8639 = vadd.f32 %v8638, %v8608
      %v8640 = vadd.f32 %v8639, %v8609
      %v8641 = vadd.f32 %v8640, %v8610
      %v8642 = vadd.f32 %v8641, %v8611
      %v8643 = vadd.f32 %v8642, %v8612
      %v8644 = vadd.f32 %v8643, %v8613
      %v8645 = vadd.f32 %v8644, %v8614
      %v8646 = vadd.f32 %v8645, %v8615
      %v8647 = vadd.f32 %v8646, %v8616
      %v8648 = vadd.f32 %v8647, %v8617
      %v8649 = vrot.slane %v8648, 4
      %v8650 = vadd.f32 %v8648, %v8649
      %v8651 = vrot.slane %v8650, 2
      %v8652 = vadd.f32 %v8650, %v8651
      %v8653 = vrot.slane %v8652, 1
      %v8654 = vadd.f32 %v8652, %v8653
      %v8655 = vmul.f32 %v8654, 0.00390625
      %v8656 = vmul.f32 %v8585, %v8585
      %v8657 = vsub.f32 %v8655, %v8656
      %v8658 = vmax.f32 %v8657, 0.0
      %v8659 = vsub.f32 %v8516, %v8585
      %v8660 = vsub.f32 %v8517, %v8585
      %v8661 = vsub.f32 %v8518, %v8585
      %v8662 = vsub.f32 %v8519, %v8585
      %v8663 = vsub.f32 %v8520, %v8585
      %v8664 = vsub.f32 %v8521, %v8585
      %v8665 = vsub.f32 %v8522, %v8585
      %v8666 = vsub.f32 %v8523, %v8585
      %v8667 = vsub.f32 %v8524, %v8585
      %v8668 = vsub.f32 %v8525, %v8585
      %v8669 = vsub.f32 %v8526, %v8585
      %v8670 = vsub.f32 %v8527, %v8585
      %v8671 = vsub.f32 %v8528, %v8585
      %v8672 = vsub.f32 %v8529, %v8585
      %v8673 = vsub.f32 %v8530, %v8585
      %v8674 = vsub.f32 %v8531, %v8585
      %v8675 = vsub.f32 %v8532, %v8585
      %v8676 = vsub.f32 %v8533, %v8585
      %v8677 = vsub.f32 %v8534, %v8585
      %v8678 = vsub.f32 %v8535, %v8585
      %v8679 = vsub.f32 %v8536, %v8585
      %v8680 = vsub.f32 %v8537, %v8585
      %v8681 = vsub.f32 %v8538, %v8585
      %v8682 = vsub.f32 %v8539, %v8585
      %v8683 = vsub.f32 %v8540, %v8585
      %v8684 = vsub.f32 %v8541, %v8585
      %v8685 = vsub.f32 %v8542, %v8585
      %v8686 = vsub.f32 %v8543, %v8585
      %v8687 = vsub.f32 %v8544, %v8585
      %v8688 = vsub.f32 %v8545, %v8585
      %v8689 = vsub.f32 %v8546, %v8585
      %v8690 = vsub.f32 %v8547, %v8585
      %v8691 = vadd.f32 %v8658, 1e-05
      %v8692 = vrsqrt.pop %v8691
      %v8693 = vmul.f32 %v8659, %v8692
      %v8694 = vmul.f32 %v8660, %v8692
      %v8695 = vmul.f32 %v8661, %v8692
      %v8696 = vmul.f32 %v8662, %v8692
      %v8697 = vmul.f32 %v8663, %v8692
      %v8698 = vmul.f32 %v8664, %v8692
      %v8699 = vmul.f32 %v8665, %v8692
      %v8700 = vmul.f32 %v8666, %v8692
      %v8701 = vmul.f32 %v8667, %v8692
      %v8702 = vmul.f32 %v8668, %v8692
      %v8703 = vmul.f32 %v8669, %v8692
      %v8704 = vmul.f32 %v8670, %v8692
      %v8705 = vmul.f32 %v8671, %v8692
      %v8706 = vmul.f32 %v8672, %v8692
      %v8707 = vmul.f32 %v8673, %v8692
      %v8708 = vmul.f32 %v8674, %v8692
      %v8709 = vmul.f32 %v8675, %v8692
      %v8710 = vmul.f32 %v8676, %v8692
      %v8711 = vmul.f32 %v8677, %v8692
      %v8712 = vmul.f32 %v8678, %v8692
      %v8713 = vmul.f32 %v8679, %v8692
      %v8714 = vmul.f32 %v8680, %v8692
      %v8715 = vmul.f32 %v8681, %v8692
      %v8716 = vmul.f32 %v8682, %v8692
      %v8717 = vmul.f32 %v8683, %v8692
      %v8718 = vmul.f32 %v8684, %v8692
      %v8719 = vmul.f32 %v8685, %v8692
      %v8720 = vmul.f32 %v8686, %v8692
      %v8721 = vmul.f32 %v8687, %v8692
      %v8722 = vmul.f32 %v8688, %v8692
      %v8723 = vmul.f32 %v8689, %v8692
      %v8724 = vmul.f32 %v8690, %v8692
      %v8725 = vld [vmem:[%s165] sm:$0xff]
      %v8726 = vld [vmem:[%s165 + $0x8] sm:$0xff]
      %v8727 = vld [vmem:[%s165 + $0x10] sm:$0xff]
      %v8728 = vld [vmem:[%s165 + $0x18] sm:$0xff]
      %v8729 = vld [vmem:[%s165 + $0x20] sm:$0xff]
      %v8730 = vld [vmem:[%s165 + $0x28] sm:$0xff]
      %v8731 = vld [vmem:[%s165 + $0x30] sm:$0xff]
      %v8732 = vld [vmem:[%s165 + $0x38] sm:$0xff]
      %v8733 = vld [vmem:[%s165 + $0x40] sm:$0xff]
      %v8734 = vld [vmem:[%s165 + $0x48] sm:$0xff]
      %v8735 = vld [vmem:[%s165 + $0x50] sm:$0xff]
      %v8736 = vld [vmem:[%s165 + $0x58] sm:$0xff]
      %v8737 = vld [vmem:[%s165 + $0x60] sm:$0xff]
      %v8738 = vld [vmem:[%s165 + $0x68] sm:$0xff]
      %v8739 = vld [vmem:[%s165 + $0x70] sm:$0xff]
      %v8740 = vld [vmem:[%s165 + $0x78] sm:$0xff]
      %v8741 = vld [vmem:[%s165 + $0x80] sm:$0xff]
      %v8742 = vld [vmem:[%s165 + $0x88] sm:$0xff]
      %v8743 = vld [vmem:[%s165 + $0x90] sm:$0xff]
      %v8744 = vld [vmem:[%s165 + $0x98] sm:$0xff]
      %v8745 = vld [vmem:[%s165 + $0xa0] sm:$0xff]
      %v8746 = vld [vmem:[%s165 + $0xa8] sm:$0xff]
      %v8747 = vld [vmem:[%s165 + $0xb0] sm:$0xff]
      %v8748 = vld [vmem:[%s165 + $0xb8] sm:$0xff]
      %v8749 = vld [vmem:[%s165 + $0xc0] sm:$0xff]
      %v8750 = vld [vmem:[%s165 + $0xc8] sm:$0xff]
      %v8751 = vld [vmem:[%s165 + $0xd0] sm:$0xff]
      %v8752 = vld [vmem:[%s165 + $0xd8] sm:$0xff]
      %v8753 = vld [vmem:[%s165 + $0xe0] sm:$0xff]
      %v8754 = vld [vmem:[%s165 + $0xe8] sm:$0xff]
      %v8755 = vld [vmem:[%s165 + $0xf0] sm:$0xff]
      %v8756 = vld [vmem:[%s165 + $0xf8] sm:$0xff]
      %v8757 = vadd.f32 %v8725, %v8693
      %v8758 = vadd.f32 %v8726, %v8694
      %v8759 = vadd.f32 %v8727, %v8695
      %v8760 = vadd.f32 %v8728, %v8696
      %v8761 = vadd.f32 %v8729, %v8697
      %v8762 = vadd.f32 %v8730, %v8698
      %v8763 = vadd.f32 %v8731, %v8699
      %v8764 = vadd.f32 %v8732, %v8700
      %v8765 = vadd.f32 %v8733, %v8701
      %v8766 = vadd.f32 %v8734, %v8702
      %v8767 = vadd.f32 %v8735, %v8703
      %v8768 = vadd.f32 %v8736, %v8704
      %v8769 = vadd.f32 %v8737, %v8705
      %v8770 = vadd.f32 %v8738, %v8706
      %v8771 = vadd.f32 %v8739, %v8707
      %v8772 = vadd.f32 %v8740, %v8708
      %v8773 = vadd.f32 %v8741, %v8709
      %v8774 = vadd.f32 %v8742, %v8710
      %v8775 = vadd.f32 %v8743, %v8711
      %v8776 = vadd.f32 %v8744, %v8712
      %v8777 = vadd.f32 %v8745, %v8713
      %v8778 = vadd.f32 %v8746, %v8714
      %v8779 = vadd.f32 %v8747, %v8715
      %v8780 = vadd.f32 %v8748, %v8716
      %v8781 = vadd.f32 %v8749, %v8717
      %v8782 = vadd.f32 %v8750, %v8718
      %v8783 = vadd.f32 %v8751, %v8719
      %v8784 = vadd.f32 %v8752, %v8720
      %v8785 = vadd.f32 %v8753, %v8721
      %v8786 = vadd.f32 %v8754, %v8722
      %v8787 = vadd.f32 %v8755, %v8723
      %v8788 = vadd.f32 %v8756, %v8724
      %8789 = vst [vmem:[%s170] sm:$0xff] %v8757
      %8790 = vst [vmem:[%s170 + $0x8] sm:$0xff] %v8758
      %8791 = vst [vmem:[%s170 + $0x10] sm:$0xff] %v8759
      %8792 = vst [vmem:[%s170 + $0x18] sm:$0xff] %v8760
      %8793 = vst [vmem:[%s170 + $0x20] sm:$0xff] %v8761
      %8794 = vst [vmem:[%s170 + $0x28] sm:$0xff] %v8762
      %8795 = vst [vmem:[%s170 + $0x30] sm:$0xff] %v8763
      %8796 = vst [vmem:[%s170 + $0x38] sm:$0xff] %v8764
      %8797 = vst [vmem:[%s170 + $0x40] sm:$0xff] %v8765
      %8798 = vst [vmem:[%s170 + $0x48] sm:$0xff] %v8766
      %8799 = vst [vmem:[%s170 + $0x50] sm:$0xff] %v8767
      %8800 = vst [vmem:[%s170 + $0x58] sm:$0xff] %v8768
      %8801 = vst [vmem:[%s170 + $0x60] sm:$0xff] %v8769
      %8802 = vst [vmem:[%s170 + $0x68] sm:$0xff] %v8770
      %8803 = vst [vmem:[%s170 + $0x70] sm:$0xff] %v8771
      %8804 = vst [vmem:[%s170 + $0x78] sm:$0xff] %v8772
      %8805 = vst [vmem:[%s170 + $0x80] sm:$0xff] %v8773
      %8806 = vst [vmem:[%s170 + $0x88] sm:$0xff] %v8774
      %8807 = vst [vmem:[%s170 + $0x90] sm:$0xff] %v8775
      %8808 = vst [vmem:[%s170 + $0x98] sm:$0xff] %v8776
      %8809 = vst [vmem:[%s170 + $0xa0] sm:$0xff] %v8777
      %8810 = vst [vmem:[%s170 + $0xa8] sm:$0xff] %v8778
      %8811 = vst [vmem:[%s170 + $0xb0] sm:$0xff] %v8779
      %8812 = vst [vmem:[%s170 + $0xb8] sm:$0xff] %v8780
      %8813 = vst [vmem:[%s170 + $0xc0] sm:$0xff] %v8781
      %8814 = vst [vmem:[%s170 + $0xc8] sm:$0xff] %v8782
      %8815 = vst [vmem:[%s170 + $0xd0] sm:$0xff] %v8783
      %8816 = vst [vmem:[%s170 + $0xd8] sm:$0xff] %v8784
      %8817 = vst [vmem:[%s170 + $0xe0] sm:$0xff] %v8785
      %8818 = vst [vmem:[%s170 + $0xe8] sm:$0xff] %v8786
      %8819 = vst [vmem:[%s170 + $0xf0] sm:$0xff] %v8787
      %8820 = vst [vmem:[%s170 + $0xf8] sm:$0xff] %v8788
      %p8821 = scmp.lt.s32.totalorder %s14, 1
      %s8822 = scalar_select %p8821, %s14, 1
      %s8823 = smul.addr %s8822, 32
      %s8824 = smul.addr %s8823, 8
      %s8825 = scalar_lea.vmem %s3, %s8824
      // Predicated region
      $region33: #{residual_block.1} parent=31 // pred_check
        %p8826 = pneg %p100
      $region34: #{residual_block.1} parent=31 // pred_check_branch
        %8828 = sbr.rel (%p8826) target = $region36
      $region35: #{residual_block.1} parent=31 // pred_region
        _
      $region36: #{residual_block.1} parent=31 // pred_fallthru
        _
    $region32: #{residual_block.1} parent=5 // pred_fallthru
      _
    %p8829 = scmp.le.s32.totalorder 2, %s9
    // Predicated region
    $region37: #{residual_block.1} parent=5 // pred_check
      %p8830 = pneg %p8829
    $region38: #{residual_block.1} parent=5 // pred_check_branch
      %8832 = sbr.rel (%p8830) target = $region40
    $region39: #{residual_block.1} parent=5 // pred_region
      %s8833 = ssub.s32 %s9, 2
      // Predicated region
      $region41: #{residual_block.1} parent=39 // pred_check
        %p8834 = pneg %p106
      $region42: #{residual_block.1} parent=39 // pred_check_branch
        %8836 = sbr.rel (%p8834) target = $region44
      $region43: #{residual_block.1} parent=39 // pred_region
        %p8837 = scmp.lt.s32.totalorder %s15, 1
        %s8838 = scalar_select %p8837, %s15, 1
        %s8839 = smul.addr %s8838, 32
        %s8840 = smul.addr %s8839, 8
        %s8841 = scalar_lea.vmem %s3, %s8840
      $region44: #{residual_block.1} parent=39 // pred_fallthru
        _
    $region40: #{residual_block.1} parent=5 // pred_fallthru
      _
  $region6: #{residual_block.1} parent=0 // loop_footer
    %s13 = sadd.s32 1, %s9
  $region7: #{residual_block.1} parent=0 // loop_footer_branch
    %8 = sbr.rel target = $region3
  $region8: #{residual_block.1} parent=0 // loop_exit
    _

</llo_original>
